<compile_context>
chip_gen: v7x
topology: tpu7x:2x2x1
jax: 0.10.0
libtpu: 0.0.40
codegen_flags: <defaults>
</compile_context>

<pallas_src>
import jax
import jax.numpy as jnp
from jax.experimental import pallas as pl
from jax.experimental.pallas import tpu as pltpu


# ----------------------------------------------------------------------------
# Kernel 1: fused  out = relu( A @ W + bias )   (used by both convs)
# ----------------------------------------------------------------------------
def _matmul_bias_relu_kernel(a_ref, w_ref, b_ref, o_ref):
    acc = jnp.dot(a_ref[...], w_ref[...], preferred_element_type=jnp.float32)
    o_ref[...] = jnp.maximum(acc + b_ref[...], 0.0).astype(o_ref.dtype)


# ----------------------------------------------------------------------------
# Kernel 2: fused two-layer FC head (mu & logvar paths fused along N), K-tiled.
#   grid = (K // TK,)            K is the reduction axis -> "arbitrary"
#   acc   = sum_k A[:, k] @ W1[k]                    (f32 VMEM accumulator)
#   out   = relu(acc + b1) @ W2_blockdiag + b2       lane-dense (Mp, 128) store
# ----------------------------------------------------------------------------
def _fc_fused_kernel(a_ref, w1_ref, b1_ref, w2_ref, b2_ref, o_ref, acc_ref):
    k = pl.program_id(0)

    @pl.when(k == 0)
    def _():
        acc_ref[...] = jnp.zeros_like(acc_ref)

    acc_ref[...] += jnp.dot(a_ref[...], w1_ref[...],          # bf16 x bf16 -> f32
                            preferred_element_type=jnp.float32)

    @pl.when(k == pl.num_programs(0) - 1)
    def _():
        h = jnp.maximum(acc_ref[...] + b1_ref[...], 0.0)       # (Mp, 2U) f32
        out = jnp.dot(h, w2_ref[...], preferred_element_type=jnp.float32)
        o_ref[...] = (out + b2_ref[...]).astype(o_ref.dtype)


# ----------------------------------------------------------------------------
# im2col glue for Conv2d(k=4, s=2, p=1); columns ordered (kh, kw, c)
# ----------------------------------------------------------------------------
def _im2col_k4_s2_p1_nchw(x):
    """x: (B, C, H, W) NCHW.  -> ((B*Ho*Wo, 16*C), (B, Ho, Wo))."""
    B, C, H, W = x.shape
    Ho, Wo = H // 2, W // 2
    xp = jnp.pad(x, ((0, 0), (0, 0), (1, 1), (1, 1)))
    cols = [xp[:, c, kh:kh + 2 * Ho:2, kw:kw + 2 * Wo:2]
            for kh in range(4) for kw in range(4) for c in range(C)]
    a = jnp.stack(cols, axis=-1)                               # (B, Ho, Wo, 16*C)
    return a.reshape(B * Ho * Wo, 16 * C), (B, Ho, Wo)


def _im2col_k4_s2_p1_nhwc(x):
    """x: (B, H, W, C) NHWC.  -> ((B*Ho*Wo, 16*C), (B, Ho, Wo))."""
    B, H, W, C = x.shape
    Ho, Wo = H // 2, W // 2
    xp = jnp.pad(x, ((0, 0), (1, 1), (1, 1), (0, 0)))
    cols = [xp[:, kh:kh + 2 * Ho:2, kw:kw + 2 * Wo:2, :]
            for kh in range(4) for kw in range(4)]
    a = jnp.concatenate(cols, axis=-1)                         # (B, Ho, Wo, 16*C)
    return a.reshape(B * Ho * Wo, 16 * C), (B, Ho, Wo)


def _conv_matmul_bias_relu(a, w_mat, b, out_bhw, *, block_m):
    """a: (M, 16*C) im2col.  w_mat: (16*C, OC) tap-major.  b: (OC,).  -> NHWC."""
    M, K = a.shape
    OC = w_mat.shape[-1]
    bm = min(block_m, M)
    gm = pl.cdiv(M, bm)
    Mp = gm * bm
    if Mp != M:                                                # static, trace-time
        a = jnp.zeros((Mp, K), a.dtype).at[:M].set(a)

    out = pl.pallas_call(
        _matmul_bias_relu_kernel,
        out_shape=jax.ShapeDtypeStruct((Mp, OC), jnp.float32),
        grid=(gm,),
        in_specs=[
            pl.BlockSpec((bm, K), lambda i: (i, 0)),
            pl.BlockSpec((K, OC), lambda i: (0, 0)),
            pl.BlockSpec((1, OC), lambda i: (0, 0)),
        ],
        out_specs=pl.BlockSpec((bm, OC), lambda i: (i, 0)),
        compiler_params=pltpu.CompilerParams(
            dimension_semantics=("parallel",)),
    )(a, w_mat, b.reshape(1, OC))
    if Mp != M:
        out = out[:M]
    B, Ho, Wo = out_bhw
    return out.reshape(B, Ho, Wo, OC)


# ----------------------------------------------------------------------------
# Fused FC head: mu = fc12(relu(fc11(x))), logvar = fc22(relu(fc21(x)))
# ----------------------------------------------------------------------------
def fc_heads(flat, w1, b1, w2, b2, *, tk=3840, m_pad=16):
    """flat: (B, K) f32.  w1: (K, 2U) bf16.  b1: (1, 2U) f32.
    w2: (2U, 2Z) block-diagonal f32.  b2: (1, 2Z) f32."""
    B, K = flat.shape
    N1 = w1.shape[-1]
    N2 = w2.shape[-1]
    Z = N2 // 2
    tk = min(tk, K)
    assert K % tk == 0, (K, tk)           # 7680 % 3840 == 0; pick a divisor of K
    Mp = max(m_pad, B)
    a = jnp.zeros((Mp, K), jnp.bfloat16).at[:B].set(flat.astype(jnp.bfloat16))

    out = pl.pallas_call(
        _fc_fused_kernel,
        out_shape=jax.ShapeDtypeStruct((Mp, N2), jnp.float32),
        grid=(K // tk,),
        in_specs=[
            pl.BlockSpec((Mp, tk), lambda k: (0, k)),
            pl.BlockSpec((tk, N1), lambda k: (k, 0)),
            pl.BlockSpec((1, N1), lambda k: (0, 0)),
            pl.BlockSpec((N1, N2), lambda k: (0, 0)),
            pl.BlockSpec((1, N2), lambda k: (0, 0)),
        ],
        out_specs=pl.BlockSpec((Mp, N2), lambda k: (0, 0)),
        scratch_shapes=[pltpu.VMEM((Mp, N1), jnp.float32)],
        compiler_params=pltpu.CompilerParams(
            dimension_semantics=("arbitrary",)),
    )(a, w1, b1, w2, b2)
    return out[:B, :Z], out[:B, Z:]


# ----------------------------------------------------------------------------
# Encoder forward (matches the PyTorch module semantics; input is NCHW)
# ----------------------------------------------------------------------------
def encoder_forward(x_nchw, p):
    a1, bhw1 = _im2col_k4_s2_p1_nchw(x_nchw)       # no standalone layout transpose
    h = _conv_matmul_bias_relu(a1, p["conv1_w"], p["conv1_b"], bhw1, block_m=960)
    a2, bhw2 = _im2col_k4_s2_p1_nhwc(h)
    h = _conv_matmul_bias_relu(a2, p["conv2_w"], p["conv2_b"], bhw2, block_m=240)
    B = h.shape[0]
    flat = h.reshape(B, -1)     # (H, W, C) order; FC weight cols permuted offline
    return fc_heads(flat, p["fc1_w"], p["fc1_b"], p["fc2_w"], p["fc2_b"])


# ----------------------------------------------------------------------------
# One-time (offline) parameter preparation -- NOT in the jitted hot path.
# Converts PyTorch-layout params into the fused / permuted / bf16 kernel layouts.
# ----------------------------------------------------------------------------
def prepare_params(params, conv_out_hw):
    Ho2, Wo2 = conv_out_hw
    OC2 = params["conv2_w"].shape[0]

    def conv_taps(w):                       # (OC, C, 4, 4) -> (16*C, OC), (kh,kw,c) rows
        OC, C = w.shape[0], w.shape[1]
        return jnp.transpose(w, (2, 3, 1, 0)).reshape(16 * C, OC)

    def perm_fc1(w):                        # cols: torch (C,H,W) -> ours (H,W,C)
        U = w.shape[0]
        w = w.reshape(U, OC2, Ho2, Wo2).transpose(0, 2, 3, 1)
        return w.reshape(U, Ho2 * Wo2 * OC2).T                  # -> (K, U)

    fc1_w = jnp.concatenate([perm_fc1(params["fc11_w"]),
                             perm_fc1(params["fc21_w"])], axis=1)   # (K, 2U)
    fc1_b = jnp.concatenate([params["fc11_b"], params["fc21_b"]])[None, :]

    U = params["fc12_w"].shape[1]
    Z = params["fc12_w"].shape[0]
    fc2_w = jnp.zeros((2 * U, 2 * Z), jnp.float32)              # block-diagonal
    fc2_w = fc2_w.at[:U, :Z].set(params["fc12_w"].T)
    fc2_w = fc2_w.at[U:, Z:].set(params["fc22_w"].T)
    fc2_b = jnp.concatenate([params["fc12_b"], params["fc22_b"]])[None, :]

    return {
        "conv1_w": conv_taps(params["conv1_w"]),
        "conv1_b": params["conv1_b"],
        "conv2_w": conv_taps(params["conv2_w"]),
        "conv2_b": params["conv2_b"],
        "fc1_w": fc1_w.astype(jnp.bfloat16),    # dominant HBM stream -> bf16
        "fc1_b": fc1_b,
        "fc2_w": fc2_w,
        "fc2_b": fc2_b,
    }


# ----------------------------------------------------------------------------
# Pure-JAX reference (ground truth for the torch semantics, full f32)
# ----------------------------------------------------------------------------
def encoder_reference(x, params):
    def conv(x, w, b):
        y = jax.lax.conv_general_dilated(
            x, w, window_strides=(2, 2), padding=((1, 1), (1, 1)),
            dimension_numbers=("NCHW", "OIHW", "NCHW"),
            precision=jax.lax.Precision.HIGHEST)
        return jnp.maximum(y + b[None, :, None, None], 0.0)

    x = conv(x, params["conv1_w"], params["conv1_b"])
    x = conv(x, params["conv2_w"], params["conv2_b"])
    flat = x.reshape(x.shape[0], -1)

    def lin(h, w, b):
        return jnp.dot(h, w.T, precision=jax.lax.Precision.HIGHEST) + b

    mu = lin(jnp.maximum(lin(flat, params["fc11_w"], params["fc11_b"]), 0.0),
             params["fc12_w"], params["fc12_b"])
    lv = lin(jnp.maximum(lin(flat, params["fc21_w"], params["fc21_b"]), 0.0),
             params["fc22_w"], params["fc22_b"])
    return mu, lv


def init_params(key, channels=3, fc_units=256, compressed=64,
                flatten_size=32 * 15 * 16):
    ks = jax.random.split(key, 12)
    s = 0.05
    f32 = jnp.float32
    return {
        "conv1_w": s * jax.random.normal(ks[0], (32, channels, 4, 4), f32),
        "conv1_b": s * jax.random.normal(ks[1], (32,), f32),
        "conv2_w": s * jax.random.normal(ks[2], (32, 32, 4, 4), f32),
        "conv2_b": s * jax.random.normal(ks[3], (32,), f32),
        "fc11_w": s * jax.random.normal(ks[4], (fc_units, flatten_size), f32),
        "fc11_b": s * jax.random.normal(ks[5], (fc_units,), f32),
        "fc12_w": s * jax.random.normal(ks[6], (compressed, fc_units), f32),
        "fc12_b": s * jax.random.normal(ks[7], (compressed,), f32),
        "fc21_w": s * jax.random.normal(ks[8], (fc_units, flatten_size), f32),
        "fc21_b": s * jax.random.normal(ks[9], (fc_units,), f32),
        "fc22_w": s * jax.random.normal(ks[10], (compressed, fc_units), f32),
        "fc22_b": s * jax.random.normal(ks[11], (compressed,), f32),
    }


if __name__ == "__main__":
    key = jax.random.PRNGKey(0)
    k_params, k_x = jax.random.split(key)

    # (B=2, C=3, H=60, W=64) -> conv1 -> 30x32 -> conv2 -> 15x16,
    # so flatten = 32*15*16 = 7680 exactly as hard-coded in the PyTorch module.
    x = jax.random.normal(k_x, (2, 3, 60, 64), jnp.float32)
    params = init_params(k_params)
    prepped = prepare_params(params, conv_out_hw=(60 // 4, 64 // 4))  # offline, once

    fwd = jax.jit(encoder_forward)
    mu, logvar = fwd(x, prepped)
    jax.block_until_ready((mu, logvar))

    mu_ref, lv_ref = encoder_reference(x, params)
    assert mu.shape == (2, 64) and logvar.shape == (2, 64)
    # 5e-3 tolerance accounts for the bf16 fc1 weight/activation quantization
    # (accumulation itself is f32); observed error is well below this.
    err_mu = float(jnp.max(jnp.abs(mu - mu_ref)))
    err_lv = float(jnp.max(jnp.abs(logvar - lv_ref)))
    assert err_mu < 5e-3, ("mu max abs err", err_mu)
    assert err_lv < 5e-3, ("logvar max abs err", err_lv)

    print("KERNEL_OK")
</pallas_src>

<mosaic_0001>
module attributes {stable_mosaic.version = 11 : i64} {
  func.func @_matmul_bias_relu_kernel(%arg0: i32, %arg1: memref<960x48xf32, #tpu.memory_space<vmem>>, %arg2: memref<48x32xf32, #tpu.memory_space<vmem>>, %arg3: memref<1x32xf32, #tpu.memory_space<vmem>>, %arg4: memref<960x32xf32, #tpu.memory_space<vmem>>) attributes {dimension_semantics = [#tpu.dimension_semantics<parallel>], iteration_bounds = array<i64: 2>, scalar_prefetch = 0 : i64, scratch_operands = 0 : i64, tpu.core_type = #tpu.core_type<tc>, window_params = [{transform_indices = @transform_0, window_bounds = array<i64: 960, 48>}, {pipeline_mode = #tpu.pipeline_mode<synchronous>, transform_indices = @transform_1, window_bounds = array<i64: 48, 32>}, {pipeline_mode = #tpu.pipeline_mode<synchronous>, transform_indices = @transform_2, window_bounds = array<i64: 1, 32>}, {transform_indices = @transform_3, window_bounds = array<i64: 960, 32>}]} {
    %c0 = arith.constant 0 : index
    %c0_0 = arith.constant 0 : index
    %0 = vector.load %arg1[%c0, %c0_0] : memref<960x48xf32, #tpu.memory_space<vmem>>, vector<960x48xf32>
    %c0_1 = arith.constant 0 : index
    %c0_2 = arith.constant 0 : index
    %1 = vector.load %arg2[%c0_1, %c0_2] : memref<48x32xf32, #tpu.memory_space<vmem>>, vector<48x32xf32>
    %cst = arith.constant dense<0.000000e+00> : vector<960x32xf32>
    %2 = tpu.matmul %0, %1, %cst {dimension_numbers = #tpu.dot_dimension_numbers<[1], [0], [0], [1], [0, 0, 1, 1], [], []>} : vector<960x48xf32>, vector<48x32xf32>, vector<960x32xf32> -> vector<960x32xf32>
    %c0_3 = arith.constant 0 : index
    %c0_4 = arith.constant 0 : index
    %3 = vector.load %arg3[%c0_3, %c0_4] : memref<1x32xf32, #tpu.memory_space<vmem>>, vector<1x32xf32>
    %4 = vector.broadcast %3 : vector<1x32xf32> to vector<960x32xf32>
    %5 = arith.addf %2, %4 : vector<960x32xf32>
    %cst_5 = arith.constant 0.000000e+00 : f32
    %6 = vector.broadcast %cst_5 : f32 to vector<960x32xf32>
    %7 = arith.maximumf %5, %6 : vector<960x32xf32>
    %c0_6 = arith.constant 0 : index
    %c0_7 = arith.constant 0 : index
    %8 = vector.load %arg4[%c0_6, %c0_7] : memref<960x32xf32, #tpu.memory_space<vmem>>, vector<960x32xf32>
    tpu.vector_store %arg4[%c0_6, %c0_7], %7 {strides = array<i32>} : memref<960x32xf32, #tpu.memory_space<vmem>>, vector<960x32xf32>,
    return
  }
  func.func @transform_0(%arg0: i32) -> (i32, i32) {
    %c0_i32 = arith.constant 0 : i32
    %c0_i32_0 = arith.constant 0 : i32
    return %arg0, %c0_i32 : i32, i32
  }
  func.func @transform_1(%arg0: i32) -> (i32, i32) {
    %c0_i32 = arith.constant 0 : i32
    %c0_i32_0 = arith.constant 0 : i32
    %c0_i32_1 = arith.constant 0 : i32
    return %c0_i32, %c0_i32_0 : i32, i32
  }
  func.func @transform_2(%arg0: i32) -> (i32, i32) {
    %c0_i32 = arith.constant 0 : i32
    %c0_i32_0 = arith.constant 0 : i32
    %c0_i32_1 = arith.constant 0 : i32
    return %c0_i32, %c0_i32_0 : i32, i32
  }
  func.func @transform_3(%arg0: i32) -> (i32, i32) {
    %c0_i32 = arith.constant 0 : i32
    %c0_i32_0 = arith.constant 0 : i32
    return %arg0, %c0_i32 : i32, i32
  }
}

module attributes {stable_mosaic.version = 11 : i64} {
  func.func @_matmul_bias_relu_kernel(%arg0: i32, %arg1: memref<240x512xf32, #tpu.memory_space<vmem>>, %arg2: memref<512x32xf32, #tpu.memory_space<vmem>>, %arg3: memref<1x32xf32, #tpu.memory_space<vmem>>, %arg4: memref<240x32xf32, #tpu.memory_space<vmem>>) attributes {dimension_semantics = [#tpu.dimension_semantics<parallel>], iteration_bounds = array<i64: 2>, scalar_prefetch = 0 : i64, scratch_operands = 0 : i64, tpu.core_type = #tpu.core_type<tc>, window_params = [{transform_indices = @transform_0, window_bounds = array<i64: 240, 512>}, {pipeline_mode = #tpu.pipeline_mode<synchronous>, transform_indices = @transform_1, window_bounds = array<i64: 512, 32>}, {pipeline_mode = #tpu.pipeline_mode<synchronous>, transform_indices = @transform_2, window_bounds = array<i64: 1, 32>}, {transform_indices = @transform_3, window_bounds = array<i64: 240, 32>}]} {
    %c0 = arith.constant 0 : index
    %c0_0 = arith.constant 0 : index
    %0 = vector.load %arg1[%c0, %c0_0] : memref<240x512xf32, #tpu.memory_space<vmem>>, vector<240x512xf32>
    %c0_1 = arith.constant 0 : index
    %c0_2 = arith.constant 0 : index
    %1 = vector.load %arg2[%c0_1, %c0_2] : memref<512x32xf32, #tpu.memory_space<vmem>>, vector<512x32xf32>
    %cst = arith.constant dense<0.000000e+00> : vector<240x32xf32>
    %2 = tpu.matmul %0, %1, %cst {dimension_numbers = #tpu.dot_dimension_numbers<[1], [0], [0], [1], [0, 0, 1, 1], [], []>} : vector<240x512xf32>, vector<512x32xf32>, vector<240x32xf32> -> vector<240x32xf32>
    %c0_3 = arith.constant 0 : index
    %c0_4 = arith.constant 0 : index
    %3 = vector.load %arg3[%c0_3, %c0_4] : memref<1x32xf32, #tpu.memory_space<vmem>>, vector<1x32xf32>
    %4 = vector.broadcast %3 : vector<1x32xf32> to vector<240x32xf32>
    %5 = arith.addf %2, %4 : vector<240x32xf32>
    %cst_5 = arith.constant 0.000000e+00 : f32
    %6 = vector.broadcast %cst_5 : f32 to vector<240x32xf32>
    %7 = arith.maximumf %5, %6 : vector<240x32xf32>
    %c0_6 = arith.constant 0 : index
    %c0_7 = arith.constant 0 : index
    %8 = vector.load %arg4[%c0_6, %c0_7] : memref<240x32xf32, #tpu.memory_space<vmem>>, vector<240x32xf32>
    tpu.vector_store %arg4[%c0_6, %c0_7], %7 {strides = array<i32>} : memref<240x32xf32, #tpu.memory_space<vmem>>, vector<240x32xf32>,
    return
  }
  func.func @transform_0(%arg0: i32) -> (i32, i32) {
    %c0_i32 = arith.constant 0 : i32
    %c0_i32_0 = arith.constant 0 : i32
    return %arg0, %c0_i32 : i32, i32
  }
  func.func @transform_1(%arg0: i32) -> (i32, i32) {
    %c0_i32 = arith.constant 0 : i32
    %c0_i32_0 = arith.constant 0 : i32
    %c0_i32_1 = arith.constant 0 : i32
    return %c0_i32, %c0_i32_0 : i32, i32
  }
  func.func @transform_2(%arg0: i32) -> (i32, i32) {
    %c0_i32 = arith.constant 0 : i32
    %c0_i32_0 = arith.constant 0 : i32
    %c0_i32_1 = arith.constant 0 : i32
    return %c0_i32, %c0_i32_0 : i32, i32
  }
  func.func @transform_3(%arg0: i32) -> (i32, i32) {
    %c0_i32 = arith.constant 0 : i32
    %c0_i32_0 = arith.constant 0 : i32
    return %arg0, %c0_i32 : i32, i32
  }
}

module attributes {stable_mosaic.version = 11 : i64} {
  func.func @_fc_fused_kernel(%arg0: i32, %arg1: memref<16x3840xbf16, #tpu.memory_space<vmem>>, %arg2: memref<3840x512xbf16, #tpu.memory_space<vmem>>, %arg3: memref<1x512xf32, #tpu.memory_space<vmem>>, %arg4: memref<512x128xf32, #tpu.memory_space<vmem>>, %arg5: memref<1x128xf32, #tpu.memory_space<vmem>>, %arg6: memref<16x128xf32, #tpu.memory_space<vmem>>, %arg7: memref<16x512xf32, #tpu.memory_space<vmem>>) attributes {dimension_semantics = [#tpu.dimension_semantics<arbitrary>], iteration_bounds = array<i64: 2>, scalar_prefetch = 0 : i64, scratch_operands = 1 : i64, tpu.core_type = #tpu.core_type<tc>, window_params = [{transform_indices = @transform_0, window_bounds = array<i64: 16, 3840>}, {transform_indices = @transform_1, window_bounds = array<i64: 3840, 512>}, {pipeline_mode = #tpu.pipeline_mode<synchronous>, transform_indices = @transform_2, window_bounds = array<i64: 1, 512>}, {pipeline_mode = #tpu.pipeline_mode<synchronous>, transform_indices = @transform_3, window_bounds = array<i64: 512, 128>}, {pipeline_mode = #tpu.pipeline_mode<synchronous>, transform_indices = @transform_4, window_bounds = array<i64: 1, 128>}, {pipeline_mode = #tpu.pipeline_mode<synchronous>, transform_indices = @transform_5, window_bounds = array<i64: 16, 128>}]} {
    %c0_i32 = arith.constant 0 : i32
    %0 = arith.cmpi eq, %arg0, %c0_i32 : i32
    %1 = arith.extui %0 : i1 to i32
    %c0_i32_0 = arith.constant 0 : i32
    %2 = arith.cmpi ne, %1, %c0_i32_0 : i32
    scf.if %2 {
      %cst_9 = arith.constant 0.000000e+00 : f32
      %12 = vector.broadcast %cst_9 : f32 to vector<16x512xf32>
      %c0_10 = arith.constant 0 : index
      %c0_11 = arith.constant 0 : index
      %13 = vector.load %arg7[%c0_10, %c0_11] : memref<16x512xf32, #tpu.memory_space<vmem>>, vector<16x512xf32>
      tpu.vector_store %arg7[%c0_10, %c0_11], %12 {strides = array<i32>} : memref<16x512xf32, #tpu.memory_space<vmem>>, vector<16x512xf32>,
    } else {
    }
    %c0 = arith.constant 0 : index
    %c0_1 = arith.constant 0 : index
    %3 = vector.load %arg7[%c0, %c0_1] : memref<16x512xf32, #tpu.memory_space<vmem>>, vector<16x512xf32>
    %c0_2 = arith.constant 0 : index
    %c0_3 = arith.constant 0 : index
    %4 = vector.load %arg1[%c0_2, %c0_3] : memref<16x3840xbf16, #tpu.memory_space<vmem>>, vector<16x3840xbf16>
    %c0_4 = arith.constant 0 : index
    %c0_5 = arith.constant 0 : index
    %5 = vector.load %arg2[%c0_4, %c0_5] : memref<3840x512xbf16, #tpu.memory_space<vmem>>, vector<3840x512xbf16>
    %cst = arith.constant dense<0.000000e+00> : vector<16x512xf32>
    %6 = tpu.matmul %4, %5, %cst {dimension_numbers = #tpu.dot_dimension_numbers<[1], [0], [0], [1], [0, 0, 1, 1], [], []>} : vector<16x3840xbf16>, vector<3840x512xbf16>, vector<16x512xf32> -> vector<16x512xf32>
    %7 = arith.addf %3, %6 : vector<16x512xf32>
    %c0_6 = arith.constant 0 : index
    %c0_7 = arith.constant 0 : index
    %8 = vector.load %arg7[%c0_6, %c0_7] : memref<16x512xf32, #tpu.memory_space<vmem>>, vector<16x512xf32>
    tpu.vector_store %arg7[%c0_6, %c0_7], %7 {strides = array<i32>} : memref<16x512xf32, #tpu.memory_space<vmem>>, vector<16x512xf32>,
    %c1_i32 = arith.constant 1 : i32
    %9 = arith.cmpi eq, %arg0, %c1_i32 : i32
    %10 = arith.extui %9 : i1 to i32
    %c0_i32_8 = arith.constant 0 : i32
    %11 = arith.cmpi ne, %10, %c0_i32_8 : i32
    scf.if %11 {
      %c0_9 = arith.constant 0 : index
      %c0_10 = arith.constant 0 : index
      %12 = vector.load %arg7[%c0_9, %c0_10] : memref<16x512xf32, #tpu.memory_space<vmem>>, vector<16x512xf32>
      %c0_11 = arith.constant 0 : index
      %c0_12 = arith.constant 0 : index
      %13 = vector.load %arg3[%c0_11, %c0_12] : memref<1x512xf32, #tpu.memory_space<vmem>>, vector<1x512xf32>
      %14 = vector.broadcast %13 : vector<1x512xf32> to vector<16x512xf32>
      %15 = arith.addf %12, %14 : vector<16x512xf32>
      %cst_13 = arith.constant 0.000000e+00 : f32
      %16 = vector.broadcast %cst_13 : f32 to vector<16x512xf32>
      %17 = arith.maximumf %15, %16 : vector<16x512xf32>
      %c0_14 = arith.constant 0 : index
      %c0_15 = arith.constant 0 : index
      %18 = vector.load %arg4[%c0_14, %c0_15] : memref<512x128xf32, #tpu.memory_space<vmem>>, vector<512x128xf32>
      %cst_16 = arith.constant dense<0.000000e+00> : vector<16x128xf32>
      %19 = tpu.matmul %17, %18, %cst_16 {dimension_numbers = #tpu.dot_dimension_numbers<[1], [0], [0], [1], [0, 0, 1, 1], [], []>} : vector<16x512xf32>, vector<512x128xf32>, vector<16x128xf32> -> vector<16x128xf32>
      %c0_17 = arith.constant 0 : index
      %c0_18 = arith.constant 0 : index
      %20 = vector.load %arg5[%c0_17, %c0_18] : memref<1x128xf32, #tpu.memory_space<vmem>>, vector<1x128xf32>
      %21 = vector.broadcast %20 : vector<1x128xf32> to vector<16x128xf32>
      %22 = arith.addf %19, %21 : vector<16x128xf32>
      %c0_19 = arith.constant 0 : index
      %c0_20 = arith.constant 0 : index
      %23 = vector.load %arg6[%c0_19, %c0_20] : memref<16x128xf32, #tpu.memory_space<vmem>>, vector<16x128xf32>
      tpu.vector_store %arg6[%c0_19, %c0_20], %22 {strides = array<i32>} : memref<16x128xf32, #tpu.memory_space<vmem>>, vector<16x128xf32>,
    } else {
    }
    return
  }
  func.func @transform_0(%arg0: i32) -> (i32, i32) {
    %c0_i32 = arith.constant 0 : i32
    %c0_i32_0 = arith.constant 0 : i32
    return %c0_i32, %arg0 : i32, i32
  }
  func.func @transform_1(%arg0: i32) -> (i32, i32) {
    %c0_i32 = arith.constant 0 : i32
    %c0_i32_0 = arith.constant 0 : i32
    return %arg0, %c0_i32 : i32, i32
  }
  func.func @transform_2(%arg0: i32) -> (i32, i32) {
    %c0_i32 = arith.constant 0 : i32
    %c0_i32_0 = arith.constant 0 : i32
    %c0_i32_1 = arith.constant 0 : i32
    return %c0_i32, %c0_i32_0 : i32, i32
  }
  func.func @transform_3(%arg0: i32) -> (i32, i32) {
    %c0_i32 = arith.constant 0 : i32
    %c0_i32_0 = arith.constant 0 : i32
    %c0_i32_1 = arith.constant 0 : i32
    return %c0_i32, %c0_i32_0 : i32, i32
  }
  func.func @transform_4(%arg0: i32) -> (i32, i32) {
    %c0_i32 = arith.constant 0 : i32
    %c0_i32_0 = arith.constant 0 : i32
    %c0_i32_1 = arith.constant 0 : i32
    return %c0_i32, %c0_i32_0 : i32, i32
  }
  func.func @transform_5(%arg0: i32) -> (i32, i32) {
    %c0_i32 = arith.constant 0 : i32
    %c0_i32_0 = arith.constant 0 : i32
    %c0_i32_1 = arith.constant 0 : i32
    return %c0_i32, %c0_i32_0 : i32, i32
  }
}

</mosaic_0001>

<llo_original>
// kernel: encoder_forward.3
$region0: #{encoder_forward.3}
  #allocation0 [shape = 'u32[]', space=smem, size = 0x4, offset = 0x4, fixed_abs, tag = 'smem constant byte address 0x4 - core index']
  #allocation1 [shape = 'u32[144,128]{1,0:T(1,128)}', space=vmem, size = 0x12000, scoped, tag = 'internal scratch']
  %s0 = inlined_call_operand.vmem [shape: f32[1920,48], index: 0, kind: input, shape index: {}]
  %s1 = inlined_call_operand.vmem [shape: f32[48,32], index: 1, kind: input, shape index: {}]
  %s2 = inlined_call_operand.vmem [shape: f32[1,32], index: 2, kind: input, shape index: {}]
  %s3 = inlined_call_operand.vmem [shape: f32[1920,32], index: 3, kind: output, shape index: {}]
  %s4 = sld [smem:[#allocation0]]
  $region45: #{encoder_forward.3} parent=0
    _
  %s6 = ssub.s32 1, %s4
  %s7 = scalar_select 0, %s6, %s4
  loop: start=0, step=1, limit=4
  $region2: #{encoder_forward.3} parent=0 // loop_pre_header
    _
  $region3: #{encoder_forward.3} parent=0 // loop_header
    %s9 = sphi 0, %s13
    %p10 = scmp.ge.s32.totalorder %s9, 4
    %s19 = sphi 0, %s21
    %s22 = sphi 0, %s19
    %s23 = sphi 0, %s22
    %s39 = sphi 0, %s23
    %s43 = sphi 0, %s43
    %s45 = sphi 0, %s43
    %s46 = sphi 0, %s45
    %s60 = sphi 0, %s46
    %s64 = sphi 0, %s64
    %s66 = sphi 0, %s64
    %s67 = sphi 0, %s66
    %s81 = sphi 0, %s67
    %s87 = sphi 0, %s89
    %s90 = sphi 0, %s87
    %s91 = sphi 0, %s90
    %s107 = sphi 0, %s91
  $region4: #{encoder_forward.3} parent=0 // loop_header_branch
    %12 = sbr.rel (%p10) target = $region8
  $region5: #{encoder_forward.3} parent=0 // loop_body
    %s14 = ssub.s32 %s9, 1
    %s15 = ssub.s32 %s9, 2
    %s16 = sadd.s32 %s9, 1
    %s17 = ssub.s32 %s9, %s16
    %p18 = scmp.eq.s32.totalorder %s17, 0
    %s20 = sadd.s32 %s19, 1
    %s21 = scalar_select %p18, %s19, %s20
    %p24 = pneg %p18
    %p25 = scmp.eq.s32.totalorder %s9, 1
    %p26 = por %p24, %p25
    %p27 = scmp.ne.s32.totalorder %s19, %s22
    %p28 = scmp.eq.s32.totalorder %s9, 0
    %p29 = por %p27, %p28
    %p30 = scmp.ne.s32.totalorder %s19, %s22
    %p31 = scmp.eq.s32.totalorder %s14, 1
    %p32 = por %p30, %p31
    %p33 = scmp.ne.s32.totalorder %s22, %s23
    %p34 = scmp.eq.s32.totalorder %s14, 0
    %p35 = por %p33, %p34
    %p36 = scmp.ne.s32.totalorder %s22, %s23
    %p37 = scmp.eq.s32.totalorder %s15, 1
    %p38 = por %p36, %p37
    %p40 = scmp.ne.s32.totalorder %s23, %s39
    %p41 = scmp.eq.s32.totalorder %s15, 0
    %p42 = por %p40, %p41
    %s44 = sadd.s32 %s43, 1
    %p47 = scmp.eq.s32.totalorder %s9, 1
    %p48 = scmp.ne.s32.totalorder %s43, %s45
    %p49 = scmp.eq.s32.totalorder %s9, 0
    %p50 = por %p48, %p49
    %p51 = scmp.ne.s32.totalorder %s43, %s45
    %p52 = scmp.eq.s32.totalorder %s14, 1
    %p53 = por %p51, %p52
    %p54 = scmp.ne.s32.totalorder %s45, %s46
    %p55 = scmp.eq.s32.totalorder %s14, 0
    %p56 = por %p54, %p55
    %p57 = scmp.ne.s32.totalorder %s45, %s46
    %p58 = scmp.eq.s32.totalorder %s15, 1
    %p59 = por %p57, %p58
    %p61 = scmp.ne.s32.totalorder %s46, %s60
    %p62 = scmp.eq.s32.totalorder %s15, 0
    %p63 = por %p61, %p62
    %s65 = sadd.s32 %s64, 1
    %p68 = scmp.eq.s32.totalorder %s9, 1
    %p69 = scmp.ne.s32.totalorder %s64, %s66
    %p70 = scmp.eq.s32.totalorder %s9, 0
    %p71 = por %p69, %p70
    %p72 = scmp.ne.s32.totalorder %s64, %s66
    %p73 = scmp.eq.s32.totalorder %s14, 1
    %p74 = por %p72, %p73
    %p75 = scmp.ne.s32.totalorder %s66, %s67
    %p76 = scmp.eq.s32.totalorder %s14, 0
    %p77 = por %p75, %p76
    %p78 = scmp.ne.s32.totalorder %s66, %s67
    %p79 = scmp.eq.s32.totalorder %s15, 1
    %p80 = por %p78, %p79
    %p82 = scmp.ne.s32.totalorder %s67, %s81
    %p83 = scmp.eq.s32.totalorder %s15, 0
    %p84 = por %p82, %p83
    %s85 = ssub.s32 %s9, %s16
    %p86 = scmp.eq.s32.totalorder %s85, 0
    %s88 = sadd.s32 %s87, 1
    %s89 = scalar_select %p86, %s87, %s88
    %p92 = pneg %p86
    %p93 = scmp.eq.s32.totalorder %s9, 1
    %p94 = por %p92, %p93
    %p95 = scmp.ne.s32.totalorder %s87, %s90
    %p96 = scmp.eq.s32.totalorder %s9, 0
    %p97 = por %p95, %p96
    %p98 = scmp.ne.s32.totalorder %s87, %s90
    %p99 = scmp.eq.s32.totalorder %s14, 1
    %p100 = por %p98, %p99
    %p101 = scmp.ne.s32.totalorder %s90, %s91
    %p102 = scmp.eq.s32.totalorder %s14, 0
    %p103 = por %p101, %p102
    %p104 = scmp.ne.s32.totalorder %s90, %s91
    %p105 = scmp.eq.s32.totalorder %s15, 1
    %p106 = por %p104, %p105
    %p108 = scmp.ne.s32.totalorder %s91, %s107
    %p109 = scmp.eq.s32.totalorder %s15, 0
    %p110 = por %p108, %p109
    %p111 = scmp.le.s32.totalorder 1, %s9
    %p112 = scmp.lt.s32.totalorder %s9, 3
    %p113 = pnand %p111, %p112
    %p114 = pneg %p113
    // Predicated region
    $region9: #{encoder_forward.3} parent=5 // pred_check
      _
    $region10: #{encoder_forward.3} parent=5 // pred_check_branch
      %116 = sbr.rel (%p113) target = $region12
    $region11: #{encoder_forward.3} parent=5 // pred_region
      %s117 = ssub.s32 %s9, 1
      // Predicated region
      $region13: #{encoder_forward.3} parent=11 // pred_check
        %p118 = pneg %p56
      $region14: #{encoder_forward.3} parent=11 // pred_check_branch
        %120 = sbr.rel (%p118) target = $region16
      $region15: #{encoder_forward.3} parent=11 // pred_region
        _
      $region16: #{encoder_forward.3} parent=11 // pred_fallthru
        _
      // Predicated region
      $region17: #{encoder_forward.3} parent=11 // pred_check
        %p121 = pneg %p77
      $region18: #{encoder_forward.3} parent=11 // pred_check_branch
        %123 = sbr.rel (%p121) target = $region20
      $region19: #{encoder_forward.3} parent=11 // pred_region
        _
      $region20: #{encoder_forward.3} parent=11 // pred_fallthru
        _
    $region12: #{encoder_forward.3} parent=5 // pred_fallthru
      _
    %p124 = scmp.lt.s32.totalorder %s9, 2
    // Predicated region
    $region21: #{encoder_forward.3} parent=5 // pred_check
      %p125 = pneg %p124
    $region22: #{encoder_forward.3} parent=5 // pred_check_branch
      %127 = sbr.rel (%p125) target = $region24
    $region23: #{encoder_forward.3} parent=5 // pred_region
      // Predicated region
      $region25: #{encoder_forward.3} parent=23 // pred_check
        %p128 = pneg %p29
      $region26: #{encoder_forward.3} parent=23 // pred_check_branch
        %130 = sbr.rel (%p128) target = $region28
      $region27: #{encoder_forward.3} parent=23 // pred_region
        %s131 = smul.u32 120, %s9
        %p132 = scmp.lt.s32.totalorder %s131, 239
        %s133 = scalar_select %p132, %s131, 239
        %s134 = smul.addr %s133, 8
        %s135 = scalar_lea.vmem %s0, %s134
        %s136 = smul.u32 120, %s9
      $region28: #{encoder_forward.3} parent=23 // pred_fallthru
        _
    $region24: #{encoder_forward.3} parent=5 // pred_fallthru
      _
    %p137 = scmp.le.s32.totalorder 1, %s9
    %p138 = scmp.lt.s32.totalorder %s9, 3
    %p139 = pnand %p137, %p138
    %p140 = pneg %p139
    // Predicated region
    $region29: #{encoder_forward.3} parent=5 // pred_check
      _
    $region30: #{encoder_forward.3} parent=5 // pred_check_branch
      %142 = sbr.rel (%p139) target = $region32
    $region31: #{encoder_forward.3} parent=5 // pred_region
      %s143 = ssub.s32 %s9, 1
      %s144 = smul.u32 120, %s14
      %p145 = scmp.lt.s32.totalorder %s144, 239
      %s146 = scalar_select %p145, %s144, 239
      %s147 = smul.addr %s146, 8
      %s148 = scalar_lea.vmem %s0, %s147
      %p149 = pneg %p35
      %p150 = pneg %p32
      %p151 = pneg %p56
      %p152 = pneg %p53
      %p153 = pneg %p77
      %p154 = pneg %p74
      %p155 = pneg %p103
      %p156 = pneg %p100
      %s157 = smul.u32 120, %s14
      %p158 = scmp.lt.s32.totalorder %s157, 239
      %s159 = scalar_select %p158, %s157, 239
      %s160 = smul.addr %s159, 8
      %s161 = scalar_lea.vmem %s3, %s160
      %s162 = smul.u32 120, %s14
      %p163 = scmp.lt.s32.totalorder %s162, 239
      %s164 = scalar_select %p163, %s162, 239
      %s165 = smul.addr %s164, 8
      %s166 = scalar_lea.vmem %s0, %s165
      %s167 = smul.u32 120, %s14
      %s168 = smul.u32 120, %s14
      %p169 = scmp.lt.s32.totalorder %s168, 239
      %s170 = scalar_select %p169, %s168, 239
      %s171 = smul.addr %s170, 8
      %s172 = scalar_lea.vmem %s3, %s171
      %s173 = smul.u32 120, %s14
      %v174 = vld [vmem:[%s166] sm:$0xff]
      %v175 = vld [vmem:[%s166 + $0x8] sm:$0xff]
      %v176 = vld [vmem:[%s166 + $0x10] sm:$0xff]
      %v177 = vld [vmem:[%s166 + $0x18] sm:$0xff]
      %v178 = vld [vmem:[%s166 + $0x20] sm:$0xff]
      %v179 = vld [vmem:[%s166 + $0x28] sm:$0xff]
      %v180 = vld [vmem:[%s166 + $0x30] sm:$0xff]
      %v181 = vld [vmem:[%s166 + $0x38] sm:$0xff]
      %v182 = vld [vmem:[%s166 + $0x40] sm:$0xff]
      %v183 = vld [vmem:[%s166 + $0x48] sm:$0xff]
      %v184 = vld [vmem:[%s166 + $0x50] sm:$0xff]
      %v185 = vld [vmem:[%s166 + $0x58] sm:$0xff]
      %v186 = vld [vmem:[%s166 + $0x60] sm:$0xff]
      %v187 = vld [vmem:[%s166 + $0x68] sm:$0xff]
      %v188 = vld [vmem:[%s166 + $0x70] sm:$0xff]
      %v189 = vld [vmem:[%s166 + $0x78] sm:$0xff]
      %v190 = vld [vmem:[%s166 + $0x80] sm:$0xff]
      %v191 = vld [vmem:[%s166 + $0x88] sm:$0xff]
      %v192 = vld [vmem:[%s166 + $0x90] sm:$0xff]
      %v193 = vld [vmem:[%s166 + $0x98] sm:$0xff]
      %v194 = vld [vmem:[%s166 + $0xa0] sm:$0xff]
      %v195 = vld [vmem:[%s166 + $0xa8] sm:$0xff]
      %v196 = vld [vmem:[%s166 + $0xb0] sm:$0xff]
      %v197 = vld [vmem:[%s166 + $0xb8] sm:$0xff]
      %v198 = vld [vmem:[%s166 + $0xc0] sm:$0xff]
      %v199 = vld [vmem:[%s166 + $0xc8] sm:$0xff]
      %v200 = vld [vmem:[%s166 + $0xd0] sm:$0xff]
      %v201 = vld [vmem:[%s166 + $0xd8] sm:$0xff]
      %v202 = vld [vmem:[%s166 + $0xe0] sm:$0xff]
      %v203 = vld [vmem:[%s166 + $0xe8] sm:$0xff]
      %v204 = vld [vmem:[%s166 + $0xf0] sm:$0xff]
      %v205 = vld [vmem:[%s166 + $0xf8] sm:$0xff]
      %v206 = vld [vmem:[%s166 + $0x100] sm:$0xff]
      %v207 = vld [vmem:[%s166 + $0x108] sm:$0xff]
      %v208 = vld [vmem:[%s166 + $0x110] sm:$0xff]
      %v209 = vld [vmem:[%s166 + $0x118] sm:$0xff]
      %v210 = vld [vmem:[%s166 + $0x120] sm:$0xff]
      %v211 = vld [vmem:[%s166 + $0x128] sm:$0xff]
      %v212 = vld [vmem:[%s166 + $0x130] sm:$0xff]
      %v213 = vld [vmem:[%s166 + $0x138] sm:$0xff]
      %v214 = vld [vmem:[%s166 + $0x140] sm:$0xff]
      %v215 = vld [vmem:[%s166 + $0x148] sm:$0xff]
      %v216 = vld [vmem:[%s166 + $0x150] sm:$0xff]
      %v217 = vld [vmem:[%s166 + $0x158] sm:$0xff]
      %v218 = vld [vmem:[%s166 + $0x160] sm:$0xff]
      %v219 = vld [vmem:[%s166 + $0x168] sm:$0xff]
      %v220 = vld [vmem:[%s166 + $0x170] sm:$0xff]
      %v221 = vld [vmem:[%s166 + $0x178] sm:$0xff]
      %v222 = vld [vmem:[%s166 + $0x180] sm:$0xff]
      %v223 = vld [vmem:[%s166 + $0x188] sm:$0xff]
      %v224 = vld [vmem:[%s166 + $0x190] sm:$0xff]
      %v225 = vld [vmem:[%s166 + $0x198] sm:$0xff]
      %v226 = vld [vmem:[%s166 + $0x1a0] sm:$0xff]
      %v227 = vld [vmem:[%s166 + $0x1a8] sm:$0xff]
      %v228 = vld [vmem:[%s166 + $0x1b0] sm:$0xff]
      %v229 = vld [vmem:[%s166 + $0x1b8] sm:$0xff]
      %v230 = vld [vmem:[%s166 + $0x1c0] sm:$0xff]
      %v231 = vld [vmem:[%s166 + $0x1c8] sm:$0xff]
      %v232 = vld [vmem:[%s166 + $0x1d0] sm:$0xff]
      %v233 = vld [vmem:[%s166 + $0x1d8] sm:$0xff]
      %v234 = vld [vmem:[%s166 + $0x1e0] sm:$0xff]
      %v235 = vld [vmem:[%s166 + $0x1e8] sm:$0xff]
      %v236 = vld [vmem:[%s166 + $0x1f0] sm:$0xff]
      %v237 = vld [vmem:[%s166 + $0x1f8] sm:$0xff]
      %v238 = vld [vmem:[%s166 + $0x200] sm:$0xff]
      %v239 = vld [vmem:[%s166 + $0x208] sm:$0xff]
      %v240 = vld [vmem:[%s166 + $0x210] sm:$0xff]
      %v241 = vld [vmem:[%s166 + $0x218] sm:$0xff]
      %v242 = vld [vmem:[%s166 + $0x220] sm:$0xff]
      %v243 = vld [vmem:[%s166 + $0x228] sm:$0xff]
      %v244 = vld [vmem:[%s166 + $0x230] sm:$0xff]
      %v245 = vld [vmem:[%s166 + $0x238] sm:$0xff]
      %v246 = vld [vmem:[%s166 + $0x240] sm:$0xff]
      %v247 = vld [vmem:[%s166 + $0x248] sm:$0xff]
      %v248 = vld [vmem:[%s166 + $0x250] sm:$0xff]
      %v249 = vld [vmem:[%s166 + $0x258] sm:$0xff]
      %v250 = vld [vmem:[%s166 + $0x260] sm:$0xff]
      %v251 = vld [vmem:[%s166 + $0x268] sm:$0xff]
      %v252 = vld [vmem:[%s166 + $0x270] sm:$0xff]
      %v253 = vld [vmem:[%s166 + $0x278] sm:$0xff]
      %v254 = vld [vmem:[%s166 + $0x280] sm:$0xff]
      %v255 = vld [vmem:[%s166 + $0x288] sm:$0xff]
      %v256 = vld [vmem:[%s166 + $0x290] sm:$0xff]
      %v257 = vld [vmem:[%s166 + $0x298] sm:$0xff]
      %v258 = vld [vmem:[%s166 + $0x2a0] sm:$0xff]
      %v259 = vld [vmem:[%s166 + $0x2a8] sm:$0xff]
      %v260 = vld [vmem:[%s166 + $0x2b0] sm:$0xff]
      %v261 = vld [vmem:[%s166 + $0x2b8] sm:$0xff]
      %v262 = vld [vmem:[%s166 + $0x2c0] sm:$0xff]
      %v263 = vld [vmem:[%s166 + $0x2c8] sm:$0xff]
      %v264 = vld [vmem:[%s166 + $0x2d0] sm:$0xff]
      %v265 = vld [vmem:[%s166 + $0x2d8] sm:$0xff]
      %v266 = vld [vmem:[%s166 + $0x2e0] sm:$0xff]
      %v267 = vld [vmem:[%s166 + $0x2e8] sm:$0xff]
      %v268 = vld [vmem:[%s166 + $0x2f0] sm:$0xff]
      %v269 = vld [vmem:[%s166 + $0x2f8] sm:$0xff]
      %v270 = vld [vmem:[%s166 + $0x300] sm:$0xff]
      %v271 = vld [vmem:[%s166 + $0x308] sm:$0xff]
      %v272 = vld [vmem:[%s166 + $0x310] sm:$0xff]
      %v273 = vld [vmem:[%s166 + $0x318] sm:$0xff]
      %v274 = vld [vmem:[%s166 + $0x320] sm:$0xff]
      %v275 = vld [vmem:[%s166 + $0x328] sm:$0xff]
      %v276 = vld [vmem:[%s166 + $0x330] sm:$0xff]
      %v277 = vld [vmem:[%s166 + $0x338] sm:$0xff]
      %v278 = vld [vmem:[%s166 + $0x340] sm:$0xff]
      %v279 = vld [vmem:[%s166 + $0x348] sm:$0xff]
      %v280 = vld [vmem:[%s166 + $0x350] sm:$0xff]
      %v281 = vld [vmem:[%s166 + $0x358] sm:$0xff]
      %v282 = vld [vmem:[%s166 + $0x360] sm:$0xff]
      %v283 = vld [vmem:[%s166 + $0x368] sm:$0xff]
      %v284 = vld [vmem:[%s166 + $0x370] sm:$0xff]
      %v285 = vld [vmem:[%s166 + $0x378] sm:$0xff]
      %v286 = vld [vmem:[%s166 + $0x380] sm:$0xff]
      %v287 = vld [vmem:[%s166 + $0x388] sm:$0xff]
      %v288 = vld [vmem:[%s166 + $0x390] sm:$0xff]
      %v289 = vld [vmem:[%s166 + $0x398] sm:$0xff]
      %v290 = vld [vmem:[%s166 + $0x3a0] sm:$0xff]
      %v291 = vld [vmem:[%s166 + $0x3a8] sm:$0xff]
      %v292 = vld [vmem:[%s166 + $0x3b0] sm:$0xff]
      %v293 = vld [vmem:[%s166 + $0x3b8] sm:$0xff]
      %v294 = vld [vmem:[%s1] sm:$0xff]
      %v295 = vld [vmem:[%s1 + $0x8] sm:$0xff]
      %v296 = vld [vmem:[%s1 + $0x10] sm:$0xff]
      %v297 = vld [vmem:[%s1 + $0x18] sm:$0xff]
      %v298 = vld [vmem:[%s1 + $0x20] sm:$0xff]
      %v299 = vld [vmem:[%s1 + $0x28] sm:$0xff]
      %v300 = vld [vmem:[%s2] sm:$0x1]
      %v302 = vlaneseq
      %v303 = vshrl.u32 %v302, 7
      %v304 = vsub.s32 0, %v303
      %v305 = vrot.slane %v300, %v304
      %vm307 = vcmask 392192
      %v309 = vsel %vm307, %v174, 0
      %v312 = vsel %vm307, %v175, 0
      %v315 = vsel %vm307, %v176, 0
      %v318 = vsel %vm307, %v177, 0
      %v321 = vsel %vm307, %v178, 0
      %v324 = vsel %vm307, %v179, 0
      %v327 = vsel %vm307, %v180, 0
      %v330 = vsel %vm307, %v181, 0
      %v333 = vsel %vm307, %v182, 0
      %v336 = vsel %vm307, %v183, 0
      %v339 = vsel %vm307, %v184, 0
      %v342 = vsel %vm307, %v185, 0
      %v345 = vsel %vm307, %v186, 0
      %v348 = vsel %vm307, %v187, 0
      %v351 = vsel %vm307, %v188, 0
      %v354 = vsel %vm307, %v189, 0
      %v357 = vsel %vm307, %v190, 0
      %v360 = vsel %vm307, %v191, 0
      %v363 = vsel %vm307, %v192, 0
      %v366 = vsel %vm307, %v193, 0
      %v369 = vsel %vm307, %v194, 0
      %v372 = vsel %vm307, %v195, 0
      %v375 = vsel %vm307, %v196, 0
      %v378 = vsel %vm307, %v197, 0
      %v381 = vsel %vm307, %v198, 0
      %v384 = vsel %vm307, %v199, 0
      %v387 = vsel %vm307, %v200, 0
      %v390 = vsel %vm307, %v201, 0
      %v393 = vsel %vm307, %v202, 0
      %v396 = vsel %vm307, %v203, 0
      %v399 = vsel %vm307, %v204, 0
      %v402 = vsel %vm307, %v205, 0
      %v405 = vsel %vm307, %v206, 0
      %v408 = vsel %vm307, %v207, 0
      %v411 = vsel %vm307, %v208, 0
      %v414 = vsel %vm307, %v209, 0
      %v417 = vsel %vm307, %v210, 0
      %v420 = vsel %vm307, %v211, 0
      %v423 = vsel %vm307, %v212, 0
      %v426 = vsel %vm307, %v213, 0
      %v429 = vsel %vm307, %v214, 0
      %v432 = vsel %vm307, %v215, 0
      %v435 = vsel %vm307, %v216, 0
      %v438 = vsel %vm307, %v217, 0
      %v441 = vsel %vm307, %v218, 0
      %v444 = vsel %vm307, %v219, 0
      %v447 = vsel %vm307, %v220, 0
      %v450 = vsel %vm307, %v221, 0
      %v453 = vsel %vm307, %v222, 0
      %v456 = vsel %vm307, %v223, 0
      %v459 = vsel %vm307, %v224, 0
      %v462 = vsel %vm307, %v225, 0
      %v465 = vsel %vm307, %v226, 0
      %v468 = vsel %vm307, %v227, 0
      %v471 = vsel %vm307, %v228, 0
      %v474 = vsel %vm307, %v229, 0
      %v477 = vsel %vm307, %v230, 0
      %v480 = vsel %vm307, %v231, 0
      %v483 = vsel %vm307, %v232, 0
      %v486 = vsel %vm307, %v233, 0
      %v489 = vsel %vm307, %v234, 0
      %v492 = vsel %vm307, %v235, 0
      %v495 = vsel %vm307, %v236, 0
      %v498 = vsel %vm307, %v237, 0
      %v501 = vsel %vm307, %v238, 0
      %v504 = vsel %vm307, %v239, 0
      %v507 = vsel %vm307, %v240, 0
      %v510 = vsel %vm307, %v241, 0
      %v513 = vsel %vm307, %v242, 0
      %v516 = vsel %vm307, %v243, 0
      %v519 = vsel %vm307, %v244, 0
      %v522 = vsel %vm307, %v245, 0
      %v525 = vsel %vm307, %v246, 0
      %v528 = vsel %vm307, %v247, 0
      %v531 = vsel %vm307, %v248, 0
      %v534 = vsel %vm307, %v249, 0
      %v537 = vsel %vm307, %v250, 0
      %v540 = vsel %vm307, %v251, 0
      %v543 = vsel %vm307, %v252, 0
      %v546 = vsel %vm307, %v253, 0
      %v549 = vsel %vm307, %v254, 0
      %v552 = vsel %vm307, %v255, 0
      %v555 = vsel %vm307, %v256, 0
      %v558 = vsel %vm307, %v257, 0
      %v561 = vsel %vm307, %v258, 0
      %v564 = vsel %vm307, %v259, 0
      %v567 = vsel %vm307, %v260, 0
      %v570 = vsel %vm307, %v261, 0
      %v573 = vsel %vm307, %v262, 0
      %v576 = vsel %vm307, %v263, 0
      %v579 = vsel %vm307, %v264, 0
      %v582 = vsel %vm307, %v265, 0
      %v585 = vsel %vm307, %v266, 0
      %v588 = vsel %vm307, %v267, 0
      %v591 = vsel %vm307, %v268, 0
      %v594 = vsel %vm307, %v269, 0
      %v597 = vsel %vm307, %v270, 0
      %v600 = vsel %vm307, %v271, 0
      %v603 = vsel %vm307, %v272, 0
      %v606 = vsel %vm307, %v273, 0
      %v609 = vsel %vm307, %v274, 0
      %v612 = vsel %vm307, %v275, 0
      %v615 = vsel %vm307, %v276, 0
      %v618 = vsel %vm307, %v277, 0
      %v621 = vsel %vm307, %v278, 0
      %v624 = vsel %vm307, %v279, 0
      %v627 = vsel %vm307, %v280, 0
      %v630 = vsel %vm307, %v281, 0
      %v633 = vsel %vm307, %v282, 0
      %v636 = vsel %vm307, %v283, 0
      %v639 = vsel %vm307, %v284, 0
      %v642 = vsel %vm307, %v285, 0
      %v645 = vsel %vm307, %v286, 0
      %v648 = vsel %vm307, %v287, 0
      %v651 = vsel %vm307, %v288, 0
      %v654 = vsel %vm307, %v289, 0
      %v657 = vsel %vm307, %v290, 0
      %v660 = vsel %vm307, %v291, 0
      %v663 = vsel %vm307, %v292, 0
      %v666 = vsel %vm307, %v293, 0
      %668 = vmatprep.subr.mxu0 0.0
      %669 = vmatpush1.msra.mxu0 %v294
      %670 = vmatprep.subr.mxu0 0.0
      %671 = vmatpush1.msra.mxu0 %v295
      %672 = vmatprep.subr.mxu0 0.0
      %673 = vmatpush1.msra.mxu0 %v296
      %674 = vmatprep.subr.mxu0 0.0
      %675 = vmatpush1.msra.mxu0 %v297
      %676 = vmatprep.subr.mxu0 0.0
      %677 = vmatpush1.msra.mxu0 %v298
      %678 = vmatprep.subr.mxu0 0.0
      %679 = vmatpush1.msra.mxu0 %v299
      %680 = vmatprep.subr.mxu0 0.0
      %681 = vmatpush1.msra.mxu0 0.0
      %682 = vmatprep.subr.mxu0 0.0
      %683 = vmatpush1.msra.mxu0 0.0
      %684 = vmatprep.subr.mxu0 0.0
      %685 = vmatpush1.msra.mxu0 0.0
      %686 = vmatprep.subr.mxu0 0.0
      %687 = vmatpush1.msra.mxu0 0.0
      %688 = vmatprep.subr.mxu0 0.0
      %689 = vmatpush1.msra.mxu0 0.0
      %690 = vmatprep.subr.mxu0 0.0
      %691 = vmatpush1.msra.mxu0 0.0
      %692 = vmatprep.subr.mxu0 0.0
      %693 = vmatpush1.msra.mxu0 0.0
      %694 = vmatprep.subr.mxu0 0.0
      %695 = vmatpush1.msra.mxu0 0.0
      %696 = vmatprep.subr.mxu0 0.0
      %697 = vmatpush1.msra.mxu0 0.0
      %698 = vmatprep.subr.mxu0 0.0
      %699 = vmatpush1.msra.mxu0 0.0
      %700 = vmatprep.subr.mxu0 0.0
      %701 = vmatpush1.msra.mxu0 0.0
      %702 = vmatprep.subr.mxu0 0.0
      %703 = vmatpush1.msra.mxu0 0.0
      %704 = vmatprep.subr.mxu0 0.0
      %705 = vmatpush1.msra.mxu0 0.0
      %706 = vmatprep.subr.mxu0 0.0
      %707 = vmatpush1.msra.mxu0 0.0
      %708 = vmatprep.subr.mxu0 0.0
      %709 = vmatpush1.msra.mxu0 0.0
      %710 = vmatprep.subr.mxu0 0.0
      %711 = vmatpush1.msra.mxu0 0.0
      %712 = vmatprep.subr.mxu0 0.0
      %713 = vmatpush1.msra.mxu0 0.0
      %714 = vmatprep.subr.mxu0 0.0
      %715 = vmatpush1.msra.mxu0 0.0
      %716 = vmatprep.subr.mxu0 0.0
      %717 = vmatpush1.msra.mxu0 0.0
      %718 = vmatprep.subr.mxu0 0.0
      %719 = vmatpush1.msra.mxu0 0.0
      %720 = vmatprep.subr.mxu0 0.0
      %721 = vmatpush1.msra.mxu0 0.0
      %722 = vmatprep.subr.mxu0 0.0
      %723 = vmatpush1.msra.mxu0 0.0
      %724 = vmatprep.subr.mxu0 0.0
      %725 = vmatpush1.msra.mxu0 0.0
      %726 = vmatprep.subr.mxu0 0.0
      %727 = vmatpush1.msra.mxu0 0.0
      %728 = vmatprep.subr.mxu0 0.0
      %729 = vmatpush1.msra.mxu0 0.0
      %730 = vmatprep.subr.mxu0 0.0
      %731 = vmatpush1.msra.mxu0 0.0
      %732 = vmatprep.mubr.f32.mxu0 0.0
      %733 = vmatmul.mubr.f32.gmra.mrb[0].mxu0 %v309
      %v734 = vpop.f32.mrb[0].mxu0
      %v735 = vadd.f32 %v305, %v734
      %v736 = vpop.f32.mrb[0].mxu0
      %737 = vmatprep.mubr.f32.mxu0 0.0
      %738 = vmatmul.mubr.f32.gmra.mrb[0].mxu0 %v312
      %v739 = vpop.f32.mrb[0].mxu0
      %v740 = vadd.f32 %v305, %v739
      %v741 = vpop.f32.mrb[0].mxu0
      %742 = vmatprep.mubr.f32.mxu0 0.0
      %743 = vmatmul.mubr.f32.gmra.mrb[0].mxu0 %v315
      %v744 = vpop.f32.mrb[0].mxu0
      %v745 = vadd.f32 %v305, %v744
      %v746 = vpop.f32.mrb[0].mxu0
      %747 = vmatprep.mubr.f32.mxu0 0.0
      %748 = vmatmul.mubr.f32.gmra.mrb[0].mxu0 %v318
      %v749 = vpop.f32.mrb[0].mxu0
      %v750 = vadd.f32 %v305, %v749
      %v751 = vpop.f32.mrb[0].mxu0
      %752 = vmatprep.mubr.f32.mxu0 0.0
      %753 = vmatmul.mubr.f32.gmra.mrb[0].mxu0 %v321
      %v754 = vpop.f32.mrb[0].mxu0
      %v755 = vadd.f32 %v305, %v754
      %v756 = vpop.f32.mrb[0].mxu0
      %757 = vmatprep.mubr.f32.mxu0 0.0
      %758 = vmatmul.mubr.f32.gmra.mrb[0].mxu0 %v324
      %v759 = vpop.f32.mrb[0].mxu0
      %v760 = vadd.f32 %v305, %v759
      %v761 = vpop.f32.mrb[0].mxu0
      %762 = vmatprep.mubr.f32.mxu0 0.0
      %763 = vmatmul.mubr.f32.gmra.mrb[0].mxu0 %v327
      %v764 = vpop.f32.mrb[0].mxu0
      %v765 = vadd.f32 %v305, %v764
      %v766 = vpop.f32.mrb[0].mxu0
      %767 = vmatprep.mubr.f32.mxu0 0.0
      %768 = vmatmul.mubr.f32.gmra.mrb[0].mxu0 %v330
      %v769 = vpop.f32.mrb[0].mxu0
      %v770 = vadd.f32 %v305, %v769
      %v771 = vpop.f32.mrb[0].mxu0
      %772 = vmatprep.mubr.f32.mxu0 0.0
      %773 = vmatmul.mubr.f32.gmra.mrb[0].mxu0 %v333
      %v774 = vpop.f32.mrb[0].mxu0
      %v775 = vadd.f32 %v305, %v774
      %v776 = vpop.f32.mrb[0].mxu0
      %777 = vmatprep.mubr.f32.mxu0 0.0
      %778 = vmatmul.mubr.f32.gmra.mrb[0].mxu0 %v336
      %v779 = vpop.f32.mrb[0].mxu0
      %v780 = vadd.f32 %v305, %v779
      %v781 = vpop.f32.mrb[0].mxu0
      %782 = vmatprep.mubr.f32.mxu0 0.0
      %783 = vmatmul.mubr.f32.gmra.mrb[0].mxu0 %v339
      %v784 = vpop.f32.mrb[0].mxu0
      %v785 = vadd.f32 %v305, %v784
      %v786 = vpop.f32.mrb[0].mxu0
      %787 = vmatprep.mubr.f32.mxu0 0.0
      %788 = vmatmul.mubr.f32.gmra.mrb[0].mxu0 %v342
      %v789 = vpop.f32.mrb[0].mxu0
      %v790 = vadd.f32 %v305, %v789
      %v791 = vpop.f32.mrb[0].mxu0
      %792 = vmatprep.mubr.f32.mxu0 0.0
      %793 = vmatmul.mubr.f32.gmra.mrb[0].mxu0 %v345
      %v794 = vpop.f32.mrb[0].mxu0
      %v795 = vadd.f32 %v305, %v794
      %v796 = vpop.f32.mrb[0].mxu0
      %797 = vmatprep.mubr.f32.mxu0 0.0
      %798 = vmatmul.mubr.f32.gmra.mrb[0].mxu0 %v348
      %v799 = vpop.f32.mrb[0].mxu0
      %v800 = vadd.f32 %v305, %v799
      %v801 = vpop.f32.mrb[0].mxu0
      %802 = vmatprep.mubr.f32.mxu0 0.0
      %803 = vmatmul.mubr.f32.gmra.mrb[0].mxu0 %v351
      %v804 = vpop.f32.mrb[0].mxu0
      %v805 = vadd.f32 %v305, %v804
      %v806 = vpop.f32.mrb[0].mxu0
      %807 = vmatprep.mubr.f32.mxu0 0.0
      %808 = vmatmul.mubr.f32.gmra.mrb[0].mxu0 %v354
      %v809 = vpop.f32.mrb[0].mxu0
      %v810 = vadd.f32 %v305, %v809
      %v811 = vpop.f32.mrb[0].mxu0
      %812 = vmatprep.mubr.f32.mxu0 0.0
      %813 = vmatmul.mubr.f32.gmra.mrb[0].mxu0 %v357
      %v814 = vpop.f32.mrb[0].mxu0
      %v815 = vadd.f32 %v305, %v814
      %v816 = vpop.f32.mrb[0].mxu0
      %817 = vmatprep.mubr.f32.mxu0 0.0
      %818 = vmatmul.mubr.f32.gmra.mrb[0].mxu0 %v360
      %v819 = vpop.f32.mrb[0].mxu0
      %v820 = vadd.f32 %v305, %v819
      %v821 = vpop.f32.mrb[0].mxu0
      %822 = vmatprep.mubr.f32.mxu0 0.0
      %823 = vmatmul.mubr.f32.gmra.mrb[0].mxu0 %v363
      %v824 = vpop.f32.mrb[0].mxu0
      %v825 = vadd.f32 %v305, %v824
      %v826 = vpop.f32.mrb[0].mxu0
      %827 = vmatprep.mubr.f32.mxu0 0.0
      %828 = vmatmul.mubr.f32.gmra.mrb[0].mxu0 %v366
      %v829 = vpop.f32.mrb[0].mxu0
      %v830 = vadd.f32 %v305, %v829
      %v831 = vpop.f32.mrb[0].mxu0
      %832 = vmatprep.mubr.f32.mxu0 0.0
      %833 = vmatmul.mubr.f32.gmra.mrb[0].mxu0 %v369
      %v834 = vpop.f32.mrb[0].mxu0
      %v835 = vadd.f32 %v305, %v834
      %v836 = vpop.f32.mrb[0].mxu0
      %837 = vmatprep.mubr.f32.mxu0 0.0
      %838 = vmatmul.mubr.f32.gmra.mrb[0].mxu0 %v372
      %v839 = vpop.f32.mrb[0].mxu0
      %v840 = vadd.f32 %v305, %v839
      %v841 = vpop.f32.mrb[0].mxu0
      %842 = vmatprep.mubr.f32.mxu0 0.0
      %843 = vmatmul.mubr.f32.gmra.mrb[0].mxu0 %v375
      %v844 = vpop.f32.mrb[0].mxu0
      %v845 = vadd.f32 %v305, %v844
      %v846 = vpop.f32.mrb[0].mxu0
      %847 = vmatprep.mubr.f32.mxu0 0.0
      %848 = vmatmul.mubr.f32.gmra.mrb[0].mxu0 %v378
      %v849 = vpop.f32.mrb[0].mxu0
      %v850 = vadd.f32 %v305, %v849
      %v851 = vpop.f32.mrb[0].mxu0
      %852 = vmatprep.mubr.f32.mxu0 0.0
      %853 = vmatmul.mubr.f32.gmra.mrb[0].mxu0 %v381
      %v854 = vpop.f32.mrb[0].mxu0
      %v855 = vadd.f32 %v305, %v854
      %v856 = vpop.f32.mrb[0].mxu0
      %857 = vmatprep.mubr.f32.mxu0 0.0
      %858 = vmatmul.mubr.f32.gmra.mrb[0].mxu0 %v384
      %v859 = vpop.f32.mrb[0].mxu0
      %v860 = vadd.f32 %v305, %v859
      %v861 = vpop.f32.mrb[0].mxu0
      %862 = vmatprep.mubr.f32.mxu0 0.0
      %863 = vmatmul.mubr.f32.gmra.mrb[0].mxu0 %v387
      %v864 = vpop.f32.mrb[0].mxu0
      %v865 = vadd.f32 %v305, %v864
      %v866 = vpop.f32.mrb[0].mxu0
      %867 = vmatprep.mubr.f32.mxu0 0.0
      %868 = vmatmul.mubr.f32.gmra.mrb[0].mxu0 %v390
      %v869 = vpop.f32.mrb[0].mxu0
      %v870 = vadd.f32 %v305, %v869
      %v871 = vpop.f32.mrb[0].mxu0
      %872 = vmatprep.mubr.f32.mxu0 0.0
      %873 = vmatmul.mubr.f32.gmra.mrb[0].mxu0 %v393
      %v874 = vpop.f32.mrb[0].mxu0
      %v875 = vadd.f32 %v305, %v874
      %v876 = vpop.f32.mrb[0].mxu0
      %877 = vmatprep.mubr.f32.mxu0 0.0
      %878 = vmatmul.mubr.f32.gmra.mrb[0].mxu0 %v396
      %v879 = vpop.f32.mrb[0].mxu0
      %v880 = vadd.f32 %v305, %v879
      %v881 = vpop.f32.mrb[0].mxu0
      %882 = vmatprep.mubr.f32.mxu0 0.0
      %883 = vmatmul.mubr.f32.gmra.mrb[0].mxu0 %v399
      %v884 = vpop.f32.mrb[0].mxu0
      %v885 = vadd.f32 %v305, %v884
      %v886 = vpop.f32.mrb[0].mxu0
      %887 = vmatprep.mubr.f32.mxu0 0.0
      %888 = vmatmul.mubr.f32.gmra.mrb[0].mxu0 %v402
      %v889 = vpop.f32.mrb[0].mxu0
      %v890 = vadd.f32 %v305, %v889
      %v891 = vpop.f32.mrb[0].mxu0
      %892 = vmatprep.mubr.f32.mxu0 0.0
      %893 = vmatmul.mubr.f32.gmra.mrb[0].mxu0 %v405
      %v894 = vpop.f32.mrb[0].mxu0
      %v895 = vadd.f32 %v305, %v894
      %v896 = vpop.f32.mrb[0].mxu0
      %897 = vmatprep.mubr.f32.mxu0 0.0
      %898 = vmatmul.mubr.f32.gmra.mrb[0].mxu0 %v408
      %v899 = vpop.f32.mrb[0].mxu0
      %v900 = vadd.f32 %v305, %v899
      %v901 = vpop.f32.mrb[0].mxu0
      %902 = vmatprep.mubr.f32.mxu0 0.0
      %903 = vmatmul.mubr.f32.gmra.mrb[0].mxu0 %v411
      %v904 = vpop.f32.mrb[0].mxu0
      %v905 = vadd.f32 %v305, %v904
      %v906 = vpop.f32.mrb[0].mxu0
      %907 = vmatprep.mubr.f32.mxu0 0.0
      %908 = vmatmul.mubr.f32.gmra.mrb[0].mxu0 %v414
      %v909 = vpop.f32.mrb[0].mxu0
      %v910 = vadd.f32 %v305, %v909
      %v911 = vpop.f32.mrb[0].mxu0
      %912 = vmatprep.mubr.f32.mxu0 0.0
      %913 = vmatmul.mubr.f32.gmra.mrb[0].mxu0 %v417
      %v914 = vpop.f32.mrb[0].mxu0
      %v915 = vadd.f32 %v305, %v914
      %v916 = vpop.f32.mrb[0].mxu0
      %917 = vmatprep.mubr.f32.mxu0 0.0
      %918 = vmatmul.mubr.f32.gmra.mrb[0].mxu0 %v420
      %v919 = vpop.f32.mrb[0].mxu0
      %v920 = vadd.f32 %v305, %v919
      %v921 = vpop.f32.mrb[0].mxu0
      %922 = vmatprep.mubr.f32.mxu0 0.0
      %923 = vmatmul.mubr.f32.gmra.mrb[0].mxu0 %v423
      %v924 = vpop.f32.mrb[0].mxu0
      %v925 = vadd.f32 %v305, %v924
      %v926 = vpop.f32.mrb[0].mxu0
      %927 = vmatprep.mubr.f32.mxu0 0.0
      %928 = vmatmul.mubr.f32.gmra.mrb[0].mxu0 %v426
      %v929 = vpop.f32.mrb[0].mxu0
      %v930 = vadd.f32 %v305, %v929
      %v931 = vpop.f32.mrb[0].mxu0
      %932 = vmatprep.mubr.f32.mxu0 0.0
      %933 = vmatmul.mubr.f32.gmra.mrb[0].mxu0 %v429
      %v934 = vpop.f32.mrb[0].mxu0
      %v935 = vadd.f32 %v305, %v934
      %v936 = vpop.f32.mrb[0].mxu0
      %937 = vmatprep.mubr.f32.mxu0 0.0
      %938 = vmatmul.mubr.f32.gmra.mrb[0].mxu0 %v432
      %v939 = vpop.f32.mrb[0].mxu0
      %v940 = vadd.f32 %v305, %v939
      %v941 = vpop.f32.mrb[0].mxu0
      %942 = vmatprep.mubr.f32.mxu0 0.0
      %943 = vmatmul.mubr.f32.gmra.mrb[0].mxu0 %v435
      %v944 = vpop.f32.mrb[0].mxu0
      %v945 = vadd.f32 %v305, %v944
      %v946 = vpop.f32.mrb[0].mxu0
      %947 = vmatprep.mubr.f32.mxu0 0.0
      %948 = vmatmul.mubr.f32.gmra.mrb[0].mxu0 %v438
      %v949 = vpop.f32.mrb[0].mxu0
      %v950 = vadd.f32 %v305, %v949
      %v951 = vpop.f32.mrb[0].mxu0
      %952 = vmatprep.mubr.f32.mxu0 0.0
      %953 = vmatmul.mubr.f32.gmra.mrb[0].mxu0 %v441
      %v954 = vpop.f32.mrb[0].mxu0
      %v955 = vadd.f32 %v305, %v954
      %v956 = vpop.f32.mrb[0].mxu0
      %957 = vmatprep.mubr.f32.mxu0 0.0
      %958 = vmatmul.mubr.f32.gmra.mrb[0].mxu0 %v444
      %v959 = vpop.f32.mrb[0].mxu0
      %v960 = vadd.f32 %v305, %v959
      %v961 = vpop.f32.mrb[0].mxu0
      %962 = vmatprep.mubr.f32.mxu0 0.0
      %963 = vmatmul.mubr.f32.gmra.mrb[0].mxu0 %v447
      %v964 = vpop.f32.mrb[0].mxu0
      %v965 = vadd.f32 %v305, %v964
      %v966 = vpop.f32.mrb[0].mxu0
      %967 = vmatprep.mubr.f32.mxu0 0.0
      %968 = vmatmul.mubr.f32.gmra.mrb[0].mxu0 %v450
      %v969 = vpop.f32.mrb[0].mxu0
      %v970 = vadd.f32 %v305, %v969
      %v971 = vpop.f32.mrb[0].mxu0
      %972 = vmatprep.mubr.f32.mxu0 0.0
      %973 = vmatmul.mubr.f32.gmra.mrb[0].mxu0 %v453
      %v974 = vpop.f32.mrb[0].mxu0
      %v975 = vadd.f32 %v305, %v974
      %v976 = vpop.f32.mrb[0].mxu0
      %977 = vmatprep.mubr.f32.mxu0 0.0
      %978 = vmatmul.mubr.f32.gmra.mrb[0].mxu0 %v456
      %v979 = vpop.f32.mrb[0].mxu0
      %v980 = vadd.f32 %v305, %v979
      %v981 = vpop.f32.mrb[0].mxu0
      %982 = vmatprep.mubr.f32.mxu0 0.0
      %983 = vmatmul.mubr.f32.gmra.mrb[0].mxu0 %v459
      %v984 = vpop.f32.mrb[0].mxu0
      %v985 = vadd.f32 %v305, %v984
      %v986 = vpop.f32.mrb[0].mxu0
      %987 = vmatprep.mubr.f32.mxu0 0.0
      %988 = vmatmul.mubr.f32.gmra.mrb[0].mxu0 %v462
      %v989 = vpop.f32.mrb[0].mxu0
      %v990 = vadd.f32 %v305, %v989
      %v991 = vpop.f32.mrb[0].mxu0
      %992 = vmatprep.mubr.f32.mxu0 0.0
      %993 = vmatmul.mubr.f32.gmra.mrb[0].mxu0 %v465
      %v994 = vpop.f32.mrb[0].mxu0
      %v995 = vadd.f32 %v305, %v994
      %v996 = vpop.f32.mrb[0].mxu0
      %997 = vmatprep.mubr.f32.mxu0 0.0
      %998 = vmatmul.mubr.f32.gmra.mrb[0].mxu0 %v468
      %v999 = vpop.f32.mrb[0].mxu0
      %v1000 = vadd.f32 %v305, %v999
      %v1001 = vpop.f32.mrb[0].mxu0
      %1002 = vmatprep.mubr.f32.mxu0 0.0
      %1003 = vmatmul.mubr.f32.gmra.mrb[0].mxu0 %v471
      %v1004 = vpop.f32.mrb[0].mxu0
      %v1005 = vadd.f32 %v305, %v1004
      %v1006 = vpop.f32.mrb[0].mxu0
      %1007 = vmatprep.mubr.f32.mxu0 0.0
      %1008 = vmatmul.mubr.f32.gmra.mrb[0].mxu0 %v474
      %v1009 = vpop.f32.mrb[0].mxu0
      %v1010 = vadd.f32 %v305, %v1009
      %v1011 = vpop.f32.mrb[0].mxu0
      %1012 = vmatprep.mubr.f32.mxu0 0.0
      %1013 = vmatmul.mubr.f32.gmra.mrb[0].mxu0 %v477
      %v1014 = vpop.f32.mrb[0].mxu0
      %v1015 = vadd.f32 %v305, %v1014
      %v1016 = vpop.f32.mrb[0].mxu0
      %1017 = vmatprep.mubr.f32.mxu0 0.0
      %1018 = vmatmul.mubr.f32.gmra.mrb[0].mxu0 %v480
      %v1019 = vpop.f32.mrb[0].mxu0
      %v1020 = vadd.f32 %v305, %v1019
      %v1021 = vpop.f32.mrb[0].mxu0
      %1022 = vmatprep.mubr.f32.mxu0 0.0
      %1023 = vmatmul.mubr.f32.gmra.mrb[0].mxu0 %v483
      %v1024 = vpop.f32.mrb[0].mxu0
      %v1025 = vadd.f32 %v305, %v1024
      %v1026 = vpop.f32.mrb[0].mxu0
      %1027 = vmatprep.mubr.f32.mxu0 0.0
      %1028 = vmatmul.mubr.f32.gmra.mrb[0].mxu0 %v486
      %v1029 = vpop.f32.mrb[0].mxu0
      %v1030 = vadd.f32 %v305, %v1029
      %v1031 = vpop.f32.mrb[0].mxu0
      %1032 = vmatprep.mubr.f32.mxu0 0.0
      %1033 = vmatmul.mubr.f32.gmra.mrb[0].mxu0 %v489
      %v1034 = vpop.f32.mrb[0].mxu0
      %v1035 = vadd.f32 %v305, %v1034
      %v1036 = vpop.f32.mrb[0].mxu0
      %1037 = vmatprep.mubr.f32.mxu0 0.0
      %1038 = vmatmul.mubr.f32.gmra.mrb[0].mxu0 %v492
      %v1039 = vpop.f32.mrb[0].mxu0
      %v1040 = vadd.f32 %v305, %v1039
      %v1041 = vpop.f32.mrb[0].mxu0
      %1042 = vmatprep.mubr.f32.mxu0 0.0
      %1043 = vmatmul.mubr.f32.gmra.mrb[0].mxu0 %v495
      %v1044 = vpop.f32.mrb[0].mxu0
      %v1045 = vadd.f32 %v305, %v1044
      %v1046 = vpop.f32.mrb[0].mxu0
      %1047 = vmatprep.mubr.f32.mxu0 0.0
      %1048 = vmatmul.mubr.f32.gmra.mrb[0].mxu0 %v498
      %v1049 = vpop.f32.mrb[0].mxu0
      %v1050 = vadd.f32 %v305, %v1049
      %v1051 = vpop.f32.mrb[0].mxu0
      %1052 = vmatprep.mubr.f32.mxu0 0.0
      %1053 = vmatmul.mubr.f32.gmra.mrb[0].mxu0 %v501
      %v1054 = vpop.f32.mrb[0].mxu0
      %v1055 = vadd.f32 %v305, %v1054
      %v1056 = vpop.f32.mrb[0].mxu0
      %1057 = vmatprep.mubr.f32.mxu0 0.0
      %1058 = vmatmul.mubr.f32.gmra.mrb[0].mxu0 %v504
      %v1059 = vpop.f32.mrb[0].mxu0
      %v1060 = vadd.f32 %v305, %v1059
      %v1061 = vpop.f32.mrb[0].mxu0
      %1062 = vmatprep.mubr.f32.mxu0 0.0
      %1063 = vmatmul.mubr.f32.gmra.mrb[0].mxu0 %v507
      %v1064 = vpop.f32.mrb[0].mxu0
      %v1065 = vadd.f32 %v305, %v1064
      %v1066 = vpop.f32.mrb[0].mxu0
      %1067 = vmatprep.mubr.f32.mxu0 0.0
      %1068 = vmatmul.mubr.f32.gmra.mrb[0].mxu0 %v510
      %v1069 = vpop.f32.mrb[0].mxu0
      %v1070 = vadd.f32 %v305, %v1069
      %v1071 = vpop.f32.mrb[0].mxu0
      %1072 = vmatprep.mubr.f32.mxu0 0.0
      %1073 = vmatmul.mubr.f32.gmra.mrb[0].mxu0 %v513
      %v1074 = vpop.f32.mrb[0].mxu0
      %v1075 = vadd.f32 %v305, %v1074
      %v1076 = vpop.f32.mrb[0].mxu0
      %1077 = vmatprep.mubr.f32.mxu0 0.0
      %1078 = vmatmul.mubr.f32.gmra.mrb[0].mxu0 %v516
      %v1079 = vpop.f32.mrb[0].mxu0
      %v1080 = vadd.f32 %v305, %v1079
      %v1081 = vpop.f32.mrb[0].mxu0
      %1082 = vmatprep.mubr.f32.mxu0 0.0
      %1083 = vmatmul.mubr.f32.gmra.mrb[0].mxu0 %v519
      %v1084 = vpop.f32.mrb[0].mxu0
      %v1085 = vadd.f32 %v305, %v1084
      %v1086 = vpop.f32.mrb[0].mxu0
      %1087 = vmatprep.mubr.f32.mxu0 0.0
      %1088 = vmatmul.mubr.f32.gmra.mrb[0].mxu0 %v522
      %v1089 = vpop.f32.mrb[0].mxu0
      %v1090 = vadd.f32 %v305, %v1089
      %v1091 = vpop.f32.mrb[0].mxu0
      %1092 = vmatprep.mubr.f32.mxu0 0.0
      %1093 = vmatmul.mubr.f32.gmra.mrb[0].mxu0 %v525
      %v1094 = vpop.f32.mrb[0].mxu0
      %v1095 = vadd.f32 %v305, %v1094
      %v1096 = vpop.f32.mrb[0].mxu0
      %1097 = vmatprep.mubr.f32.mxu0 0.0
      %1098 = vmatmul.mubr.f32.gmra.mrb[0].mxu0 %v528
      %v1099 = vpop.f32.mrb[0].mxu0
      %v1100 = vadd.f32 %v305, %v1099
      %v1101 = vpop.f32.mrb[0].mxu0
      %1102 = vmatprep.mubr.f32.mxu0 0.0
      %1103 = vmatmul.mubr.f32.gmra.mrb[0].mxu0 %v531
      %v1104 = vpop.f32.mrb[0].mxu0
      %v1105 = vadd.f32 %v305, %v1104
      %v1106 = vpop.f32.mrb[0].mxu0
      %1107 = vmatprep.mubr.f32.mxu0 0.0
      %1108 = vmatmul.mubr.f32.gmra.mrb[0].mxu0 %v534
      %v1109 = vpop.f32.mrb[0].mxu0
      %v1110 = vadd.f32 %v305, %v1109
      %v1111 = vpop.f32.mrb[0].mxu0
      %1112 = vmatprep.mubr.f32.mxu0 0.0
      %1113 = vmatmul.mubr.f32.gmra.mrb[0].mxu0 %v537
      %v1114 = vpop.f32.mrb[0].mxu0
      %v1115 = vadd.f32 %v305, %v1114
      %v1116 = vpop.f32.mrb[0].mxu0
      %1117 = vmatprep.mubr.f32.mxu0 0.0
      %1118 = vmatmul.mubr.f32.gmra.mrb[0].mxu0 %v540
      %v1119 = vpop.f32.mrb[0].mxu0
      %v1120 = vadd.f32 %v305, %v1119
      %v1121 = vpop.f32.mrb[0].mxu0
      %1122 = vmatprep.mubr.f32.mxu0 0.0
      %1123 = vmatmul.mubr.f32.gmra.mrb[0].mxu0 %v543
      %v1124 = vpop.f32.mrb[0].mxu0
      %v1125 = vadd.f32 %v305, %v1124
      %v1126 = vpop.f32.mrb[0].mxu0
      %1127 = vmatprep.mubr.f32.mxu0 0.0
      %1128 = vmatmul.mubr.f32.gmra.mrb[0].mxu0 %v546
      %v1129 = vpop.f32.mrb[0].mxu0
      %v1130 = vadd.f32 %v305, %v1129
      %v1131 = vpop.f32.mrb[0].mxu0
      %1132 = vmatprep.mubr.f32.mxu0 0.0
      %1133 = vmatmul.mubr.f32.gmra.mrb[0].mxu0 %v549
      %v1134 = vpop.f32.mrb[0].mxu0
      %v1135 = vadd.f32 %v305, %v1134
      %v1136 = vpop.f32.mrb[0].mxu0
      %1137 = vmatprep.mubr.f32.mxu0 0.0
      %1138 = vmatmul.mubr.f32.gmra.mrb[0].mxu0 %v552
      %v1139 = vpop.f32.mrb[0].mxu0
      %v1140 = vadd.f32 %v305, %v1139
      %v1141 = vpop.f32.mrb[0].mxu0
      %1142 = vmatprep.mubr.f32.mxu0 0.0
      %1143 = vmatmul.mubr.f32.gmra.mrb[0].mxu0 %v555
      %v1144 = vpop.f32.mrb[0].mxu0
      %v1145 = vadd.f32 %v305, %v1144
      %v1146 = vpop.f32.mrb[0].mxu0
      %1147 = vmatprep.mubr.f32.mxu0 0.0
      %1148 = vmatmul.mubr.f32.gmra.mrb[0].mxu0 %v558
      %v1149 = vpop.f32.mrb[0].mxu0
      %v1150 = vadd.f32 %v305, %v1149
      %v1151 = vpop.f32.mrb[0].mxu0
      %1152 = vmatprep.mubr.f32.mxu0 0.0
      %1153 = vmatmul.mubr.f32.gmra.mrb[0].mxu0 %v561
      %v1154 = vpop.f32.mrb[0].mxu0
      %v1155 = vadd.f32 %v305, %v1154
      %v1156 = vpop.f32.mrb[0].mxu0
      %1157 = vmatprep.mubr.f32.mxu0 0.0
      %1158 = vmatmul.mubr.f32.gmra.mrb[0].mxu0 %v564
      %v1159 = vpop.f32.mrb[0].mxu0
      %v1160 = vadd.f32 %v305, %v1159
      %v1161 = vpop.f32.mrb[0].mxu0
      %1162 = vmatprep.mubr.f32.mxu0 0.0
      %1163 = vmatmul.mubr.f32.gmra.mrb[0].mxu0 %v567
      %v1164 = vpop.f32.mrb[0].mxu0
      %v1165 = vadd.f32 %v305, %v1164
      %v1166 = vpop.f32.mrb[0].mxu0
      %1167 = vmatprep.mubr.f32.mxu0 0.0
      %1168 = vmatmul.mubr.f32.gmra.mrb[0].mxu0 %v570
      %v1169 = vpop.f32.mrb[0].mxu0
      %v1170 = vadd.f32 %v305, %v1169
      %v1171 = vpop.f32.mrb[0].mxu0
      %1172 = vmatprep.mubr.f32.mxu0 0.0
      %1173 = vmatmul.mubr.f32.gmra.mrb[0].mxu0 %v573
      %v1174 = vpop.f32.mrb[0].mxu0
      %v1175 = vadd.f32 %v305, %v1174
      %v1176 = vpop.f32.mrb[0].mxu0
      %1177 = vmatprep.mubr.f32.mxu0 0.0
      %1178 = vmatmul.mubr.f32.gmra.mrb[0].mxu0 %v576
      %v1179 = vpop.f32.mrb[0].mxu0
      %v1180 = vadd.f32 %v305, %v1179
      %v1181 = vpop.f32.mrb[0].mxu0
      %1182 = vmatprep.mubr.f32.mxu0 0.0
      %1183 = vmatmul.mubr.f32.gmra.mrb[0].mxu0 %v579
      %v1184 = vpop.f32.mrb[0].mxu0
      %v1185 = vadd.f32 %v305, %v1184
      %v1186 = vpop.f32.mrb[0].mxu0
      %1187 = vmatprep.mubr.f32.mxu0 0.0
      %1188 = vmatmul.mubr.f32.gmra.mrb[0].mxu0 %v582
      %v1189 = vpop.f32.mrb[0].mxu0
      %v1190 = vadd.f32 %v305, %v1189
      %v1191 = vpop.f32.mrb[0].mxu0
      %1192 = vmatprep.mubr.f32.mxu0 0.0
      %1193 = vmatmul.mubr.f32.gmra.mrb[0].mxu0 %v585
      %v1194 = vpop.f32.mrb[0].mxu0
      %v1195 = vadd.f32 %v305, %v1194
      %v1196 = vpop.f32.mrb[0].mxu0
      %1197 = vmatprep.mubr.f32.mxu0 0.0
      %1198 = vmatmul.mubr.f32.gmra.mrb[0].mxu0 %v588
      %v1199 = vpop.f32.mrb[0].mxu0
      %v1200 = vadd.f32 %v305, %v1199
      %v1201 = vpop.f32.mrb[0].mxu0
      %1202 = vmatprep.mubr.f32.mxu0 0.0
      %1203 = vmatmul.mubr.f32.gmra.mrb[0].mxu0 %v591
      %v1204 = vpop.f32.mrb[0].mxu0
      %v1205 = vadd.f32 %v305, %v1204
      %v1206 = vpop.f32.mrb[0].mxu0
      %1207 = vmatprep.mubr.f32.mxu0 0.0
      %1208 = vmatmul.mubr.f32.gmra.mrb[0].mxu0 %v594
      %v1209 = vpop.f32.mrb[0].mxu0
      %v1210 = vadd.f32 %v305, %v1209
      %v1211 = vpop.f32.mrb[0].mxu0
      %1212 = vmatprep.mubr.f32.mxu0 0.0
      %1213 = vmatmul.mubr.f32.gmra.mrb[0].mxu0 %v597
      %v1214 = vpop.f32.mrb[0].mxu0
      %v1215 = vadd.f32 %v305, %v1214
      %v1216 = vpop.f32.mrb[0].mxu0
      %1217 = vmatprep.mubr.f32.mxu0 0.0
      %1218 = vmatmul.mubr.f32.gmra.mrb[0].mxu0 %v600
      %v1219 = vpop.f32.mrb[0].mxu0
      %v1220 = vadd.f32 %v305, %v1219
      %v1221 = vpop.f32.mrb[0].mxu0
      %1222 = vmatprep.mubr.f32.mxu0 0.0
      %1223 = vmatmul.mubr.f32.gmra.mrb[0].mxu0 %v603
      %v1224 = vpop.f32.mrb[0].mxu0
      %v1225 = vadd.f32 %v305, %v1224
      %v1226 = vpop.f32.mrb[0].mxu0
      %1227 = vmatprep.mubr.f32.mxu0 0.0
      %1228 = vmatmul.mubr.f32.gmra.mrb[0].mxu0 %v606
      %v1229 = vpop.f32.mrb[0].mxu0
      %v1230 = vadd.f32 %v305, %v1229
      %v1231 = vpop.f32.mrb[0].mxu0
      %1232 = vmatprep.mubr.f32.mxu0 0.0
      %1233 = vmatmul.mubr.f32.gmra.mrb[0].mxu0 %v609
      %v1234 = vpop.f32.mrb[0].mxu0
      %v1235 = vadd.f32 %v305, %v1234
      %v1236 = vpop.f32.mrb[0].mxu0
      %1237 = vmatprep.mubr.f32.mxu0 0.0
      %1238 = vmatmul.mubr.f32.gmra.mrb[0].mxu0 %v612
      %v1239 = vpop.f32.mrb[0].mxu0
      %v1240 = vadd.f32 %v305, %v1239
      %v1241 = vpop.f32.mrb[0].mxu0
      %1242 = vmatprep.mubr.f32.mxu0 0.0
      %1243 = vmatmul.mubr.f32.gmra.mrb[0].mxu0 %v615
      %v1244 = vpop.f32.mrb[0].mxu0
      %v1245 = vadd.f32 %v305, %v1244
      %v1246 = vpop.f32.mrb[0].mxu0
      %1247 = vmatprep.mubr.f32.mxu0 0.0
      %1248 = vmatmul.mubr.f32.gmra.mrb[0].mxu0 %v618
      %v1249 = vpop.f32.mrb[0].mxu0
      %v1250 = vadd.f32 %v305, %v1249
      %v1251 = vpop.f32.mrb[0].mxu0
      %1252 = vmatprep.mubr.f32.mxu0 0.0
      %1253 = vmatmul.mubr.f32.gmra.mrb[0].mxu0 %v621
      %v1254 = vpop.f32.mrb[0].mxu0
      %v1255 = vadd.f32 %v305, %v1254
      %v1256 = vpop.f32.mrb[0].mxu0
      %1257 = vmatprep.mubr.f32.mxu0 0.0
      %1258 = vmatmul.mubr.f32.gmra.mrb[0].mxu0 %v624
      %v1259 = vpop.f32.mrb[0].mxu0
      %v1260 = vadd.f32 %v305, %v1259
      %v1261 = vpop.f32.mrb[0].mxu0
      %1262 = vmatprep.mubr.f32.mxu0 0.0
      %1263 = vmatmul.mubr.f32.gmra.mrb[0].mxu0 %v627
      %v1264 = vpop.f32.mrb[0].mxu0
      %v1265 = vadd.f32 %v305, %v1264
      %v1266 = vpop.f32.mrb[0].mxu0
      %1267 = vmatprep.mubr.f32.mxu0 0.0
      %1268 = vmatmul.mubr.f32.gmra.mrb[0].mxu0 %v630
      %v1269 = vpop.f32.mrb[0].mxu0
      %v1270 = vadd.f32 %v305, %v1269
      %v1271 = vpop.f32.mrb[0].mxu0
      %1272 = vmatprep.mubr.f32.mxu0 0.0
      %1273 = vmatmul.mubr.f32.gmra.mrb[0].mxu0 %v633
      %v1274 = vpop.f32.mrb[0].mxu0
      %v1275 = vadd.f32 %v305, %v1274
      %v1276 = vpop.f32.mrb[0].mxu0
      %1277 = vmatprep.mubr.f32.mxu0 0.0
      %1278 = vmatmul.mubr.f32.gmra.mrb[0].mxu0 %v636
      %v1279 = vpop.f32.mrb[0].mxu0
      %v1280 = vadd.f32 %v305, %v1279
      %v1281 = vpop.f32.mrb[0].mxu0
      %1282 = vmatprep.mubr.f32.mxu0 0.0
      %1283 = vmatmul.mubr.f32.gmra.mrb[0].mxu0 %v639
      %v1284 = vpop.f32.mrb[0].mxu0
      %v1285 = vadd.f32 %v305, %v1284
      %v1286 = vpop.f32.mrb[0].mxu0
      %1287 = vmatprep.mubr.f32.mxu0 0.0
      %1288 = vmatmul.mubr.f32.gmra.mrb[0].mxu0 %v642
      %v1289 = vpop.f32.mrb[0].mxu0
      %v1290 = vadd.f32 %v305, %v1289
      %v1291 = vpop.f32.mrb[0].mxu0
      %1292 = vmatprep.mubr.f32.mxu0 0.0
      %1293 = vmatmul.mubr.f32.gmra.mrb[0].mxu0 %v645
      %v1294 = vpop.f32.mrb[0].mxu0
      %v1295 = vadd.f32 %v305, %v1294
      %v1296 = vpop.f32.mrb[0].mxu0
      %1297 = vmatprep.mubr.f32.mxu0 0.0
      %1298 = vmatmul.mubr.f32.gmra.mrb[0].mxu0 %v648
      %v1299 = vpop.f32.mrb[0].mxu0
      %v1300 = vadd.f32 %v305, %v1299
      %v1301 = vpop.f32.mrb[0].mxu0
      %1302 = vmatprep.mubr.f32.mxu0 0.0
      %1303 = vmatmul.mubr.f32.gmra.mrb[0].mxu0 %v651
      %v1304 = vpop.f32.mrb[0].mxu0
      %v1305 = vadd.f32 %v305, %v1304
      %v1306 = vpop.f32.mrb[0].mxu0
      %1307 = vmatprep.mubr.f32.mxu0 0.0
      %1308 = vmatmul.mubr.f32.gmra.mrb[0].mxu0 %v654
      %v1309 = vpop.f32.mrb[0].mxu0
      %v1310 = vadd.f32 %v305, %v1309
      %v1311 = vpop.f32.mrb[0].mxu0
      %1312 = vmatprep.mubr.f32.mxu0 0.0
      %1313 = vmatmul.mubr.f32.gmra.mrb[0].mxu0 %v657
      %v1314 = vpop.f32.mrb[0].mxu0
      %v1315 = vadd.f32 %v305, %v1314
      %v1316 = vpop.f32.mrb[0].mxu0
      %1317 = vmatprep.mubr.f32.mxu0 0.0
      %1318 = vmatmul.mubr.f32.gmra.mrb[0].mxu0 %v660
      %v1319 = vpop.f32.mrb[0].mxu0
      %v1320 = vadd.f32 %v305, %v1319
      %v1321 = vpop.f32.mrb[0].mxu0
      %1322 = vmatprep.mubr.f32.mxu0 0.0
      %1323 = vmatmul.mubr.f32.gmra.mrb[0].mxu0 %v663
      %v1324 = vpop.f32.mrb[0].mxu0
      %v1325 = vadd.f32 %v305, %v1324
      %v1326 = vpop.f32.mrb[0].mxu0
      %1327 = vmatprep.mubr.f32.mxu0 0.0
      %1328 = vmatmul.mubr.f32.gmra.mrb[0].mxu0 %v666
      %v1329 = vpop.f32.mrb[0].mxu0
      %v1330 = vadd.f32 %v305, %v1329
      %v1331 = vpop.f32.mrb[0].mxu0
      %1332 = vdwg.mxu0
      %v1333 = vmax.f32 %v735, 0.0
      %v1334 = vmax.f32 %v740, 0.0
      %v1335 = vmax.f32 %v745, 0.0
      %v1336 = vmax.f32 %v750, 0.0
      %v1337 = vmax.f32 %v755, 0.0
      %v1338 = vmax.f32 %v760, 0.0
      %v1339 = vmax.f32 %v765, 0.0
      %v1340 = vmax.f32 %v770, 0.0
      %v1341 = vmax.f32 %v775, 0.0
      %v1342 = vmax.f32 %v780, 0.0
      %v1343 = vmax.f32 %v785, 0.0
      %v1344 = vmax.f32 %v790, 0.0
      %v1345 = vmax.f32 %v795, 0.0
      %v1346 = vmax.f32 %v800, 0.0
      %v1347 = vmax.f32 %v805, 0.0
      %v1348 = vmax.f32 %v810, 0.0
      %v1349 = vmax.f32 %v815, 0.0
      %v1350 = vmax.f32 %v820, 0.0
      %v1351 = vmax.f32 %v825, 0.0
      %v1352 = vmax.f32 %v830, 0.0
      %v1353 = vmax.f32 %v835, 0.0
      %v1354 = vmax.f32 %v840, 0.0
      %v1355 = vmax.f32 %v845, 0.0
      %v1356 = vmax.f32 %v850, 0.0
      %v1357 = vmax.f32 %v855, 0.0
      %v1358 = vmax.f32 %v860, 0.0
      %v1359 = vmax.f32 %v865, 0.0
      %v1360 = vmax.f32 %v870, 0.0
      %v1361 = vmax.f32 %v875, 0.0
      %v1362 = vmax.f32 %v880, 0.0
      %v1363 = vmax.f32 %v885, 0.0
      %v1364 = vmax.f32 %v890, 0.0
      %v1365 = vmax.f32 %v895, 0.0
      %v1366 = vmax.f32 %v900, 0.0
      %v1367 = vmax.f32 %v905, 0.0
      %v1368 = vmax.f32 %v910, 0.0
      %v1369 = vmax.f32 %v915, 0.0
      %v1370 = vmax.f32 %v920, 0.0
      %v1371 = vmax.f32 %v925, 0.0
      %v1372 = vmax.f32 %v930, 0.0
      %v1373 = vmax.f32 %v935, 0.0
      %v1374 = vmax.f32 %v940, 0.0
      %v1375 = vmax.f32 %v945, 0.0
      %v1376 = vmax.f32 %v950, 0.0
      %v1377 = vmax.f32 %v955, 0.0
      %v1378 = vmax.f32 %v960, 0.0
      %v1379 = vmax.f32 %v965, 0.0
      %v1380 = vmax.f32 %v970, 0.0
      %v1381 = vmax.f32 %v975, 0.0
      %v1382 = vmax.f32 %v980, 0.0
      %v1383 = vmax.f32 %v985, 0.0
      %v1384 = vmax.f32 %v990, 0.0
      %v1385 = vmax.f32 %v995, 0.0
      %v1386 = vmax.f32 %v1000, 0.0
      %v1387 = vmax.f32 %v1005, 0.0
      %v1388 = vmax.f32 %v1010, 0.0
      %v1389 = vmax.f32 %v1015, 0.0
      %v1390 = vmax.f32 %v1020, 0.0
      %v1391 = vmax.f32 %v1025, 0.0
      %v1392 = vmax.f32 %v1030, 0.0
      %v1393 = vmax.f32 %v1035, 0.0
      %v1394 = vmax.f32 %v1040, 0.0
      %v1395 = vmax.f32 %v1045, 0.0
      %v1396 = vmax.f32 %v1050, 0.0
      %v1397 = vmax.f32 %v1055, 0.0
      %v1398 = vmax.f32 %v1060, 0.0
      %v1399 = vmax.f32 %v1065, 0.0
      %v1400 = vmax.f32 %v1070, 0.0
      %v1401 = vmax.f32 %v1075, 0.0
      %v1402 = vmax.f32 %v1080, 0.0
      %v1403 = vmax.f32 %v1085, 0.0
      %v1404 = vmax.f32 %v1090, 0.0
      %v1405 = vmax.f32 %v1095, 0.0
      %v1406 = vmax.f32 %v1100, 0.0
      %v1407 = vmax.f32 %v1105, 0.0
      %v1408 = vmax.f32 %v1110, 0.0
      %v1409 = vmax.f32 %v1115, 0.0
      %v1410 = vmax.f32 %v1120, 0.0
      %v1411 = vmax.f32 %v1125, 0.0
      %v1412 = vmax.f32 %v1130, 0.0
      %v1413 = vmax.f32 %v1135, 0.0
      %v1414 = vmax.f32 %v1140, 0.0
      %v1415 = vmax.f32 %v1145, 0.0
      %v1416 = vmax.f32 %v1150, 0.0
      %v1417 = vmax.f32 %v1155, 0.0
      %v1418 = vmax.f32 %v1160, 0.0
      %v1419 = vmax.f32 %v1165, 0.0
      %v1420 = vmax.f32 %v1170, 0.0
      %v1421 = vmax.f32 %v1175, 0.0
      %v1422 = vmax.f32 %v1180, 0.0
      %v1423 = vmax.f32 %v1185, 0.0
      %v1424 = vmax.f32 %v1190, 0.0
      %v1425 = vmax.f32 %v1195, 0.0
      %v1426 = vmax.f32 %v1200, 0.0
      %v1427 = vmax.f32 %v1205, 0.0
      %v1428 = vmax.f32 %v1210, 0.0
      %v1429 = vmax.f32 %v1215, 0.0
      %v1430 = vmax.f32 %v1220, 0.0
      %v1431 = vmax.f32 %v1225, 0.0
      %v1432 = vmax.f32 %v1230, 0.0
      %v1433 = vmax.f32 %v1235, 0.0
      %v1434 = vmax.f32 %v1240, 0.0
      %v1435 = vmax.f32 %v1245, 0.0
      %v1436 = vmax.f32 %v1250, 0.0
      %v1437 = vmax.f32 %v1255, 0.0
      %v1438 = vmax.f32 %v1260, 0.0
      %v1439 = vmax.f32 %v1265, 0.0
      %v1440 = vmax.f32 %v1270, 0.0
      %v1441 = vmax.f32 %v1275, 0.0
      %v1442 = vmax.f32 %v1280, 0.0
      %v1443 = vmax.f32 %v1285, 0.0
      %v1444 = vmax.f32 %v1290, 0.0
      %v1445 = vmax.f32 %v1295, 0.0
      %v1446 = vmax.f32 %v1300, 0.0
      %v1447 = vmax.f32 %v1305, 0.0
      %v1448 = vmax.f32 %v1310, 0.0
      %v1449 = vmax.f32 %v1315, 0.0
      %v1450 = vmax.f32 %v1320, 0.0
      %v1451 = vmax.f32 %v1325, 0.0
      %v1452 = vmax.f32 %v1330, 0.0
      %vm1453 = vcmask 261120
      %1454 = vst.msk [vmem:[%s172] sm:$0xff] %vm1453, %v1333
      %1455 = vst.msk [vmem:[%s172 + $0x8] sm:$0xff] %vm1453, %v1334
      %1456 = vst.msk [vmem:[%s172 + $0x10] sm:$0xff] %vm1453, %v1335
      %1457 = vst.msk [vmem:[%s172 + $0x18] sm:$0xff] %vm1453, %v1336
      %1458 = vst.msk [vmem:[%s172 + $0x20] sm:$0xff] %vm1453, %v1337
      %1459 = vst.msk [vmem:[%s172 + $0x28] sm:$0xff] %vm1453, %v1338
      %1460 = vst.msk [vmem:[%s172 + $0x30] sm:$0xff] %vm1453, %v1339
      %1461 = vst.msk [vmem:[%s172 + $0x38] sm:$0xff] %vm1453, %v1340
      %1462 = vst.msk [vmem:[%s172 + $0x40] sm:$0xff] %vm1453, %v1341
      %1463 = vst.msk [vmem:[%s172 + $0x48] sm:$0xff] %vm1453, %v1342
      %1464 = vst.msk [vmem:[%s172 + $0x50] sm:$0xff] %vm1453, %v1343
      %1465 = vst.msk [vmem:[%s172 + $0x58] sm:$0xff] %vm1453, %v1344
      %1466 = vst.msk [vmem:[%s172 + $0x60] sm:$0xff] %vm1453, %v1345
      %1467 = vst.msk [vmem:[%s172 + $0x68] sm:$0xff] %vm1453, %v1346
      %1468 = vst.msk [vmem:[%s172 + $0x70] sm:$0xff] %vm1453, %v1347
      %1469 = vst.msk [vmem:[%s172 + $0x78] sm:$0xff] %vm1453, %v1348
      %1470 = vst.msk [vmem:[%s172 + $0x80] sm:$0xff] %vm1453, %v1349
      %1471 = vst.msk [vmem:[%s172 + $0x88] sm:$0xff] %vm1453, %v1350
      %1472 = vst.msk [vmem:[%s172 + $0x90] sm:$0xff] %vm1453, %v1351
      %1473 = vst.msk [vmem:[%s172 + $0x98] sm:$0xff] %vm1453, %v1352
      %1474 = vst.msk [vmem:[%s172 + $0xa0] sm:$0xff] %vm1453, %v1353
      %1475 = vst.msk [vmem:[%s172 + $0xa8] sm:$0xff] %vm1453, %v1354
      %1476 = vst.msk [vmem:[%s172 + $0xb0] sm:$0xff] %vm1453, %v1355
      %1477 = vst.msk [vmem:[%s172 + $0xb8] sm:$0xff] %vm1453, %v1356
      %1478 = vst.msk [vmem:[%s172 + $0xc0] sm:$0xff] %vm1453, %v1357
      %1479 = vst.msk [vmem:[%s172 + $0xc8] sm:$0xff] %vm1453, %v1358
      %1480 = vst.msk [vmem:[%s172 + $0xd0] sm:$0xff] %vm1453, %v1359
      %1481 = vst.msk [vmem:[%s172 + $0xd8] sm:$0xff] %vm1453, %v1360
      %1482 = vst.msk [vmem:[%s172 + $0xe0] sm:$0xff] %vm1453, %v1361
      %1483 = vst.msk [vmem:[%s172 + $0xe8] sm:$0xff] %vm1453, %v1362
      %1484 = vst.msk [vmem:[%s172 + $0xf0] sm:$0xff] %vm1453, %v1363
      %1485 = vst.msk [vmem:[%s172 + $0xf8] sm:$0xff] %vm1453, %v1364
      %1486 = vst.msk [vmem:[%s172 + $0x100] sm:$0xff] %vm1453, %v1365
      %1487 = vst.msk [vmem:[%s172 + $0x108] sm:$0xff] %vm1453, %v1366
      %1488 = vst.msk [vmem:[%s172 + $0x110] sm:$0xff] %vm1453, %v1367
      %1489 = vst.msk [vmem:[%s172 + $0x118] sm:$0xff] %vm1453, %v1368
      %1490 = vst.msk [vmem:[%s172 + $0x120] sm:$0xff] %vm1453, %v1369
      %1491 = vst.msk [vmem:[%s172 + $0x128] sm:$0xff] %vm1453, %v1370
      %1492 = vst.msk [vmem:[%s172 + $0x130] sm:$0xff] %vm1453, %v1371
      %1493 = vst.msk [vmem:[%s172 + $0x138] sm:$0xff] %vm1453, %v1372
      %1494 = vst.msk [vmem:[%s172 + $0x140] sm:$0xff] %vm1453, %v1373
      %1495 = vst.msk [vmem:[%s172 + $0x148] sm:$0xff] %vm1453, %v1374
      %1496 = vst.msk [vmem:[%s172 + $0x150] sm:$0xff] %vm1453, %v1375
      %1497 = vst.msk [vmem:[%s172 + $0x158] sm:$0xff] %vm1453, %v1376
      %1498 = vst.msk [vmem:[%s172 + $0x160] sm:$0xff] %vm1453, %v1377
      %1499 = vst.msk [vmem:[%s172 + $0x168] sm:$0xff] %vm1453, %v1378
      %1500 = vst.msk [vmem:[%s172 + $0x170] sm:$0xff] %vm1453, %v1379
      %1501 = vst.msk [vmem:[%s172 + $0x178] sm:$0xff] %vm1453, %v1380
      %1502 = vst.msk [vmem:[%s172 + $0x180] sm:$0xff] %vm1453, %v1381
      %1503 = vst.msk [vmem:[%s172 + $0x188] sm:$0xff] %vm1453, %v1382
      %1504 = vst.msk [vmem:[%s172 + $0x190] sm:$0xff] %vm1453, %v1383
      %1505 = vst.msk [vmem:[%s172 + $0x198] sm:$0xff] %vm1453, %v1384
      %1506 = vst.msk [vmem:[%s172 + $0x1a0] sm:$0xff] %vm1453, %v1385
      %1507 = vst.msk [vmem:[%s172 + $0x1a8] sm:$0xff] %vm1453, %v1386
      %1508 = vst.msk [vmem:[%s172 + $0x1b0] sm:$0xff] %vm1453, %v1387
      %1509 = vst.msk [vmem:[%s172 + $0x1b8] sm:$0xff] %vm1453, %v1388
      %1510 = vst.msk [vmem:[%s172 + $0x1c0] sm:$0xff] %vm1453, %v1389
      %1511 = vst.msk [vmem:[%s172 + $0x1c8] sm:$0xff] %vm1453, %v1390
      %1512 = vst.msk [vmem:[%s172 + $0x1d0] sm:$0xff] %vm1453, %v1391
      %1513 = vst.msk [vmem:[%s172 + $0x1d8] sm:$0xff] %vm1453, %v1392
      %1514 = vst.msk [vmem:[%s172 + $0x1e0] sm:$0xff] %vm1453, %v1393
      %1515 = vst.msk [vmem:[%s172 + $0x1e8] sm:$0xff] %vm1453, %v1394
      %1516 = vst.msk [vmem:[%s172 + $0x1f0] sm:$0xff] %vm1453, %v1395
      %1517 = vst.msk [vmem:[%s172 + $0x1f8] sm:$0xff] %vm1453, %v1396
      %1518 = vst.msk [vmem:[%s172 + $0x200] sm:$0xff] %vm1453, %v1397
      %1519 = vst.msk [vmem:[%s172 + $0x208] sm:$0xff] %vm1453, %v1398
      %1520 = vst.msk [vmem:[%s172 + $0x210] sm:$0xff] %vm1453, %v1399
      %1521 = vst.msk [vmem:[%s172 + $0x218] sm:$0xff] %vm1453, %v1400
      %1522 = vst.msk [vmem:[%s172 + $0x220] sm:$0xff] %vm1453, %v1401
      %1523 = vst.msk [vmem:[%s172 + $0x228] sm:$0xff] %vm1453, %v1402
      %1524 = vst.msk [vmem:[%s172 + $0x230] sm:$0xff] %vm1453, %v1403
      %1525 = vst.msk [vmem:[%s172 + $0x238] sm:$0xff] %vm1453, %v1404
      %1526 = vst.msk [vmem:[%s172 + $0x240] sm:$0xff] %vm1453, %v1405
      %1527 = vst.msk [vmem:[%s172 + $0x248] sm:$0xff] %vm1453, %v1406
      %1528 = vst.msk [vmem:[%s172 + $0x250] sm:$0xff] %vm1453, %v1407
      %1529 = vst.msk [vmem:[%s172 + $0x258] sm:$0xff] %vm1453, %v1408
      %1530 = vst.msk [vmem:[%s172 + $0x260] sm:$0xff] %vm1453, %v1409
      %1531 = vst.msk [vmem:[%s172 + $0x268] sm:$0xff] %vm1453, %v1410
      %1532 = vst.msk [vmem:[%s172 + $0x270] sm:$0xff] %vm1453, %v1411
      %1533 = vst.msk [vmem:[%s172 + $0x278] sm:$0xff] %vm1453, %v1412
      %1534 = vst.msk [vmem:[%s172 + $0x280] sm:$0xff] %vm1453, %v1413
      %1535 = vst.msk [vmem:[%s172 + $0x288] sm:$0xff] %vm1453, %v1414
      %1536 = vst.msk [vmem:[%s172 + $0x290] sm:$0xff] %vm1453, %v1415
      %1537 = vst.msk [vmem:[%s172 + $0x298] sm:$0xff] %vm1453, %v1416
      %1538 = vst.msk [vmem:[%s172 + $0x2a0] sm:$0xff] %vm1453, %v1417
      %1539 = vst.msk [vmem:[%s172 + $0x2a8] sm:$0xff] %vm1453, %v1418
      %1540 = vst.msk [vmem:[%s172 + $0x2b0] sm:$0xff] %vm1453, %v1419
      %1541 = vst.msk [vmem:[%s172 + $0x2b8] sm:$0xff] %vm1453, %v1420
      %1542 = vst.msk [vmem:[%s172 + $0x2c0] sm:$0xff] %vm1453, %v1421
      %1543 = vst.msk [vmem:[%s172 + $0x2c8] sm:$0xff] %vm1453, %v1422
      %1544 = vst.msk [vmem:[%s172 + $0x2d0] sm:$0xff] %vm1453, %v1423
      %1545 = vst.msk [vmem:[%s172 + $0x2d8] sm:$0xff] %vm1453, %v1424
      %1546 = vst.msk [vmem:[%s172 + $0x2e0] sm:$0xff] %vm1453, %v1425
      %1547 = vst.msk [vmem:[%s172 + $0x2e8] sm:$0xff] %vm1453, %v1426
      %1548 = vst.msk [vmem:[%s172 + $0x2f0] sm:$0xff] %vm1453, %v1427
      %1549 = vst.msk [vmem:[%s172 + $0x2f8] sm:$0xff] %vm1453, %v1428
      %1550 = vst.msk [vmem:[%s172 + $0x300] sm:$0xff] %vm1453, %v1429
      %1551 = vst.msk [vmem:[%s172 + $0x308] sm:$0xff] %vm1453, %v1430
      %1552 = vst.msk [vmem:[%s172 + $0x310] sm:$0xff] %vm1453, %v1431
      %1553 = vst.msk [vmem:[%s172 + $0x318] sm:$0xff] %vm1453, %v1432
      %1554 = vst.msk [vmem:[%s172 + $0x320] sm:$0xff] %vm1453, %v1433
      %1555 = vst.msk [vmem:[%s172 + $0x328] sm:$0xff] %vm1453, %v1434
      %1556 = vst.msk [vmem:[%s172 + $0x330] sm:$0xff] %vm1453, %v1435
      %1557 = vst.msk [vmem:[%s172 + $0x338] sm:$0xff] %vm1453, %v1436
      %1558 = vst.msk [vmem:[%s172 + $0x340] sm:$0xff] %vm1453, %v1437
      %1559 = vst.msk [vmem:[%s172 + $0x348] sm:$0xff] %vm1453, %v1438
      %1560 = vst.msk [vmem:[%s172 + $0x350] sm:$0xff] %vm1453, %v1439
      %1561 = vst.msk [vmem:[%s172 + $0x358] sm:$0xff] %vm1453, %v1440
      %1562 = vst.msk [vmem:[%s172 + $0x360] sm:$0xff] %vm1453, %v1441
      %1563 = vst.msk [vmem:[%s172 + $0x368] sm:$0xff] %vm1453, %v1442
      %1564 = vst.msk [vmem:[%s172 + $0x370] sm:$0xff] %vm1453, %v1443
      %1565 = vst.msk [vmem:[%s172 + $0x378] sm:$0xff] %vm1453, %v1444
      %1566 = vst.msk [vmem:[%s172 + $0x380] sm:$0xff] %vm1453, %v1445
      %1567 = vst.msk [vmem:[%s172 + $0x388] sm:$0xff] %vm1453, %v1446
      %1568 = vst.msk [vmem:[%s172 + $0x390] sm:$0xff] %vm1453, %v1447
      %1569 = vst.msk [vmem:[%s172 + $0x398] sm:$0xff] %vm1453, %v1448
      %1570 = vst.msk [vmem:[%s172 + $0x3a0] sm:$0xff] %vm1453, %v1449
      %1571 = vst.msk [vmem:[%s172 + $0x3a8] sm:$0xff] %vm1453, %v1450
      %1572 = vst.msk [vmem:[%s172 + $0x3b0] sm:$0xff] %vm1453, %v1451
      %1573 = vst.msk [vmem:[%s172 + $0x3b8] sm:$0xff] %vm1453, %v1452
      %s1574 = smul.u32 120, %s14
      %p1575 = scmp.lt.s32.totalorder %s1574, 239
      %s1576 = scalar_select %p1575, %s1574, 239
      %s1577 = smul.addr %s1576, 8
      %s1578 = scalar_lea.vmem %s3, %s1577
      // Predicated region
      $region33: #{encoder_forward.3} parent=31 // pred_check
        %p1579 = pneg %p100
      $region34: #{encoder_forward.3} parent=31 // pred_check_branch
        %1581 = sbr.rel (%p1579) target = $region36
      $region35: #{encoder_forward.3} parent=31 // pred_region
        %s1582 = smul.u32 120, %s14
      $region36: #{encoder_forward.3} parent=31 // pred_fallthru
        _
    $region32: #{encoder_forward.3} parent=5 // pred_fallthru
      _
    %p1583 = scmp.le.s32.totalorder 2, %s9
    // Predicated region
    $region37: #{encoder_forward.3} parent=5 // pred_check
      %p1584 = pneg %p1583
    $region38: #{encoder_forward.3} parent=5 // pred_check_branch
      %1586 = sbr.rel (%p1584) target = $region40
    $region39: #{encoder_forward.3} parent=5 // pred_region
      %s1587 = ssub.s32 %s9, 2
      // Predicated region
      $region41: #{encoder_forward.3} parent=39 // pred_check
        %p1588 = pneg %p106
      $region42: #{encoder_forward.3} parent=39 // pred_check_branch
        %1590 = sbr.rel (%p1588) target = $region44
      $region43: #{encoder_forward.3} parent=39 // pred_region
        %s1591 = smul.u32 120, %s15
        %p1592 = scmp.lt.s32.totalorder %s1591, 239
        %s1593 = scalar_select %p1592, %s1591, 239
        %s1594 = smul.addr %s1593, 8
        %s1595 = scalar_lea.vmem %s3, %s1594
      $region44: #{encoder_forward.3} parent=39 // pred_fallthru
        _
    $region40: #{encoder_forward.3} parent=5 // pred_fallthru
      _
  $region6: #{encoder_forward.3} parent=0 // loop_footer
    %s13 = sadd.s32 1, %s9
  $region7: #{encoder_forward.3} parent=0 // loop_footer_branch
    %8 = sbr.rel target = $region3
  $region8: #{encoder_forward.3} parent=0 // loop_exit
    _

// kernel: encoder_forward.4
$region0: #{encoder_forward.4}
  #allocation0 [shape = 'u32[]', space=smem, size = 0x4, offset = 0x4, fixed_abs, tag = 'smem constant byte address 0x4 - core index']
  #allocation1 [shape = 'u32[144,128]{1,0:T(1,128)}', space=vmem, size = 0x12000, scoped, tag = 'internal scratch']
  %s0 = inlined_call_operand.vmem [shape: f32[480,512], index: 0, kind: input, shape index: {}]
  %s1 = inlined_call_operand.vmem [shape: f32[512,32], index: 1, kind: input, shape index: {}]
  %s2 = inlined_call_operand.vmem [shape: f32[1,32], index: 2, kind: input, shape index: {}]
  %s3 = inlined_call_operand.vmem [shape: f32[480,32], index: 3, kind: output, shape index: {}]
  %s4 = sld [smem:[#allocation0]]
  $region45: #{encoder_forward.4} parent=0
    _
  %s6 = ssub.s32 1, %s4
  %s7 = scalar_select 0, %s6, %s4
  loop: start=0, step=1, limit=4
  $region2: #{encoder_forward.4} parent=0 // loop_pre_header
    _
  $region3: #{encoder_forward.4} parent=0 // loop_header
    %s9 = sphi 0, %s13
    %p10 = scmp.ge.s32.totalorder %s9, 4
    %s19 = sphi 0, %s21
    %s22 = sphi 0, %s19
    %s23 = sphi 0, %s22
    %s39 = sphi 0, %s23
    %s43 = sphi 0, %s43
    %s45 = sphi 0, %s43
    %s46 = sphi 0, %s45
    %s60 = sphi 0, %s46
    %s64 = sphi 0, %s64
    %s66 = sphi 0, %s64
    %s67 = sphi 0, %s66
    %s81 = sphi 0, %s67
    %s87 = sphi 0, %s89
    %s90 = sphi 0, %s87
    %s91 = sphi 0, %s90
    %s107 = sphi 0, %s91
  $region4: #{encoder_forward.4} parent=0 // loop_header_branch
    %12 = sbr.rel (%p10) target = $region8
  $region5: #{encoder_forward.4} parent=0 // loop_body
    %s14 = ssub.s32 %s9, 1
    %s15 = ssub.s32 %s9, 2
    %s16 = sadd.s32 %s9, 1
    %s17 = ssub.s32 %s9, %s16
    %p18 = scmp.eq.s32.totalorder %s17, 0
    %s20 = sadd.s32 %s19, 1
    %s21 = scalar_select %p18, %s19, %s20
    %p24 = pneg %p18
    %p25 = scmp.eq.s32.totalorder %s9, 1
    %p26 = por %p24, %p25
    %p27 = scmp.ne.s32.totalorder %s19, %s22
    %p28 = scmp.eq.s32.totalorder %s9, 0
    %p29 = por %p27, %p28
    %p30 = scmp.ne.s32.totalorder %s19, %s22
    %p31 = scmp.eq.s32.totalorder %s14, 1
    %p32 = por %p30, %p31
    %p33 = scmp.ne.s32.totalorder %s22, %s23
    %p34 = scmp.eq.s32.totalorder %s14, 0
    %p35 = por %p33, %p34
    %p36 = scmp.ne.s32.totalorder %s22, %s23
    %p37 = scmp.eq.s32.totalorder %s15, 1
    %p38 = por %p36, %p37
    %p40 = scmp.ne.s32.totalorder %s23, %s39
    %p41 = scmp.eq.s32.totalorder %s15, 0
    %p42 = por %p40, %p41
    %s44 = sadd.s32 %s43, 1
    %p47 = scmp.eq.s32.totalorder %s9, 1
    %p48 = scmp.ne.s32.totalorder %s43, %s45
    %p49 = scmp.eq.s32.totalorder %s9, 0
    %p50 = por %p48, %p49
    %p51 = scmp.ne.s32.totalorder %s43, %s45
    %p52 = scmp.eq.s32.totalorder %s14, 1
    %p53 = por %p51, %p52
    %p54 = scmp.ne.s32.totalorder %s45, %s46
    %p55 = scmp.eq.s32.totalorder %s14, 0
    %p56 = por %p54, %p55
    %p57 = scmp.ne.s32.totalorder %s45, %s46
    %p58 = scmp.eq.s32.totalorder %s15, 1
    %p59 = por %p57, %p58
    %p61 = scmp.ne.s32.totalorder %s46, %s60
    %p62 = scmp.eq.s32.totalorder %s15, 0
    %p63 = por %p61, %p62
    %s65 = sadd.s32 %s64, 1
    %p68 = scmp.eq.s32.totalorder %s9, 1
    %p69 = scmp.ne.s32.totalorder %s64, %s66
    %p70 = scmp.eq.s32.totalorder %s9, 0
    %p71 = por %p69, %p70
    %p72 = scmp.ne.s32.totalorder %s64, %s66
    %p73 = scmp.eq.s32.totalorder %s14, 1
    %p74 = por %p72, %p73
    %p75 = scmp.ne.s32.totalorder %s66, %s67
    %p76 = scmp.eq.s32.totalorder %s14, 0
    %p77 = por %p75, %p76
    %p78 = scmp.ne.s32.totalorder %s66, %s67
    %p79 = scmp.eq.s32.totalorder %s15, 1
    %p80 = por %p78, %p79
    %p82 = scmp.ne.s32.totalorder %s67, %s81
    %p83 = scmp.eq.s32.totalorder %s15, 0
    %p84 = por %p82, %p83
    %s85 = ssub.s32 %s9, %s16
    %p86 = scmp.eq.s32.totalorder %s85, 0
    %s88 = sadd.s32 %s87, 1
    %s89 = scalar_select %p86, %s87, %s88
    %p92 = pneg %p86
    %p93 = scmp.eq.s32.totalorder %s9, 1
    %p94 = por %p92, %p93
    %p95 = scmp.ne.s32.totalorder %s87, %s90
    %p96 = scmp.eq.s32.totalorder %s9, 0
    %p97 = por %p95, %p96
    %p98 = scmp.ne.s32.totalorder %s87, %s90
    %p99 = scmp.eq.s32.totalorder %s14, 1
    %p100 = por %p98, %p99
    %p101 = scmp.ne.s32.totalorder %s90, %s91
    %p102 = scmp.eq.s32.totalorder %s14, 0
    %p103 = por %p101, %p102
    %p104 = scmp.ne.s32.totalorder %s90, %s91
    %p105 = scmp.eq.s32.totalorder %s15, 1
    %p106 = por %p104, %p105
    %p108 = scmp.ne.s32.totalorder %s91, %s107
    %p109 = scmp.eq.s32.totalorder %s15, 0
    %p110 = por %p108, %p109
    %p111 = scmp.le.s32.totalorder 1, %s9
    %p112 = scmp.lt.s32.totalorder %s9, 3
    %p113 = pnand %p111, %p112
    %p114 = pneg %p113
    // Predicated region
    $region9: #{encoder_forward.4} parent=5 // pred_check
      _
    $region10: #{encoder_forward.4} parent=5 // pred_check_branch
      %116 = sbr.rel (%p113) target = $region12
    $region11: #{encoder_forward.4} parent=5 // pred_region
      %s117 = ssub.s32 %s9, 1
      // Predicated region
      $region13: #{encoder_forward.4} parent=11 // pred_check
        %p118 = pneg %p56
      $region14: #{encoder_forward.4} parent=11 // pred_check_branch
        %120 = sbr.rel (%p118) target = $region16
      $region15: #{encoder_forward.4} parent=11 // pred_region
        _
      $region16: #{encoder_forward.4} parent=11 // pred_fallthru
        _
      // Predicated region
      $region17: #{encoder_forward.4} parent=11 // pred_check
        %p121 = pneg %p77
      $region18: #{encoder_forward.4} parent=11 // pred_check_branch
        %123 = sbr.rel (%p121) target = $region20
      $region19: #{encoder_forward.4} parent=11 // pred_region
        _
      $region20: #{encoder_forward.4} parent=11 // pred_fallthru
        _
    $region12: #{encoder_forward.4} parent=5 // pred_fallthru
      _
    %p124 = scmp.lt.s32.totalorder %s9, 2
    // Predicated region
    $region21: #{encoder_forward.4} parent=5 // pred_check
      %p125 = pneg %p124
    $region22: #{encoder_forward.4} parent=5 // pred_check_branch
      %127 = sbr.rel (%p125) target = $region24
    $region23: #{encoder_forward.4} parent=5 // pred_region
      // Predicated region
      $region25: #{encoder_forward.4} parent=23 // pred_check
        %p128 = pneg %p29
      $region26: #{encoder_forward.4} parent=23 // pred_check_branch
        %130 = sbr.rel (%p128) target = $region28
      $region27: #{encoder_forward.4} parent=23 // pred_region
        %s131 = smul.u32 30, %s9
        %p132 = scmp.lt.s32.totalorder %s131, 59
        %s133 = scalar_select %p132, %s131, 59
        %s134 = smul.addr %s133, 4
        %s135 = smul.addr %s134, 8
        %s136 = scalar_lea.vmem %s0, %s135
        %s137 = smul.u32 30, %s9
      $region28: #{encoder_forward.4} parent=23 // pred_fallthru
        _
    $region24: #{encoder_forward.4} parent=5 // pred_fallthru
      _
    %p138 = scmp.le.s32.totalorder 1, %s9
    %p139 = scmp.lt.s32.totalorder %s9, 3
    %p140 = pnand %p138, %p139
    %p141 = pneg %p140
    // Predicated region
    $region29: #{encoder_forward.4} parent=5 // pred_check
      _
    $region30: #{encoder_forward.4} parent=5 // pred_check_branch
      %143 = sbr.rel (%p140) target = $region32
    $region31: #{encoder_forward.4} parent=5 // pred_region
      %s144 = ssub.s32 %s9, 1
      %s145 = smul.u32 30, %s14
      %p146 = scmp.lt.s32.totalorder %s145, 59
      %s147 = scalar_select %p146, %s145, 59
      %s148 = smul.addr %s147, 4
      %s149 = smul.addr %s148, 8
      %s150 = scalar_lea.vmem %s0, %s149
      %p151 = pneg %p35
      %p152 = pneg %p32
      %p153 = pneg %p56
      %p154 = pneg %p53
      %p155 = pneg %p77
      %p156 = pneg %p74
      %p157 = pneg %p103
      %p158 = pneg %p100
      %s159 = smul.u32 30, %s14
      %p160 = scmp.lt.s32.totalorder %s159, 59
      %s161 = scalar_select %p160, %s159, 59
      %s162 = smul.addr %s161, 8
      %s163 = scalar_lea.vmem %s3, %s162
      %s164 = smul.u32 30, %s14
      %p165 = scmp.lt.s32.totalorder %s164, 59
      %s166 = scalar_select %p165, %s164, 59
      %s167 = smul.addr %s166, 4
      %s168 = smul.addr %s167, 8
      %s169 = scalar_lea.vmem %s0, %s168
      %s170 = smul.u32 30, %s14
      %s171 = smul.u32 30, %s14
      %p172 = scmp.lt.s32.totalorder %s171, 59
      %s173 = scalar_select %p172, %s171, 59
      %s174 = smul.addr %s173, 8
      %s175 = scalar_lea.vmem %s3, %s174
      %s176 = smul.u32 30, %s14
      %v177 = vld [vmem:[%s169] sm:$0xff]
      %v178 = vld [vmem:[%s169 + $0x8] sm:$0xff]
      %v179 = vld [vmem:[%s169 + $0x10] sm:$0xff]
      %v180 = vld [vmem:[%s169 + $0x18] sm:$0xff]
      %v181 = vld [vmem:[%s169 + $0x20] sm:$0xff]
      %v182 = vld [vmem:[%s169 + $0x28] sm:$0xff]
      %v183 = vld [vmem:[%s169 + $0x30] sm:$0xff]
      %v184 = vld [vmem:[%s169 + $0x38] sm:$0xff]
      %v185 = vld [vmem:[%s169 + $0x40] sm:$0xff]
      %v186 = vld [vmem:[%s169 + $0x48] sm:$0xff]
      %v187 = vld [vmem:[%s169 + $0x50] sm:$0xff]
      %v188 = vld [vmem:[%s169 + $0x58] sm:$0xff]
      %v189 = vld [vmem:[%s169 + $0x60] sm:$0xff]
      %v190 = vld [vmem:[%s169 + $0x68] sm:$0xff]
      %v191 = vld [vmem:[%s169 + $0x70] sm:$0xff]
      %v192 = vld [vmem:[%s169 + $0x78] sm:$0xff]
      %v193 = vld [vmem:[%s169 + $0x80] sm:$0xff]
      %v194 = vld [vmem:[%s169 + $0x88] sm:$0xff]
      %v195 = vld [vmem:[%s169 + $0x90] sm:$0xff]
      %v196 = vld [vmem:[%s169 + $0x98] sm:$0xff]
      %v197 = vld [vmem:[%s169 + $0xa0] sm:$0xff]
      %v198 = vld [vmem:[%s169 + $0xa8] sm:$0xff]
      %v199 = vld [vmem:[%s169 + $0xb0] sm:$0xff]
      %v200 = vld [vmem:[%s169 + $0xb8] sm:$0xff]
      %v201 = vld [vmem:[%s169 + $0xc0] sm:$0xff]
      %v202 = vld [vmem:[%s169 + $0xc8] sm:$0xff]
      %v203 = vld [vmem:[%s169 + $0xd0] sm:$0xff]
      %v204 = vld [vmem:[%s169 + $0xd8] sm:$0xff]
      %v205 = vld [vmem:[%s169 + $0xe0] sm:$0xff]
      %v206 = vld [vmem:[%s169 + $0xe8] sm:$0xff]
      %v207 = vld [vmem:[%s169 + $0xf0] sm:$0xff]
      %v208 = vld [vmem:[%s169 + $0xf8] sm:$0xff]
      %v209 = vld [vmem:[%s169 + $0x100] sm:$0xff]
      %v210 = vld [vmem:[%s169 + $0x108] sm:$0xff]
      %v211 = vld [vmem:[%s169 + $0x110] sm:$0xff]
      %v212 = vld [vmem:[%s169 + $0x118] sm:$0xff]
      %v213 = vld [vmem:[%s169 + $0x120] sm:$0xff]
      %v214 = vld [vmem:[%s169 + $0x128] sm:$0xff]
      %v215 = vld [vmem:[%s169 + $0x130] sm:$0xff]
      %v216 = vld [vmem:[%s169 + $0x138] sm:$0xff]
      %v217 = vld [vmem:[%s169 + $0x140] sm:$0xff]
      %v218 = vld [vmem:[%s169 + $0x148] sm:$0xff]
      %v219 = vld [vmem:[%s169 + $0x150] sm:$0xff]
      %v220 = vld [vmem:[%s169 + $0x158] sm:$0xff]
      %v221 = vld [vmem:[%s169 + $0x160] sm:$0xff]
      %v222 = vld [vmem:[%s169 + $0x168] sm:$0xff]
      %v223 = vld [vmem:[%s169 + $0x170] sm:$0xff]
      %v224 = vld [vmem:[%s169 + $0x178] sm:$0xff]
      %v225 = vld [vmem:[%s169 + $0x180] sm:$0xff]
      %v226 = vld [vmem:[%s169 + $0x188] sm:$0xff]
      %v227 = vld [vmem:[%s169 + $0x190] sm:$0xff]
      %v228 = vld [vmem:[%s169 + $0x198] sm:$0xff]
      %v229 = vld [vmem:[%s169 + $0x1a0] sm:$0xff]
      %v230 = vld [vmem:[%s169 + $0x1a8] sm:$0xff]
      %v231 = vld [vmem:[%s169 + $0x1b0] sm:$0xff]
      %v232 = vld [vmem:[%s169 + $0x1b8] sm:$0xff]
      %v233 = vld [vmem:[%s169 + $0x1c0] sm:$0xff]
      %v234 = vld [vmem:[%s169 + $0x1c8] sm:$0xff]
      %v235 = vld [vmem:[%s169 + $0x1d0] sm:$0xff]
      %v236 = vld [vmem:[%s169 + $0x1d8] sm:$0xff]
      %v237 = vld [vmem:[%s169 + $0x1e0] sm:$0xff]
      %v238 = vld [vmem:[%s169 + $0x1e8] sm:$0xff]
      %v239 = vld [vmem:[%s169 + $0x1f0] sm:$0xff]
      %v240 = vld [vmem:[%s169 + $0x1f8] sm:$0xff]
      %v241 = vld [vmem:[%s169 + $0x200] sm:$0xff]
      %v242 = vld [vmem:[%s169 + $0x208] sm:$0xff]
      %v243 = vld [vmem:[%s169 + $0x210] sm:$0xff]
      %v244 = vld [vmem:[%s169 + $0x218] sm:$0xff]
      %v245 = vld [vmem:[%s169 + $0x220] sm:$0xff]
      %v246 = vld [vmem:[%s169 + $0x228] sm:$0xff]
      %v247 = vld [vmem:[%s169 + $0x230] sm:$0xff]
      %v248 = vld [vmem:[%s169 + $0x238] sm:$0xff]
      %v249 = vld [vmem:[%s169 + $0x240] sm:$0xff]
      %v250 = vld [vmem:[%s169 + $0x248] sm:$0xff]
      %v251 = vld [vmem:[%s169 + $0x250] sm:$0xff]
      %v252 = vld [vmem:[%s169 + $0x258] sm:$0xff]
      %v253 = vld [vmem:[%s169 + $0x260] sm:$0xff]
      %v254 = vld [vmem:[%s169 + $0x268] sm:$0xff]
      %v255 = vld [vmem:[%s169 + $0x270] sm:$0xff]
      %v256 = vld [vmem:[%s169 + $0x278] sm:$0xff]
      %v257 = vld [vmem:[%s169 + $0x280] sm:$0xff]
      %v258 = vld [vmem:[%s169 + $0x288] sm:$0xff]
      %v259 = vld [vmem:[%s169 + $0x290] sm:$0xff]
      %v260 = vld [vmem:[%s169 + $0x298] sm:$0xff]
      %v261 = vld [vmem:[%s169 + $0x2a0] sm:$0xff]
      %v262 = vld [vmem:[%s169 + $0x2a8] sm:$0xff]
      %v263 = vld [vmem:[%s169 + $0x2b0] sm:$0xff]
      %v264 = vld [vmem:[%s169 + $0x2b8] sm:$0xff]
      %v265 = vld [vmem:[%s169 + $0x2c0] sm:$0xff]
      %v266 = vld [vmem:[%s169 + $0x2c8] sm:$0xff]
      %v267 = vld [vmem:[%s169 + $0x2d0] sm:$0xff]
      %v268 = vld [vmem:[%s169 + $0x2d8] sm:$0xff]
      %v269 = vld [vmem:[%s169 + $0x2e0] sm:$0xff]
      %v270 = vld [vmem:[%s169 + $0x2e8] sm:$0xff]
      %v271 = vld [vmem:[%s169 + $0x2f0] sm:$0xff]
      %v272 = vld [vmem:[%s169 + $0x2f8] sm:$0xff]
      %v273 = vld [vmem:[%s169 + $0x300] sm:$0xff]
      %v274 = vld [vmem:[%s169 + $0x308] sm:$0xff]
      %v275 = vld [vmem:[%s169 + $0x310] sm:$0xff]
      %v276 = vld [vmem:[%s169 + $0x318] sm:$0xff]
      %v277 = vld [vmem:[%s169 + $0x320] sm:$0xff]
      %v278 = vld [vmem:[%s169 + $0x328] sm:$0xff]
      %v279 = vld [vmem:[%s169 + $0x330] sm:$0xff]
      %v280 = vld [vmem:[%s169 + $0x338] sm:$0xff]
      %v281 = vld [vmem:[%s169 + $0x340] sm:$0xff]
      %v282 = vld [vmem:[%s169 + $0x348] sm:$0xff]
      %v283 = vld [vmem:[%s169 + $0x350] sm:$0xff]
      %v284 = vld [vmem:[%s169 + $0x358] sm:$0xff]
      %v285 = vld [vmem:[%s169 + $0x360] sm:$0xff]
      %v286 = vld [vmem:[%s169 + $0x368] sm:$0xff]
      %v287 = vld [vmem:[%s169 + $0x370] sm:$0xff]
      %v288 = vld [vmem:[%s169 + $0x378] sm:$0xff]
      %v289 = vld [vmem:[%s169 + $0x380] sm:$0xff]
      %v290 = vld [vmem:[%s169 + $0x388] sm:$0xff]
      %v291 = vld [vmem:[%s169 + $0x390] sm:$0xff]
      %v292 = vld [vmem:[%s169 + $0x398] sm:$0xff]
      %v293 = vld [vmem:[%s169 + $0x3a0] sm:$0xff]
      %v294 = vld [vmem:[%s169 + $0x3a8] sm:$0xff]
      %v295 = vld [vmem:[%s169 + $0x3b0] sm:$0xff]
      %v296 = vld [vmem:[%s169 + $0x3b8] sm:$0xff]
      %v297 = vld [vmem:[%s1] sm:$0xff]
      %v298 = vld [vmem:[%s1 + $0x8] sm:$0xff]
      %v299 = vld [vmem:[%s1 + $0x10] sm:$0xff]
      %v300 = vld [vmem:[%s1 + $0x18] sm:$0xff]
      %v301 = vld [vmem:[%s1 + $0x20] sm:$0xff]
      %v302 = vld [vmem:[%s1 + $0x28] sm:$0xff]
      %v303 = vld [vmem:[%s1 + $0x30] sm:$0xff]
      %v304 = vld [vmem:[%s1 + $0x38] sm:$0xff]
      %v305 = vld [vmem:[%s1 + $0x40] sm:$0xff]
      %v306 = vld [vmem:[%s1 + $0x48] sm:$0xff]
      %v307 = vld [vmem:[%s1 + $0x50] sm:$0xff]
      %v308 = vld [vmem:[%s1 + $0x58] sm:$0xff]
      %v309 = vld [vmem:[%s1 + $0x60] sm:$0xff]
      %v310 = vld [vmem:[%s1 + $0x68] sm:$0xff]
      %v311 = vld [vmem:[%s1 + $0x70] sm:$0xff]
      %v312 = vld [vmem:[%s1 + $0x78] sm:$0xff]
      %v313 = vld [vmem:[%s1 + $0x80] sm:$0xff]
      %v314 = vld [vmem:[%s1 + $0x88] sm:$0xff]
      %v315 = vld [vmem:[%s1 + $0x90] sm:$0xff]
      %v316 = vld [vmem:[%s1 + $0x98] sm:$0xff]
      %v317 = vld [vmem:[%s1 + $0xa0] sm:$0xff]
      %v318 = vld [vmem:[%s1 + $0xa8] sm:$0xff]
      %v319 = vld [vmem:[%s1 + $0xb0] sm:$0xff]
      %v320 = vld [vmem:[%s1 + $0xb8] sm:$0xff]
      %v321 = vld [vmem:[%s1 + $0xc0] sm:$0xff]
      %v322 = vld [vmem:[%s1 + $0xc8] sm:$0xff]
      %v323 = vld [vmem:[%s1 + $0xd0] sm:$0xff]
      %v324 = vld [vmem:[%s1 + $0xd8] sm:$0xff]
      %v325 = vld [vmem:[%s1 + $0xe0] sm:$0xff]
      %v326 = vld [vmem:[%s1 + $0xe8] sm:$0xff]
      %v327 = vld [vmem:[%s1 + $0xf0] sm:$0xff]
      %v328 = vld [vmem:[%s1 + $0xf8] sm:$0xff]
      %v329 = vld [vmem:[%s1 + $0x100] sm:$0xff]
      %v330 = vld [vmem:[%s1 + $0x108] sm:$0xff]
      %v331 = vld [vmem:[%s1 + $0x110] sm:$0xff]
      %v332 = vld [vmem:[%s1 + $0x118] sm:$0xff]
      %v333 = vld [vmem:[%s1 + $0x120] sm:$0xff]
      %v334 = vld [vmem:[%s1 + $0x128] sm:$0xff]
      %v335 = vld [vmem:[%s1 + $0x130] sm:$0xff]
      %v336 = vld [vmem:[%s1 + $0x138] sm:$0xff]
      %v337 = vld [vmem:[%s1 + $0x140] sm:$0xff]
      %v338 = vld [vmem:[%s1 + $0x148] sm:$0xff]
      %v339 = vld [vmem:[%s1 + $0x150] sm:$0xff]
      %v340 = vld [vmem:[%s1 + $0x158] sm:$0xff]
      %v341 = vld [vmem:[%s1 + $0x160] sm:$0xff]
      %v342 = vld [vmem:[%s1 + $0x168] sm:$0xff]
      %v343 = vld [vmem:[%s1 + $0x170] sm:$0xff]
      %v344 = vld [vmem:[%s1 + $0x178] sm:$0xff]
      %v345 = vld [vmem:[%s1 + $0x180] sm:$0xff]
      %v346 = vld [vmem:[%s1 + $0x188] sm:$0xff]
      %v347 = vld [vmem:[%s1 + $0x190] sm:$0xff]
      %v348 = vld [vmem:[%s1 + $0x198] sm:$0xff]
      %v349 = vld [vmem:[%s1 + $0x1a0] sm:$0xff]
      %v350 = vld [vmem:[%s1 + $0x1a8] sm:$0xff]
      %v351 = vld [vmem:[%s1 + $0x1b0] sm:$0xff]
      %v352 = vld [vmem:[%s1 + $0x1b8] sm:$0xff]
      %v353 = vld [vmem:[%s1 + $0x1c0] sm:$0xff]
      %v354 = vld [vmem:[%s1 + $0x1c8] sm:$0xff]
      %v355 = vld [vmem:[%s1 + $0x1d0] sm:$0xff]
      %v356 = vld [vmem:[%s1 + $0x1d8] sm:$0xff]
      %v357 = vld [vmem:[%s1 + $0x1e0] sm:$0xff]
      %v358 = vld [vmem:[%s1 + $0x1e8] sm:$0xff]
      %v359 = vld [vmem:[%s1 + $0x1f0] sm:$0xff]
      %v360 = vld [vmem:[%s1 + $0x1f8] sm:$0xff]
      %v361 = vld [vmem:[%s2] sm:$0x1]
      %v363 = vlaneseq
      %v364 = vshrl.u32 %v363, 7
      %v365 = vsub.s32 0, %v364
      %v366 = vrot.slane %v361, %v365
      %368 = vmatprep.subr.mxu0 0.0
      %369 = vmatpush1.msra.mxu0 %v297
      %370 = vmatprep.subr.mxu0 0.0
      %371 = vmatpush1.msra.mxu0 %v298
      %372 = vmatprep.subr.mxu0 0.0
      %373 = vmatpush1.msra.mxu0 %v299
      %374 = vmatprep.subr.mxu0 0.0
      %375 = vmatpush1.msra.mxu0 %v300
      %376 = vmatprep.subr.mxu0 0.0
      %377 = vmatpush1.msra.mxu0 %v301
      %378 = vmatprep.subr.mxu0 0.0
      %379 = vmatpush1.msra.mxu0 %v302
      %380 = vmatprep.subr.mxu0 0.0
      %381 = vmatpush1.msra.mxu0 %v303
      %382 = vmatprep.subr.mxu0 0.0
      %383 = vmatpush1.msra.mxu0 %v304
      %384 = vmatprep.subr.mxu0 0.0
      %385 = vmatpush1.msra.mxu0 %v305
      %386 = vmatprep.subr.mxu0 0.0
      %387 = vmatpush1.msra.mxu0 %v306
      %388 = vmatprep.subr.mxu0 0.0
      %389 = vmatpush1.msra.mxu0 %v307
      %390 = vmatprep.subr.mxu0 0.0
      %391 = vmatpush1.msra.mxu0 %v308
      %392 = vmatprep.subr.mxu0 0.0
      %393 = vmatpush1.msra.mxu0 %v309
      %394 = vmatprep.subr.mxu0 0.0
      %395 = vmatpush1.msra.mxu0 %v310
      %396 = vmatprep.subr.mxu0 0.0
      %397 = vmatpush1.msra.mxu0 %v311
      %398 = vmatprep.subr.mxu0 0.0
      %399 = vmatpush1.msra.mxu0 %v312
      %400 = vmatprep.subr.mxu0 0.0
      %401 = vmatpush1.msra.mxu0 %v313
      %402 = vmatprep.subr.mxu0 0.0
      %403 = vmatpush1.msra.mxu0 %v314
      %404 = vmatprep.subr.mxu0 0.0
      %405 = vmatpush1.msra.mxu0 %v315
      %406 = vmatprep.subr.mxu0 0.0
      %407 = vmatpush1.msra.mxu0 %v316
      %408 = vmatprep.subr.mxu0 0.0
      %409 = vmatpush1.msra.mxu0 %v317
      %410 = vmatprep.subr.mxu0 0.0
      %411 = vmatpush1.msra.mxu0 %v318
      %412 = vmatprep.subr.mxu0 0.0
      %413 = vmatpush1.msra.mxu0 %v319
      %414 = vmatprep.subr.mxu0 0.0
      %415 = vmatpush1.msra.mxu0 %v320
      %416 = vmatprep.subr.mxu0 0.0
      %417 = vmatpush1.msra.mxu0 %v321
      %418 = vmatprep.subr.mxu0 0.0
      %419 = vmatpush1.msra.mxu0 %v322
      %420 = vmatprep.subr.mxu0 0.0
      %421 = vmatpush1.msra.mxu0 %v323
      %422 = vmatprep.subr.mxu0 0.0
      %423 = vmatpush1.msra.mxu0 %v324
      %424 = vmatprep.subr.mxu0 0.0
      %425 = vmatpush1.msra.mxu0 %v325
      %426 = vmatprep.subr.mxu0 0.0
      %427 = vmatpush1.msra.mxu0 %v326
      %428 = vmatprep.subr.mxu0 0.0
      %429 = vmatpush1.msra.mxu0 %v327
      %430 = vmatprep.subr.mxu0 0.0
      %431 = vmatpush1.msra.mxu0 %v328
      %432 = vmatprep.mubr.f32.mxu0 %v178
      %433 = vmatmul.mubr.f32.gmra.mrb[0].mxu0 %v177
      %v434 = vpop.f32.mrb[0].mxu0
      %v435 = vadd.f32 %v366, %v434
      %v436 = vpop.f32.mrb[0].mxu0
      %437 = vmatprep.mubr.f32.mxu0 %v182
      %438 = vmatmul.mubr.f32.gmra.mrb[0].mxu0 %v181
      %v439 = vpop.f32.mrb[0].mxu0
      %v440 = vadd.f32 %v366, %v439
      %v441 = vpop.f32.mrb[0].mxu0
      %442 = vmatprep.mubr.f32.mxu0 %v186
      %443 = vmatmul.mubr.f32.gmra.mrb[0].mxu0 %v185
      %v444 = vpop.f32.mrb[0].mxu0
      %v445 = vadd.f32 %v366, %v444
      %v446 = vpop.f32.mrb[0].mxu0
      %447 = vmatprep.mubr.f32.mxu0 %v190
      %448 = vmatmul.mubr.f32.gmra.mrb[0].mxu0 %v189
      %v449 = vpop.f32.mrb[0].mxu0
      %v450 = vadd.f32 %v366, %v449
      %v451 = vpop.f32.mrb[0].mxu0
      %452 = vmatprep.mubr.f32.mxu0 %v194
      %453 = vmatmul.mubr.f32.gmra.mrb[0].mxu0 %v193
      %v454 = vpop.f32.mrb[0].mxu0
      %v455 = vadd.f32 %v366, %v454
      %v456 = vpop.f32.mrb[0].mxu0
      %457 = vmatprep.mubr.f32.mxu0 %v198
      %458 = vmatmul.mubr.f32.gmra.mrb[0].mxu0 %v197
      %v459 = vpop.f32.mrb[0].mxu0
      %v460 = vadd.f32 %v366, %v459
      %v461 = vpop.f32.mrb[0].mxu0
      %462 = vmatprep.mubr.f32.mxu0 %v202
      %463 = vmatmul.mubr.f32.gmra.mrb[0].mxu0 %v201
      %v464 = vpop.f32.mrb[0].mxu0
      %v465 = vadd.f32 %v366, %v464
      %v466 = vpop.f32.mrb[0].mxu0
      %467 = vmatprep.mubr.f32.mxu0 %v206
      %468 = vmatmul.mubr.f32.gmra.mrb[0].mxu0 %v205
      %v469 = vpop.f32.mrb[0].mxu0
      %v470 = vadd.f32 %v366, %v469
      %v471 = vpop.f32.mrb[0].mxu0
      %472 = vmatprep.mubr.f32.mxu0 %v210
      %473 = vmatmul.mubr.f32.gmra.mrb[0].mxu0 %v209
      %v474 = vpop.f32.mrb[0].mxu0
      %v475 = vadd.f32 %v366, %v474
      %v476 = vpop.f32.mrb[0].mxu0
      %477 = vmatprep.mubr.f32.mxu0 %v214
      %478 = vmatmul.mubr.f32.gmra.mrb[0].mxu0 %v213
      %v479 = vpop.f32.mrb[0].mxu0
      %v480 = vadd.f32 %v366, %v479
      %v481 = vpop.f32.mrb[0].mxu0
      %482 = vmatprep.mubr.f32.mxu0 %v218
      %483 = vmatmul.mubr.f32.gmra.mrb[0].mxu0 %v217
      %v484 = vpop.f32.mrb[0].mxu0
      %v485 = vadd.f32 %v366, %v484
      %v486 = vpop.f32.mrb[0].mxu0
      %487 = vmatprep.mubr.f32.mxu0 %v222
      %488 = vmatmul.mubr.f32.gmra.mrb[0].mxu0 %v221
      %v489 = vpop.f32.mrb[0].mxu0
      %v490 = vadd.f32 %v366, %v489
      %v491 = vpop.f32.mrb[0].mxu0
      %492 = vmatprep.mubr.f32.mxu0 %v226
      %493 = vmatmul.mubr.f32.gmra.mrb[0].mxu0 %v225
      %v494 = vpop.f32.mrb[0].mxu0
      %v495 = vadd.f32 %v366, %v494
      %v496 = vpop.f32.mrb[0].mxu0
      %497 = vmatprep.mubr.f32.mxu0 %v230
      %498 = vmatmul.mubr.f32.gmra.mrb[0].mxu0 %v229
      %v499 = vpop.f32.mrb[0].mxu0
      %v500 = vadd.f32 %v366, %v499
      %v501 = vpop.f32.mrb[0].mxu0
      %502 = vmatprep.mubr.f32.mxu0 %v234
      %503 = vmatmul.mubr.f32.gmra.mrb[0].mxu0 %v233
      %v504 = vpop.f32.mrb[0].mxu0
      %v505 = vadd.f32 %v366, %v504
      %v506 = vpop.f32.mrb[0].mxu0
      %507 = vmatprep.mubr.f32.mxu0 %v238
      %508 = vmatmul.mubr.f32.gmra.mrb[0].mxu0 %v237
      %v509 = vpop.f32.mrb[0].mxu0
      %v510 = vadd.f32 %v366, %v509
      %v511 = vpop.f32.mrb[0].mxu0
      %512 = vmatprep.mubr.f32.mxu0 %v242
      %513 = vmatmul.mubr.f32.gmra.mrb[0].mxu0 %v241
      %v514 = vpop.f32.mrb[0].mxu0
      %v515 = vadd.f32 %v366, %v514
      %v516 = vpop.f32.mrb[0].mxu0
      %517 = vmatprep.mubr.f32.mxu0 %v246
      %518 = vmatmul.mubr.f32.gmra.mrb[0].mxu0 %v245
      %v519 = vpop.f32.mrb[0].mxu0
      %v520 = vadd.f32 %v366, %v519
      %v521 = vpop.f32.mrb[0].mxu0
      %522 = vmatprep.mubr.f32.mxu0 %v250
      %523 = vmatmul.mubr.f32.gmra.mrb[0].mxu0 %v249
      %v524 = vpop.f32.mrb[0].mxu0
      %v525 = vadd.f32 %v366, %v524
      %v526 = vpop.f32.mrb[0].mxu0
      %527 = vmatprep.mubr.f32.mxu0 %v254
      %528 = vmatmul.mubr.f32.gmra.mrb[0].mxu0 %v253
      %v529 = vpop.f32.mrb[0].mxu0
      %v530 = vadd.f32 %v366, %v529
      %v531 = vpop.f32.mrb[0].mxu0
      %532 = vmatprep.mubr.f32.mxu0 %v258
      %533 = vmatmul.mubr.f32.gmra.mrb[0].mxu0 %v257
      %v534 = vpop.f32.mrb[0].mxu0
      %v535 = vadd.f32 %v366, %v534
      %v536 = vpop.f32.mrb[0].mxu0
      %537 = vmatprep.mubr.f32.mxu0 %v262
      %538 = vmatmul.mubr.f32.gmra.mrb[0].mxu0 %v261
      %v539 = vpop.f32.mrb[0].mxu0
      %v540 = vadd.f32 %v366, %v539
      %v541 = vpop.f32.mrb[0].mxu0
      %542 = vmatprep.mubr.f32.mxu0 %v266
      %543 = vmatmul.mubr.f32.gmra.mrb[0].mxu0 %v265
      %v544 = vpop.f32.mrb[0].mxu0
      %v545 = vadd.f32 %v366, %v544
      %v546 = vpop.f32.mrb[0].mxu0
      %547 = vmatprep.mubr.f32.mxu0 %v270
      %548 = vmatmul.mubr.f32.gmra.mrb[0].mxu0 %v269
      %v549 = vpop.f32.mrb[0].mxu0
      %v550 = vadd.f32 %v366, %v549
      %v551 = vpop.f32.mrb[0].mxu0
      %552 = vmatprep.mubr.f32.mxu0 %v274
      %553 = vmatmul.mubr.f32.gmra.mrb[0].mxu0 %v273
      %v554 = vpop.f32.mrb[0].mxu0
      %v555 = vadd.f32 %v366, %v554
      %v556 = vpop.f32.mrb[0].mxu0
      %557 = vmatprep.mubr.f32.mxu0 %v278
      %558 = vmatmul.mubr.f32.gmra.mrb[0].mxu0 %v277
      %v559 = vpop.f32.mrb[0].mxu0
      %v560 = vadd.f32 %v366, %v559
      %v561 = vpop.f32.mrb[0].mxu0
      %562 = vmatprep.mubr.f32.mxu0 %v282
      %563 = vmatmul.mubr.f32.gmra.mrb[0].mxu0 %v281
      %v564 = vpop.f32.mrb[0].mxu0
      %v565 = vadd.f32 %v366, %v564
      %v566 = vpop.f32.mrb[0].mxu0
      %567 = vmatprep.mubr.f32.mxu0 %v286
      %568 = vmatmul.mubr.f32.gmra.mrb[0].mxu0 %v285
      %v569 = vpop.f32.mrb[0].mxu0
      %v570 = vadd.f32 %v366, %v569
      %v571 = vpop.f32.mrb[0].mxu0
      %572 = vmatprep.mubr.f32.mxu0 %v290
      %573 = vmatmul.mubr.f32.gmra.mrb[0].mxu0 %v289
      %v574 = vpop.f32.mrb[0].mxu0
      %v575 = vadd.f32 %v366, %v574
      %v576 = vpop.f32.mrb[0].mxu0
      %577 = vmatprep.mubr.f32.mxu0 %v294
      %578 = vmatmul.mubr.f32.gmra.mrb[0].mxu0 %v293
      %v579 = vpop.f32.mrb[0].mxu0
      %v580 = vadd.f32 %v366, %v579
      %v581 = vpop.f32.mrb[0].mxu0
      %582 = vdwg.mxu0
      %583 = vmatprep.subr.mxu0 0.0
      %584 = vmatpush1.msra.mxu0 %v329
      %585 = vmatprep.subr.mxu0 0.0
      %586 = vmatpush1.msra.mxu0 %v330
      %587 = vmatprep.subr.mxu0 0.0
      %588 = vmatpush1.msra.mxu0 %v331
      %589 = vmatprep.subr.mxu0 0.0
      %590 = vmatpush1.msra.mxu0 %v332
      %591 = vmatprep.subr.mxu0 0.0
      %592 = vmatpush1.msra.mxu0 %v333
      %593 = vmatprep.subr.mxu0 0.0
      %594 = vmatpush1.msra.mxu0 %v334
      %595 = vmatprep.subr.mxu0 0.0
      %596 = vmatpush1.msra.mxu0 %v335
      %597 = vmatprep.subr.mxu0 0.0
      %598 = vmatpush1.msra.mxu0 %v336
      %599 = vmatprep.subr.mxu0 0.0
      %600 = vmatpush1.msra.mxu0 %v337
      %601 = vmatprep.subr.mxu0 0.0
      %602 = vmatpush1.msra.mxu0 %v338
      %603 = vmatprep.subr.mxu0 0.0
      %604 = vmatpush1.msra.mxu0 %v339
      %605 = vmatprep.subr.mxu0 0.0
      %606 = vmatpush1.msra.mxu0 %v340
      %607 = vmatprep.subr.mxu0 0.0
      %608 = vmatpush1.msra.mxu0 %v341
      %609 = vmatprep.subr.mxu0 0.0
      %610 = vmatpush1.msra.mxu0 %v342
      %611 = vmatprep.subr.mxu0 0.0
      %612 = vmatpush1.msra.mxu0 %v343
      %613 = vmatprep.subr.mxu0 0.0
      %614 = vmatpush1.msra.mxu0 %v344
      %615 = vmatprep.subr.mxu0 0.0
      %616 = vmatpush1.msra.mxu0 %v345
      %617 = vmatprep.subr.mxu0 0.0
      %618 = vmatpush1.msra.mxu0 %v346
      %619 = vmatprep.subr.mxu0 0.0
      %620 = vmatpush1.msra.mxu0 %v347
      %621 = vmatprep.subr.mxu0 0.0
      %622 = vmatpush1.msra.mxu0 %v348
      %623 = vmatprep.subr.mxu0 0.0
      %624 = vmatpush1.msra.mxu0 %v349
      %625 = vmatprep.subr.mxu0 0.0
      %626 = vmatpush1.msra.mxu0 %v350
      %627 = vmatprep.subr.mxu0 0.0
      %628 = vmatpush1.msra.mxu0 %v351
      %629 = vmatprep.subr.mxu0 0.0
      %630 = vmatpush1.msra.mxu0 %v352
      %631 = vmatprep.subr.mxu0 0.0
      %632 = vmatpush1.msra.mxu0 %v353
      %633 = vmatprep.subr.mxu0 0.0
      %634 = vmatpush1.msra.mxu0 %v354
      %635 = vmatprep.subr.mxu0 0.0
      %636 = vmatpush1.msra.mxu0 %v355
      %637 = vmatprep.subr.mxu0 0.0
      %638 = vmatpush1.msra.mxu0 %v356
      %639 = vmatprep.subr.mxu0 0.0
      %640 = vmatpush1.msra.mxu0 %v357
      %641 = vmatprep.subr.mxu0 0.0
      %642 = vmatpush1.msra.mxu0 %v358
      %643 = vmatprep.subr.mxu0 0.0
      %644 = vmatpush1.msra.mxu0 %v359
      %645 = vmatprep.subr.mxu0 0.0
      %646 = vmatpush1.msra.mxu0 %v360
      %647 = vmatprep.mubr.f32.mxu0 %v180
      %648 = vmatmul.mubr.f32.gmra.mrb[0].mxu0 %v179
      %v649 = vpop.f32.mrb[0].mxu0
      %v650 = vadd.f32 %v435, %v649
      %v651 = vpop.f32.mrb[0].mxu0
      %652 = vmatprep.mubr.f32.mxu0 %v184
      %653 = vmatmul.mubr.f32.gmra.mrb[0].mxu0 %v183
      %v654 = vpop.f32.mrb[0].mxu0
      %v655 = vadd.f32 %v440, %v654
      %v656 = vpop.f32.mrb[0].mxu0
      %657 = vmatprep.mubr.f32.mxu0 %v188
      %658 = vmatmul.mubr.f32.gmra.mrb[0].mxu0 %v187
      %v659 = vpop.f32.mrb[0].mxu0
      %v660 = vadd.f32 %v445, %v659
      %v661 = vpop.f32.mrb[0].mxu0
      %662 = vmatprep.mubr.f32.mxu0 %v192
      %663 = vmatmul.mubr.f32.gmra.mrb[0].mxu0 %v191
      %v664 = vpop.f32.mrb[0].mxu0
      %v665 = vadd.f32 %v450, %v664
      %v666 = vpop.f32.mrb[0].mxu0
      %667 = vmatprep.mubr.f32.mxu0 %v196
      %668 = vmatmul.mubr.f32.gmra.mrb[0].mxu0 %v195
      %v669 = vpop.f32.mrb[0].mxu0
      %v670 = vadd.f32 %v455, %v669
      %v671 = vpop.f32.mrb[0].mxu0
      %672 = vmatprep.mubr.f32.mxu0 %v200
      %673 = vmatmul.mubr.f32.gmra.mrb[0].mxu0 %v199
      %v674 = vpop.f32.mrb[0].mxu0
      %v675 = vadd.f32 %v460, %v674
      %v676 = vpop.f32.mrb[0].mxu0
      %677 = vmatprep.mubr.f32.mxu0 %v204
      %678 = vmatmul.mubr.f32.gmra.mrb[0].mxu0 %v203
      %v679 = vpop.f32.mrb[0].mxu0
      %v680 = vadd.f32 %v465, %v679
      %v681 = vpop.f32.mrb[0].mxu0
      %682 = vmatprep.mubr.f32.mxu0 %v208
      %683 = vmatmul.mubr.f32.gmra.mrb[0].mxu0 %v207
      %v684 = vpop.f32.mrb[0].mxu0
      %v685 = vadd.f32 %v470, %v684
      %v686 = vpop.f32.mrb[0].mxu0
      %687 = vmatprep.mubr.f32.mxu0 %v212
      %688 = vmatmul.mubr.f32.gmra.mrb[0].mxu0 %v211
      %v689 = vpop.f32.mrb[0].mxu0
      %v690 = vadd.f32 %v475, %v689
      %v691 = vpop.f32.mrb[0].mxu0
      %692 = vmatprep.mubr.f32.mxu0 %v216
      %693 = vmatmul.mubr.f32.gmra.mrb[0].mxu0 %v215
      %v694 = vpop.f32.mrb[0].mxu0
      %v695 = vadd.f32 %v480, %v694
      %v696 = vpop.f32.mrb[0].mxu0
      %697 = vmatprep.mubr.f32.mxu0 %v220
      %698 = vmatmul.mubr.f32.gmra.mrb[0].mxu0 %v219
      %v699 = vpop.f32.mrb[0].mxu0
      %v700 = vadd.f32 %v485, %v699
      %v701 = vpop.f32.mrb[0].mxu0
      %702 = vmatprep.mubr.f32.mxu0 %v224
      %703 = vmatmul.mubr.f32.gmra.mrb[0].mxu0 %v223
      %v704 = vpop.f32.mrb[0].mxu0
      %v705 = vadd.f32 %v490, %v704
      %v706 = vpop.f32.mrb[0].mxu0
      %707 = vmatprep.mubr.f32.mxu0 %v228
      %708 = vmatmul.mubr.f32.gmra.mrb[0].mxu0 %v227
      %v709 = vpop.f32.mrb[0].mxu0
      %v710 = vadd.f32 %v495, %v709
      %v711 = vpop.f32.mrb[0].mxu0
      %712 = vmatprep.mubr.f32.mxu0 %v232
      %713 = vmatmul.mubr.f32.gmra.mrb[0].mxu0 %v231
      %v714 = vpop.f32.mrb[0].mxu0
      %v715 = vadd.f32 %v500, %v714
      %v716 = vpop.f32.mrb[0].mxu0
      %717 = vmatprep.mubr.f32.mxu0 %v236
      %718 = vmatmul.mubr.f32.gmra.mrb[0].mxu0 %v235
      %v719 = vpop.f32.mrb[0].mxu0
      %v720 = vadd.f32 %v505, %v719
      %v721 = vpop.f32.mrb[0].mxu0
      %722 = vmatprep.mubr.f32.mxu0 %v240
      %723 = vmatmul.mubr.f32.gmra.mrb[0].mxu0 %v239
      %v724 = vpop.f32.mrb[0].mxu0
      %v725 = vadd.f32 %v510, %v724
      %v726 = vpop.f32.mrb[0].mxu0
      %727 = vmatprep.mubr.f32.mxu0 %v244
      %728 = vmatmul.mubr.f32.gmra.mrb[0].mxu0 %v243
      %v729 = vpop.f32.mrb[0].mxu0
      %v730 = vadd.f32 %v515, %v729
      %v731 = vpop.f32.mrb[0].mxu0
      %732 = vmatprep.mubr.f32.mxu0 %v248
      %733 = vmatmul.mubr.f32.gmra.mrb[0].mxu0 %v247
      %v734 = vpop.f32.mrb[0].mxu0
      %v735 = vadd.f32 %v520, %v734
      %v736 = vpop.f32.mrb[0].mxu0
      %737 = vmatprep.mubr.f32.mxu0 %v252
      %738 = vmatmul.mubr.f32.gmra.mrb[0].mxu0 %v251
      %v739 = vpop.f32.mrb[0].mxu0
      %v740 = vadd.f32 %v525, %v739
      %v741 = vpop.f32.mrb[0].mxu0
      %742 = vmatprep.mubr.f32.mxu0 %v256
      %743 = vmatmul.mubr.f32.gmra.mrb[0].mxu0 %v255
      %v744 = vpop.f32.mrb[0].mxu0
      %v745 = vadd.f32 %v530, %v744
      %v746 = vpop.f32.mrb[0].mxu0
      %747 = vmatprep.mubr.f32.mxu0 %v260
      %748 = vmatmul.mubr.f32.gmra.mrb[0].mxu0 %v259
      %v749 = vpop.f32.mrb[0].mxu0
      %v750 = vadd.f32 %v535, %v749
      %v751 = vpop.f32.mrb[0].mxu0
      %752 = vmatprep.mubr.f32.mxu0 %v264
      %753 = vmatmul.mubr.f32.gmra.mrb[0].mxu0 %v263
      %v754 = vpop.f32.mrb[0].mxu0
      %v755 = vadd.f32 %v540, %v754
      %v756 = vpop.f32.mrb[0].mxu0
      %757 = vmatprep.mubr.f32.mxu0 %v268
      %758 = vmatmul.mubr.f32.gmra.mrb[0].mxu0 %v267
      %v759 = vpop.f32.mrb[0].mxu0
      %v760 = vadd.f32 %v545, %v759
      %v761 = vpop.f32.mrb[0].mxu0
      %762 = vmatprep.mubr.f32.mxu0 %v272
      %763 = vmatmul.mubr.f32.gmra.mrb[0].mxu0 %v271
      %v764 = vpop.f32.mrb[0].mxu0
      %v765 = vadd.f32 %v550, %v764
      %v766 = vpop.f32.mrb[0].mxu0
      %767 = vmatprep.mubr.f32.mxu0 %v276
      %768 = vmatmul.mubr.f32.gmra.mrb[0].mxu0 %v275
      %v769 = vpop.f32.mrb[0].mxu0
      %v770 = vadd.f32 %v555, %v769
      %v771 = vpop.f32.mrb[0].mxu0
      %772 = vmatprep.mubr.f32.mxu0 %v280
      %773 = vmatmul.mubr.f32.gmra.mrb[0].mxu0 %v279
      %v774 = vpop.f32.mrb[0].mxu0
      %v775 = vadd.f32 %v560, %v774
      %v776 = vpop.f32.mrb[0].mxu0
      %777 = vmatprep.mubr.f32.mxu0 %v284
      %778 = vmatmul.mubr.f32.gmra.mrb[0].mxu0 %v283
      %v779 = vpop.f32.mrb[0].mxu0
      %v780 = vadd.f32 %v565, %v779
      %v781 = vpop.f32.mrb[0].mxu0
      %782 = vmatprep.mubr.f32.mxu0 %v288
      %783 = vmatmul.mubr.f32.gmra.mrb[0].mxu0 %v287
      %v784 = vpop.f32.mrb[0].mxu0
      %v785 = vadd.f32 %v570, %v784
      %v786 = vpop.f32.mrb[0].mxu0
      %787 = vmatprep.mubr.f32.mxu0 %v292
      %788 = vmatmul.mubr.f32.gmra.mrb[0].mxu0 %v291
      %v789 = vpop.f32.mrb[0].mxu0
      %v790 = vadd.f32 %v575, %v789
      %v791 = vpop.f32.mrb[0].mxu0
      %792 = vmatprep.mubr.f32.mxu0 %v296
      %793 = vmatmul.mubr.f32.gmra.mrb[0].mxu0 %v295
      %v794 = vpop.f32.mrb[0].mxu0
      %v795 = vadd.f32 %v580, %v794
      %v796 = vpop.f32.mrb[0].mxu0
      %797 = vdwg.mxu0
      %v798 = vmax.f32 %v650, 0.0
      %v799 = vmax.f32 %v655, 0.0
      %v800 = vmax.f32 %v660, 0.0
      %v801 = vmax.f32 %v665, 0.0
      %v802 = vmax.f32 %v670, 0.0
      %v803 = vmax.f32 %v675, 0.0
      %v804 = vmax.f32 %v680, 0.0
      %v805 = vmax.f32 %v685, 0.0
      %v806 = vmax.f32 %v690, 0.0
      %v807 = vmax.f32 %v695, 0.0
      %v808 = vmax.f32 %v700, 0.0
      %v809 = vmax.f32 %v705, 0.0
      %v810 = vmax.f32 %v710, 0.0
      %v811 = vmax.f32 %v715, 0.0
      %v812 = vmax.f32 %v720, 0.0
      %v813 = vmax.f32 %v725, 0.0
      %v814 = vmax.f32 %v730, 0.0
      %v815 = vmax.f32 %v735, 0.0
      %v816 = vmax.f32 %v740, 0.0
      %v817 = vmax.f32 %v745, 0.0
      %v818 = vmax.f32 %v750, 0.0
      %v819 = vmax.f32 %v755, 0.0
      %v820 = vmax.f32 %v760, 0.0
      %v821 = vmax.f32 %v765, 0.0
      %v822 = vmax.f32 %v770, 0.0
      %v823 = vmax.f32 %v775, 0.0
      %v824 = vmax.f32 %v780, 0.0
      %v825 = vmax.f32 %v785, 0.0
      %v826 = vmax.f32 %v790, 0.0
      %v827 = vmax.f32 %v795, 0.0
      %vm828 = vcmask 261120
      %829 = vst.msk [vmem:[%s175] sm:$0xff] %vm828, %v798
      %830 = vst.msk [vmem:[%s175 + $0x8] sm:$0xff] %vm828, %v799
      %831 = vst.msk [vmem:[%s175 + $0x10] sm:$0xff] %vm828, %v800
      %832 = vst.msk [vmem:[%s175 + $0x18] sm:$0xff] %vm828, %v801
      %833 = vst.msk [vmem:[%s175 + $0x20] sm:$0xff] %vm828, %v802
      %834 = vst.msk [vmem:[%s175 + $0x28] sm:$0xff] %vm828, %v803
      %835 = vst.msk [vmem:[%s175 + $0x30] sm:$0xff] %vm828, %v804
      %836 = vst.msk [vmem:[%s175 + $0x38] sm:$0xff] %vm828, %v805
      %837 = vst.msk [vmem:[%s175 + $0x40] sm:$0xff] %vm828, %v806
      %838 = vst.msk [vmem:[%s175 + $0x48] sm:$0xff] %vm828, %v807
      %839 = vst.msk [vmem:[%s175 + $0x50] sm:$0xff] %vm828, %v808
      %840 = vst.msk [vmem:[%s175 + $0x58] sm:$0xff] %vm828, %v809
      %841 = vst.msk [vmem:[%s175 + $0x60] sm:$0xff] %vm828, %v810
      %842 = vst.msk [vmem:[%s175 + $0x68] sm:$0xff] %vm828, %v811
      %843 = vst.msk [vmem:[%s175 + $0x70] sm:$0xff] %vm828, %v812
      %844 = vst.msk [vmem:[%s175 + $0x78] sm:$0xff] %vm828, %v813
      %845 = vst.msk [vmem:[%s175 + $0x80] sm:$0xff] %vm828, %v814
      %846 = vst.msk [vmem:[%s175 + $0x88] sm:$0xff] %vm828, %v815
      %847 = vst.msk [vmem:[%s175 + $0x90] sm:$0xff] %vm828, %v816
      %848 = vst.msk [vmem:[%s175 + $0x98] sm:$0xff] %vm828, %v817
      %849 = vst.msk [vmem:[%s175 + $0xa0] sm:$0xff] %vm828, %v818
      %850 = vst.msk [vmem:[%s175 + $0xa8] sm:$0xff] %vm828, %v819
      %851 = vst.msk [vmem:[%s175 + $0xb0] sm:$0xff] %vm828, %v820
      %852 = vst.msk [vmem:[%s175 + $0xb8] sm:$0xff] %vm828, %v821
      %853 = vst.msk [vmem:[%s175 + $0xc0] sm:$0xff] %vm828, %v822
      %854 = vst.msk [vmem:[%s175 + $0xc8] sm:$0xff] %vm828, %v823
      %855 = vst.msk [vmem:[%s175 + $0xd0] sm:$0xff] %vm828, %v824
      %856 = vst.msk [vmem:[%s175 + $0xd8] sm:$0xff] %vm828, %v825
      %857 = vst.msk [vmem:[%s175 + $0xe0] sm:$0xff] %vm828, %v826
      %858 = vst.msk [vmem:[%s175 + $0xe8] sm:$0xff] %vm828, %v827
      %s859 = smul.u32 30, %s14
      %p860 = scmp.lt.s32.totalorder %s859, 59
      %s861 = scalar_select %p860, %s859, 59
      %s862 = smul.addr %s861, 8
      %s863 = scalar_lea.vmem %s3, %s862
      // Predicated region
      $region33: #{encoder_forward.4} parent=31 // pred_check
        %p864 = pneg %p100
      $region34: #{encoder_forward.4} parent=31 // pred_check_branch
        %866 = sbr.rel (%p864) target = $region36
      $region35: #{encoder_forward.4} parent=31 // pred_region
        %s867 = smul.u32 30, %s14
      $region36: #{encoder_forward.4} parent=31 // pred_fallthru
        _
    $region32: #{encoder_forward.4} parent=5 // pred_fallthru
      _
    %p868 = scmp.le.s32.totalorder 2, %s9
    // Predicated region
    $region37: #{encoder_forward.4} parent=5 // pred_check
      %p869 = pneg %p868
    $region38: #{encoder_forward.4} parent=5 // pred_check_branch
      %871 = sbr.rel (%p869) target = $region40
    $region39: #{encoder_forward.4} parent=5 // pred_region
      %s872 = ssub.s32 %s9, 2
      // Predicated region
      $region41: #{encoder_forward.4} parent=39 // pred_check
        %p873 = pneg %p106
      $region42: #{encoder_forward.4} parent=39 // pred_check_branch
        %875 = sbr.rel (%p873) target = $region44
      $region43: #{encoder_forward.4} parent=39 // pred_region
        %s876 = smul.u32 30, %s15
        %p877 = scmp.lt.s32.totalorder %s876, 59
        %s878 = scalar_select %p877, %s876, 59
        %s879 = smul.addr %s878, 8
        %s880 = scalar_lea.vmem %s3, %s879
      $region44: #{encoder_forward.4} parent=39 // pred_fallthru
        _
    $region40: #{encoder_forward.4} parent=5 // pred_fallthru
      _
  $region6: #{encoder_forward.4} parent=0 // loop_footer
    %s13 = sadd.s32 1, %s9
  $region7: #{encoder_forward.4} parent=0 // loop_footer_branch
    %8 = sbr.rel target = $region3
  $region8: #{encoder_forward.4} parent=0 // loop_exit
    _

// kernel: encoder_forward.5
$region0: #{encoder_forward.5}
  #allocation0 [shape = 'u32[]', space=smem, size = 0x4, offset = 0x4, fixed_abs, tag = 'smem constant byte address 0x4 - core index']
  #allocation1 [shape = 'u32[144,128]{1,0:T(1,128)}', space=vmem, size = 0x12000, scoped, tag = 'internal scratch']
  #allocation2 [shape = 'f32[16,512]{1,0:T(8,128)}', space=vmem, size = 0x8000, scoped, tag = 'scratch operand']
  %s0 = inlined_call_operand.vmem [shape: bf16[16,7680], index: 0, kind: input, shape index: {}]
  %s1 = inlined_call_operand.vmem [shape: bf16[7680,512], index: 1, kind: input, shape index: {}]
  %s2 = inlined_call_operand.vmem [shape: f32[1,512], index: 2, kind: input, shape index: {}]
  %s3 = inlined_call_operand.vmem [shape: f32[512,128], index: 3, kind: input, shape index: {}]
  %s4 = inlined_call_operand.vmem [shape: f32[1,128], index: 4, kind: input, shape index: {}]
  %s5 = inlined_call_operand.vmem [shape: f32[16,128], index: 5, kind: output, shape index: {}]
  %s6 = sld [smem:[#allocation0]]
  $region84: #{encoder_forward.5} parent=0
    _
  %s8 = ssub.s32 1, %s6
  %s9 = scalar_select 0, %s8, %s6
  $region1: #{encoder_forward.5} parent=0
    #allocation3 [shape = 'u8[245760]{0}', space=vmem, size = 0x3c000, scoped, tag = 'input window, operand 0']
    loop: start=0, step=1, limit=4
    $region2: #{encoder_forward.5} parent=1 // loop_pre_header
      _
    $region3: #{encoder_forward.5} parent=1 // loop_header
      %s11 = sphi 0, %s15
      %p12 = scmp.ge.s32.totalorder %s11, 4
      %s21 = sphi 0, %s23
      %s24 = sphi 0, %s21
      %s25 = sphi 0, %s24
      %s41 = sphi 0, %s25
      %s47 = sphi 0, %s49
      %s50 = sphi 0, %s47
      %s51 = sphi 0, %s50
      %s67 = sphi 0, %s51
      %s71 = sphi 0, %s71
      %s73 = sphi 0, %s71
      %s74 = sphi 0, %s73
      %s88 = sphi 0, %s74
      %s92 = sphi 0, %s92
      %s94 = sphi 0, %s92
      %s95 = sphi 0, %s94
      %s109 = sphi 0, %s95
      %s113 = sphi 0, %s113
      %s115 = sphi 0, %s113
      %s116 = sphi 0, %s115
      %s130 = sphi 0, %s116
      %s134 = sphi 0, %s134
      %s136 = sphi 0, %s134
      %s137 = sphi 0, %s136
      %s151 = sphi 0, %s137
    $region4: #{encoder_forward.5} parent=1 // loop_header_branch
      %14 = sbr.rel (%p12) target = $region8
    $region5: #{encoder_forward.5} parent=1 // loop_body
      %s16 = ssub.s32 %s11, 1
      %s17 = ssub.s32 %s11, 2
      %s18 = sadd.s32 %s11, 1
      %s19 = ssub.s32 %s11, %s18
      %p20 = scmp.eq.s32.totalorder %s19, 0
      %s22 = sadd.s32 %s21, 1
      %s23 = scalar_select %p20, %s21, %s22
      %p26 = pneg %p20
      %p27 = scmp.eq.s32.totalorder %s11, 1
      %p28 = por %p26, %p27
      %p29 = scmp.ne.s32.totalorder %s21, %s24
      %p30 = scmp.eq.s32.totalorder %s11, 0
      %p31 = por %p29, %p30
      %p32 = scmp.ne.s32.totalorder %s21, %s24
      %p33 = scmp.eq.s32.totalorder %s16, 1
      %p34 = por %p32, %p33
      %p35 = scmp.ne.s32.totalorder %s24, %s25
      %p36 = scmp.eq.s32.totalorder %s16, 0
      %p37 = por %p35, %p36
      %p38 = scmp.ne.s32.totalorder %s24, %s25
      %p39 = scmp.eq.s32.totalorder %s17, 1
      %p40 = por %p38, %p39
      %p42 = scmp.ne.s32.totalorder %s25, %s41
      %p43 = scmp.eq.s32.totalorder %s17, 0
      %p44 = por %p42, %p43
      %s45 = ssub.s32 %s11, %s18
      %p46 = scmp.eq.s32.totalorder %s45, 0
      %s48 = sadd.s32 %s47, 1
      %s49 = scalar_select %p46, %s47, %s48
      %p52 = pneg %p46
      %p53 = scmp.eq.s32.totalorder %s11, 1
      %p54 = por %p52, %p53
      %p55 = scmp.ne.s32.totalorder %s47, %s50
      %p56 = scmp.eq.s32.totalorder %s11, 0
      %p57 = por %p55, %p56
      %p58 = scmp.ne.s32.totalorder %s47, %s50
      %p59 = scmp.eq.s32.totalorder %s16, 1
      %p60 = por %p58, %p59
      %p61 = scmp.ne.s32.totalorder %s50, %s51
      %p62 = scmp.eq.s32.totalorder %s16, 0
      %p63 = por %p61, %p62
      %p64 = scmp.ne.s32.totalorder %s50, %s51
      %p65 = scmp.eq.s32.totalorder %s17, 1
      %p66 = por %p64, %p65
      %p68 = scmp.ne.s32.totalorder %s51, %s67
      %p69 = scmp.eq.s32.totalorder %s17, 0
      %p70 = por %p68, %p69
      %s72 = sadd.s32 %s71, 1
      %p75 = scmp.eq.s32.totalorder %s11, 1
      %p76 = scmp.ne.s32.totalorder %s71, %s73
      %p77 = scmp.eq.s32.totalorder %s11, 0
      %p78 = por %p76, %p77
      %p79 = scmp.ne.s32.totalorder %s71, %s73
      %p80 = scmp.eq.s32.totalorder %s16, 1
      %p81 = por %p79, %p80
      %p82 = scmp.ne.s32.totalorder %s73, %s74
      %p83 = scmp.eq.s32.totalorder %s16, 0
      %p84 = por %p82, %p83
      %p85 = scmp.ne.s32.totalorder %s73, %s74
      %p86 = scmp.eq.s32.totalorder %s17, 1
      %p87 = por %p85, %p86
      %p89 = scmp.ne.s32.totalorder %s74, %s88
      %p90 = scmp.eq.s32.totalorder %s17, 0
      %p91 = por %p89, %p90
      %s93 = sadd.s32 %s92, 1
      %p96 = scmp.eq.s32.totalorder %s11, 1
      %p97 = scmp.ne.s32.totalorder %s92, %s94
      %p98 = scmp.eq.s32.totalorder %s11, 0
      %p99 = por %p97, %p98
      %p100 = scmp.ne.s32.totalorder %s92, %s94
      %p101 = scmp.eq.s32.totalorder %s16, 1
      %p102 = por %p100, %p101
      %p103 = scmp.ne.s32.totalorder %s94, %s95
      %p104 = scmp.eq.s32.totalorder %s16, 0
      %p105 = por %p103, %p104
      %p106 = scmp.ne.s32.totalorder %s94, %s95
      %p107 = scmp.eq.s32.totalorder %s17, 1
      %p108 = por %p106, %p107
      %p110 = scmp.ne.s32.totalorder %s95, %s109
      %p111 = scmp.eq.s32.totalorder %s17, 0
      %p112 = por %p110, %p111
      %s114 = sadd.s32 %s113, 1
      %p117 = scmp.eq.s32.totalorder %s11, 1
      %p118 = scmp.ne.s32.totalorder %s113, %s115
      %p119 = scmp.eq.s32.totalorder %s11, 0
      %p120 = por %p118, %p119
      %p121 = scmp.ne.s32.totalorder %s113, %s115
      %p122 = scmp.eq.s32.totalorder %s16, 1
      %p123 = por %p121, %p122
      %p124 = scmp.ne.s32.totalorder %s115, %s116
      %p125 = scmp.eq.s32.totalorder %s16, 0
      %p126 = por %p124, %p125
      %p127 = scmp.ne.s32.totalorder %s115, %s116
      %p128 = scmp.eq.s32.totalorder %s17, 1
      %p129 = por %p127, %p128
      %p131 = scmp.ne.s32.totalorder %s116, %s130
      %p132 = scmp.eq.s32.totalorder %s17, 0
      %p133 = por %p131, %p132
      %s135 = sadd.s32 %s134, 1
      %p138 = scmp.eq.s32.totalorder %s11, 1
      %p139 = scmp.ne.s32.totalorder %s134, %s136
      %p140 = scmp.eq.s32.totalorder %s11, 0
      %p141 = por %p139, %p140
      %p142 = scmp.ne.s32.totalorder %s134, %s136
      %p143 = scmp.eq.s32.totalorder %s16, 1
      %p144 = por %p142, %p143
      %p145 = scmp.ne.s32.totalorder %s136, %s137
      %p146 = scmp.eq.s32.totalorder %s16, 0
      %p147 = por %p145, %p146
      %p148 = scmp.ne.s32.totalorder %s136, %s137
      %p149 = scmp.eq.s32.totalorder %s17, 1
      %p150 = por %p148, %p149
      %p152 = scmp.ne.s32.totalorder %s137, %s151
      %p153 = scmp.eq.s32.totalorder %s17, 0
      %p154 = por %p152, %p153
      %p155 = scmp.le.s32.totalorder 1, %s11
      %p156 = scmp.lt.s32.totalorder %s11, 3
      %p157 = pnand %p155, %p156
      %p158 = pneg %p157
      // Predicated region
      $region9: #{encoder_forward.5} parent=5 // pred_check
        _
      $region10: #{encoder_forward.5} parent=5 // pred_check_branch
        %160 = sbr.rel (%p157) target = $region12
      $region11: #{encoder_forward.5} parent=5 // pred_region
        %s161 = ssub.s32 %s11, 1
        // Predicated region
        $region13: #{encoder_forward.5} parent=11 // pred_check
          %p162 = pneg %p84
        $region14: #{encoder_forward.5} parent=11 // pred_check_branch
          %164 = sbr.rel (%p162) target = $region16
        $region15: #{encoder_forward.5} parent=11 // pred_region
          _
        $region16: #{encoder_forward.5} parent=11 // pred_fallthru
          _
        // Predicated region
        $region17: #{encoder_forward.5} parent=11 // pred_check
          %p165 = pneg %p105
        $region18: #{encoder_forward.5} parent=11 // pred_check_branch
          %167 = sbr.rel (%p165) target = $region20
        $region19: #{encoder_forward.5} parent=11 // pred_region
          _
        $region20: #{encoder_forward.5} parent=11 // pred_fallthru
          _
        // Predicated region
        $region21: #{encoder_forward.5} parent=11 // pred_check
          %p168 = pneg %p126
        $region22: #{encoder_forward.5} parent=11 // pred_check_branch
          %170 = sbr.rel (%p168) target = $region24
        $region23: #{encoder_forward.5} parent=11 // pred_region
          _
        $region24: #{encoder_forward.5} parent=11 // pred_fallthru
          _
      $region12: #{encoder_forward.5} parent=5 // pred_fallthru
        _
      %p171 = scmp.lt.s32.totalorder %s11, 2
      // Predicated region
      $region25: #{encoder_forward.5} parent=5 // pred_check
        %p172 = pneg %p171
      $region26: #{encoder_forward.5} parent=5 // pred_check_branch
        %174 = sbr.rel (%p172) target = $region28
      $region27: #{encoder_forward.5} parent=5 // pred_region
        // Predicated region
        $region29: #{encoder_forward.5} parent=27 // pred_check
          %p175 = pneg %p31
        $region30: #{encoder_forward.5} parent=27 // pred_check_branch
          %177 = sbr.rel (%p175) target = $region32
        $region31: #{encoder_forward.5} parent=27 // pred_region
          %s178 = sand.u32 %s21, 1
          %s179 = sand.u32 %s21, 1
          %s180 = smul.addr %s179, 240
          %s181 = scalar_lea.vmem [#allocation3], %s180
          %s182 = smul.u32 30, %s11
          %s183 = smul.addr %s182, 4
          %s184 = scalar_lea.vmem %s0, %s183
          // Predicated region
          $region33: #{encoder_forward.5} parent=31 // pred_check
            _
          $region34: #{encoder_forward.5} parent=31 // pred_check_branch
            %186 = sbr.rel (0) target = $region36
          $region35: #{encoder_forward.5} parent=31 // pred_region
            // Predicated region
            $region37: #{encoder_forward.5} parent=35 // pred_check
              _
            $region38: #{encoder_forward.5} parent=35 // pred_check_branch
              %188 = sbr.rel (0) target = $region40
            $region39: #{encoder_forward.5} parent=35 // pred_region
              loop: start=0, step=1, limit=1
              $region41: #{encoder_forward.5} parent=39 // loop_pre_header
                _
              $region42: #{encoder_forward.5} parent=39 // loop_header
                %s190 = sphi 0, %s194
                %p191 = scmp.ge.s32.totalorder %s190, 1
                %s195 = sphi %s184, %s184
                %s196 = sphi %s181, %s181
              $region43: #{encoder_forward.5} parent=39 // loop_header_branch
                %193 = sbr.rel (%p191) target = $region47
              $region44: #{encoder_forward.5} parent=39 // loop_body
                %v197 = vld [vmem:[%s195] sm:$0xff]
                %198 = vst [vmem:[%s196] sm:$0xff] %v197
                %v199 = vld [vmem:[%s195 + $0x8] sm:$0xff]
                %200 = vst [vmem:[%s196 + $0x8] sm:$0xff] %v199
                %v201 = vld [vmem:[%s195 + $0x10] sm:$0xff]
                %202 = vst [vmem:[%s196 + $0x10] sm:$0xff] %v201
                %v203 = vld [vmem:[%s195 + $0x18] sm:$0xff]
                %204 = vst [vmem:[%s196 + $0x18] sm:$0xff] %v203
                %v205 = vld [vmem:[%s195 + $0x20] sm:$0xff]
                %206 = vst [vmem:[%s196 + $0x20] sm:$0xff] %v205
                %v207 = vld [vmem:[%s195 + $0x28] sm:$0xff]
                %208 = vst [vmem:[%s196 + $0x28] sm:$0xff] %v207
                %v209 = vld [vmem:[%s195 + $0x30] sm:$0xff]
                %210 = vst [vmem:[%s196 + $0x30] sm:$0xff] %v209
                %v211 = vld [vmem:[%s195 + $0x38] sm:$0xff]
                %212 = vst [vmem:[%s196 + $0x38] sm:$0xff] %v211
                %v213 = vld [vmem:[%s195 + $0x40] sm:$0xff]
                %214 = vst [vmem:[%s196 + $0x40] sm:$0xff] %v213
                %v215 = vld [vmem:[%s195 + $0x48] sm:$0xff]
                %216 = vst [vmem:[%s196 + $0x48] sm:$0xff] %v215
                %v217 = vld [vmem:[%s195 + $0x50] sm:$0xff]
                %218 = vst [vmem:[%s196 + $0x50] sm:$0xff] %v217
                %v219 = vld [vmem:[%s195 + $0x58] sm:$0xff]
                %220 = vst [vmem:[%s196 + $0x58] sm:$0xff] %v219
                %v221 = vld [vmem:[%s195 + $0x60] sm:$0xff]
                %222 = vst [vmem:[%s196 + $0x60] sm:$0xff] %v221
                %v223 = vld [vmem:[%s195 + $0x68] sm:$0xff]
                %224 = vst [vmem:[%s196 + $0x68] sm:$0xff] %v223
                %v225 = vld [vmem:[%s195 + $0x70] sm:$0xff]
                %226 = vst [vmem:[%s196 + $0x70] sm:$0xff] %v225
                %v227 = vld [vmem:[%s195 + $0xf0] sm:$0xff]
                %228 = vst [vmem:[%s196 + $0x78] sm:$0xff] %v227
                %v229 = vld [vmem:[%s195 + $0xf8] sm:$0xff]
                %230 = vst [vmem:[%s196 + $0x80] sm:$0xff] %v229
                %v231 = vld [vmem:[%s195 + $0x100] sm:$0xff]
                %232 = vst [vmem:[%s196 + $0x88] sm:$0xff] %v231
                %v233 = vld [vmem:[%s195 + $0x108] sm:$0xff]
                %234 = vst [vmem:[%s196 + $0x90] sm:$0xff] %v233
                %v235 = vld [vmem:[%s195 + $0x110] sm:$0xff]
                %236 = vst [vmem:[%s196 + $0x98] sm:$0xff] %v235
                %v237 = vld [vmem:[%s195 + $0x118] sm:$0xff]
                %238 = vst [vmem:[%s196 + $0xa0] sm:$0xff] %v237
                %v239 = vld [vmem:[%s195 + $0x120] sm:$0xff]
                %240 = vst [vmem:[%s196 + $0xa8] sm:$0xff] %v239
                %v241 = vld [vmem:[%s195 + $0x128] sm:$0xff]
                %242 = vst [vmem:[%s196 + $0xb0] sm:$0xff] %v241
                %v243 = vld [vmem:[%s195 + $0x130] sm:$0xff]
                %244 = vst [vmem:[%s196 + $0xb8] sm:$0xff] %v243
                %v245 = vld [vmem:[%s195 + $0x138] sm:$0xff]
                %246 = vst [vmem:[%s196 + $0xc0] sm:$0xff] %v245
                %v247 = vld [vmem:[%s195 + $0x140] sm:$0xff]
                %248 = vst [vmem:[%s196 + $0xc8] sm:$0xff] %v247
                %v249 = vld [vmem:[%s195 + $0x148] sm:$0xff]
                %250 = vst [vmem:[%s196 + $0xd0] sm:$0xff] %v249
                %v251 = vld [vmem:[%s195 + $0x150] sm:$0xff]
                %252 = vst [vmem:[%s196 + $0xd8] sm:$0xff] %v251
                %v253 = vld [vmem:[%s195 + $0x158] sm:$0xff]
                %254 = vst [vmem:[%s196 + $0xe0] sm:$0xff] %v253
                %v255 = vld [vmem:[%s195 + $0x160] sm:$0xff]
                %256 = vst [vmem:[%s196 + $0xe8] sm:$0xff] %v255
              $region45: #{encoder_forward.5} parent=39 // loop_footer
                %s194 = sadd.s32 1, %s190
              $region46: #{encoder_forward.5} parent=39 // loop_footer_branch
                %189 = sbr.rel target = $region42
              $region47: #{encoder_forward.5} parent=39 // loop_exit
                _
            $region40: #{encoder_forward.5} parent=35 // pred_fallthru
              _
            // Predicated region
            $region48: #{encoder_forward.5} parent=35 // pred_check
              _
            $region49: #{encoder_forward.5} parent=35 // pred_check_branch
              %258 = sbr.rel target = $region51
            $region50: #{encoder_forward.5} parent=35 // pred_region
              _
            $region51: #{encoder_forward.5} parent=35 // pred_fallthru
              _
          $region36: #{encoder_forward.5} parent=31 // pred_fallthru
            _
          %259 = vnop
        $region32: #{encoder_forward.5} parent=27 // pred_fallthru
          _
        // Predicated region
        $region52: #{encoder_forward.5} parent=27 // pred_check
          %p260 = pneg %p57
        $region53: #{encoder_forward.5} parent=27 // pred_check_branch
          %262 = sbr.rel (%p260) target = $region55
        $region54: #{encoder_forward.5} parent=27 // pred_region
          %s263 = smul.u32 480, %s11
          %p264 = scmp.lt.s32.totalorder %s263, 959
          %s265 = scalar_select %p264, %s263, 959
          %s266 = smul.addr %s265, 4
          %s267 = smul.addr %s266, 4
          %s268 = scalar_lea.vmem %s1, %s267
          %s269 = smul.u32 480, %s11
        $region55: #{encoder_forward.5} parent=27 // pred_fallthru
          _
      $region28: #{encoder_forward.5} parent=5 // pred_fallthru
        _
      %p270 = scmp.le.s32.totalorder 1, %s11
      %p271 = scmp.lt.s32.totalorder %s11, 3
      %p272 = pnand %p270, %p271
      %p273 = pneg %p272
      // Predicated region
      $region56: #{encoder_forward.5} parent=5 // pred_check
        _
      $region57: #{encoder_forward.5} parent=5 // pred_check_branch
        %275 = sbr.rel (%p272) target = $region59
      $region58: #{encoder_forward.5} parent=5 // pred_region
        %s276 = ssub.s32 %s11, 1
        %s277 = sand.u32 %s24, 1
        %s278 = sand.u32 %s24, 1
        %s279 = smul.addr %s278, 240
        %s280 = scalar_lea.vmem [#allocation3], %s279
        // Predicated region
        $region60: #{encoder_forward.5} parent=58 // pred_check
          %p281 = pneg %p37
        $region61: #{encoder_forward.5} parent=58 // pred_check_branch
          %283 = sbr.rel (%p281) target = $region63
        $region62: #{encoder_forward.5} parent=58 // pred_region
          _
        $region63: #{encoder_forward.5} parent=58 // pred_fallthru
          _
        %s284 = sand.u32 %s24, 1
        %s285 = sand.u32 %s24, 1
        %s286 = smul.addr %s285, 240
        %s287 = scalar_lea.vmem [#allocation3], %s286
        %p288 = pneg %p37
        %p289 = pneg %p34
        %s290 = smul.u32 480, %s16
        %p291 = scmp.lt.s32.totalorder %s290, 959
        %s292 = scalar_select %p291, %s290, 959
        %s293 = smul.addr %s292, 4
        %s294 = smul.addr %s293, 4
        %s295 = scalar_lea.vmem %s1, %s294
        %p296 = pneg %p63
        %p297 = pneg %p60
        %p298 = pneg %p84
        %p299 = pneg %p81
        %p300 = pneg %p105
        %p301 = pneg %p102
        %p302 = pneg %p126
        %p303 = pneg %p123
        %p304 = pneg %p147
        %p305 = pneg %p144
        %s306 = smul.u32 30, %s16
        %s307 = smul.u32 480, %s16
        %p308 = scmp.lt.s32.totalorder %s307, 959
        %s309 = scalar_select %p308, %s307, 959
        %s310 = smul.addr %s309, 4
        %s311 = smul.addr %s310, 4
        %s312 = scalar_lea.vmem %s1, %s311
        %s313 = smul.u32 480, %s16
        %p314 = scmp.eq.s32.totalorder %s16, 0
        // Predicated region
        $region64: #{encoder_forward.5} parent=58 // pred_check
          %p315 = pneg %p314
        $region65: #{encoder_forward.5} parent=58 // pred_check_branch
          %317 = sbr.rel (%p315) target = $region67
        $region66: #{encoder_forward.5} parent=58 // pred_region
          %318 = vst [vmem:[#allocation2] sm:$0xff] 0.0
          %319 = vst [vmem:[#allocation2 + $0x8] sm:$0xff] 0.0
          %320 = vst [vmem:[#allocation2 + $0x10] sm:$0xff] 0.0
          %321 = vst [vmem:[#allocation2 + $0x18] sm:$0xff] 0.0
          %322 = vst [vmem:[#allocation2 + $0x20] sm:$0xff] 0.0
          %323 = vst [vmem:[#allocation2 + $0x28] sm:$0xff] 0.0
          %324 = vst [vmem:[#allocation2 + $0x30] sm:$0xff] 0.0
          %325 = vst [vmem:[#allocation2 + $0x38] sm:$0xff] 0.0
        $region67: #{encoder_forward.5} parent=58 // pred_fallthru
          _
        %v326 = vld [vmem:[#allocation2] sm:$0xff]
        %v327 = vld [vmem:[#allocation2 + $0x8] sm:$0xff]
        %v328 = vld [vmem:[#allocation2 + $0x10] sm:$0xff]
        %v329 = vld [vmem:[#allocation2 + $0x18] sm:$0xff]
        %v330 = vld [vmem:[#allocation2 + $0x20] sm:$0xff]
        %v331 = vld [vmem:[#allocation2 + $0x28] sm:$0xff]
        %v332 = vld [vmem:[#allocation2 + $0x30] sm:$0xff]
        %v333 = vld [vmem:[#allocation2 + $0x38] sm:$0xff]
        %v334 = vld [vmem:[%s280] sm:$0xff]
        %v335 = vld [vmem:[%s280 + $0x8] sm:$0xff]
        %v336 = vld [vmem:[%s280 + $0x10] sm:$0xff]
        %v337 = vld [vmem:[%s280 + $0x18] sm:$0xff]
        %v338 = vld [vmem:[%s280 + $0x20] sm:$0xff]
        %v339 = vld [vmem:[%s280 + $0x28] sm:$0xff]
        %v340 = vld [vmem:[%s280 + $0x30] sm:$0xff]
        %v341 = vld [vmem:[%s280 + $0x38] sm:$0xff]
        %v342 = vld [vmem:[%s280 + $0x40] sm:$0xff]
        %v343 = vld [vmem:[%s280 + $0x48] sm:$0xff]
        %v344 = vld [vmem:[%s280 + $0x50] sm:$0xff]
        %v345 = vld [vmem:[%s280 + $0x58] sm:$0xff]
        %v346 = vld [vmem:[%s280 + $0x60] sm:$0xff]
        %v347 = vld [vmem:[%s280 + $0x68] sm:$0xff]
        %v348 = vld [vmem:[%s280 + $0x70] sm:$0xff]
        %v349 = vld [vmem:[%s280 + $0x78] sm:$0xff]
        %v350 = vld [vmem:[%s280 + $0x80] sm:$0xff]
        %v351 = vld [vmem:[%s280 + $0x88] sm:$0xff]
        %v352 = vld [vmem:[%s280 + $0x90] sm:$0xff]
        %v353 = vld [vmem:[%s280 + $0x98] sm:$0xff]
        %v354 = vld [vmem:[%s280 + $0xa0] sm:$0xff]
        %v355 = vld [vmem:[%s280 + $0xa8] sm:$0xff]
        %v356 = vld [vmem:[%s280 + $0xb0] sm:$0xff]
        %v357 = vld [vmem:[%s280 + $0xb8] sm:$0xff]
        %v358 = vld [vmem:[%s280 + $0xc0] sm:$0xff]
        %v359 = vld [vmem:[%s280 + $0xc8] sm:$0xff]
        %v360 = vld [vmem:[%s280 + $0xd0] sm:$0xff]
        %v361 = vld [vmem:[%s280 + $0xd8] sm:$0xff]
        %v362 = vld [vmem:[%s280 + $0xe0] sm:$0xff]
        %v363 = vld [vmem:[%s280 + $0xe8] sm:$0xff]
        %v364 = vld [vmem:[%s312] sm:$0xff]
        %v365 = vld [vmem:[%s312 + $0x8] sm:$0xff]
        %v366 = vld [vmem:[%s312 + $0x10] sm:$0xff]
        %v367 = vld [vmem:[%s312 + $0x18] sm:$0xff]
        %v368 = vld [vmem:[%s312 + $0x20] sm:$0xff]
        %v369 = vld [vmem:[%s312 + $0x28] sm:$0xff]
        %v370 = vld [vmem:[%s312 + $0x30] sm:$0xff]
        %v371 = vld [vmem:[%s312 + $0x38] sm:$0xff]
        %v372 = vld [vmem:[%s312 + $0x40] sm:$0xff]
        %v373 = vld [vmem:[%s312 + $0x48] sm:$0xff]
        %v374 = vld [vmem:[%s312 + $0x50] sm:$0xff]
        %v375 = vld [vmem:[%s312 + $0x58] sm:$0xff]
        %v376 = vld [vmem:[%s312 + $0x60] sm:$0xff]
        %v377 = vld [vmem:[%s312 + $0x68] sm:$0xff]
        %v378 = vld [vmem:[%s312 + $0x70] sm:$0xff]
        %v379 = vld [vmem:[%s312 + $0x78] sm:$0xff]
        %v380 = vld [vmem:[%s312 + $0x80] sm:$0xff]
        %v381 = vld [vmem:[%s312 + $0x88] sm:$0xff]
        %v382 = vld [vmem:[%s312 + $0x90] sm:$0xff]
        %v383 = vld [vmem:[%s312 + $0x98] sm:$0xff]
        %v384 = vld [vmem:[%s312 + $0xa0] sm:$0xff]
        %v385 = vld [vmem:[%s312 + $0xa8] sm:$0xff]
        %v386 = vld [vmem:[%s312 + $0xb0] sm:$0xff]
        %v387 = vld [vmem:[%s312 + $0xb8] sm:$0xff]
        %v388 = vld [vmem:[%s312 + $0xc0] sm:$0xff]
        %v389 = vld [vmem:[%s312 + $0xc8] sm:$0xff]
        %v390 = vld [vmem:[%s312 + $0xd0] sm:$0xff]
        %v391 = vld [vmem:[%s312 + $0xd8] sm:$0xff]
        %v392 = vld [vmem:[%s312 + $0xe0] sm:$0xff]
        %v393 = vld [vmem:[%s312 + $0xe8] sm:$0xff]
        %v394 = vld [vmem:[%s312 + $0xf0] sm:$0xff]
        %v395 = vld [vmem:[%s312 + $0xf8] sm:$0xff]
        %v396 = vld [vmem:[%s312 + $0x100] sm:$0xff]
        %v397 = vld [vmem:[%s312 + $0x108] sm:$0xff]
        %v398 = vld [vmem:[%s312 + $0x110] sm:$0xff]
        %v399 = vld [vmem:[%s312 + $0x118] sm:$0xff]
        %v400 = vld [vmem:[%s312 + $0x120] sm:$0xff]
        %v401 = vld [vmem:[%s312 + $0x128] sm:$0xff]
        %v402 = vld [vmem:[%s312 + $0x130] sm:$0xff]
        %v403 = vld [vmem:[%s312 + $0x138] sm:$0xff]
        %v404 = vld [vmem:[%s312 + $0x140] sm:$0xff]
        %v405 = vld [vmem:[%s312 + $0x148] sm:$0xff]
        %v406 = vld [vmem:[%s312 + $0x150] sm:$0xff]
        %v407 = vld [vmem:[%s312 + $0x158] sm:$0xff]
        %v408 = vld [vmem:[%s312 + $0x160] sm:$0xff]
        %v409 = vld [vmem:[%s312 + $0x168] sm:$0xff]
        %v410 = vld [vmem:[%s312 + $0x170] sm:$0xff]
        %v411 = vld [vmem:[%s312 + $0x178] sm:$0xff]
        %v412 = vld [vmem:[%s312 + $0x180] sm:$0xff]
        %v413 = vld [vmem:[%s312 + $0x188] sm:$0xff]
        %v414 = vld [vmem:[%s312 + $0x190] sm:$0xff]
        %v415 = vld [vmem:[%s312 + $0x198] sm:$0xff]
        %v416 = vld [vmem:[%s312 + $0x1a0] sm:$0xff]
        %v417 = vld [vmem:[%s312 + $0x1a8] sm:$0xff]
        %v418 = vld [vmem:[%s312 + $0x1b0] sm:$0xff]
        %v419 = vld [vmem:[%s312 + $0x1b8] sm:$0xff]
        %v420 = vld [vmem:[%s312 + $0x1c0] sm:$0xff]
        %v421 = vld [vmem:[%s312 + $0x1c8] sm:$0xff]
        %v422 = vld [vmem:[%s312 + $0x1d0] sm:$0xff]
        %v423 = vld [vmem:[%s312 + $0x1d8] sm:$0xff]
        %v424 = vld [vmem:[%s312 + $0x1e0] sm:$0xff]
        %v425 = vld [vmem:[%s312 + $0x1e8] sm:$0xff]
        %v426 = vld [vmem:[%s312 + $0x1f0] sm:$0xff]
        %v427 = vld [vmem:[%s312 + $0x1f8] sm:$0xff]
        %v428 = vld [vmem:[%s312 + $0x200] sm:$0xff]
        %v429 = vld [vmem:[%s312 + $0x208] sm:$0xff]
        %v430 = vld [vmem:[%s312 + $0x210] sm:$0xff]
        %v431 = vld [vmem:[%s312 + $0x218] sm:$0xff]
        %v432 = vld [vmem:[%s312 + $0x220] sm:$0xff]
        %v433 = vld [vmem:[%s312 + $0x228] sm:$0xff]
        %v434 = vld [vmem:[%s312 + $0x230] sm:$0xff]
        %v435 = vld [vmem:[%s312 + $0x238] sm:$0xff]
        %v436 = vld [vmem:[%s312 + $0x240] sm:$0xff]
        %v437 = vld [vmem:[%s312 + $0x248] sm:$0xff]
        %v438 = vld [vmem:[%s312 + $0x250] sm:$0xff]
        %v439 = vld [vmem:[%s312 + $0x258] sm:$0xff]
        %v440 = vld [vmem:[%s312 + $0x260] sm:$0xff]
        %v441 = vld [vmem:[%s312 + $0x268] sm:$0xff]
        %v442 = vld [vmem:[%s312 + $0x270] sm:$0xff]
        %v443 = vld [vmem:[%s312 + $0x278] sm:$0xff]
        %v444 = vld [vmem:[%s312 + $0x280] sm:$0xff]
        %v445 = vld [vmem:[%s312 + $0x288] sm:$0xff]
        %v446 = vld [vmem:[%s312 + $0x290] sm:$0xff]
        %v447 = vld [vmem:[%s312 + $0x298] sm:$0xff]
        %v448 = vld [vmem:[%s312 + $0x2a0] sm:$0xff]
        %v449 = vld [vmem:[%s312 + $0x2a8] sm:$0xff]
        %v450 = vld [vmem:[%s312 + $0x2b0] sm:$0xff]
        %v451 = vld [vmem:[%s312 + $0x2b8] sm:$0xff]
        %v452 = vld [vmem:[%s312 + $0x2c0] sm:$0xff]
        %v453 = vld [vmem:[%s312 + $0x2c8] sm:$0xff]
        %v454 = vld [vmem:[%s312 + $0x2d0] sm:$0xff]
        %v455 = vld [vmem:[%s312 + $0x2d8] sm:$0xff]
        %v456 = vld [vmem:[%s312 + $0x2e0] sm:$0xff]
        %v457 = vld [vmem:[%s312 + $0x2e8] sm:$0xff]
        %v458 = vld [vmem:[%s312 + $0x2f0] sm:$0xff]
        %v459 = vld [vmem:[%s312 + $0x2f8] sm:$0xff]
        %v460 = vld [vmem:[%s312 + $0x300] sm:$0xff]
        %v461 = vld [vmem:[%s312 + $0x308] sm:$0xff]
        %v462 = vld [vmem:[%s312 + $0x310] sm:$0xff]
        %v463 = vld [vmem:[%s312 + $0x318] sm:$0xff]
        %v464 = vld [vmem:[%s312 + $0x320] sm:$0xff]
        %v465 = vld [vmem:[%s312 + $0x328] sm:$0xff]
        %v466 = vld [vmem:[%s312 + $0x330] sm:$0xff]
        %v467 = vld [vmem:[%s312 + $0x338] sm:$0xff]
        %v468 = vld [vmem:[%s312 + $0x340] sm:$0xff]
        %v469 = vld [vmem:[%s312 + $0x348] sm:$0xff]
        %v470 = vld [vmem:[%s312 + $0x350] sm:$0xff]
        %v471 = vld [vmem:[%s312 + $0x358] sm:$0xff]
        %v472 = vld [vmem:[%s312 + $0x360] sm:$0xff]
        %v473 = vld [vmem:[%s312 + $0x368] sm:$0xff]
        %v474 = vld [vmem:[%s312 + $0x370] sm:$0xff]
        %v475 = vld [vmem:[%s312 + $0x378] sm:$0xff]
        %v476 = vld [vmem:[%s312 + $0x380] sm:$0xff]
        %v477 = vld [vmem:[%s312 + $0x388] sm:$0xff]
        %v478 = vld [vmem:[%s312 + $0x390] sm:$0xff]
        %v479 = vld [vmem:[%s312 + $0x398] sm:$0xff]
        %v480 = vld [vmem:[%s312 + $0x3a0] sm:$0xff]
        %v481 = vld [vmem:[%s312 + $0x3a8] sm:$0xff]
        %v482 = vld [vmem:[%s312 + $0x3b0] sm:$0xff]
        %v483 = vld [vmem:[%s312 + $0x3b8] sm:$0xff]
        %v484 = vld [vmem:[%s312 + $0x3c0] sm:$0xff]
        %v485 = vld [vmem:[%s312 + $0x3c8] sm:$0xff]
        %v486 = vld [vmem:[%s312 + $0x3d0] sm:$0xff]
        %v487 = vld [vmem:[%s312 + $0x3d8] sm:$0xff]
        %v488 = vld [vmem:[%s312 + $0x3e0] sm:$0xff]
        %v489 = vld [vmem:[%s312 + $0x3e8] sm:$0xff]
        %v490 = vld [vmem:[%s312 + $0x3f0] sm:$0xff]
        %v491 = vld [vmem:[%s312 + $0x3f8] sm:$0xff]
        %v492 = vld [vmem:[%s312 + $0x400] sm:$0xff]
        %v493 = vld [vmem:[%s312 + $0x408] sm:$0xff]
        %v494 = vld [vmem:[%s312 + $0x410] sm:$0xff]
        %v495 = vld [vmem:[%s312 + $0x418] sm:$0xff]
        %v496 = vld [vmem:[%s312 + $0x420] sm:$0xff]
        %v497 = vld [vmem:[%s312 + $0x428] sm:$0xff]
        %v498 = vld [vmem:[%s312 + $0x430] sm:$0xff]
        %v499 = vld [vmem:[%s312 + $0x438] sm:$0xff]
        %v500 = vld [vmem:[%s312 + $0x440] sm:$0xff]
        %v501 = vld [vmem:[%s312 + $0x448] sm:$0xff]
        %v502 = vld [vmem:[%s312 + $0x450] sm:$0xff]
        %v503 = vld [vmem:[%s312 + $0x458] sm:$0xff]
        %v504 = vld [vmem:[%s312 + $0x460] sm:$0xff]
        %v505 = vld [vmem:[%s312 + $0x468] sm:$0xff]
        %v506 = vld [vmem:[%s312 + $0x470] sm:$0xff]
        %v507 = vld [vmem:[%s312 + $0x478] sm:$0xff]
        %v508 = vld [vmem:[%s312 + $0x480] sm:$0xff]
        %v509 = vld [vmem:[%s312 + $0x488] sm:$0xff]
        %v510 = vld [vmem:[%s312 + $0x490] sm:$0xff]
        %v511 = vld [vmem:[%s312 + $0x498] sm:$0xff]
        %v512 = vld [vmem:[%s312 + $0x4a0] sm:$0xff]
        %v513 = vld [vmem:[%s312 + $0x4a8] sm:$0xff]
        %v514 = vld [vmem:[%s312 + $0x4b0] sm:$0xff]
        %v515 = vld [vmem:[%s312 + $0x4b8] sm:$0xff]
        %v516 = vld [vmem:[%s312 + $0x4c0] sm:$0xff]
        %v517 = vld [vmem:[%s312 + $0x4c8] sm:$0xff]
        %v518 = vld [vmem:[%s312 + $0x4d0] sm:$0xff]
        %v519 = vld [vmem:[%s312 + $0x4d8] sm:$0xff]
        %v520 = vld [vmem:[%s312 + $0x4e0] sm:$0xff]
        %v521 = vld [vmem:[%s312 + $0x4e8] sm:$0xff]
        %v522 = vld [vmem:[%s312 + $0x4f0] sm:$0xff]
        %v523 = vld [vmem:[%s312 + $0x4f8] sm:$0xff]
        %v524 = vld [vmem:[%s312 + $0x500] sm:$0xff]
        %v525 = vld [vmem:[%s312 + $0x508] sm:$0xff]
        %v526 = vld [vmem:[%s312 + $0x510] sm:$0xff]
        %v527 = vld [vmem:[%s312 + $0x518] sm:$0xff]
        %v528 = vld [vmem:[%s312 + $0x520] sm:$0xff]
        %v529 = vld [vmem:[%s312 + $0x528] sm:$0xff]
        %v530 = vld [vmem:[%s312 + $0x530] sm:$0xff]
        %v531 = vld [vmem:[%s312 + $0x538] sm:$0xff]
        %v532 = vld [vmem:[%s312 + $0x540] sm:$0xff]
        %v533 = vld [vmem:[%s312 + $0x548] sm:$0xff]
        %v534 = vld [vmem:[%s312 + $0x550] sm:$0xff]
        %v535 = vld [vmem:[%s312 + $0x558] sm:$0xff]
        %v536 = vld [vmem:[%s312 + $0x560] sm:$0xff]
        %v537 = vld [vmem:[%s312 + $0x568] sm:$0xff]
        %v538 = vld [vmem:[%s312 + $0x570] sm:$0xff]
        %v539 = vld [vmem:[%s312 + $0x578] sm:$0xff]
        %v540 = vld [vmem:[%s312 + $0x580] sm:$0xff]
        %v541 = vld [vmem:[%s312 + $0x588] sm:$0xff]
        %v542 = vld [vmem:[%s312 + $0x590] sm:$0xff]
        %v543 = vld [vmem:[%s312 + $0x598] sm:$0xff]
        %v544 = vld [vmem:[%s312 + $0x5a0] sm:$0xff]
        %v545 = vld [vmem:[%s312 + $0x5a8] sm:$0xff]
        %v546 = vld [vmem:[%s312 + $0x5b0] sm:$0xff]
        %v547 = vld [vmem:[%s312 + $0x5b8] sm:$0xff]
        %v548 = vld [vmem:[%s312 + $0x5c0] sm:$0xff]
        %v549 = vld [vmem:[%s312 + $0x5c8] sm:$0xff]
        %v550 = vld [vmem:[%s312 + $0x5d0] sm:$0xff]
        %v551 = vld [vmem:[%s312 + $0x5d8] sm:$0xff]
        %v552 = vld [vmem:[%s312 + $0x5e0] sm:$0xff]
        %v553 = vld [vmem:[%s312 + $0x5e8] sm:$0xff]
        %v554 = vld [vmem:[%s312 + $0x5f0] sm:$0xff]
        %v555 = vld [vmem:[%s312 + $0x5f8] sm:$0xff]
        %v556 = vld [vmem:[%s312 + $0x600] sm:$0xff]
        %v557 = vld [vmem:[%s312 + $0x608] sm:$0xff]
        %v558 = vld [vmem:[%s312 + $0x610] sm:$0xff]
        %v559 = vld [vmem:[%s312 + $0x618] sm:$0xff]
        %v560 = vld [vmem:[%s312 + $0x620] sm:$0xff]
        %v561 = vld [vmem:[%s312 + $0x628] sm:$0xff]
        %v562 = vld [vmem:[%s312 + $0x630] sm:$0xff]
        %v563 = vld [vmem:[%s312 + $0x638] sm:$0xff]
        %v564 = vld [vmem:[%s312 + $0x640] sm:$0xff]
        %v565 = vld [vmem:[%s312 + $0x648] sm:$0xff]
        %v566 = vld [vmem:[%s312 + $0x650] sm:$0xff]
        %v567 = vld [vmem:[%s312 + $0x658] sm:$0xff]
        %v568 = vld [vmem:[%s312 + $0x660] sm:$0xff]
        %v569 = vld [vmem:[%s312 + $0x668] sm:$0xff]
        %v570 = vld [vmem:[%s312 + $0x670] sm:$0xff]
        %v571 = vld [vmem:[%s312 + $0x678] sm:$0xff]
        %v572 = vld [vmem:[%s312 + $0x680] sm:$0xff]
        %v573 = vld [vmem:[%s312 + $0x688] sm:$0xff]
        %v574 = vld [vmem:[%s312 + $0x690] sm:$0xff]
        %v575 = vld [vmem:[%s312 + $0x698] sm:$0xff]
        %v576 = vld [vmem:[%s312 + $0x6a0] sm:$0xff]
        %v577 = vld [vmem:[%s312 + $0x6a8] sm:$0xff]
        %v578 = vld [vmem:[%s312 + $0x6b0] sm:$0xff]
        %v579 = vld [vmem:[%s312 + $0x6b8] sm:$0xff]
        %v580 = vld [vmem:[%s312 + $0x6c0] sm:$0xff]
        %v581 = vld [vmem:[%s312 + $0x6c8] sm:$0xff]
        %v582 = vld [vmem:[%s312 + $0x6d0] sm:$0xff]
        %v583 = vld [vmem:[%s312 + $0x6d8] sm:$0xff]
        %v584 = vld [vmem:[%s312 + $0x6e0] sm:$0xff]
        %v585 = vld [vmem:[%s312 + $0x6e8] sm:$0xff]
        %v586 = vld [vmem:[%s312 + $0x6f0] sm:$0xff]
        %v587 = vld [vmem:[%s312 + $0x6f8] sm:$0xff]
        %v588 = vld [vmem:[%s312 + $0x700] sm:$0xff]
        %v589 = vld [vmem:[%s312 + $0x708] sm:$0xff]
        %v590 = vld [vmem:[%s312 + $0x710] sm:$0xff]
        %v591 = vld [vmem:[%s312 + $0x718] sm:$0xff]
        %v592 = vld [vmem:[%s312 + $0x720] sm:$0xff]
        %v593 = vld [vmem:[%s312 + $0x728] sm:$0xff]
        %v594 = vld [vmem:[%s312 + $0x730] sm:$0xff]
        %v595 = vld [vmem:[%s312 + $0x738] sm:$0xff]
        %v596 = vld [vmem:[%s312 + $0x740] sm:$0xff]
        %v597 = vld [vmem:[%s312 + $0x748] sm:$0xff]
        %v598 = vld [vmem:[%s312 + $0x750] sm:$0xff]
        %v599 = vld [vmem:[%s312 + $0x758] sm:$0xff]
        %v600 = vld [vmem:[%s312 + $0x760] sm:$0xff]
        %v601 = vld [vmem:[%s312 + $0x768] sm:$0xff]
        %v602 = vld [vmem:[%s312 + $0x770] sm:$0xff]
        %v603 = vld [vmem:[%s312 + $0x778] sm:$0xff]
        %v604 = vld [vmem:[%s312 + $0x780] sm:$0xff]
        %v605 = vld [vmem:[%s312 + $0x788] sm:$0xff]
        %v606 = vld [vmem:[%s312 + $0x790] sm:$0xff]
        %v607 = vld [vmem:[%s312 + $0x798] sm:$0xff]
        %v608 = vld [vmem:[%s312 + $0x7a0] sm:$0xff]
        %v609 = vld [vmem:[%s312 + $0x7a8] sm:$0xff]
        %v610 = vld [vmem:[%s312 + $0x7b0] sm:$0xff]
        %v611 = vld [vmem:[%s312 + $0x7b8] sm:$0xff]
        %v612 = vld [vmem:[%s312 + $0x7c0] sm:$0xff]
        %v613 = vld [vmem:[%s312 + $0x7c8] sm:$0xff]
        %v614 = vld [vmem:[%s312 + $0x7d0] sm:$0xff]
        %v615 = vld [vmem:[%s312 + $0x7d8] sm:$0xff]
        %v616 = vld [vmem:[%s312 + $0x7e0] sm:$0xff]
        %v617 = vld [vmem:[%s312 + $0x7e8] sm:$0xff]
        %v618 = vld [vmem:[%s312 + $0x7f0] sm:$0xff]
        %v619 = vld [vmem:[%s312 + $0x7f8] sm:$0xff]
        %v620 = vld [vmem:[%s312 + $0x800] sm:$0xff]
        %v621 = vld [vmem:[%s312 + $0x808] sm:$0xff]
        %v622 = vld [vmem:[%s312 + $0x810] sm:$0xff]
        %v623 = vld [vmem:[%s312 + $0x818] sm:$0xff]
        %v624 = vld [vmem:[%s312 + $0x820] sm:$0xff]
        %v625 = vld [vmem:[%s312 + $0x828] sm:$0xff]
        %v626 = vld [vmem:[%s312 + $0x830] sm:$0xff]
        %v627 = vld [vmem:[%s312 + $0x838] sm:$0xff]
        %v628 = vld [vmem:[%s312 + $0x840] sm:$0xff]
        %v629 = vld [vmem:[%s312 + $0x848] sm:$0xff]
        %v630 = vld [vmem:[%s312 + $0x850] sm:$0xff]
        %v631 = vld [vmem:[%s312 + $0x858] sm:$0xff]
        %v632 = vld [vmem:[%s312 + $0x860] sm:$0xff]
        %v633 = vld [vmem:[%s312 + $0x868] sm:$0xff]
        %v634 = vld [vmem:[%s312 + $0x870] sm:$0xff]
        %v635 = vld [vmem:[%s312 + $0x878] sm:$0xff]
        %v636 = vld [vmem:[%s312 + $0x880] sm:$0xff]
        %v637 = vld [vmem:[%s312 + $0x888] sm:$0xff]
        %v638 = vld [vmem:[%s312 + $0x890] sm:$0xff]
        %v639 = vld [vmem:[%s312 + $0x898] sm:$0xff]
        %v640 = vld [vmem:[%s312 + $0x8a0] sm:$0xff]
        %v641 = vld [vmem:[%s312 + $0x8a8] sm:$0xff]
        %v642 = vld [vmem:[%s312 + $0x8b0] sm:$0xff]
        %v643 = vld [vmem:[%s312 + $0x8b8] sm:$0xff]
        %v644 = vld [vmem:[%s312 + $0x8c0] sm:$0xff]
        %v645 = vld [vmem:[%s312 + $0x8c8] sm:$0xff]
        %v646 = vld [vmem:[%s312 + $0x8d0] sm:$0xff]
        %v647 = vld [vmem:[%s312 + $0x8d8] sm:$0xff]
        %v648 = vld [vmem:[%s312 + $0x8e0] sm:$0xff]
        %v649 = vld [vmem:[%s312 + $0x8e8] sm:$0xff]
        %v650 = vld [vmem:[%s312 + $0x8f0] sm:$0xff]
        %v651 = vld [vmem:[%s312 + $0x8f8] sm:$0xff]
        %v652 = vld [vmem:[%s312 + $0x900] sm:$0xff]
        %v653 = vld [vmem:[%s312 + $0x908] sm:$0xff]
        %v654 = vld [vmem:[%s312 + $0x910] sm:$0xff]
        %v655 = vld [vmem:[%s312 + $0x918] sm:$0xff]
        %v656 = vld [vmem:[%s312 + $0x920] sm:$0xff]
        %v657 = vld [vmem:[%s312 + $0x928] sm:$0xff]
        %v658 = vld [vmem:[%s312 + $0x930] sm:$0xff]
        %v659 = vld [vmem:[%s312 + $0x938] sm:$0xff]
        %v660 = vld [vmem:[%s312 + $0x940] sm:$0xff]
        %v661 = vld [vmem:[%s312 + $0x948] sm:$0xff]
        %v662 = vld [vmem:[%s312 + $0x950] sm:$0xff]
        %v663 = vld [vmem:[%s312 + $0x958] sm:$0xff]
        %v664 = vld [vmem:[%s312 + $0x960] sm:$0xff]
        %v665 = vld [vmem:[%s312 + $0x968] sm:$0xff]
        %v666 = vld [vmem:[%s312 + $0x970] sm:$0xff]
        %v667 = vld [vmem:[%s312 + $0x978] sm:$0xff]
        %v668 = vld [vmem:[%s312 + $0x980] sm:$0xff]
        %v669 = vld [vmem:[%s312 + $0x988] sm:$0xff]
        %v670 = vld [vmem:[%s312 + $0x990] sm:$0xff]
        %v671 = vld [vmem:[%s312 + $0x998] sm:$0xff]
        %v672 = vld [vmem:[%s312 + $0x9a0] sm:$0xff]
        %v673 = vld [vmem:[%s312 + $0x9a8] sm:$0xff]
        %v674 = vld [vmem:[%s312 + $0x9b0] sm:$0xff]
        %v675 = vld [vmem:[%s312 + $0x9b8] sm:$0xff]
        %v676 = vld [vmem:[%s312 + $0x9c0] sm:$0xff]
        %v677 = vld [vmem:[%s312 + $0x9c8] sm:$0xff]
        %v678 = vld [vmem:[%s312 + $0x9d0] sm:$0xff]
        %v679 = vld [vmem:[%s312 + $0x9d8] sm:$0xff]
        %v680 = vld [vmem:[%s312 + $0x9e0] sm:$0xff]
        %v681 = vld [vmem:[%s312 + $0x9e8] sm:$0xff]
        %v682 = vld [vmem:[%s312 + $0x9f0] sm:$0xff]
        %v683 = vld [vmem:[%s312 + $0x9f8] sm:$0xff]
        %v684 = vld [vmem:[%s312 + $0xa00] sm:$0xff]
        %v685 = vld [vmem:[%s312 + $0xa08] sm:$0xff]
        %v686 = vld [vmem:[%s312 + $0xa10] sm:$0xff]
        %v687 = vld [vmem:[%s312 + $0xa18] sm:$0xff]
        %v688 = vld [vmem:[%s312 + $0xa20] sm:$0xff]
        %v689 = vld [vmem:[%s312 + $0xa28] sm:$0xff]
        %v690 = vld [vmem:[%s312 + $0xa30] sm:$0xff]
        %v691 = vld [vmem:[%s312 + $0xa38] sm:$0xff]
        %v692 = vld [vmem:[%s312 + $0xa40] sm:$0xff]
        %v693 = vld [vmem:[%s312 + $0xa48] sm:$0xff]
        %v694 = vld [vmem:[%s312 + $0xa50] sm:$0xff]
        %v695 = vld [vmem:[%s312 + $0xa58] sm:$0xff]
        %v696 = vld [vmem:[%s312 + $0xa60] sm:$0xff]
        %v697 = vld [vmem:[%s312 + $0xa68] sm:$0xff]
        %v698 = vld [vmem:[%s312 + $0xa70] sm:$0xff]
        %v699 = vld [vmem:[%s312 + $0xa78] sm:$0xff]
        %v700 = vld [vmem:[%s312 + $0xa80] sm:$0xff]
        %v701 = vld [vmem:[%s312 + $0xa88] sm:$0xff]
        %v702 = vld [vmem:[%s312 + $0xa90] sm:$0xff]
        %v703 = vld [vmem:[%s312 + $0xa98] sm:$0xff]
        %v704 = vld [vmem:[%s312 + $0xaa0] sm:$0xff]
        %v705 = vld [vmem:[%s312 + $0xaa8] sm:$0xff]
        %v706 = vld [vmem:[%s312 + $0xab0] sm:$0xff]
        %v707 = vld [vmem:[%s312 + $0xab8] sm:$0xff]
        %v708 = vld [vmem:[%s312 + $0xac0] sm:$0xff]
        %v709 = vld [vmem:[%s312 + $0xac8] sm:$0xff]
        %v710 = vld [vmem:[%s312 + $0xad0] sm:$0xff]
        %v711 = vld [vmem:[%s312 + $0xad8] sm:$0xff]
        %v712 = vld [vmem:[%s312 + $0xae0] sm:$0xff]
        %v713 = vld [vmem:[%s312 + $0xae8] sm:$0xff]
        %v714 = vld [vmem:[%s312 + $0xaf0] sm:$0xff]
        %v715 = vld [vmem:[%s312 + $0xaf8] sm:$0xff]
        %v716 = vld [vmem:[%s312 + $0xb00] sm:$0xff]
        %v717 = vld [vmem:[%s312 + $0xb08] sm:$0xff]
        %v718 = vld [vmem:[%s312 + $0xb10] sm:$0xff]
        %v719 = vld [vmem:[%s312 + $0xb18] sm:$0xff]
        %v720 = vld [vmem:[%s312 + $0xb20] sm:$0xff]
        %v721 = vld [vmem:[%s312 + $0xb28] sm:$0xff]
        %v722 = vld [vmem:[%s312 + $0xb30] sm:$0xff]
        %v723 = vld [vmem:[%s312 + $0xb38] sm:$0xff]
        %v724 = vld [vmem:[%s312 + $0xb40] sm:$0xff]
        %v725 = vld [vmem:[%s312 + $0xb48] sm:$0xff]
        %v726 = vld [vmem:[%s312 + $0xb50] sm:$0xff]
        %v727 = vld [vmem:[%s312 + $0xb58] sm:$0xff]
        %v728 = vld [vmem:[%s312 + $0xb60] sm:$0xff]
        %v729 = vld [vmem:[%s312 + $0xb68] sm:$0xff]
        %v730 = vld [vmem:[%s312 + $0xb70] sm:$0xff]
        %v731 = vld [vmem:[%s312 + $0xb78] sm:$0xff]
        %v732 = vld [vmem:[%s312 + $0xb80] sm:$0xff]
        %v733 = vld [vmem:[%s312 + $0xb88] sm:$0xff]
        %v734 = vld [vmem:[%s312 + $0xb90] sm:$0xff]
        %v735 = vld [vmem:[%s312 + $0xb98] sm:$0xff]
        %v736 = vld [vmem:[%s312 + $0xba0] sm:$0xff]
        %v737 = vld [vmem:[%s312 + $0xba8] sm:$0xff]
        %v738 = vld [vmem:[%s312 + $0xbb0] sm:$0xff]
        %v739 = vld [vmem:[%s312 + $0xbb8] sm:$0xff]
        %v740 = vld [vmem:[%s312 + $0xbc0] sm:$0xff]
        %v741 = vld [vmem:[%s312 + $0xbc8] sm:$0xff]
        %v742 = vld [vmem:[%s312 + $0xbd0] sm:$0xff]
        %v743 = vld [vmem:[%s312 + $0xbd8] sm:$0xff]
        %v744 = vld [vmem:[%s312 + $0xbe0] sm:$0xff]
        %v745 = vld [vmem:[%s312 + $0xbe8] sm:$0xff]
        %v746 = vld [vmem:[%s312 + $0xbf0] sm:$0xff]
        %v747 = vld [vmem:[%s312 + $0xbf8] sm:$0xff]
        %v748 = vld [vmem:[%s312 + $0xc00] sm:$0xff]
        %v749 = vld [vmem:[%s312 + $0xc08] sm:$0xff]
        %v750 = vld [vmem:[%s312 + $0xc10] sm:$0xff]
        %v751 = vld [vmem:[%s312 + $0xc18] sm:$0xff]
        %v752 = vld [vmem:[%s312 + $0xc20] sm:$0xff]
        %v753 = vld [vmem:[%s312 + $0xc28] sm:$0xff]
        %v754 = vld [vmem:[%s312 + $0xc30] sm:$0xff]
        %v755 = vld [vmem:[%s312 + $0xc38] sm:$0xff]
        %v756 = vld [vmem:[%s312 + $0xc40] sm:$0xff]
        %v757 = vld [vmem:[%s312 + $0xc48] sm:$0xff]
        %v758 = vld [vmem:[%s312 + $0xc50] sm:$0xff]
        %v759 = vld [vmem:[%s312 + $0xc58] sm:$0xff]
        %v760 = vld [vmem:[%s312 + $0xc60] sm:$0xff]
        %v761 = vld [vmem:[%s312 + $0xc68] sm:$0xff]
        %v762 = vld [vmem:[%s312 + $0xc70] sm:$0xff]
        %v763 = vld [vmem:[%s312 + $0xc78] sm:$0xff]
        %v764 = vld [vmem:[%s312 + $0xc80] sm:$0xff]
        %v765 = vld [vmem:[%s312 + $0xc88] sm:$0xff]
        %v766 = vld [vmem:[%s312 + $0xc90] sm:$0xff]
        %v767 = vld [vmem:[%s312 + $0xc98] sm:$0xff]
        %v768 = vld [vmem:[%s312 + $0xca0] sm:$0xff]
        %v769 = vld [vmem:[%s312 + $0xca8] sm:$0xff]
        %v770 = vld [vmem:[%s312 + $0xcb0] sm:$0xff]
        %v771 = vld [vmem:[%s312 + $0xcb8] sm:$0xff]
        %v772 = vld [vmem:[%s312 + $0xcc0] sm:$0xff]
        %v773 = vld [vmem:[%s312 + $0xcc8] sm:$0xff]
        %v774 = vld [vmem:[%s312 + $0xcd0] sm:$0xff]
        %v775 = vld [vmem:[%s312 + $0xcd8] sm:$0xff]
        %v776 = vld [vmem:[%s312 + $0xce0] sm:$0xff]
        %v777 = vld [vmem:[%s312 + $0xce8] sm:$0xff]
        %v778 = vld [vmem:[%s312 + $0xcf0] sm:$0xff]
        %v779 = vld [vmem:[%s312 + $0xcf8] sm:$0xff]
        %v780 = vld [vmem:[%s312 + $0xd00] sm:$0xff]
        %v781 = vld [vmem:[%s312 + $0xd08] sm:$0xff]
        %v782 = vld [vmem:[%s312 + $0xd10] sm:$0xff]
        %v783 = vld [vmem:[%s312 + $0xd18] sm:$0xff]
        %v784 = vld [vmem:[%s312 + $0xd20] sm:$0xff]
        %v785 = vld [vmem:[%s312 + $0xd28] sm:$0xff]
        %v786 = vld [vmem:[%s312 + $0xd30] sm:$0xff]
        %v787 = vld [vmem:[%s312 + $0xd38] sm:$0xff]
        %v788 = vld [vmem:[%s312 + $0xd40] sm:$0xff]
        %v789 = vld [vmem:[%s312 + $0xd48] sm:$0xff]
        %v790 = vld [vmem:[%s312 + $0xd50] sm:$0xff]
        %v791 = vld [vmem:[%s312 + $0xd58] sm:$0xff]
        %v792 = vld [vmem:[%s312 + $0xd60] sm:$0xff]
        %v793 = vld [vmem:[%s312 + $0xd68] sm:$0xff]
        %v794 = vld [vmem:[%s312 + $0xd70] sm:$0xff]
        %v795 = vld [vmem:[%s312 + $0xd78] sm:$0xff]
        %v796 = vld [vmem:[%s312 + $0xd80] sm:$0xff]
        %v797 = vld [vmem:[%s312 + $0xd88] sm:$0xff]
        %v798 = vld [vmem:[%s312 + $0xd90] sm:$0xff]
        %v799 = vld [vmem:[%s312 + $0xd98] sm:$0xff]
        %v800 = vld [vmem:[%s312 + $0xda0] sm:$0xff]
        %v801 = vld [vmem:[%s312 + $0xda8] sm:$0xff]
        %v802 = vld [vmem:[%s312 + $0xdb0] sm:$0xff]
        %v803 = vld [vmem:[%s312 + $0xdb8] sm:$0xff]
        %v804 = vld [vmem:[%s312 + $0xdc0] sm:$0xff]
        %v805 = vld [vmem:[%s312 + $0xdc8] sm:$0xff]
        %v806 = vld [vmem:[%s312 + $0xdd0] sm:$0xff]
        %v807 = vld [vmem:[%s312 + $0xdd8] sm:$0xff]
        %v808 = vld [vmem:[%s312 + $0xde0] sm:$0xff]
        %v809 = vld [vmem:[%s312 + $0xde8] sm:$0xff]
        %v810 = vld [vmem:[%s312 + $0xdf0] sm:$0xff]
        %v811 = vld [vmem:[%s312 + $0xdf8] sm:$0xff]
        %v812 = vld [vmem:[%s312 + $0xe00] sm:$0xff]
        %v813 = vld [vmem:[%s312 + $0xe08] sm:$0xff]
        %v814 = vld [vmem:[%s312 + $0xe10] sm:$0xff]
        %v815 = vld [vmem:[%s312 + $0xe18] sm:$0xff]
        %v816 = vld [vmem:[%s312 + $0xe20] sm:$0xff]
        %v817 = vld [vmem:[%s312 + $0xe28] sm:$0xff]
        %v818 = vld [vmem:[%s312 + $0xe30] sm:$0xff]
        %v819 = vld [vmem:[%s312 + $0xe38] sm:$0xff]
        %v820 = vld [vmem:[%s312 + $0xe40] sm:$0xff]
        %v821 = vld [vmem:[%s312 + $0xe48] sm:$0xff]
        %v822 = vld [vmem:[%s312 + $0xe50] sm:$0xff]
        %v823 = vld [vmem:[%s312 + $0xe58] sm:$0xff]
        %v824 = vld [vmem:[%s312 + $0xe60] sm:$0xff]
        %v825 = vld [vmem:[%s312 + $0xe68] sm:$0xff]
        %v826 = vld [vmem:[%s312 + $0xe70] sm:$0xff]
        %v827 = vld [vmem:[%s312 + $0xe78] sm:$0xff]
        %v828 = vld [vmem:[%s312 + $0xe80] sm:$0xff]
        %v829 = vld [vmem:[%s312 + $0xe88] sm:$0xff]
        %v830 = vld [vmem:[%s312 + $0xe90] sm:$0xff]
        %v831 = vld [vmem:[%s312 + $0xe98] sm:$0xff]
        %v832 = vld [vmem:[%s312 + $0xea0] sm:$0xff]
        %v833 = vld [vmem:[%s312 + $0xea8] sm:$0xff]
        %v834 = vld [vmem:[%s312 + $0xeb0] sm:$0xff]
        %v835 = vld [vmem:[%s312 + $0xeb8] sm:$0xff]
        %v836 = vld [vmem:[%s312 + $0xec0] sm:$0xff]
        %v837 = vld [vmem:[%s312 + $0xec8] sm:$0xff]
        %v838 = vld [vmem:[%s312 + $0xed0] sm:$0xff]
        %v839 = vld [vmem:[%s312 + $0xed8] sm:$0xff]
        %v840 = vld [vmem:[%s312 + $0xee0] sm:$0xff]
        %v841 = vld [vmem:[%s312 + $0xee8] sm:$0xff]
        %v842 = vld [vmem:[%s312 + $0xef0] sm:$0xff]
        %v843 = vld [vmem:[%s312 + $0xef8] sm:$0xff]
        %v844 = vld [vmem:[%s312 + $0xf00] sm:$0xff]
        %v845 = vld [vmem:[%s312 + $0xf08] sm:$0xff]
        %v846 = vld [vmem:[%s312 + $0xf10] sm:$0xff]
        %v847 = vld [vmem:[%s312 + $0xf18] sm:$0xff]
        %v848 = vld [vmem:[%s312 + $0xf20] sm:$0xff]
        %v849 = vld [vmem:[%s312 + $0xf28] sm:$0xff]
        %v850 = vld [vmem:[%s312 + $0xf30] sm:$0xff]
        %v851 = vld [vmem:[%s312 + $0xf38] sm:$0xff]
        %v852 = vld [vmem:[%s312 + $0xf40] sm:$0xff]
        %v853 = vld [vmem:[%s312 + $0xf48] sm:$0xff]
        %v854 = vld [vmem:[%s312 + $0xf50] sm:$0xff]
        %v855 = vld [vmem:[%s312 + $0xf58] sm:$0xff]
        %v856 = vld [vmem:[%s312 + $0xf60] sm:$0xff]
        %v857 = vld [vmem:[%s312 + $0xf68] sm:$0xff]
        %v858 = vld [vmem:[%s312 + $0xf70] sm:$0xff]
        %v859 = vld [vmem:[%s312 + $0xf78] sm:$0xff]
        %v860 = vld [vmem:[%s312 + $0xf80] sm:$0xff]
        %v861 = vld [vmem:[%s312 + $0xf88] sm:$0xff]
        %v862 = vld [vmem:[%s312 + $0xf90] sm:$0xff]
        %v863 = vld [vmem:[%s312 + $0xf98] sm:$0xff]
        %v864 = vld [vmem:[%s312 + $0xfa0] sm:$0xff]
        %v865 = vld [vmem:[%s312 + $0xfa8] sm:$0xff]
        %v866 = vld [vmem:[%s312 + $0xfb0] sm:$0xff]
        %v867 = vld [vmem:[%s312 + $0xfb8] sm:$0xff]
        %v868 = vld [vmem:[%s312 + $0xfc0] sm:$0xff]
        %v869 = vld [vmem:[%s312 + $0xfc8] sm:$0xff]
        %v870 = vld [vmem:[%s312 + $0xfd0] sm:$0xff]
        %v871 = vld [vmem:[%s312 + $0xfd8] sm:$0xff]
        %v872 = vld [vmem:[%s312 + $0xfe0] sm:$0xff]
        %v873 = vld [vmem:[%s312 + $0xfe8] sm:$0xff]
        %v874 = vld [vmem:[%s312 + $0xff0] sm:$0xff]
        %v875 = vld [vmem:[%s312 + $0xff8] sm:$0xff]
        %v876 = vld [vmem:[%s312 + $0x1000] sm:$0xff]
        %v877 = vld [vmem:[%s312 + $0x1008] sm:$0xff]
        %v878 = vld [vmem:[%s312 + $0x1010] sm:$0xff]
        %v879 = vld [vmem:[%s312 + $0x1018] sm:$0xff]
        %v880 = vld [vmem:[%s312 + $0x1020] sm:$0xff]
        %v881 = vld [vmem:[%s312 + $0x1028] sm:$0xff]
        %v882 = vld [vmem:[%s312 + $0x1030] sm:$0xff]
        %v883 = vld [vmem:[%s312 + $0x1038] sm:$0xff]
        %v884 = vld [vmem:[%s312 + $0x1040] sm:$0xff]
        %v885 = vld [vmem:[%s312 + $0x1048] sm:$0xff]
        %v886 = vld [vmem:[%s312 + $0x1050] sm:$0xff]
        %v887 = vld [vmem:[%s312 + $0x1058] sm:$0xff]
        %v888 = vld [vmem:[%s312 + $0x1060] sm:$0xff]
        %v889 = vld [vmem:[%s312 + $0x1068] sm:$0xff]
        %v890 = vld [vmem:[%s312 + $0x1070] sm:$0xff]
        %v891 = vld [vmem:[%s312 + $0x1078] sm:$0xff]
        %v892 = vld [vmem:[%s312 + $0x1080] sm:$0xff]
        %v893 = vld [vmem:[%s312 + $0x1088] sm:$0xff]
        %v894 = vld [vmem:[%s312 + $0x1090] sm:$0xff]
        %v895 = vld [vmem:[%s312 + $0x1098] sm:$0xff]
        %v896 = vld [vmem:[%s312 + $0x10a0] sm:$0xff]
        %v897 = vld [vmem:[%s312 + $0x10a8] sm:$0xff]
        %v898 = vld [vmem:[%s312 + $0x10b0] sm:$0xff]
        %v899 = vld [vmem:[%s312 + $0x10b8] sm:$0xff]
        %v900 = vld [vmem:[%s312 + $0x10c0] sm:$0xff]
        %v901 = vld [vmem:[%s312 + $0x10c8] sm:$0xff]
        %v902 = vld [vmem:[%s312 + $0x10d0] sm:$0xff]
        %v903 = vld [vmem:[%s312 + $0x10d8] sm:$0xff]
        %v904 = vld [vmem:[%s312 + $0x10e0] sm:$0xff]
        %v905 = vld [vmem:[%s312 + $0x10e8] sm:$0xff]
        %v906 = vld [vmem:[%s312 + $0x10f0] sm:$0xff]
        %v907 = vld [vmem:[%s312 + $0x10f8] sm:$0xff]
        %v908 = vld [vmem:[%s312 + $0x1100] sm:$0xff]
        %v909 = vld [vmem:[%s312 + $0x1108] sm:$0xff]
        %v910 = vld [vmem:[%s312 + $0x1110] sm:$0xff]
        %v911 = vld [vmem:[%s312 + $0x1118] sm:$0xff]
        %v912 = vld [vmem:[%s312 + $0x1120] sm:$0xff]
        %v913 = vld [vmem:[%s312 + $0x1128] sm:$0xff]
        %v914 = vld [vmem:[%s312 + $0x1130] sm:$0xff]
        %v915 = vld [vmem:[%s312 + $0x1138] sm:$0xff]
        %v916 = vld [vmem:[%s312 + $0x1140] sm:$0xff]
        %v917 = vld [vmem:[%s312 + $0x1148] sm:$0xff]
        %v918 = vld [vmem:[%s312 + $0x1150] sm:$0xff]
        %v919 = vld [vmem:[%s312 + $0x1158] sm:$0xff]
        %v920 = vld [vmem:[%s312 + $0x1160] sm:$0xff]
        %v921 = vld [vmem:[%s312 + $0x1168] sm:$0xff]
        %v922 = vld [vmem:[%s312 + $0x1170] sm:$0xff]
        %v923 = vld [vmem:[%s312 + $0x1178] sm:$0xff]
        %v924 = vld [vmem:[%s312 + $0x1180] sm:$0xff]
        %v925 = vld [vmem:[%s312 + $0x1188] sm:$0xff]
        %v926 = vld [vmem:[%s312 + $0x1190] sm:$0xff]
        %v927 = vld [vmem:[%s312 + $0x1198] sm:$0xff]
        %v928 = vld [vmem:[%s312 + $0x11a0] sm:$0xff]
        %v929 = vld [vmem:[%s312 + $0x11a8] sm:$0xff]
        %v930 = vld [vmem:[%s312 + $0x11b0] sm:$0xff]
        %v931 = vld [vmem:[%s312 + $0x11b8] sm:$0xff]
        %v932 = vld [vmem:[%s312 + $0x11c0] sm:$0xff]
        %v933 = vld [vmem:[%s312 + $0x11c8] sm:$0xff]
        %v934 = vld [vmem:[%s312 + $0x11d0] sm:$0xff]
        %v935 = vld [vmem:[%s312 + $0x11d8] sm:$0xff]
        %v936 = vld [vmem:[%s312 + $0x11e0] sm:$0xff]
        %v937 = vld [vmem:[%s312 + $0x11e8] sm:$0xff]
        %v938 = vld [vmem:[%s312 + $0x11f0] sm:$0xff]
        %v939 = vld [vmem:[%s312 + $0x11f8] sm:$0xff]
        %v940 = vld [vmem:[%s312 + $0x1200] sm:$0xff]
        %v941 = vld [vmem:[%s312 + $0x1208] sm:$0xff]
        %v942 = vld [vmem:[%s312 + $0x1210] sm:$0xff]
        %v943 = vld [vmem:[%s312 + $0x1218] sm:$0xff]
        %v944 = vld [vmem:[%s312 + $0x1220] sm:$0xff]
        %v945 = vld [vmem:[%s312 + $0x1228] sm:$0xff]
        %v946 = vld [vmem:[%s312 + $0x1230] sm:$0xff]
        %v947 = vld [vmem:[%s312 + $0x1238] sm:$0xff]
        %v948 = vld [vmem:[%s312 + $0x1240] sm:$0xff]
        %v949 = vld [vmem:[%s312 + $0x1248] sm:$0xff]
        %v950 = vld [vmem:[%s312 + $0x1250] sm:$0xff]
        %v951 = vld [vmem:[%s312 + $0x1258] sm:$0xff]
        %v952 = vld [vmem:[%s312 + $0x1260] sm:$0xff]
        %v953 = vld [vmem:[%s312 + $0x1268] sm:$0xff]
        %v954 = vld [vmem:[%s312 + $0x1270] sm:$0xff]
        %v955 = vld [vmem:[%s312 + $0x1278] sm:$0xff]
        %v956 = vld [vmem:[%s312 + $0x1280] sm:$0xff]
        %v957 = vld [vmem:[%s312 + $0x1288] sm:$0xff]
        %v958 = vld [vmem:[%s312 + $0x1290] sm:$0xff]
        %v959 = vld [vmem:[%s312 + $0x1298] sm:$0xff]
        %v960 = vld [vmem:[%s312 + $0x12a0] sm:$0xff]
        %v961 = vld [vmem:[%s312 + $0x12a8] sm:$0xff]
        %v962 = vld [vmem:[%s312 + $0x12b0] sm:$0xff]
        %v963 = vld [vmem:[%s312 + $0x12b8] sm:$0xff]
        %v964 = vld [vmem:[%s312 + $0x12c0] sm:$0xff]
        %v965 = vld [vmem:[%s312 + $0x12c8] sm:$0xff]
        %v966 = vld [vmem:[%s312 + $0x12d0] sm:$0xff]
        %v967 = vld [vmem:[%s312 + $0x12d8] sm:$0xff]
        %v968 = vld [vmem:[%s312 + $0x12e0] sm:$0xff]
        %v969 = vld [vmem:[%s312 + $0x12e8] sm:$0xff]
        %v970 = vld [vmem:[%s312 + $0x12f0] sm:$0xff]
        %v971 = vld [vmem:[%s312 + $0x12f8] sm:$0xff]
        %v972 = vld [vmem:[%s312 + $0x1300] sm:$0xff]
        %v973 = vld [vmem:[%s312 + $0x1308] sm:$0xff]
        %v974 = vld [vmem:[%s312 + $0x1310] sm:$0xff]
        %v975 = vld [vmem:[%s312 + $0x1318] sm:$0xff]
        %v976 = vld [vmem:[%s312 + $0x1320] sm:$0xff]
        %v977 = vld [vmem:[%s312 + $0x1328] sm:$0xff]
        %v978 = vld [vmem:[%s312 + $0x1330] sm:$0xff]
        %v979 = vld [vmem:[%s312 + $0x1338] sm:$0xff]
        %v980 = vld [vmem:[%s312 + $0x1340] sm:$0xff]
        %v981 = vld [vmem:[%s312 + $0x1348] sm:$0xff]
        %v982 = vld [vmem:[%s312 + $0x1350] sm:$0xff]
        %v983 = vld [vmem:[%s312 + $0x1358] sm:$0xff]
        %v984 = vld [vmem:[%s312 + $0x1360] sm:$0xff]
        %v985 = vld [vmem:[%s312 + $0x1368] sm:$0xff]
        %v986 = vld [vmem:[%s312 + $0x1370] sm:$0xff]
        %v987 = vld [vmem:[%s312 + $0x1378] sm:$0xff]
        %v988 = vld [vmem:[%s312 + $0x1380] sm:$0xff]
        %v989 = vld [vmem:[%s312 + $0x1388] sm:$0xff]
        %v990 = vld [vmem:[%s312 + $0x1390] sm:$0xff]
        %v991 = vld [vmem:[%s312 + $0x1398] sm:$0xff]
        %v992 = vld [vmem:[%s312 + $0x13a0] sm:$0xff]
        %v993 = vld [vmem:[%s312 + $0x13a8] sm:$0xff]
        %v994 = vld [vmem:[%s312 + $0x13b0] sm:$0xff]
        %v995 = vld [vmem:[%s312 + $0x13b8] sm:$0xff]
        %v996 = vld [vmem:[%s312 + $0x13c0] sm:$0xff]
        %v997 = vld [vmem:[%s312 + $0x13c8] sm:$0xff]
        %v998 = vld [vmem:[%s312 + $0x13d0] sm:$0xff]
        %v999 = vld [vmem:[%s312 + $0x13d8] sm:$0xff]
        %v1000 = vld [vmem:[%s312 + $0x13e0] sm:$0xff]
        %v1001 = vld [vmem:[%s312 + $0x13e8] sm:$0xff]
        %v1002 = vld [vmem:[%s312 + $0x13f0] sm:$0xff]
        %v1003 = vld [vmem:[%s312 + $0x13f8] sm:$0xff]
        %v1004 = vld [vmem:[%s312 + $0x1400] sm:$0xff]
        %v1005 = vld [vmem:[%s312 + $0x1408] sm:$0xff]
        %v1006 = vld [vmem:[%s312 + $0x1410] sm:$0xff]
        %v1007 = vld [vmem:[%s312 + $0x1418] sm:$0xff]
        %v1008 = vld [vmem:[%s312 + $0x1420] sm:$0xff]
        %v1009 = vld [vmem:[%s312 + $0x1428] sm:$0xff]
        %v1010 = vld [vmem:[%s312 + $0x1430] sm:$0xff]
        %v1011 = vld [vmem:[%s312 + $0x1438] sm:$0xff]
        %v1012 = vld [vmem:[%s312 + $0x1440] sm:$0xff]
        %v1013 = vld [vmem:[%s312 + $0x1448] sm:$0xff]
        %v1014 = vld [vmem:[%s312 + $0x1450] sm:$0xff]
        %v1015 = vld [vmem:[%s312 + $0x1458] sm:$0xff]
        %v1016 = vld [vmem:[%s312 + $0x1460] sm:$0xff]
        %v1017 = vld [vmem:[%s312 + $0x1468] sm:$0xff]
        %v1018 = vld [vmem:[%s312 + $0x1470] sm:$0xff]
        %v1019 = vld [vmem:[%s312 + $0x1478] sm:$0xff]
        %v1020 = vld [vmem:[%s312 + $0x1480] sm:$0xff]
        %v1021 = vld [vmem:[%s312 + $0x1488] sm:$0xff]
        %v1022 = vld [vmem:[%s312 + $0x1490] sm:$0xff]
        %v1023 = vld [vmem:[%s312 + $0x1498] sm:$0xff]
        %v1024 = vld [vmem:[%s312 + $0x14a0] sm:$0xff]
        %v1025 = vld [vmem:[%s312 + $0x14a8] sm:$0xff]
        %v1026 = vld [vmem:[%s312 + $0x14b0] sm:$0xff]
        %v1027 = vld [vmem:[%s312 + $0x14b8] sm:$0xff]
        %v1028 = vld [vmem:[%s312 + $0x14c0] sm:$0xff]
        %v1029 = vld [vmem:[%s312 + $0x14c8] sm:$0xff]
        %v1030 = vld [vmem:[%s312 + $0x14d0] sm:$0xff]
        %v1031 = vld [vmem:[%s312 + $0x14d8] sm:$0xff]
        %v1032 = vld [vmem:[%s312 + $0x14e0] sm:$0xff]
        %v1033 = vld [vmem:[%s312 + $0x14e8] sm:$0xff]
        %v1034 = vld [vmem:[%s312 + $0x14f0] sm:$0xff]
        %v1035 = vld [vmem:[%s312 + $0x14f8] sm:$0xff]
        %v1036 = vld [vmem:[%s312 + $0x1500] sm:$0xff]
        %v1037 = vld [vmem:[%s312 + $0x1508] sm:$0xff]
        %v1038 = vld [vmem:[%s312 + $0x1510] sm:$0xff]
        %v1039 = vld [vmem:[%s312 + $0x1518] sm:$0xff]
        %v1040 = vld [vmem:[%s312 + $0x1520] sm:$0xff]
        %v1041 = vld [vmem:[%s312 + $0x1528] sm:$0xff]
        %v1042 = vld [vmem:[%s312 + $0x1530] sm:$0xff]
        %v1043 = vld [vmem:[%s312 + $0x1538] sm:$0xff]
        %v1044 = vld [vmem:[%s312 + $0x1540] sm:$0xff]
        %v1045 = vld [vmem:[%s312 + $0x1548] sm:$0xff]
        %v1046 = vld [vmem:[%s312 + $0x1550] sm:$0xff]
        %v1047 = vld [vmem:[%s312 + $0x1558] sm:$0xff]
        %v1048 = vld [vmem:[%s312 + $0x1560] sm:$0xff]
        %v1049 = vld [vmem:[%s312 + $0x1568] sm:$0xff]
        %v1050 = vld [vmem:[%s312 + $0x1570] sm:$0xff]
        %v1051 = vld [vmem:[%s312 + $0x1578] sm:$0xff]
        %v1052 = vld [vmem:[%s312 + $0x1580] sm:$0xff]
        %v1053 = vld [vmem:[%s312 + $0x1588] sm:$0xff]
        %v1054 = vld [vmem:[%s312 + $0x1590] sm:$0xff]
        %v1055 = vld [vmem:[%s312 + $0x1598] sm:$0xff]
        %v1056 = vld [vmem:[%s312 + $0x15a0] sm:$0xff]
        %v1057 = vld [vmem:[%s312 + $0x15a8] sm:$0xff]
        %v1058 = vld [vmem:[%s312 + $0x15b0] sm:$0xff]
        %v1059 = vld [vmem:[%s312 + $0x15b8] sm:$0xff]
        %v1060 = vld [vmem:[%s312 + $0x15c0] sm:$0xff]
        %v1061 = vld [vmem:[%s312 + $0x15c8] sm:$0xff]
        %v1062 = vld [vmem:[%s312 + $0x15d0] sm:$0xff]
        %v1063 = vld [vmem:[%s312 + $0x15d8] sm:$0xff]
        %v1064 = vld [vmem:[%s312 + $0x15e0] sm:$0xff]
        %v1065 = vld [vmem:[%s312 + $0x15e8] sm:$0xff]
        %v1066 = vld [vmem:[%s312 + $0x15f0] sm:$0xff]
        %v1067 = vld [vmem:[%s312 + $0x15f8] sm:$0xff]
        %v1068 = vld [vmem:[%s312 + $0x1600] sm:$0xff]
        %v1069 = vld [vmem:[%s312 + $0x1608] sm:$0xff]
        %v1070 = vld [vmem:[%s312 + $0x1610] sm:$0xff]
        %v1071 = vld [vmem:[%s312 + $0x1618] sm:$0xff]
        %v1072 = vld [vmem:[%s312 + $0x1620] sm:$0xff]
        %v1073 = vld [vmem:[%s312 + $0x1628] sm:$0xff]
        %v1074 = vld [vmem:[%s312 + $0x1630] sm:$0xff]
        %v1075 = vld [vmem:[%s312 + $0x1638] sm:$0xff]
        %v1076 = vld [vmem:[%s312 + $0x1640] sm:$0xff]
        %v1077 = vld [vmem:[%s312 + $0x1648] sm:$0xff]
        %v1078 = vld [vmem:[%s312 + $0x1650] sm:$0xff]
        %v1079 = vld [vmem:[%s312 + $0x1658] sm:$0xff]
        %v1080 = vld [vmem:[%s312 + $0x1660] sm:$0xff]
        %v1081 = vld [vmem:[%s312 + $0x1668] sm:$0xff]
        %v1082 = vld [vmem:[%s312 + $0x1670] sm:$0xff]
        %v1083 = vld [vmem:[%s312 + $0x1678] sm:$0xff]
        %v1084 = vld [vmem:[%s312 + $0x1680] sm:$0xff]
        %v1085 = vld [vmem:[%s312 + $0x1688] sm:$0xff]
        %v1086 = vld [vmem:[%s312 + $0x1690] sm:$0xff]
        %v1087 = vld [vmem:[%s312 + $0x1698] sm:$0xff]
        %v1088 = vld [vmem:[%s312 + $0x16a0] sm:$0xff]
        %v1089 = vld [vmem:[%s312 + $0x16a8] sm:$0xff]
        %v1090 = vld [vmem:[%s312 + $0x16b0] sm:$0xff]
        %v1091 = vld [vmem:[%s312 + $0x16b8] sm:$0xff]
        %v1092 = vld [vmem:[%s312 + $0x16c0] sm:$0xff]
        %v1093 = vld [vmem:[%s312 + $0x16c8] sm:$0xff]
        %v1094 = vld [vmem:[%s312 + $0x16d0] sm:$0xff]
        %v1095 = vld [vmem:[%s312 + $0x16d8] sm:$0xff]
        %v1096 = vld [vmem:[%s312 + $0x16e0] sm:$0xff]
        %v1097 = vld [vmem:[%s312 + $0x16e8] sm:$0xff]
        %v1098 = vld [vmem:[%s312 + $0x16f0] sm:$0xff]
        %v1099 = vld [vmem:[%s312 + $0x16f8] sm:$0xff]
        %v1100 = vld [vmem:[%s312 + $0x1700] sm:$0xff]
        %v1101 = vld [vmem:[%s312 + $0x1708] sm:$0xff]
        %v1102 = vld [vmem:[%s312 + $0x1710] sm:$0xff]
        %v1103 = vld [vmem:[%s312 + $0x1718] sm:$0xff]
        %v1104 = vld [vmem:[%s312 + $0x1720] sm:$0xff]
        %v1105 = vld [vmem:[%s312 + $0x1728] sm:$0xff]
        %v1106 = vld [vmem:[%s312 + $0x1730] sm:$0xff]
        %v1107 = vld [vmem:[%s312 + $0x1738] sm:$0xff]
        %v1108 = vld [vmem:[%s312 + $0x1740] sm:$0xff]
        %v1109 = vld [vmem:[%s312 + $0x1748] sm:$0xff]
        %v1110 = vld [vmem:[%s312 + $0x1750] sm:$0xff]
        %v1111 = vld [vmem:[%s312 + $0x1758] sm:$0xff]
        %v1112 = vld [vmem:[%s312 + $0x1760] sm:$0xff]
        %v1113 = vld [vmem:[%s312 + $0x1768] sm:$0xff]
        %v1114 = vld [vmem:[%s312 + $0x1770] sm:$0xff]
        %v1115 = vld [vmem:[%s312 + $0x1778] sm:$0xff]
        %v1116 = vld [vmem:[%s312 + $0x1780] sm:$0xff]
        %v1117 = vld [vmem:[%s312 + $0x1788] sm:$0xff]
        %v1118 = vld [vmem:[%s312 + $0x1790] sm:$0xff]
        %v1119 = vld [vmem:[%s312 + $0x1798] sm:$0xff]
        %v1120 = vld [vmem:[%s312 + $0x17a0] sm:$0xff]
        %v1121 = vld [vmem:[%s312 + $0x17a8] sm:$0xff]
        %v1122 = vld [vmem:[%s312 + $0x17b0] sm:$0xff]
        %v1123 = vld [vmem:[%s312 + $0x17b8] sm:$0xff]
        %v1124 = vld [vmem:[%s312 + $0x17c0] sm:$0xff]
        %v1125 = vld [vmem:[%s312 + $0x17c8] sm:$0xff]
        %v1126 = vld [vmem:[%s312 + $0x17d0] sm:$0xff]
        %v1127 = vld [vmem:[%s312 + $0x17d8] sm:$0xff]
        %v1128 = vld [vmem:[%s312 + $0x17e0] sm:$0xff]
        %v1129 = vld [vmem:[%s312 + $0x17e8] sm:$0xff]
        %v1130 = vld [vmem:[%s312 + $0x17f0] sm:$0xff]
        %v1131 = vld [vmem:[%s312 + $0x17f8] sm:$0xff]
        %v1132 = vld [vmem:[%s312 + $0x1800] sm:$0xff]
        %v1133 = vld [vmem:[%s312 + $0x1808] sm:$0xff]
        %v1134 = vld [vmem:[%s312 + $0x1810] sm:$0xff]
        %v1135 = vld [vmem:[%s312 + $0x1818] sm:$0xff]
        %v1136 = vld [vmem:[%s312 + $0x1820] sm:$0xff]
        %v1137 = vld [vmem:[%s312 + $0x1828] sm:$0xff]
        %v1138 = vld [vmem:[%s312 + $0x1830] sm:$0xff]
        %v1139 = vld [vmem:[%s312 + $0x1838] sm:$0xff]
        %v1140 = vld [vmem:[%s312 + $0x1840] sm:$0xff]
        %v1141 = vld [vmem:[%s312 + $0x1848] sm:$0xff]
        %v1142 = vld [vmem:[%s312 + $0x1850] sm:$0xff]
        %v1143 = vld [vmem:[%s312 + $0x1858] sm:$0xff]
        %v1144 = vld [vmem:[%s312 + $0x1860] sm:$0xff]
        %v1145 = vld [vmem:[%s312 + $0x1868] sm:$0xff]
        %v1146 = vld [vmem:[%s312 + $0x1870] sm:$0xff]
        %v1147 = vld [vmem:[%s312 + $0x1878] sm:$0xff]
        %v1148 = vld [vmem:[%s312 + $0x1880] sm:$0xff]
        %v1149 = vld [vmem:[%s312 + $0x1888] sm:$0xff]
        %v1150 = vld [vmem:[%s312 + $0x1890] sm:$0xff]
        %v1151 = vld [vmem:[%s312 + $0x1898] sm:$0xff]
        %v1152 = vld [vmem:[%s312 + $0x18a0] sm:$0xff]
        %v1153 = vld [vmem:[%s312 + $0x18a8] sm:$0xff]
        %v1154 = vld [vmem:[%s312 + $0x18b0] sm:$0xff]
        %v1155 = vld [vmem:[%s312 + $0x18b8] sm:$0xff]
        %v1156 = vld [vmem:[%s312 + $0x18c0] sm:$0xff]
        %v1157 = vld [vmem:[%s312 + $0x18c8] sm:$0xff]
        %v1158 = vld [vmem:[%s312 + $0x18d0] sm:$0xff]
        %v1159 = vld [vmem:[%s312 + $0x18d8] sm:$0xff]
        %v1160 = vld [vmem:[%s312 + $0x18e0] sm:$0xff]
        %v1161 = vld [vmem:[%s312 + $0x18e8] sm:$0xff]
        %v1162 = vld [vmem:[%s312 + $0x18f0] sm:$0xff]
        %v1163 = vld [vmem:[%s312 + $0x18f8] sm:$0xff]
        %v1164 = vld [vmem:[%s312 + $0x1900] sm:$0xff]
        %v1165 = vld [vmem:[%s312 + $0x1908] sm:$0xff]
        %v1166 = vld [vmem:[%s312 + $0x1910] sm:$0xff]
        %v1167 = vld [vmem:[%s312 + $0x1918] sm:$0xff]
        %v1168 = vld [vmem:[%s312 + $0x1920] sm:$0xff]
        %v1169 = vld [vmem:[%s312 + $0x1928] sm:$0xff]
        %v1170 = vld [vmem:[%s312 + $0x1930] sm:$0xff]
        %v1171 = vld [vmem:[%s312 + $0x1938] sm:$0xff]
        %v1172 = vld [vmem:[%s312 + $0x1940] sm:$0xff]
        %v1173 = vld [vmem:[%s312 + $0x1948] sm:$0xff]
        %v1174 = vld [vmem:[%s312 + $0x1950] sm:$0xff]
        %v1175 = vld [vmem:[%s312 + $0x1958] sm:$0xff]
        %v1176 = vld [vmem:[%s312 + $0x1960] sm:$0xff]
        %v1177 = vld [vmem:[%s312 + $0x1968] sm:$0xff]
        %v1178 = vld [vmem:[%s312 + $0x1970] sm:$0xff]
        %v1179 = vld [vmem:[%s312 + $0x1978] sm:$0xff]
        %v1180 = vld [vmem:[%s312 + $0x1980] sm:$0xff]
        %v1181 = vld [vmem:[%s312 + $0x1988] sm:$0xff]
        %v1182 = vld [vmem:[%s312 + $0x1990] sm:$0xff]
        %v1183 = vld [vmem:[%s312 + $0x1998] sm:$0xff]
        %v1184 = vld [vmem:[%s312 + $0x19a0] sm:$0xff]
        %v1185 = vld [vmem:[%s312 + $0x19a8] sm:$0xff]
        %v1186 = vld [vmem:[%s312 + $0x19b0] sm:$0xff]
        %v1187 = vld [vmem:[%s312 + $0x19b8] sm:$0xff]
        %v1188 = vld [vmem:[%s312 + $0x19c0] sm:$0xff]
        %v1189 = vld [vmem:[%s312 + $0x19c8] sm:$0xff]
        %v1190 = vld [vmem:[%s312 + $0x19d0] sm:$0xff]
        %v1191 = vld [vmem:[%s312 + $0x19d8] sm:$0xff]
        %v1192 = vld [vmem:[%s312 + $0x19e0] sm:$0xff]
        %v1193 = vld [vmem:[%s312 + $0x19e8] sm:$0xff]
        %v1194 = vld [vmem:[%s312 + $0x19f0] sm:$0xff]
        %v1195 = vld [vmem:[%s312 + $0x19f8] sm:$0xff]
        %v1196 = vld [vmem:[%s312 + $0x1a00] sm:$0xff]
        %v1197 = vld [vmem:[%s312 + $0x1a08] sm:$0xff]
        %v1198 = vld [vmem:[%s312 + $0x1a10] sm:$0xff]
        %v1199 = vld [vmem:[%s312 + $0x1a18] sm:$0xff]
        %v1200 = vld [vmem:[%s312 + $0x1a20] sm:$0xff]
        %v1201 = vld [vmem:[%s312 + $0x1a28] sm:$0xff]
        %v1202 = vld [vmem:[%s312 + $0x1a30] sm:$0xff]
        %v1203 = vld [vmem:[%s312 + $0x1a38] sm:$0xff]
        %v1204 = vld [vmem:[%s312 + $0x1a40] sm:$0xff]
        %v1205 = vld [vmem:[%s312 + $0x1a48] sm:$0xff]
        %v1206 = vld [vmem:[%s312 + $0x1a50] sm:$0xff]
        %v1207 = vld [vmem:[%s312 + $0x1a58] sm:$0xff]
        %v1208 = vld [vmem:[%s312 + $0x1a60] sm:$0xff]
        %v1209 = vld [vmem:[%s312 + $0x1a68] sm:$0xff]
        %v1210 = vld [vmem:[%s312 + $0x1a70] sm:$0xff]
        %v1211 = vld [vmem:[%s312 + $0x1a78] sm:$0xff]
        %v1212 = vld [vmem:[%s312 + $0x1a80] sm:$0xff]
        %v1213 = vld [vmem:[%s312 + $0x1a88] sm:$0xff]
        %v1214 = vld [vmem:[%s312 + $0x1a90] sm:$0xff]
        %v1215 = vld [vmem:[%s312 + $0x1a98] sm:$0xff]
        %v1216 = vld [vmem:[%s312 + $0x1aa0] sm:$0xff]
        %v1217 = vld [vmem:[%s312 + $0x1aa8] sm:$0xff]
        %v1218 = vld [vmem:[%s312 + $0x1ab0] sm:$0xff]
        %v1219 = vld [vmem:[%s312 + $0x1ab8] sm:$0xff]
        %v1220 = vld [vmem:[%s312 + $0x1ac0] sm:$0xff]
        %v1221 = vld [vmem:[%s312 + $0x1ac8] sm:$0xff]
        %v1222 = vld [vmem:[%s312 + $0x1ad0] sm:$0xff]
        %v1223 = vld [vmem:[%s312 + $0x1ad8] sm:$0xff]
        %v1224 = vld [vmem:[%s312 + $0x1ae0] sm:$0xff]
        %v1225 = vld [vmem:[%s312 + $0x1ae8] sm:$0xff]
        %v1226 = vld [vmem:[%s312 + $0x1af0] sm:$0xff]
        %v1227 = vld [vmem:[%s312 + $0x1af8] sm:$0xff]
        %v1228 = vld [vmem:[%s312 + $0x1b00] sm:$0xff]
        %v1229 = vld [vmem:[%s312 + $0x1b08] sm:$0xff]
        %v1230 = vld [vmem:[%s312 + $0x1b10] sm:$0xff]
        %v1231 = vld [vmem:[%s312 + $0x1b18] sm:$0xff]
        %v1232 = vld [vmem:[%s312 + $0x1b20] sm:$0xff]
        %v1233 = vld [vmem:[%s312 + $0x1b28] sm:$0xff]
        %v1234 = vld [vmem:[%s312 + $0x1b30] sm:$0xff]
        %v1235 = vld [vmem:[%s312 + $0x1b38] sm:$0xff]
        %v1236 = vld [vmem:[%s312 + $0x1b40] sm:$0xff]
        %v1237 = vld [vmem:[%s312 + $0x1b48] sm:$0xff]
        %v1238 = vld [vmem:[%s312 + $0x1b50] sm:$0xff]
        %v1239 = vld [vmem:[%s312 + $0x1b58] sm:$0xff]
        %v1240 = vld [vmem:[%s312 + $0x1b60] sm:$0xff]
        %v1241 = vld [vmem:[%s312 + $0x1b68] sm:$0xff]
        %v1242 = vld [vmem:[%s312 + $0x1b70] sm:$0xff]
        %v1243 = vld [vmem:[%s312 + $0x1b78] sm:$0xff]
        %v1244 = vld [vmem:[%s312 + $0x1b80] sm:$0xff]
        %v1245 = vld [vmem:[%s312 + $0x1b88] sm:$0xff]
        %v1246 = vld [vmem:[%s312 + $0x1b90] sm:$0xff]
        %v1247 = vld [vmem:[%s312 + $0x1b98] sm:$0xff]
        %v1248 = vld [vmem:[%s312 + $0x1ba0] sm:$0xff]
        %v1249 = vld [vmem:[%s312 + $0x1ba8] sm:$0xff]
        %v1250 = vld [vmem:[%s312 + $0x1bb0] sm:$0xff]
        %v1251 = vld [vmem:[%s312 + $0x1bb8] sm:$0xff]
        %v1252 = vld [vmem:[%s312 + $0x1bc0] sm:$0xff]
        %v1253 = vld [vmem:[%s312 + $0x1bc8] sm:$0xff]
        %v1254 = vld [vmem:[%s312 + $0x1bd0] sm:$0xff]
        %v1255 = vld [vmem:[%s312 + $0x1bd8] sm:$0xff]
        %v1256 = vld [vmem:[%s312 + $0x1be0] sm:$0xff]
        %v1257 = vld [vmem:[%s312 + $0x1be8] sm:$0xff]
        %v1258 = vld [vmem:[%s312 + $0x1bf0] sm:$0xff]
        %v1259 = vld [vmem:[%s312 + $0x1bf8] sm:$0xff]
        %v1260 = vld [vmem:[%s312 + $0x1c00] sm:$0xff]
        %v1261 = vld [vmem:[%s312 + $0x1c08] sm:$0xff]
        %v1262 = vld [vmem:[%s312 + $0x1c10] sm:$0xff]
        %v1263 = vld [vmem:[%s312 + $0x1c18] sm:$0xff]
        %v1264 = vld [vmem:[%s312 + $0x1c20] sm:$0xff]
        %v1265 = vld [vmem:[%s312 + $0x1c28] sm:$0xff]
        %v1266 = vld [vmem:[%s312 + $0x1c30] sm:$0xff]
        %v1267 = vld [vmem:[%s312 + $0x1c38] sm:$0xff]
        %v1268 = vld [vmem:[%s312 + $0x1c40] sm:$0xff]
        %v1269 = vld [vmem:[%s312 + $0x1c48] sm:$0xff]
        %v1270 = vld [vmem:[%s312 + $0x1c50] sm:$0xff]
        %v1271 = vld [vmem:[%s312 + $0x1c58] sm:$0xff]
        %v1272 = vld [vmem:[%s312 + $0x1c60] sm:$0xff]
        %v1273 = vld [vmem:[%s312 + $0x1c68] sm:$0xff]
        %v1274 = vld [vmem:[%s312 + $0x1c70] sm:$0xff]
        %v1275 = vld [vmem:[%s312 + $0x1c78] sm:$0xff]
        %v1276 = vld [vmem:[%s312 + $0x1c80] sm:$0xff]
        %v1277 = vld [vmem:[%s312 + $0x1c88] sm:$0xff]
        %v1278 = vld [vmem:[%s312 + $0x1c90] sm:$0xff]
        %v1279 = vld [vmem:[%s312 + $0x1c98] sm:$0xff]
        %v1280 = vld [vmem:[%s312 + $0x1ca0] sm:$0xff]
        %v1281 = vld [vmem:[%s312 + $0x1ca8] sm:$0xff]
        %v1282 = vld [vmem:[%s312 + $0x1cb0] sm:$0xff]
        %v1283 = vld [vmem:[%s312 + $0x1cb8] sm:$0xff]
        %v1284 = vld [vmem:[%s312 + $0x1cc0] sm:$0xff]
        %v1285 = vld [vmem:[%s312 + $0x1cc8] sm:$0xff]
        %v1286 = vld [vmem:[%s312 + $0x1cd0] sm:$0xff]
        %v1287 = vld [vmem:[%s312 + $0x1cd8] sm:$0xff]
        %v1288 = vld [vmem:[%s312 + $0x1ce0] sm:$0xff]
        %v1289 = vld [vmem:[%s312 + $0x1ce8] sm:$0xff]
        %v1290 = vld [vmem:[%s312 + $0x1cf0] sm:$0xff]
        %v1291 = vld [vmem:[%s312 + $0x1cf8] sm:$0xff]
        %v1292 = vld [vmem:[%s312 + $0x1d00] sm:$0xff]
        %v1293 = vld [vmem:[%s312 + $0x1d08] sm:$0xff]
        %v1294 = vld [vmem:[%s312 + $0x1d10] sm:$0xff]
        %v1295 = vld [vmem:[%s312 + $0x1d18] sm:$0xff]
        %v1296 = vld [vmem:[%s312 + $0x1d20] sm:$0xff]
        %v1297 = vld [vmem:[%s312 + $0x1d28] sm:$0xff]
        %v1298 = vld [vmem:[%s312 + $0x1d30] sm:$0xff]
        %v1299 = vld [vmem:[%s312 + $0x1d38] sm:$0xff]
        %v1300 = vld [vmem:[%s312 + $0x1d40] sm:$0xff]
        %v1301 = vld [vmem:[%s312 + $0x1d48] sm:$0xff]
        %v1302 = vld [vmem:[%s312 + $0x1d50] sm:$0xff]
        %v1303 = vld [vmem:[%s312 + $0x1d58] sm:$0xff]
        %v1304 = vld [vmem:[%s312 + $0x1d60] sm:$0xff]
        %v1305 = vld [vmem:[%s312 + $0x1d68] sm:$0xff]
        %v1306 = vld [vmem:[%s312 + $0x1d70] sm:$0xff]
        %v1307 = vld [vmem:[%s312 + $0x1d78] sm:$0xff]
        %v1308 = vld [vmem:[%s312 + $0x1d80] sm:$0xff]
        %v1309 = vld [vmem:[%s312 + $0x1d88] sm:$0xff]
        %v1310 = vld [vmem:[%s312 + $0x1d90] sm:$0xff]
        %v1311 = vld [vmem:[%s312 + $0x1d98] sm:$0xff]
        %v1312 = vld [vmem:[%s312 + $0x1da0] sm:$0xff]
        %v1313 = vld [vmem:[%s312 + $0x1da8] sm:$0xff]
        %v1314 = vld [vmem:[%s312 + $0x1db0] sm:$0xff]
        %v1315 = vld [vmem:[%s312 + $0x1db8] sm:$0xff]
        %v1316 = vld [vmem:[%s312 + $0x1dc0] sm:$0xff]
        %v1317 = vld [vmem:[%s312 + $0x1dc8] sm:$0xff]
        %v1318 = vld [vmem:[%s312 + $0x1dd0] sm:$0xff]
        %v1319 = vld [vmem:[%s312 + $0x1dd8] sm:$0xff]
        %v1320 = vld [vmem:[%s312 + $0x1de0] sm:$0xff]
        %v1321 = vld [vmem:[%s312 + $0x1de8] sm:$0xff]
        %v1322 = vld [vmem:[%s312 + $0x1df0] sm:$0xff]
        %v1323 = vld [vmem:[%s312 + $0x1df8] sm:$0xff]
        %v1354 = vunpack.c.l.b16 %v334
        %v1355 = vunpack.c.h.b16 %v334
        %v1356 = vunpack.c.l.b16 %v335
        %v1357 = vunpack.c.h.b16 %v335
        %v1358 = vunpack.c.l.b16 %v336
        %v1359 = vunpack.c.h.b16 %v336
        %v1360 = vunpack.c.l.b16 %v337
        %v1361 = vunpack.c.h.b16 %v337
        %v1362 = vunpack.c.l.b16 %v338
        %v1363 = vunpack.c.h.b16 %v338
        %v1364 = vunpack.c.l.b16 %v339
        %v1365 = vunpack.c.h.b16 %v339
        %v1366 = vunpack.c.l.b16 %v340
        %v1367 = vunpack.c.h.b16 %v340
        %v1368 = vunpack.c.l.b16 %v341
        %v1369 = vunpack.c.h.b16 %v341
        %v1370 = vunpack.c.l.b16 %v342
        %v1371 = vunpack.c.h.b16 %v342
        %v1372 = vunpack.c.l.b16 %v343
        %v1373 = vunpack.c.h.b16 %v343
        %v1374 = vunpack.c.l.b16 %v344
        %v1375 = vunpack.c.h.b16 %v344
        %v1376 = vunpack.c.l.b16 %v345
        %v1377 = vunpack.c.h.b16 %v345
        %v1378 = vunpack.c.l.b16 %v346
        %v1379 = vunpack.c.h.b16 %v346
        %v1380 = vunpack.c.l.b16 %v347
        %v1381 = vunpack.c.h.b16 %v347
        %v1382 = vunpack.c.l.b16 %v348
        %v1383 = vunpack.c.h.b16 %v348
        %v1384 = vunpack.c.l.b16 %v349
        %v1385 = vunpack.c.h.b16 %v349
        %v1386 = vunpack.c.l.b16 %v350
        %v1387 = vunpack.c.h.b16 %v350
        %v1388 = vunpack.c.l.b16 %v351
        %v1389 = vunpack.c.h.b16 %v351
        %v1390 = vunpack.c.l.b16 %v352
        %v1391 = vunpack.c.h.b16 %v352
        %v1392 = vunpack.c.l.b16 %v353
        %v1393 = vunpack.c.h.b16 %v353
        %v1394 = vunpack.c.l.b16 %v354
        %v1395 = vunpack.c.h.b16 %v354
        %v1396 = vunpack.c.l.b16 %v355
        %v1397 = vunpack.c.h.b16 %v355
        %v1398 = vunpack.c.l.b16 %v356
        %v1399 = vunpack.c.h.b16 %v356
        %v1400 = vunpack.c.l.b16 %v357
        %v1401 = vunpack.c.h.b16 %v357
        %v1402 = vunpack.c.l.b16 %v358
        %v1403 = vunpack.c.h.b16 %v358
        %v1404 = vunpack.c.l.b16 %v359
        %v1405 = vunpack.c.h.b16 %v359
        %v1406 = vunpack.c.l.b16 %v360
        %v1407 = vunpack.c.h.b16 %v360
        %v1408 = vunpack.c.l.b16 %v361
        %v1409 = vunpack.c.h.b16 %v361
        %v1410 = vunpack.c.l.b16 %v362
        %v1411 = vunpack.c.h.b16 %v362
        %v1412 = vunpack.c.l.b16 %v363
        %v1413 = vunpack.c.h.b16 %v363
        %v1414 = vpack.c.b16 %v1384, %v1354
        %v1415 = vpack.c.b16 %v1385, %v1355
        %v1416 = vpack.c.b16 %v1386, %v1356
        %v1417 = vpack.c.b16 %v1387, %v1357
        %v1418 = vpack.c.b16 %v1388, %v1358
        %v1419 = vpack.c.b16 %v1389, %v1359
        %v1420 = vpack.c.b16 %v1390, %v1360
        %v1421 = vpack.c.b16 %v1391, %v1361
        %v1422 = vpack.c.b16 %v1392, %v1362
        %v1423 = vpack.c.b16 %v1393, %v1363
        %v1424 = vpack.c.b16 %v1394, %v1364
        %v1425 = vpack.c.b16 %v1395, %v1365
        %v1426 = vpack.c.b16 %v1396, %v1366
        %v1427 = vpack.c.b16 %v1397, %v1367
        %v1428 = vpack.c.b16 %v1398, %v1368
        %v1429 = vpack.c.b16 %v1399, %v1369
        %v1430 = vpack.c.b16 %v1400, %v1370
        %v1431 = vpack.c.b16 %v1401, %v1371
        %v1432 = vpack.c.b16 %v1402, %v1372
        %v1433 = vpack.c.b16 %v1403, %v1373
        %v1434 = vpack.c.b16 %v1404, %v1374
        %v1435 = vpack.c.b16 %v1405, %v1375
        %v1436 = vpack.c.b16 %v1406, %v1376
        %v1437 = vpack.c.b16 %v1407, %v1377
        %v1438 = vpack.c.b16 %v1408, %v1378
        %v1439 = vpack.c.b16 %v1409, %v1379
        %v1440 = vpack.c.b16 %v1410, %v1380
        %v1441 = vpack.c.b16 %v1411, %v1381
        %v1442 = vpack.c.b16 %v1412, %v1382
        %v1443 = vpack.c.b16 %v1413, %v1383
        %v2434 = vunpack.c.l.b16 %v364
        %v2435 = vunpack.c.h.b16 %v364
        %v2436 = vunpack.c.l.b16 %v365
        %v2437 = vunpack.c.h.b16 %v365
        %v2438 = vunpack.c.l.b16 %v366
        %v2439 = vunpack.c.h.b16 %v366
        %v2440 = vunpack.c.l.b16 %v367
        %v2441 = vunpack.c.h.b16 %v367
        %v2442 = vunpack.c.l.b16 %v368
        %v2443 = vunpack.c.h.b16 %v368
        %v2444 = vunpack.c.l.b16 %v369
        %v2445 = vunpack.c.h.b16 %v369
        %v2446 = vunpack.c.l.b16 %v370
        %v2447 = vunpack.c.h.b16 %v370
        %v2448 = vunpack.c.l.b16 %v371
        %v2449 = vunpack.c.h.b16 %v371
        %v2450 = vunpack.c.l.b16 %v372
        %v2451 = vunpack.c.h.b16 %v372
        %v2452 = vunpack.c.l.b16 %v373
        %v2453 = vunpack.c.h.b16 %v373
        %v2454 = vunpack.c.l.b16 %v374
        %v2455 = vunpack.c.h.b16 %v374
        %v2456 = vunpack.c.l.b16 %v375
        %v2457 = vunpack.c.h.b16 %v375
        %v2458 = vunpack.c.l.b16 %v376
        %v2459 = vunpack.c.h.b16 %v376
        %v2460 = vunpack.c.l.b16 %v377
        %v2461 = vunpack.c.h.b16 %v377
        %v2462 = vunpack.c.l.b16 %v378
        %v2463 = vunpack.c.h.b16 %v378
        %v2464 = vunpack.c.l.b16 %v379
        %v2465 = vunpack.c.h.b16 %v379
        %v2466 = vunpack.c.l.b16 %v380
        %v2467 = vunpack.c.h.b16 %v380
        %v2468 = vunpack.c.l.b16 %v381
        %v2469 = vunpack.c.h.b16 %v381
        %v2470 = vunpack.c.l.b16 %v382
        %v2471 = vunpack.c.h.b16 %v382
        %v2472 = vunpack.c.l.b16 %v383
        %v2473 = vunpack.c.h.b16 %v383
        %v2474 = vunpack.c.l.b16 %v384
        %v2475 = vunpack.c.h.b16 %v384
        %v2476 = vunpack.c.l.b16 %v385
        %v2477 = vunpack.c.h.b16 %v385
        %v2478 = vunpack.c.l.b16 %v386
        %v2479 = vunpack.c.h.b16 %v386
        %v2480 = vunpack.c.l.b16 %v387
        %v2481 = vunpack.c.h.b16 %v387
        %v2482 = vunpack.c.l.b16 %v388
        %v2483 = vunpack.c.h.b16 %v388
        %v2484 = vunpack.c.l.b16 %v389
        %v2485 = vunpack.c.h.b16 %v389
        %v2486 = vunpack.c.l.b16 %v390
        %v2487 = vunpack.c.h.b16 %v390
        %v2488 = vunpack.c.l.b16 %v391
        %v2489 = vunpack.c.h.b16 %v391
        %v2490 = vunpack.c.l.b16 %v392
        %v2491 = vunpack.c.h.b16 %v392
        %v2492 = vunpack.c.l.b16 %v393
        %v2493 = vunpack.c.h.b16 %v393
        %v2494 = vunpack.c.l.b16 %v394
        %v2495 = vunpack.c.h.b16 %v394
        %v2496 = vunpack.c.l.b16 %v395
        %v2497 = vunpack.c.h.b16 %v395
        %v2498 = vunpack.c.l.b16 %v396
        %v2499 = vunpack.c.h.b16 %v396
        %v2500 = vunpack.c.l.b16 %v397
        %v2501 = vunpack.c.h.b16 %v397
        %v2502 = vunpack.c.l.b16 %v398
        %v2503 = vunpack.c.h.b16 %v398
        %v2504 = vunpack.c.l.b16 %v399
        %v2505 = vunpack.c.h.b16 %v399
        %v2506 = vunpack.c.l.b16 %v400
        %v2507 = vunpack.c.h.b16 %v400
        %v2508 = vunpack.c.l.b16 %v401
        %v2509 = vunpack.c.h.b16 %v401
        %v2510 = vunpack.c.l.b16 %v402
        %v2511 = vunpack.c.h.b16 %v402
        %v2512 = vunpack.c.l.b16 %v403
        %v2513 = vunpack.c.h.b16 %v403
        %v2514 = vunpack.c.l.b16 %v404
        %v2515 = vunpack.c.h.b16 %v404
        %v2516 = vunpack.c.l.b16 %v405
        %v2517 = vunpack.c.h.b16 %v405
        %v2518 = vunpack.c.l.b16 %v406
        %v2519 = vunpack.c.h.b16 %v406
        %v2520 = vunpack.c.l.b16 %v407
        %v2521 = vunpack.c.h.b16 %v407
        %v2522 = vunpack.c.l.b16 %v408
        %v2523 = vunpack.c.h.b16 %v408
        %v2524 = vunpack.c.l.b16 %v409
        %v2525 = vunpack.c.h.b16 %v409
        %v2526 = vunpack.c.l.b16 %v410
        %v2527 = vunpack.c.h.b16 %v410
        %v2528 = vunpack.c.l.b16 %v411
        %v2529 = vunpack.c.h.b16 %v411
        %v2530 = vunpack.c.l.b16 %v412
        %v2531 = vunpack.c.h.b16 %v412
        %v2532 = vunpack.c.l.b16 %v413
        %v2533 = vunpack.c.h.b16 %v413
        %v2534 = vunpack.c.l.b16 %v414
        %v2535 = vunpack.c.h.b16 %v414
        %v2536 = vunpack.c.l.b16 %v415
        %v2537 = vunpack.c.h.b16 %v415
        %v2538 = vunpack.c.l.b16 %v416
        %v2539 = vunpack.c.h.b16 %v416
        %v2540 = vunpack.c.l.b16 %v417
        %v2541 = vunpack.c.h.b16 %v417
        %v2542 = vunpack.c.l.b16 %v418
        %v2543 = vunpack.c.h.b16 %v418
        %v2544 = vunpack.c.l.b16 %v419
        %v2545 = vunpack.c.h.b16 %v419
        %v2546 = vunpack.c.l.b16 %v420
        %v2547 = vunpack.c.h.b16 %v420
        %v2548 = vunpack.c.l.b16 %v421
        %v2549 = vunpack.c.h.b16 %v421
        %v2550 = vunpack.c.l.b16 %v422
        %v2551 = vunpack.c.h.b16 %v422
        %v2552 = vunpack.c.l.b16 %v423
        %v2553 = vunpack.c.h.b16 %v423
        %v2554 = vunpack.c.l.b16 %v424
        %v2555 = vunpack.c.h.b16 %v424
        %v2556 = vunpack.c.l.b16 %v425
        %v2557 = vunpack.c.h.b16 %v425
        %v2558 = vunpack.c.l.b16 %v426
        %v2559 = vunpack.c.h.b16 %v426
        %v2560 = vunpack.c.l.b16 %v427
        %v2561 = vunpack.c.h.b16 %v427
        %v2562 = vunpack.c.l.b16 %v428
        %v2563 = vunpack.c.h.b16 %v428
        %v2564 = vunpack.c.l.b16 %v429
        %v2565 = vunpack.c.h.b16 %v429
        %v2566 = vunpack.c.l.b16 %v430
        %v2567 = vunpack.c.h.b16 %v430
        %v2568 = vunpack.c.l.b16 %v431
        %v2569 = vunpack.c.h.b16 %v431
        %v2570 = vunpack.c.l.b16 %v432
        %v2571 = vunpack.c.h.b16 %v432
        %v2572 = vunpack.c.l.b16 %v433
        %v2573 = vunpack.c.h.b16 %v433
        %v2574 = vunpack.c.l.b16 %v434
        %v2575 = vunpack.c.h.b16 %v434
        %v2576 = vunpack.c.l.b16 %v435
        %v2577 = vunpack.c.h.b16 %v435
        %v2578 = vunpack.c.l.b16 %v436
        %v2579 = vunpack.c.h.b16 %v436
        %v2580 = vunpack.c.l.b16 %v437
        %v2581 = vunpack.c.h.b16 %v437
        %v2582 = vunpack.c.l.b16 %v438
        %v2583 = vunpack.c.h.b16 %v438
        %v2584 = vunpack.c.l.b16 %v439
        %v2585 = vunpack.c.h.b16 %v439
        %v2586 = vunpack.c.l.b16 %v440
        %v2587 = vunpack.c.h.b16 %v440
        %v2588 = vunpack.c.l.b16 %v441
        %v2589 = vunpack.c.h.b16 %v441
        %v2590 = vunpack.c.l.b16 %v442
        %v2591 = vunpack.c.h.b16 %v442
        %v2592 = vunpack.c.l.b16 %v443
        %v2593 = vunpack.c.h.b16 %v443
        %v2594 = vunpack.c.l.b16 %v444
        %v2595 = vunpack.c.h.b16 %v444
        %v2596 = vunpack.c.l.b16 %v445
        %v2597 = vunpack.c.h.b16 %v445
        %v2598 = vunpack.c.l.b16 %v446
        %v2599 = vunpack.c.h.b16 %v446
        %v2600 = vunpack.c.l.b16 %v447
        %v2601 = vunpack.c.h.b16 %v447
        %v2602 = vunpack.c.l.b16 %v448
        %v2603 = vunpack.c.h.b16 %v448
        %v2604 = vunpack.c.l.b16 %v449
        %v2605 = vunpack.c.h.b16 %v449
        %v2606 = vunpack.c.l.b16 %v450
        %v2607 = vunpack.c.h.b16 %v450
        %v2608 = vunpack.c.l.b16 %v451
        %v2609 = vunpack.c.h.b16 %v451
        %v2610 = vunpack.c.l.b16 %v452
        %v2611 = vunpack.c.h.b16 %v452
        %v2612 = vunpack.c.l.b16 %v453
        %v2613 = vunpack.c.h.b16 %v453
        %v2614 = vunpack.c.l.b16 %v454
        %v2615 = vunpack.c.h.b16 %v454
        %v2616 = vunpack.c.l.b16 %v455
        %v2617 = vunpack.c.h.b16 %v455
        %v2618 = vunpack.c.l.b16 %v456
        %v2619 = vunpack.c.h.b16 %v456
        %v2620 = vunpack.c.l.b16 %v457
        %v2621 = vunpack.c.h.b16 %v457
        %v2622 = vunpack.c.l.b16 %v458
        %v2623 = vunpack.c.h.b16 %v458
        %v2624 = vunpack.c.l.b16 %v459
        %v2625 = vunpack.c.h.b16 %v459
        %v2626 = vunpack.c.l.b16 %v460
        %v2627 = vunpack.c.h.b16 %v460
        %v2628 = vunpack.c.l.b16 %v461
        %v2629 = vunpack.c.h.b16 %v461
        %v2630 = vunpack.c.l.b16 %v462
        %v2631 = vunpack.c.h.b16 %v462
        %v2632 = vunpack.c.l.b16 %v463
        %v2633 = vunpack.c.h.b16 %v463
        %v2634 = vunpack.c.l.b16 %v464
        %v2635 = vunpack.c.h.b16 %v464
        %v2636 = vunpack.c.l.b16 %v465
        %v2637 = vunpack.c.h.b16 %v465
        %v2638 = vunpack.c.l.b16 %v466
        %v2639 = vunpack.c.h.b16 %v466
        %v2640 = vunpack.c.l.b16 %v467
        %v2641 = vunpack.c.h.b16 %v467
        %v2642 = vunpack.c.l.b16 %v468
        %v2643 = vunpack.c.h.b16 %v468
        %v2644 = vunpack.c.l.b16 %v469
        %v2645 = vunpack.c.h.b16 %v469
        %v2646 = vunpack.c.l.b16 %v470
        %v2647 = vunpack.c.h.b16 %v470
        %v2648 = vunpack.c.l.b16 %v471
        %v2649 = vunpack.c.h.b16 %v471
        %v2650 = vunpack.c.l.b16 %v472
        %v2651 = vunpack.c.h.b16 %v472
        %v2652 = vunpack.c.l.b16 %v473
        %v2653 = vunpack.c.h.b16 %v473
        %v2654 = vunpack.c.l.b16 %v474
        %v2655 = vunpack.c.h.b16 %v474
        %v2656 = vunpack.c.l.b16 %v475
        %v2657 = vunpack.c.h.b16 %v475
        %v2658 = vunpack.c.l.b16 %v476
        %v2659 = vunpack.c.h.b16 %v476
        %v2660 = vunpack.c.l.b16 %v477
        %v2661 = vunpack.c.h.b16 %v477
        %v2662 = vunpack.c.l.b16 %v478
        %v2663 = vunpack.c.h.b16 %v478
        %v2664 = vunpack.c.l.b16 %v479
        %v2665 = vunpack.c.h.b16 %v479
        %v2666 = vunpack.c.l.b16 %v480
        %v2667 = vunpack.c.h.b16 %v480
        %v2668 = vunpack.c.l.b16 %v481
        %v2669 = vunpack.c.h.b16 %v481
        %v2670 = vunpack.c.l.b16 %v482
        %v2671 = vunpack.c.h.b16 %v482
        %v2672 = vunpack.c.l.b16 %v483
        %v2673 = vunpack.c.h.b16 %v483
        %v2674 = vunpack.c.l.b16 %v484
        %v2675 = vunpack.c.h.b16 %v484
        %v2676 = vunpack.c.l.b16 %v485
        %v2677 = vunpack.c.h.b16 %v485
        %v2678 = vunpack.c.l.b16 %v486
        %v2679 = vunpack.c.h.b16 %v486
        %v2680 = vunpack.c.l.b16 %v487
        %v2681 = vunpack.c.h.b16 %v487
        %v2682 = vunpack.c.l.b16 %v488
        %v2683 = vunpack.c.h.b16 %v488
        %v2684 = vunpack.c.l.b16 %v489
        %v2685 = vunpack.c.h.b16 %v489
        %v2686 = vunpack.c.l.b16 %v490
        %v2687 = vunpack.c.h.b16 %v490
        %v2688 = vunpack.c.l.b16 %v491
        %v2689 = vunpack.c.h.b16 %v491
        %v2690 = vunpack.c.l.b16 %v492
        %v2691 = vunpack.c.h.b16 %v492
        %v2692 = vunpack.c.l.b16 %v493
        %v2693 = vunpack.c.h.b16 %v493
        %v2694 = vunpack.c.l.b16 %v494
        %v2695 = vunpack.c.h.b16 %v494
        %v2696 = vunpack.c.l.b16 %v495
        %v2697 = vunpack.c.h.b16 %v495
        %v2698 = vunpack.c.l.b16 %v496
        %v2699 = vunpack.c.h.b16 %v496
        %v2700 = vunpack.c.l.b16 %v497
        %v2701 = vunpack.c.h.b16 %v497
        %v2702 = vunpack.c.l.b16 %v498
        %v2703 = vunpack.c.h.b16 %v498
        %v2704 = vunpack.c.l.b16 %v499
        %v2705 = vunpack.c.h.b16 %v499
        %v2706 = vunpack.c.l.b16 %v500
        %v2707 = vunpack.c.h.b16 %v500
        %v2708 = vunpack.c.l.b16 %v501
        %v2709 = vunpack.c.h.b16 %v501
        %v2710 = vunpack.c.l.b16 %v502
        %v2711 = vunpack.c.h.b16 %v502
        %v2712 = vunpack.c.l.b16 %v503
        %v2713 = vunpack.c.h.b16 %v503
        %v2714 = vunpack.c.l.b16 %v504
        %v2715 = vunpack.c.h.b16 %v504
        %v2716 = vunpack.c.l.b16 %v505
        %v2717 = vunpack.c.h.b16 %v505
        %v2718 = vunpack.c.l.b16 %v506
        %v2719 = vunpack.c.h.b16 %v506
        %v2720 = vunpack.c.l.b16 %v507
        %v2721 = vunpack.c.h.b16 %v507
        %v2722 = vunpack.c.l.b16 %v508
        %v2723 = vunpack.c.h.b16 %v508
        %v2724 = vunpack.c.l.b16 %v509
        %v2725 = vunpack.c.h.b16 %v509
        %v2726 = vunpack.c.l.b16 %v510
        %v2727 = vunpack.c.h.b16 %v510
        %v2728 = vunpack.c.l.b16 %v511
        %v2729 = vunpack.c.h.b16 %v511
        %v2730 = vunpack.c.l.b16 %v512
        %v2731 = vunpack.c.h.b16 %v512
        %v2732 = vunpack.c.l.b16 %v513
        %v2733 = vunpack.c.h.b16 %v513
        %v2734 = vunpack.c.l.b16 %v514
        %v2735 = vunpack.c.h.b16 %v514
        %v2736 = vunpack.c.l.b16 %v515
        %v2737 = vunpack.c.h.b16 %v515
        %v2738 = vunpack.c.l.b16 %v516
        %v2739 = vunpack.c.h.b16 %v516
        %v2740 = vunpack.c.l.b16 %v517
        %v2741 = vunpack.c.h.b16 %v517
        %v2742 = vunpack.c.l.b16 %v518
        %v2743 = vunpack.c.h.b16 %v518
        %v2744 = vunpack.c.l.b16 %v519
        %v2745 = vunpack.c.h.b16 %v519
        %v2746 = vunpack.c.l.b16 %v520
        %v2747 = vunpack.c.h.b16 %v520
        %v2748 = vunpack.c.l.b16 %v521
        %v2749 = vunpack.c.h.b16 %v521
        %v2750 = vunpack.c.l.b16 %v522
        %v2751 = vunpack.c.h.b16 %v522
        %v2752 = vunpack.c.l.b16 %v523
        %v2753 = vunpack.c.h.b16 %v523
        %v2754 = vunpack.c.l.b16 %v524
        %v2755 = vunpack.c.h.b16 %v524
        %v2756 = vunpack.c.l.b16 %v525
        %v2757 = vunpack.c.h.b16 %v525
        %v2758 = vunpack.c.l.b16 %v526
        %v2759 = vunpack.c.h.b16 %v526
        %v2760 = vunpack.c.l.b16 %v527
        %v2761 = vunpack.c.h.b16 %v527
        %v2762 = vunpack.c.l.b16 %v528
        %v2763 = vunpack.c.h.b16 %v528
        %v2764 = vunpack.c.l.b16 %v529
        %v2765 = vunpack.c.h.b16 %v529
        %v2766 = vunpack.c.l.b16 %v530
        %v2767 = vunpack.c.h.b16 %v530
        %v2768 = vunpack.c.l.b16 %v531
        %v2769 = vunpack.c.h.b16 %v531
        %v2770 = vunpack.c.l.b16 %v532
        %v2771 = vunpack.c.h.b16 %v532
        %v2772 = vunpack.c.l.b16 %v533
        %v2773 = vunpack.c.h.b16 %v533
        %v2774 = vunpack.c.l.b16 %v534
        %v2775 = vunpack.c.h.b16 %v534
        %v2776 = vunpack.c.l.b16 %v535
        %v2777 = vunpack.c.h.b16 %v535
        %v2778 = vunpack.c.l.b16 %v536
        %v2779 = vunpack.c.h.b16 %v536
        %v2780 = vunpack.c.l.b16 %v537
        %v2781 = vunpack.c.h.b16 %v537
        %v2782 = vunpack.c.l.b16 %v538
        %v2783 = vunpack.c.h.b16 %v538
        %v2784 = vunpack.c.l.b16 %v539
        %v2785 = vunpack.c.h.b16 %v539
        %v2786 = vunpack.c.l.b16 %v540
        %v2787 = vunpack.c.h.b16 %v540
        %v2788 = vunpack.c.l.b16 %v541
        %v2789 = vunpack.c.h.b16 %v541
        %v2790 = vunpack.c.l.b16 %v542
        %v2791 = vunpack.c.h.b16 %v542
        %v2792 = vunpack.c.l.b16 %v543
        %v2793 = vunpack.c.h.b16 %v543
        %v2794 = vunpack.c.l.b16 %v544
        %v2795 = vunpack.c.h.b16 %v544
        %v2796 = vunpack.c.l.b16 %v545
        %v2797 = vunpack.c.h.b16 %v545
        %v2798 = vunpack.c.l.b16 %v546
        %v2799 = vunpack.c.h.b16 %v546
        %v2800 = vunpack.c.l.b16 %v547
        %v2801 = vunpack.c.h.b16 %v547
        %v2802 = vunpack.c.l.b16 %v548
        %v2803 = vunpack.c.h.b16 %v548
        %v2804 = vunpack.c.l.b16 %v549
        %v2805 = vunpack.c.h.b16 %v549
        %v2806 = vunpack.c.l.b16 %v550
        %v2807 = vunpack.c.h.b16 %v550
        %v2808 = vunpack.c.l.b16 %v551
        %v2809 = vunpack.c.h.b16 %v551
        %v2810 = vunpack.c.l.b16 %v552
        %v2811 = vunpack.c.h.b16 %v552
        %v2812 = vunpack.c.l.b16 %v553
        %v2813 = vunpack.c.h.b16 %v553
        %v2814 = vunpack.c.l.b16 %v554
        %v2815 = vunpack.c.h.b16 %v554
        %v2816 = vunpack.c.l.b16 %v555
        %v2817 = vunpack.c.h.b16 %v555
        %v2818 = vunpack.c.l.b16 %v556
        %v2819 = vunpack.c.h.b16 %v556
        %v2820 = vunpack.c.l.b16 %v557
        %v2821 = vunpack.c.h.b16 %v557
        %v2822 = vunpack.c.l.b16 %v558
        %v2823 = vunpack.c.h.b16 %v558
        %v2824 = vunpack.c.l.b16 %v559
        %v2825 = vunpack.c.h.b16 %v559
        %v2826 = vunpack.c.l.b16 %v560
        %v2827 = vunpack.c.h.b16 %v560
        %v2828 = vunpack.c.l.b16 %v561
        %v2829 = vunpack.c.h.b16 %v561
        %v2830 = vunpack.c.l.b16 %v562
        %v2831 = vunpack.c.h.b16 %v562
        %v2832 = vunpack.c.l.b16 %v563
        %v2833 = vunpack.c.h.b16 %v563
        %v2834 = vunpack.c.l.b16 %v564
        %v2835 = vunpack.c.h.b16 %v564
        %v2836 = vunpack.c.l.b16 %v565
        %v2837 = vunpack.c.h.b16 %v565
        %v2838 = vunpack.c.l.b16 %v566
        %v2839 = vunpack.c.h.b16 %v566
        %v2840 = vunpack.c.l.b16 %v567
        %v2841 = vunpack.c.h.b16 %v567
        %v2842 = vunpack.c.l.b16 %v568
        %v2843 = vunpack.c.h.b16 %v568
        %v2844 = vunpack.c.l.b16 %v569
        %v2845 = vunpack.c.h.b16 %v569
        %v2846 = vunpack.c.l.b16 %v570
        %v2847 = vunpack.c.h.b16 %v570
        %v2848 = vunpack.c.l.b16 %v571
        %v2849 = vunpack.c.h.b16 %v571
        %v2850 = vunpack.c.l.b16 %v572
        %v2851 = vunpack.c.h.b16 %v572
        %v2852 = vunpack.c.l.b16 %v573
        %v2853 = vunpack.c.h.b16 %v573
        %v2854 = vunpack.c.l.b16 %v574
        %v2855 = vunpack.c.h.b16 %v574
        %v2856 = vunpack.c.l.b16 %v575
        %v2857 = vunpack.c.h.b16 %v575
        %v2858 = vunpack.c.l.b16 %v576
        %v2859 = vunpack.c.h.b16 %v576
        %v2860 = vunpack.c.l.b16 %v577
        %v2861 = vunpack.c.h.b16 %v577
        %v2862 = vunpack.c.l.b16 %v578
        %v2863 = vunpack.c.h.b16 %v578
        %v2864 = vunpack.c.l.b16 %v579
        %v2865 = vunpack.c.h.b16 %v579
        %v2866 = vunpack.c.l.b16 %v580
        %v2867 = vunpack.c.h.b16 %v580
        %v2868 = vunpack.c.l.b16 %v581
        %v2869 = vunpack.c.h.b16 %v581
        %v2870 = vunpack.c.l.b16 %v582
        %v2871 = vunpack.c.h.b16 %v582
        %v2872 = vunpack.c.l.b16 %v583
        %v2873 = vunpack.c.h.b16 %v583
        %v2874 = vunpack.c.l.b16 %v584
        %v2875 = vunpack.c.h.b16 %v584
        %v2876 = vunpack.c.l.b16 %v585
        %v2877 = vunpack.c.h.b16 %v585
        %v2878 = vunpack.c.l.b16 %v586
        %v2879 = vunpack.c.h.b16 %v586
        %v2880 = vunpack.c.l.b16 %v587
        %v2881 = vunpack.c.h.b16 %v587
        %v2882 = vunpack.c.l.b16 %v588
        %v2883 = vunpack.c.h.b16 %v588
        %v2884 = vunpack.c.l.b16 %v589
        %v2885 = vunpack.c.h.b16 %v589
        %v2886 = vunpack.c.l.b16 %v590
        %v2887 = vunpack.c.h.b16 %v590
        %v2888 = vunpack.c.l.b16 %v591
        %v2889 = vunpack.c.h.b16 %v591
        %v2890 = vunpack.c.l.b16 %v592
        %v2891 = vunpack.c.h.b16 %v592
        %v2892 = vunpack.c.l.b16 %v593
        %v2893 = vunpack.c.h.b16 %v593
        %v2894 = vunpack.c.l.b16 %v594
        %v2895 = vunpack.c.h.b16 %v594
        %v2896 = vunpack.c.l.b16 %v595
        %v2897 = vunpack.c.h.b16 %v595
        %v2898 = vunpack.c.l.b16 %v596
        %v2899 = vunpack.c.h.b16 %v596
        %v2900 = vunpack.c.l.b16 %v597
        %v2901 = vunpack.c.h.b16 %v597
        %v2902 = vunpack.c.l.b16 %v598
        %v2903 = vunpack.c.h.b16 %v598
        %v2904 = vunpack.c.l.b16 %v599
        %v2905 = vunpack.c.h.b16 %v599
        %v2906 = vunpack.c.l.b16 %v600
        %v2907 = vunpack.c.h.b16 %v600
        %v2908 = vunpack.c.l.b16 %v601
        %v2909 = vunpack.c.h.b16 %v601
        %v2910 = vunpack.c.l.b16 %v602
        %v2911 = vunpack.c.h.b16 %v602
        %v2912 = vunpack.c.l.b16 %v603
        %v2913 = vunpack.c.h.b16 %v603
        %v2914 = vunpack.c.l.b16 %v604
        %v2915 = vunpack.c.h.b16 %v604
        %v2916 = vunpack.c.l.b16 %v605
        %v2917 = vunpack.c.h.b16 %v605
        %v2918 = vunpack.c.l.b16 %v606
        %v2919 = vunpack.c.h.b16 %v606
        %v2920 = vunpack.c.l.b16 %v607
        %v2921 = vunpack.c.h.b16 %v607
        %v2922 = vunpack.c.l.b16 %v608
        %v2923 = vunpack.c.h.b16 %v608
        %v2924 = vunpack.c.l.b16 %v609
        %v2925 = vunpack.c.h.b16 %v609
        %v2926 = vunpack.c.l.b16 %v610
        %v2927 = vunpack.c.h.b16 %v610
        %v2928 = vunpack.c.l.b16 %v611
        %v2929 = vunpack.c.h.b16 %v611
        %v2930 = vunpack.c.l.b16 %v612
        %v2931 = vunpack.c.h.b16 %v612
        %v2932 = vunpack.c.l.b16 %v613
        %v2933 = vunpack.c.h.b16 %v613
        %v2934 = vunpack.c.l.b16 %v614
        %v2935 = vunpack.c.h.b16 %v614
        %v2936 = vunpack.c.l.b16 %v615
        %v2937 = vunpack.c.h.b16 %v615
        %v2938 = vunpack.c.l.b16 %v616
        %v2939 = vunpack.c.h.b16 %v616
        %v2940 = vunpack.c.l.b16 %v617
        %v2941 = vunpack.c.h.b16 %v617
        %v2942 = vunpack.c.l.b16 %v618
        %v2943 = vunpack.c.h.b16 %v618
        %v2944 = vunpack.c.l.b16 %v619
        %v2945 = vunpack.c.h.b16 %v619
        %v2946 = vunpack.c.l.b16 %v620
        %v2947 = vunpack.c.h.b16 %v620
        %v2948 = vunpack.c.l.b16 %v621
        %v2949 = vunpack.c.h.b16 %v621
        %v2950 = vunpack.c.l.b16 %v622
        %v2951 = vunpack.c.h.b16 %v622
        %v2952 = vunpack.c.l.b16 %v623
        %v2953 = vunpack.c.h.b16 %v623
        %v2954 = vunpack.c.l.b16 %v624
        %v2955 = vunpack.c.h.b16 %v624
        %v2956 = vunpack.c.l.b16 %v625
        %v2957 = vunpack.c.h.b16 %v625
        %v2958 = vunpack.c.l.b16 %v626
        %v2959 = vunpack.c.h.b16 %v626
        %v2960 = vunpack.c.l.b16 %v627
        %v2961 = vunpack.c.h.b16 %v627
        %v2962 = vunpack.c.l.b16 %v628
        %v2963 = vunpack.c.h.b16 %v628
        %v2964 = vunpack.c.l.b16 %v629
        %v2965 = vunpack.c.h.b16 %v629
        %v2966 = vunpack.c.l.b16 %v630
        %v2967 = vunpack.c.h.b16 %v630
        %v2968 = vunpack.c.l.b16 %v631
        %v2969 = vunpack.c.h.b16 %v631
        %v2970 = vunpack.c.l.b16 %v632
        %v2971 = vunpack.c.h.b16 %v632
        %v2972 = vunpack.c.l.b16 %v633
        %v2973 = vunpack.c.h.b16 %v633
        %v2974 = vunpack.c.l.b16 %v634
        %v2975 = vunpack.c.h.b16 %v634
        %v2976 = vunpack.c.l.b16 %v635
        %v2977 = vunpack.c.h.b16 %v635
        %v2978 = vunpack.c.l.b16 %v636
        %v2979 = vunpack.c.h.b16 %v636
        %v2980 = vunpack.c.l.b16 %v637
        %v2981 = vunpack.c.h.b16 %v637
        %v2982 = vunpack.c.l.b16 %v638
        %v2983 = vunpack.c.h.b16 %v638
        %v2984 = vunpack.c.l.b16 %v639
        %v2985 = vunpack.c.h.b16 %v639
        %v2986 = vunpack.c.l.b16 %v640
        %v2987 = vunpack.c.h.b16 %v640
        %v2988 = vunpack.c.l.b16 %v641
        %v2989 = vunpack.c.h.b16 %v641
        %v2990 = vunpack.c.l.b16 %v642
        %v2991 = vunpack.c.h.b16 %v642
        %v2992 = vunpack.c.l.b16 %v643
        %v2993 = vunpack.c.h.b16 %v643
        %v2994 = vunpack.c.l.b16 %v644
        %v2995 = vunpack.c.h.b16 %v644
        %v2996 = vunpack.c.l.b16 %v645
        %v2997 = vunpack.c.h.b16 %v645
        %v2998 = vunpack.c.l.b16 %v646
        %v2999 = vunpack.c.h.b16 %v646
        %v3000 = vunpack.c.l.b16 %v647
        %v3001 = vunpack.c.h.b16 %v647
        %v3002 = vunpack.c.l.b16 %v648
        %v3003 = vunpack.c.h.b16 %v648
        %v3004 = vunpack.c.l.b16 %v649
        %v3005 = vunpack.c.h.b16 %v649
        %v3006 = vunpack.c.l.b16 %v650
        %v3007 = vunpack.c.h.b16 %v650
        %v3008 = vunpack.c.l.b16 %v651
        %v3009 = vunpack.c.h.b16 %v651
        %v3010 = vunpack.c.l.b16 %v652
        %v3011 = vunpack.c.h.b16 %v652
        %v3012 = vunpack.c.l.b16 %v653
        %v3013 = vunpack.c.h.b16 %v653
        %v3014 = vunpack.c.l.b16 %v654
        %v3015 = vunpack.c.h.b16 %v654
        %v3016 = vunpack.c.l.b16 %v655
        %v3017 = vunpack.c.h.b16 %v655
        %v3018 = vunpack.c.l.b16 %v656
        %v3019 = vunpack.c.h.b16 %v656
        %v3020 = vunpack.c.l.b16 %v657
        %v3021 = vunpack.c.h.b16 %v657
        %v3022 = vunpack.c.l.b16 %v658
        %v3023 = vunpack.c.h.b16 %v658
        %v3024 = vunpack.c.l.b16 %v659
        %v3025 = vunpack.c.h.b16 %v659
        %v3026 = vunpack.c.l.b16 %v660
        %v3027 = vunpack.c.h.b16 %v660
        %v3028 = vunpack.c.l.b16 %v661
        %v3029 = vunpack.c.h.b16 %v661
        %v3030 = vunpack.c.l.b16 %v662
        %v3031 = vunpack.c.h.b16 %v662
        %v3032 = vunpack.c.l.b16 %v663
        %v3033 = vunpack.c.h.b16 %v663
        %v3034 = vunpack.c.l.b16 %v664
        %v3035 = vunpack.c.h.b16 %v664
        %v3036 = vunpack.c.l.b16 %v665
        %v3037 = vunpack.c.h.b16 %v665
        %v3038 = vunpack.c.l.b16 %v666
        %v3039 = vunpack.c.h.b16 %v666
        %v3040 = vunpack.c.l.b16 %v667
        %v3041 = vunpack.c.h.b16 %v667
        %v3042 = vunpack.c.l.b16 %v668
        %v3043 = vunpack.c.h.b16 %v668
        %v3044 = vunpack.c.l.b16 %v669
        %v3045 = vunpack.c.h.b16 %v669
        %v3046 = vunpack.c.l.b16 %v670
        %v3047 = vunpack.c.h.b16 %v670
        %v3048 = vunpack.c.l.b16 %v671
        %v3049 = vunpack.c.h.b16 %v671
        %v3050 = vunpack.c.l.b16 %v672
        %v3051 = vunpack.c.h.b16 %v672
        %v3052 = vunpack.c.l.b16 %v673
        %v3053 = vunpack.c.h.b16 %v673
        %v3054 = vunpack.c.l.b16 %v674
        %v3055 = vunpack.c.h.b16 %v674
        %v3056 = vunpack.c.l.b16 %v675
        %v3057 = vunpack.c.h.b16 %v675
        %v3058 = vunpack.c.l.b16 %v676
        %v3059 = vunpack.c.h.b16 %v676
        %v3060 = vunpack.c.l.b16 %v677
        %v3061 = vunpack.c.h.b16 %v677
        %v3062 = vunpack.c.l.b16 %v678
        %v3063 = vunpack.c.h.b16 %v678
        %v3064 = vunpack.c.l.b16 %v679
        %v3065 = vunpack.c.h.b16 %v679
        %v3066 = vunpack.c.l.b16 %v680
        %v3067 = vunpack.c.h.b16 %v680
        %v3068 = vunpack.c.l.b16 %v681
        %v3069 = vunpack.c.h.b16 %v681
        %v3070 = vunpack.c.l.b16 %v682
        %v3071 = vunpack.c.h.b16 %v682
        %v3072 = vunpack.c.l.b16 %v683
        %v3073 = vunpack.c.h.b16 %v683
        %v3074 = vunpack.c.l.b16 %v684
        %v3075 = vunpack.c.h.b16 %v684
        %v3076 = vunpack.c.l.b16 %v685
        %v3077 = vunpack.c.h.b16 %v685
        %v3078 = vunpack.c.l.b16 %v686
        %v3079 = vunpack.c.h.b16 %v686
        %v3080 = vunpack.c.l.b16 %v687
        %v3081 = vunpack.c.h.b16 %v687
        %v3082 = vunpack.c.l.b16 %v688
        %v3083 = vunpack.c.h.b16 %v688
        %v3084 = vunpack.c.l.b16 %v689
        %v3085 = vunpack.c.h.b16 %v689
        %v3086 = vunpack.c.l.b16 %v690
        %v3087 = vunpack.c.h.b16 %v690
        %v3088 = vunpack.c.l.b16 %v691
        %v3089 = vunpack.c.h.b16 %v691
        %v3090 = vunpack.c.l.b16 %v692
        %v3091 = vunpack.c.h.b16 %v692
        %v3092 = vunpack.c.l.b16 %v693
        %v3093 = vunpack.c.h.b16 %v693
        %v3094 = vunpack.c.l.b16 %v694
        %v3095 = vunpack.c.h.b16 %v694
        %v3096 = vunpack.c.l.b16 %v695
        %v3097 = vunpack.c.h.b16 %v695
        %v3098 = vunpack.c.l.b16 %v696
        %v3099 = vunpack.c.h.b16 %v696
        %v3100 = vunpack.c.l.b16 %v697
        %v3101 = vunpack.c.h.b16 %v697
        %v3102 = vunpack.c.l.b16 %v698
        %v3103 = vunpack.c.h.b16 %v698
        %v3104 = vunpack.c.l.b16 %v699
        %v3105 = vunpack.c.h.b16 %v699
        %v3106 = vunpack.c.l.b16 %v700
        %v3107 = vunpack.c.h.b16 %v700
        %v3108 = vunpack.c.l.b16 %v701
        %v3109 = vunpack.c.h.b16 %v701
        %v3110 = vunpack.c.l.b16 %v702
        %v3111 = vunpack.c.h.b16 %v702
        %v3112 = vunpack.c.l.b16 %v703
        %v3113 = vunpack.c.h.b16 %v703
        %v3114 = vunpack.c.l.b16 %v704
        %v3115 = vunpack.c.h.b16 %v704
        %v3116 = vunpack.c.l.b16 %v705
        %v3117 = vunpack.c.h.b16 %v705
        %v3118 = vunpack.c.l.b16 %v706
        %v3119 = vunpack.c.h.b16 %v706
        %v3120 = vunpack.c.l.b16 %v707
        %v3121 = vunpack.c.h.b16 %v707
        %v3122 = vunpack.c.l.b16 %v708
        %v3123 = vunpack.c.h.b16 %v708
        %v3124 = vunpack.c.l.b16 %v709
        %v3125 = vunpack.c.h.b16 %v709
        %v3126 = vunpack.c.l.b16 %v710
        %v3127 = vunpack.c.h.b16 %v710
        %v3128 = vunpack.c.l.b16 %v711
        %v3129 = vunpack.c.h.b16 %v711
        %v3130 = vunpack.c.l.b16 %v712
        %v3131 = vunpack.c.h.b16 %v712
        %v3132 = vunpack.c.l.b16 %v713
        %v3133 = vunpack.c.h.b16 %v713
        %v3134 = vunpack.c.l.b16 %v714
        %v3135 = vunpack.c.h.b16 %v714
        %v3136 = vunpack.c.l.b16 %v715
        %v3137 = vunpack.c.h.b16 %v715
        %v3138 = vunpack.c.l.b16 %v716
        %v3139 = vunpack.c.h.b16 %v716
        %v3140 = vunpack.c.l.b16 %v717
        %v3141 = vunpack.c.h.b16 %v717
        %v3142 = vunpack.c.l.b16 %v718
        %v3143 = vunpack.c.h.b16 %v718
        %v3144 = vunpack.c.l.b16 %v719
        %v3145 = vunpack.c.h.b16 %v719
        %v3146 = vunpack.c.l.b16 %v720
        %v3147 = vunpack.c.h.b16 %v720
        %v3148 = vunpack.c.l.b16 %v721
        %v3149 = vunpack.c.h.b16 %v721
        %v3150 = vunpack.c.l.b16 %v722
        %v3151 = vunpack.c.h.b16 %v722
        %v3152 = vunpack.c.l.b16 %v723
        %v3153 = vunpack.c.h.b16 %v723
        %v3154 = vunpack.c.l.b16 %v724
        %v3155 = vunpack.c.h.b16 %v724
        %v3156 = vunpack.c.l.b16 %v725
        %v3157 = vunpack.c.h.b16 %v725
        %v3158 = vunpack.c.l.b16 %v726
        %v3159 = vunpack.c.h.b16 %v726
        %v3160 = vunpack.c.l.b16 %v727
        %v3161 = vunpack.c.h.b16 %v727
        %v3162 = vunpack.c.l.b16 %v728
        %v3163 = vunpack.c.h.b16 %v728
        %v3164 = vunpack.c.l.b16 %v729
        %v3165 = vunpack.c.h.b16 %v729
        %v3166 = vunpack.c.l.b16 %v730
        %v3167 = vunpack.c.h.b16 %v730
        %v3168 = vunpack.c.l.b16 %v731
        %v3169 = vunpack.c.h.b16 %v731
        %v3170 = vunpack.c.l.b16 %v732
        %v3171 = vunpack.c.h.b16 %v732
        %v3172 = vunpack.c.l.b16 %v733
        %v3173 = vunpack.c.h.b16 %v733
        %v3174 = vunpack.c.l.b16 %v734
        %v3175 = vunpack.c.h.b16 %v734
        %v3176 = vunpack.c.l.b16 %v735
        %v3177 = vunpack.c.h.b16 %v735
        %v3178 = vunpack.c.l.b16 %v736
        %v3179 = vunpack.c.h.b16 %v736
        %v3180 = vunpack.c.l.b16 %v737
        %v3181 = vunpack.c.h.b16 %v737
        %v3182 = vunpack.c.l.b16 %v738
        %v3183 = vunpack.c.h.b16 %v738
        %v3184 = vunpack.c.l.b16 %v739
        %v3185 = vunpack.c.h.b16 %v739
        %v3186 = vunpack.c.l.b16 %v740
        %v3187 = vunpack.c.h.b16 %v740
        %v3188 = vunpack.c.l.b16 %v741
        %v3189 = vunpack.c.h.b16 %v741
        %v3190 = vunpack.c.l.b16 %v742
        %v3191 = vunpack.c.h.b16 %v742
        %v3192 = vunpack.c.l.b16 %v743
        %v3193 = vunpack.c.h.b16 %v743
        %v3194 = vunpack.c.l.b16 %v744
        %v3195 = vunpack.c.h.b16 %v744
        %v3196 = vunpack.c.l.b16 %v745
        %v3197 = vunpack.c.h.b16 %v745
        %v3198 = vunpack.c.l.b16 %v746
        %v3199 = vunpack.c.h.b16 %v746
        %v3200 = vunpack.c.l.b16 %v747
        %v3201 = vunpack.c.h.b16 %v747
        %v3202 = vunpack.c.l.b16 %v748
        %v3203 = vunpack.c.h.b16 %v748
        %v3204 = vunpack.c.l.b16 %v749
        %v3205 = vunpack.c.h.b16 %v749
        %v3206 = vunpack.c.l.b16 %v750
        %v3207 = vunpack.c.h.b16 %v750
        %v3208 = vunpack.c.l.b16 %v751
        %v3209 = vunpack.c.h.b16 %v751
        %v3210 = vunpack.c.l.b16 %v752
        %v3211 = vunpack.c.h.b16 %v752
        %v3212 = vunpack.c.l.b16 %v753
        %v3213 = vunpack.c.h.b16 %v753
        %v3214 = vunpack.c.l.b16 %v754
        %v3215 = vunpack.c.h.b16 %v754
        %v3216 = vunpack.c.l.b16 %v755
        %v3217 = vunpack.c.h.b16 %v755
        %v3218 = vunpack.c.l.b16 %v756
        %v3219 = vunpack.c.h.b16 %v756
        %v3220 = vunpack.c.l.b16 %v757
        %v3221 = vunpack.c.h.b16 %v757
        %v3222 = vunpack.c.l.b16 %v758
        %v3223 = vunpack.c.h.b16 %v758
        %v3224 = vunpack.c.l.b16 %v759
        %v3225 = vunpack.c.h.b16 %v759
        %v3226 = vunpack.c.l.b16 %v760
        %v3227 = vunpack.c.h.b16 %v760
        %v3228 = vunpack.c.l.b16 %v761
        %v3229 = vunpack.c.h.b16 %v761
        %v3230 = vunpack.c.l.b16 %v762
        %v3231 = vunpack.c.h.b16 %v762
        %v3232 = vunpack.c.l.b16 %v763
        %v3233 = vunpack.c.h.b16 %v763
        %v3234 = vunpack.c.l.b16 %v764
        %v3235 = vunpack.c.h.b16 %v764
        %v3236 = vunpack.c.l.b16 %v765
        %v3237 = vunpack.c.h.b16 %v765
        %v3238 = vunpack.c.l.b16 %v766
        %v3239 = vunpack.c.h.b16 %v766
        %v3240 = vunpack.c.l.b16 %v767
        %v3241 = vunpack.c.h.b16 %v767
        %v3242 = vunpack.c.l.b16 %v768
        %v3243 = vunpack.c.h.b16 %v768
        %v3244 = vunpack.c.l.b16 %v769
        %v3245 = vunpack.c.h.b16 %v769
        %v3246 = vunpack.c.l.b16 %v770
        %v3247 = vunpack.c.h.b16 %v770
        %v3248 = vunpack.c.l.b16 %v771
        %v3249 = vunpack.c.h.b16 %v771
        %v3250 = vunpack.c.l.b16 %v772
        %v3251 = vunpack.c.h.b16 %v772
        %v3252 = vunpack.c.l.b16 %v773
        %v3253 = vunpack.c.h.b16 %v773
        %v3254 = vunpack.c.l.b16 %v774
        %v3255 = vunpack.c.h.b16 %v774
        %v3256 = vunpack.c.l.b16 %v775
        %v3257 = vunpack.c.h.b16 %v775
        %v3258 = vunpack.c.l.b16 %v776
        %v3259 = vunpack.c.h.b16 %v776
        %v3260 = vunpack.c.l.b16 %v777
        %v3261 = vunpack.c.h.b16 %v777
        %v3262 = vunpack.c.l.b16 %v778
        %v3263 = vunpack.c.h.b16 %v778
        %v3264 = vunpack.c.l.b16 %v779
        %v3265 = vunpack.c.h.b16 %v779
        %v3266 = vunpack.c.l.b16 %v780
        %v3267 = vunpack.c.h.b16 %v780
        %v3268 = vunpack.c.l.b16 %v781
        %v3269 = vunpack.c.h.b16 %v781
        %v3270 = vunpack.c.l.b16 %v782
        %v3271 = vunpack.c.h.b16 %v782
        %v3272 = vunpack.c.l.b16 %v783
        %v3273 = vunpack.c.h.b16 %v783
        %v3274 = vunpack.c.l.b16 %v784
        %v3275 = vunpack.c.h.b16 %v784
        %v3276 = vunpack.c.l.b16 %v785
        %v3277 = vunpack.c.h.b16 %v785
        %v3278 = vunpack.c.l.b16 %v786
        %v3279 = vunpack.c.h.b16 %v786
        %v3280 = vunpack.c.l.b16 %v787
        %v3281 = vunpack.c.h.b16 %v787
        %v3282 = vunpack.c.l.b16 %v788
        %v3283 = vunpack.c.h.b16 %v788
        %v3284 = vunpack.c.l.b16 %v789
        %v3285 = vunpack.c.h.b16 %v789
        %v3286 = vunpack.c.l.b16 %v790
        %v3287 = vunpack.c.h.b16 %v790
        %v3288 = vunpack.c.l.b16 %v791
        %v3289 = vunpack.c.h.b16 %v791
        %v3290 = vunpack.c.l.b16 %v792
        %v3291 = vunpack.c.h.b16 %v792
        %v3292 = vunpack.c.l.b16 %v793
        %v3293 = vunpack.c.h.b16 %v793
        %v3294 = vunpack.c.l.b16 %v794
        %v3295 = vunpack.c.h.b16 %v794
        %v3296 = vunpack.c.l.b16 %v795
        %v3297 = vunpack.c.h.b16 %v795
        %v3298 = vunpack.c.l.b16 %v796
        %v3299 = vunpack.c.h.b16 %v796
        %v3300 = vunpack.c.l.b16 %v797
        %v3301 = vunpack.c.h.b16 %v797
        %v3302 = vunpack.c.l.b16 %v798
        %v3303 = vunpack.c.h.b16 %v798
        %v3304 = vunpack.c.l.b16 %v799
        %v3305 = vunpack.c.h.b16 %v799
        %v3306 = vunpack.c.l.b16 %v800
        %v3307 = vunpack.c.h.b16 %v800
        %v3308 = vunpack.c.l.b16 %v801
        %v3309 = vunpack.c.h.b16 %v801
        %v3310 = vunpack.c.l.b16 %v802
        %v3311 = vunpack.c.h.b16 %v802
        %v3312 = vunpack.c.l.b16 %v803
        %v3313 = vunpack.c.h.b16 %v803
        %v3314 = vunpack.c.l.b16 %v804
        %v3315 = vunpack.c.h.b16 %v804
        %v3316 = vunpack.c.l.b16 %v805
        %v3317 = vunpack.c.h.b16 %v805
        %v3318 = vunpack.c.l.b16 %v806
        %v3319 = vunpack.c.h.b16 %v806
        %v3320 = vunpack.c.l.b16 %v807
        %v3321 = vunpack.c.h.b16 %v807
        %v3322 = vunpack.c.l.b16 %v808
        %v3323 = vunpack.c.h.b16 %v808
        %v3324 = vunpack.c.l.b16 %v809
        %v3325 = vunpack.c.h.b16 %v809
        %v3326 = vunpack.c.l.b16 %v810
        %v3327 = vunpack.c.h.b16 %v810
        %v3328 = vunpack.c.l.b16 %v811
        %v3329 = vunpack.c.h.b16 %v811
        %v3330 = vunpack.c.l.b16 %v812
        %v3331 = vunpack.c.h.b16 %v812
        %v3332 = vunpack.c.l.b16 %v813
        %v3333 = vunpack.c.h.b16 %v813
        %v3334 = vunpack.c.l.b16 %v814
        %v3335 = vunpack.c.h.b16 %v814
        %v3336 = vunpack.c.l.b16 %v815
        %v3337 = vunpack.c.h.b16 %v815
        %v3338 = vunpack.c.l.b16 %v816
        %v3339 = vunpack.c.h.b16 %v816
        %v3340 = vunpack.c.l.b16 %v817
        %v3341 = vunpack.c.h.b16 %v817
        %v3342 = vunpack.c.l.b16 %v818
        %v3343 = vunpack.c.h.b16 %v818
        %v3344 = vunpack.c.l.b16 %v819
        %v3345 = vunpack.c.h.b16 %v819
        %v3346 = vunpack.c.l.b16 %v820
        %v3347 = vunpack.c.h.b16 %v820
        %v3348 = vunpack.c.l.b16 %v821
        %v3349 = vunpack.c.h.b16 %v821
        %v3350 = vunpack.c.l.b16 %v822
        %v3351 = vunpack.c.h.b16 %v822
        %v3352 = vunpack.c.l.b16 %v823
        %v3353 = vunpack.c.h.b16 %v823
        %v3354 = vunpack.c.l.b16 %v824
        %v3355 = vunpack.c.h.b16 %v824
        %v3356 = vunpack.c.l.b16 %v825
        %v3357 = vunpack.c.h.b16 %v825
        %v3358 = vunpack.c.l.b16 %v826
        %v3359 = vunpack.c.h.b16 %v826
        %v3360 = vunpack.c.l.b16 %v827
        %v3361 = vunpack.c.h.b16 %v827
        %v3362 = vunpack.c.l.b16 %v828
        %v3363 = vunpack.c.h.b16 %v828
        %v3364 = vunpack.c.l.b16 %v829
        %v3365 = vunpack.c.h.b16 %v829
        %v3366 = vunpack.c.l.b16 %v830
        %v3367 = vunpack.c.h.b16 %v830
        %v3368 = vunpack.c.l.b16 %v831
        %v3369 = vunpack.c.h.b16 %v831
        %v3370 = vunpack.c.l.b16 %v832
        %v3371 = vunpack.c.h.b16 %v832
        %v3372 = vunpack.c.l.b16 %v833
        %v3373 = vunpack.c.h.b16 %v833
        %v3374 = vunpack.c.l.b16 %v834
        %v3375 = vunpack.c.h.b16 %v834
        %v3376 = vunpack.c.l.b16 %v835
        %v3377 = vunpack.c.h.b16 %v835
        %v3378 = vunpack.c.l.b16 %v836
        %v3379 = vunpack.c.h.b16 %v836
        %v3380 = vunpack.c.l.b16 %v837
        %v3381 = vunpack.c.h.b16 %v837
        %v3382 = vunpack.c.l.b16 %v838
        %v3383 = vunpack.c.h.b16 %v838
        %v3384 = vunpack.c.l.b16 %v839
        %v3385 = vunpack.c.h.b16 %v839
        %v3386 = vunpack.c.l.b16 %v840
        %v3387 = vunpack.c.h.b16 %v840
        %v3388 = vunpack.c.l.b16 %v841
        %v3389 = vunpack.c.h.b16 %v841
        %v3390 = vunpack.c.l.b16 %v842
        %v3391 = vunpack.c.h.b16 %v842
        %v3392 = vunpack.c.l.b16 %v843
        %v3393 = vunpack.c.h.b16 %v843
        %v3394 = vunpack.c.l.b16 %v844
        %v3395 = vunpack.c.h.b16 %v844
        %v3396 = vunpack.c.l.b16 %v845
        %v3397 = vunpack.c.h.b16 %v845
        %v3398 = vunpack.c.l.b16 %v846
        %v3399 = vunpack.c.h.b16 %v846
        %v3400 = vunpack.c.l.b16 %v847
        %v3401 = vunpack.c.h.b16 %v847
        %v3402 = vunpack.c.l.b16 %v848
        %v3403 = vunpack.c.h.b16 %v848
        %v3404 = vunpack.c.l.b16 %v849
        %v3405 = vunpack.c.h.b16 %v849
        %v3406 = vunpack.c.l.b16 %v850
        %v3407 = vunpack.c.h.b16 %v850
        %v3408 = vunpack.c.l.b16 %v851
        %v3409 = vunpack.c.h.b16 %v851
        %v3410 = vunpack.c.l.b16 %v852
        %v3411 = vunpack.c.h.b16 %v852
        %v3412 = vunpack.c.l.b16 %v853
        %v3413 = vunpack.c.h.b16 %v853
        %v3414 = vunpack.c.l.b16 %v854
        %v3415 = vunpack.c.h.b16 %v854
        %v3416 = vunpack.c.l.b16 %v855
        %v3417 = vunpack.c.h.b16 %v855
        %v3418 = vunpack.c.l.b16 %v856
        %v3419 = vunpack.c.h.b16 %v856
        %v3420 = vunpack.c.l.b16 %v857
        %v3421 = vunpack.c.h.b16 %v857
        %v3422 = vunpack.c.l.b16 %v858
        %v3423 = vunpack.c.h.b16 %v858
        %v3424 = vunpack.c.l.b16 %v859
        %v3425 = vunpack.c.h.b16 %v859
        %v3426 = vunpack.c.l.b16 %v860
        %v3427 = vunpack.c.h.b16 %v860
        %v3428 = vunpack.c.l.b16 %v861
        %v3429 = vunpack.c.h.b16 %v861
        %v3430 = vunpack.c.l.b16 %v862
        %v3431 = vunpack.c.h.b16 %v862
        %v3432 = vunpack.c.l.b16 %v863
        %v3433 = vunpack.c.h.b16 %v863
        %v3434 = vunpack.c.l.b16 %v864
        %v3435 = vunpack.c.h.b16 %v864
        %v3436 = vunpack.c.l.b16 %v865
        %v3437 = vunpack.c.h.b16 %v865
        %v3438 = vunpack.c.l.b16 %v866
        %v3439 = vunpack.c.h.b16 %v866
        %v3440 = vunpack.c.l.b16 %v867
        %v3441 = vunpack.c.h.b16 %v867
        %v3442 = vunpack.c.l.b16 %v868
        %v3443 = vunpack.c.h.b16 %v868
        %v3444 = vunpack.c.l.b16 %v869
        %v3445 = vunpack.c.h.b16 %v869
        %v3446 = vunpack.c.l.b16 %v870
        %v3447 = vunpack.c.h.b16 %v870
        %v3448 = vunpack.c.l.b16 %v871
        %v3449 = vunpack.c.h.b16 %v871
        %v3450 = vunpack.c.l.b16 %v872
        %v3451 = vunpack.c.h.b16 %v872
        %v3452 = vunpack.c.l.b16 %v873
        %v3453 = vunpack.c.h.b16 %v873
        %v3454 = vunpack.c.l.b16 %v874
        %v3455 = vunpack.c.h.b16 %v874
        %v3456 = vunpack.c.l.b16 %v875
        %v3457 = vunpack.c.h.b16 %v875
        %v3458 = vunpack.c.l.b16 %v876
        %v3459 = vunpack.c.h.b16 %v876
        %v3460 = vunpack.c.l.b16 %v877
        %v3461 = vunpack.c.h.b16 %v877
        %v3462 = vunpack.c.l.b16 %v878
        %v3463 = vunpack.c.h.b16 %v878
        %v3464 = vunpack.c.l.b16 %v879
        %v3465 = vunpack.c.h.b16 %v879
        %v3466 = vunpack.c.l.b16 %v880
        %v3467 = vunpack.c.h.b16 %v880
        %v3468 = vunpack.c.l.b16 %v881
        %v3469 = vunpack.c.h.b16 %v881
        %v3470 = vunpack.c.l.b16 %v882
        %v3471 = vunpack.c.h.b16 %v882
        %v3472 = vunpack.c.l.b16 %v883
        %v3473 = vunpack.c.h.b16 %v883
        %v3474 = vunpack.c.l.b16 %v884
        %v3475 = vunpack.c.h.b16 %v884
        %v3476 = vunpack.c.l.b16 %v885
        %v3477 = vunpack.c.h.b16 %v885
        %v3478 = vunpack.c.l.b16 %v886
        %v3479 = vunpack.c.h.b16 %v886
        %v3480 = vunpack.c.l.b16 %v887
        %v3481 = vunpack.c.h.b16 %v887
        %v3482 = vunpack.c.l.b16 %v888
        %v3483 = vunpack.c.h.b16 %v888
        %v3484 = vunpack.c.l.b16 %v889
        %v3485 = vunpack.c.h.b16 %v889
        %v3486 = vunpack.c.l.b16 %v890
        %v3487 = vunpack.c.h.b16 %v890
        %v3488 = vunpack.c.l.b16 %v891
        %v3489 = vunpack.c.h.b16 %v891
        %v3490 = vunpack.c.l.b16 %v892
        %v3491 = vunpack.c.h.b16 %v892
        %v3492 = vunpack.c.l.b16 %v893
        %v3493 = vunpack.c.h.b16 %v893
        %v3494 = vunpack.c.l.b16 %v894
        %v3495 = vunpack.c.h.b16 %v894
        %v3496 = vunpack.c.l.b16 %v895
        %v3497 = vunpack.c.h.b16 %v895
        %v3498 = vunpack.c.l.b16 %v896
        %v3499 = vunpack.c.h.b16 %v896
        %v3500 = vunpack.c.l.b16 %v897
        %v3501 = vunpack.c.h.b16 %v897
        %v3502 = vunpack.c.l.b16 %v898
        %v3503 = vunpack.c.h.b16 %v898
        %v3504 = vunpack.c.l.b16 %v899
        %v3505 = vunpack.c.h.b16 %v899
        %v3506 = vunpack.c.l.b16 %v900
        %v3507 = vunpack.c.h.b16 %v900
        %v3508 = vunpack.c.l.b16 %v901
        %v3509 = vunpack.c.h.b16 %v901
        %v3510 = vunpack.c.l.b16 %v902
        %v3511 = vunpack.c.h.b16 %v902
        %v3512 = vunpack.c.l.b16 %v903
        %v3513 = vunpack.c.h.b16 %v903
        %v3514 = vunpack.c.l.b16 %v904
        %v3515 = vunpack.c.h.b16 %v904
        %v3516 = vunpack.c.l.b16 %v905
        %v3517 = vunpack.c.h.b16 %v905
        %v3518 = vunpack.c.l.b16 %v906
        %v3519 = vunpack.c.h.b16 %v906
        %v3520 = vunpack.c.l.b16 %v907
        %v3521 = vunpack.c.h.b16 %v907
        %v3522 = vunpack.c.l.b16 %v908
        %v3523 = vunpack.c.h.b16 %v908
        %v3524 = vunpack.c.l.b16 %v909
        %v3525 = vunpack.c.h.b16 %v909
        %v3526 = vunpack.c.l.b16 %v910
        %v3527 = vunpack.c.h.b16 %v910
        %v3528 = vunpack.c.l.b16 %v911
        %v3529 = vunpack.c.h.b16 %v911
        %v3530 = vunpack.c.l.b16 %v912
        %v3531 = vunpack.c.h.b16 %v912
        %v3532 = vunpack.c.l.b16 %v913
        %v3533 = vunpack.c.h.b16 %v913
        %v3534 = vunpack.c.l.b16 %v914
        %v3535 = vunpack.c.h.b16 %v914
        %v3536 = vunpack.c.l.b16 %v915
        %v3537 = vunpack.c.h.b16 %v915
        %v3538 = vunpack.c.l.b16 %v916
        %v3539 = vunpack.c.h.b16 %v916
        %v3540 = vunpack.c.l.b16 %v917
        %v3541 = vunpack.c.h.b16 %v917
        %v3542 = vunpack.c.l.b16 %v918
        %v3543 = vunpack.c.h.b16 %v918
        %v3544 = vunpack.c.l.b16 %v919
        %v3545 = vunpack.c.h.b16 %v919
        %v3546 = vunpack.c.l.b16 %v920
        %v3547 = vunpack.c.h.b16 %v920
        %v3548 = vunpack.c.l.b16 %v921
        %v3549 = vunpack.c.h.b16 %v921
        %v3550 = vunpack.c.l.b16 %v922
        %v3551 = vunpack.c.h.b16 %v922
        %v3552 = vunpack.c.l.b16 %v923
        %v3553 = vunpack.c.h.b16 %v923
        %v3554 = vunpack.c.l.b16 %v924
        %v3555 = vunpack.c.h.b16 %v924
        %v3556 = vunpack.c.l.b16 %v925
        %v3557 = vunpack.c.h.b16 %v925
        %v3558 = vunpack.c.l.b16 %v926
        %v3559 = vunpack.c.h.b16 %v926
        %v3560 = vunpack.c.l.b16 %v927
        %v3561 = vunpack.c.h.b16 %v927
        %v3562 = vunpack.c.l.b16 %v928
        %v3563 = vunpack.c.h.b16 %v928
        %v3564 = vunpack.c.l.b16 %v929
        %v3565 = vunpack.c.h.b16 %v929
        %v3566 = vunpack.c.l.b16 %v930
        %v3567 = vunpack.c.h.b16 %v930
        %v3568 = vunpack.c.l.b16 %v931
        %v3569 = vunpack.c.h.b16 %v931
        %v3570 = vunpack.c.l.b16 %v932
        %v3571 = vunpack.c.h.b16 %v932
        %v3572 = vunpack.c.l.b16 %v933
        %v3573 = vunpack.c.h.b16 %v933
        %v3574 = vunpack.c.l.b16 %v934
        %v3575 = vunpack.c.h.b16 %v934
        %v3576 = vunpack.c.l.b16 %v935
        %v3577 = vunpack.c.h.b16 %v935
        %v3578 = vunpack.c.l.b16 %v936
        %v3579 = vunpack.c.h.b16 %v936
        %v3580 = vunpack.c.l.b16 %v937
        %v3581 = vunpack.c.h.b16 %v937
        %v3582 = vunpack.c.l.b16 %v938
        %v3583 = vunpack.c.h.b16 %v938
        %v3584 = vunpack.c.l.b16 %v939
        %v3585 = vunpack.c.h.b16 %v939
        %v3586 = vunpack.c.l.b16 %v940
        %v3587 = vunpack.c.h.b16 %v940
        %v3588 = vunpack.c.l.b16 %v941
        %v3589 = vunpack.c.h.b16 %v941
        %v3590 = vunpack.c.l.b16 %v942
        %v3591 = vunpack.c.h.b16 %v942
        %v3592 = vunpack.c.l.b16 %v943
        %v3593 = vunpack.c.h.b16 %v943
        %v3594 = vunpack.c.l.b16 %v944
        %v3595 = vunpack.c.h.b16 %v944
        %v3596 = vunpack.c.l.b16 %v945
        %v3597 = vunpack.c.h.b16 %v945
        %v3598 = vunpack.c.l.b16 %v946
        %v3599 = vunpack.c.h.b16 %v946
        %v3600 = vunpack.c.l.b16 %v947
        %v3601 = vunpack.c.h.b16 %v947
        %v3602 = vunpack.c.l.b16 %v948
        %v3603 = vunpack.c.h.b16 %v948
        %v3604 = vunpack.c.l.b16 %v949
        %v3605 = vunpack.c.h.b16 %v949
        %v3606 = vunpack.c.l.b16 %v950
        %v3607 = vunpack.c.h.b16 %v950
        %v3608 = vunpack.c.l.b16 %v951
        %v3609 = vunpack.c.h.b16 %v951
        %v3610 = vunpack.c.l.b16 %v952
        %v3611 = vunpack.c.h.b16 %v952
        %v3612 = vunpack.c.l.b16 %v953
        %v3613 = vunpack.c.h.b16 %v953
        %v3614 = vunpack.c.l.b16 %v954
        %v3615 = vunpack.c.h.b16 %v954
        %v3616 = vunpack.c.l.b16 %v955
        %v3617 = vunpack.c.h.b16 %v955
        %v3618 = vunpack.c.l.b16 %v956
        %v3619 = vunpack.c.h.b16 %v956
        %v3620 = vunpack.c.l.b16 %v957
        %v3621 = vunpack.c.h.b16 %v957
        %v3622 = vunpack.c.l.b16 %v958
        %v3623 = vunpack.c.h.b16 %v958
        %v3624 = vunpack.c.l.b16 %v959
        %v3625 = vunpack.c.h.b16 %v959
        %v3626 = vunpack.c.l.b16 %v960
        %v3627 = vunpack.c.h.b16 %v960
        %v3628 = vunpack.c.l.b16 %v961
        %v3629 = vunpack.c.h.b16 %v961
        %v3630 = vunpack.c.l.b16 %v962
        %v3631 = vunpack.c.h.b16 %v962
        %v3632 = vunpack.c.l.b16 %v963
        %v3633 = vunpack.c.h.b16 %v963
        %v3634 = vunpack.c.l.b16 %v964
        %v3635 = vunpack.c.h.b16 %v964
        %v3636 = vunpack.c.l.b16 %v965
        %v3637 = vunpack.c.h.b16 %v965
        %v3638 = vunpack.c.l.b16 %v966
        %v3639 = vunpack.c.h.b16 %v966
        %v3640 = vunpack.c.l.b16 %v967
        %v3641 = vunpack.c.h.b16 %v967
        %v3642 = vunpack.c.l.b16 %v968
        %v3643 = vunpack.c.h.b16 %v968
        %v3644 = vunpack.c.l.b16 %v969
        %v3645 = vunpack.c.h.b16 %v969
        %v3646 = vunpack.c.l.b16 %v970
        %v3647 = vunpack.c.h.b16 %v970
        %v3648 = vunpack.c.l.b16 %v971
        %v3649 = vunpack.c.h.b16 %v971
        %v3650 = vunpack.c.l.b16 %v972
        %v3651 = vunpack.c.h.b16 %v972
        %v3652 = vunpack.c.l.b16 %v973
        %v3653 = vunpack.c.h.b16 %v973
        %v3654 = vunpack.c.l.b16 %v974
        %v3655 = vunpack.c.h.b16 %v974
        %v3656 = vunpack.c.l.b16 %v975
        %v3657 = vunpack.c.h.b16 %v975
        %v3658 = vunpack.c.l.b16 %v976
        %v3659 = vunpack.c.h.b16 %v976
        %v3660 = vunpack.c.l.b16 %v977
        %v3661 = vunpack.c.h.b16 %v977
        %v3662 = vunpack.c.l.b16 %v978
        %v3663 = vunpack.c.h.b16 %v978
        %v3664 = vunpack.c.l.b16 %v979
        %v3665 = vunpack.c.h.b16 %v979
        %v3666 = vunpack.c.l.b16 %v980
        %v3667 = vunpack.c.h.b16 %v980
        %v3668 = vunpack.c.l.b16 %v981
        %v3669 = vunpack.c.h.b16 %v981
        %v3670 = vunpack.c.l.b16 %v982
        %v3671 = vunpack.c.h.b16 %v982
        %v3672 = vunpack.c.l.b16 %v983
        %v3673 = vunpack.c.h.b16 %v983
        %v3674 = vunpack.c.l.b16 %v984
        %v3675 = vunpack.c.h.b16 %v984
        %v3676 = vunpack.c.l.b16 %v985
        %v3677 = vunpack.c.h.b16 %v985
        %v3678 = vunpack.c.l.b16 %v986
        %v3679 = vunpack.c.h.b16 %v986
        %v3680 = vunpack.c.l.b16 %v987
        %v3681 = vunpack.c.h.b16 %v987
        %v3682 = vunpack.c.l.b16 %v988
        %v3683 = vunpack.c.h.b16 %v988
        %v3684 = vunpack.c.l.b16 %v989
        %v3685 = vunpack.c.h.b16 %v989
        %v3686 = vunpack.c.l.b16 %v990
        %v3687 = vunpack.c.h.b16 %v990
        %v3688 = vunpack.c.l.b16 %v991
        %v3689 = vunpack.c.h.b16 %v991
        %v3690 = vunpack.c.l.b16 %v992
        %v3691 = vunpack.c.h.b16 %v992
        %v3692 = vunpack.c.l.b16 %v993
        %v3693 = vunpack.c.h.b16 %v993
        %v3694 = vunpack.c.l.b16 %v994
        %v3695 = vunpack.c.h.b16 %v994
        %v3696 = vunpack.c.l.b16 %v995
        %v3697 = vunpack.c.h.b16 %v995
        %v3698 = vunpack.c.l.b16 %v996
        %v3699 = vunpack.c.h.b16 %v996
        %v3700 = vunpack.c.l.b16 %v997
        %v3701 = vunpack.c.h.b16 %v997
        %v3702 = vunpack.c.l.b16 %v998
        %v3703 = vunpack.c.h.b16 %v998
        %v3704 = vunpack.c.l.b16 %v999
        %v3705 = vunpack.c.h.b16 %v999
        %v3706 = vunpack.c.l.b16 %v1000
        %v3707 = vunpack.c.h.b16 %v1000
        %v3708 = vunpack.c.l.b16 %v1001
        %v3709 = vunpack.c.h.b16 %v1001
        %v3710 = vunpack.c.l.b16 %v1002
        %v3711 = vunpack.c.h.b16 %v1002
        %v3712 = vunpack.c.l.b16 %v1003
        %v3713 = vunpack.c.h.b16 %v1003
        %v3714 = vunpack.c.l.b16 %v1004
        %v3715 = vunpack.c.h.b16 %v1004
        %v3716 = vunpack.c.l.b16 %v1005
        %v3717 = vunpack.c.h.b16 %v1005
        %v3718 = vunpack.c.l.b16 %v1006
        %v3719 = vunpack.c.h.b16 %v1006
        %v3720 = vunpack.c.l.b16 %v1007
        %v3721 = vunpack.c.h.b16 %v1007
        %v3722 = vunpack.c.l.b16 %v1008
        %v3723 = vunpack.c.h.b16 %v1008
        %v3724 = vunpack.c.l.b16 %v1009
        %v3725 = vunpack.c.h.b16 %v1009
        %v3726 = vunpack.c.l.b16 %v1010
        %v3727 = vunpack.c.h.b16 %v1010
        %v3728 = vunpack.c.l.b16 %v1011
        %v3729 = vunpack.c.h.b16 %v1011
        %v3730 = vunpack.c.l.b16 %v1012
        %v3731 = vunpack.c.h.b16 %v1012
        %v3732 = vunpack.c.l.b16 %v1013
        %v3733 = vunpack.c.h.b16 %v1013
        %v3734 = vunpack.c.l.b16 %v1014
        %v3735 = vunpack.c.h.b16 %v1014
        %v3736 = vunpack.c.l.b16 %v1015
        %v3737 = vunpack.c.h.b16 %v1015
        %v3738 = vunpack.c.l.b16 %v1016
        %v3739 = vunpack.c.h.b16 %v1016
        %v3740 = vunpack.c.l.b16 %v1017
        %v3741 = vunpack.c.h.b16 %v1017
        %v3742 = vunpack.c.l.b16 %v1018
        %v3743 = vunpack.c.h.b16 %v1018
        %v3744 = vunpack.c.l.b16 %v1019
        %v3745 = vunpack.c.h.b16 %v1019
        %v3746 = vunpack.c.l.b16 %v1020
        %v3747 = vunpack.c.h.b16 %v1020
        %v3748 = vunpack.c.l.b16 %v1021
        %v3749 = vunpack.c.h.b16 %v1021
        %v3750 = vunpack.c.l.b16 %v1022
        %v3751 = vunpack.c.h.b16 %v1022
        %v3752 = vunpack.c.l.b16 %v1023
        %v3753 = vunpack.c.h.b16 %v1023
        %v3754 = vunpack.c.l.b16 %v1024
        %v3755 = vunpack.c.h.b16 %v1024
        %v3756 = vunpack.c.l.b16 %v1025
        %v3757 = vunpack.c.h.b16 %v1025
        %v3758 = vunpack.c.l.b16 %v1026
        %v3759 = vunpack.c.h.b16 %v1026
        %v3760 = vunpack.c.l.b16 %v1027
        %v3761 = vunpack.c.h.b16 %v1027
        %v3762 = vunpack.c.l.b16 %v1028
        %v3763 = vunpack.c.h.b16 %v1028
        %v3764 = vunpack.c.l.b16 %v1029
        %v3765 = vunpack.c.h.b16 %v1029
        %v3766 = vunpack.c.l.b16 %v1030
        %v3767 = vunpack.c.h.b16 %v1030
        %v3768 = vunpack.c.l.b16 %v1031
        %v3769 = vunpack.c.h.b16 %v1031
        %v3770 = vunpack.c.l.b16 %v1032
        %v3771 = vunpack.c.h.b16 %v1032
        %v3772 = vunpack.c.l.b16 %v1033
        %v3773 = vunpack.c.h.b16 %v1033
        %v3774 = vunpack.c.l.b16 %v1034
        %v3775 = vunpack.c.h.b16 %v1034
        %v3776 = vunpack.c.l.b16 %v1035
        %v3777 = vunpack.c.h.b16 %v1035
        %v3778 = vunpack.c.l.b16 %v1036
        %v3779 = vunpack.c.h.b16 %v1036
        %v3780 = vunpack.c.l.b16 %v1037
        %v3781 = vunpack.c.h.b16 %v1037
        %v3782 = vunpack.c.l.b16 %v1038
        %v3783 = vunpack.c.h.b16 %v1038
        %v3784 = vunpack.c.l.b16 %v1039
        %v3785 = vunpack.c.h.b16 %v1039
        %v3786 = vunpack.c.l.b16 %v1040
        %v3787 = vunpack.c.h.b16 %v1040
        %v3788 = vunpack.c.l.b16 %v1041
        %v3789 = vunpack.c.h.b16 %v1041
        %v3790 = vunpack.c.l.b16 %v1042
        %v3791 = vunpack.c.h.b16 %v1042
        %v3792 = vunpack.c.l.b16 %v1043
        %v3793 = vunpack.c.h.b16 %v1043
        %v3794 = vunpack.c.l.b16 %v1044
        %v3795 = vunpack.c.h.b16 %v1044
        %v3796 = vunpack.c.l.b16 %v1045
        %v3797 = vunpack.c.h.b16 %v1045
        %v3798 = vunpack.c.l.b16 %v1046
        %v3799 = vunpack.c.h.b16 %v1046
        %v3800 = vunpack.c.l.b16 %v1047
        %v3801 = vunpack.c.h.b16 %v1047
        %v3802 = vunpack.c.l.b16 %v1048
        %v3803 = vunpack.c.h.b16 %v1048
        %v3804 = vunpack.c.l.b16 %v1049
        %v3805 = vunpack.c.h.b16 %v1049
        %v3806 = vunpack.c.l.b16 %v1050
        %v3807 = vunpack.c.h.b16 %v1050
        %v3808 = vunpack.c.l.b16 %v1051
        %v3809 = vunpack.c.h.b16 %v1051
        %v3810 = vunpack.c.l.b16 %v1052
        %v3811 = vunpack.c.h.b16 %v1052
        %v3812 = vunpack.c.l.b16 %v1053
        %v3813 = vunpack.c.h.b16 %v1053
        %v3814 = vunpack.c.l.b16 %v1054
        %v3815 = vunpack.c.h.b16 %v1054
        %v3816 = vunpack.c.l.b16 %v1055
        %v3817 = vunpack.c.h.b16 %v1055
        %v3818 = vunpack.c.l.b16 %v1056
        %v3819 = vunpack.c.h.b16 %v1056
        %v3820 = vunpack.c.l.b16 %v1057
        %v3821 = vunpack.c.h.b16 %v1057
        %v3822 = vunpack.c.l.b16 %v1058
        %v3823 = vunpack.c.h.b16 %v1058
        %v3824 = vunpack.c.l.b16 %v1059
        %v3825 = vunpack.c.h.b16 %v1059
        %v3826 = vunpack.c.l.b16 %v1060
        %v3827 = vunpack.c.h.b16 %v1060
        %v3828 = vunpack.c.l.b16 %v1061
        %v3829 = vunpack.c.h.b16 %v1061
        %v3830 = vunpack.c.l.b16 %v1062
        %v3831 = vunpack.c.h.b16 %v1062
        %v3832 = vunpack.c.l.b16 %v1063
        %v3833 = vunpack.c.h.b16 %v1063
        %v3834 = vunpack.c.l.b16 %v1064
        %v3835 = vunpack.c.h.b16 %v1064
        %v3836 = vunpack.c.l.b16 %v1065
        %v3837 = vunpack.c.h.b16 %v1065
        %v3838 = vunpack.c.l.b16 %v1066
        %v3839 = vunpack.c.h.b16 %v1066
        %v3840 = vunpack.c.l.b16 %v1067
        %v3841 = vunpack.c.h.b16 %v1067
        %v3842 = vunpack.c.l.b16 %v1068
        %v3843 = vunpack.c.h.b16 %v1068
        %v3844 = vunpack.c.l.b16 %v1069
        %v3845 = vunpack.c.h.b16 %v1069
        %v3846 = vunpack.c.l.b16 %v1070
        %v3847 = vunpack.c.h.b16 %v1070
        %v3848 = vunpack.c.l.b16 %v1071
        %v3849 = vunpack.c.h.b16 %v1071
        %v3850 = vunpack.c.l.b16 %v1072
        %v3851 = vunpack.c.h.b16 %v1072
        %v3852 = vunpack.c.l.b16 %v1073
        %v3853 = vunpack.c.h.b16 %v1073
        %v3854 = vunpack.c.l.b16 %v1074
        %v3855 = vunpack.c.h.b16 %v1074
        %v3856 = vunpack.c.l.b16 %v1075
        %v3857 = vunpack.c.h.b16 %v1075
        %v3858 = vunpack.c.l.b16 %v1076
        %v3859 = vunpack.c.h.b16 %v1076
        %v3860 = vunpack.c.l.b16 %v1077
        %v3861 = vunpack.c.h.b16 %v1077
        %v3862 = vunpack.c.l.b16 %v1078
        %v3863 = vunpack.c.h.b16 %v1078
        %v3864 = vunpack.c.l.b16 %v1079
        %v3865 = vunpack.c.h.b16 %v1079
        %v3866 = vunpack.c.l.b16 %v1080
        %v3867 = vunpack.c.h.b16 %v1080
        %v3868 = vunpack.c.l.b16 %v1081
        %v3869 = vunpack.c.h.b16 %v1081
        %v3870 = vunpack.c.l.b16 %v1082
        %v3871 = vunpack.c.h.b16 %v1082
        %v3872 = vunpack.c.l.b16 %v1083
        %v3873 = vunpack.c.h.b16 %v1083
        %v3874 = vunpack.c.l.b16 %v1084
        %v3875 = vunpack.c.h.b16 %v1084
        %v3876 = vunpack.c.l.b16 %v1085
        %v3877 = vunpack.c.h.b16 %v1085
        %v3878 = vunpack.c.l.b16 %v1086
        %v3879 = vunpack.c.h.b16 %v1086
        %v3880 = vunpack.c.l.b16 %v1087
        %v3881 = vunpack.c.h.b16 %v1087
        %v3882 = vunpack.c.l.b16 %v1088
        %v3883 = vunpack.c.h.b16 %v1088
        %v3884 = vunpack.c.l.b16 %v1089
        %v3885 = vunpack.c.h.b16 %v1089
        %v3886 = vunpack.c.l.b16 %v1090
        %v3887 = vunpack.c.h.b16 %v1090
        %v3888 = vunpack.c.l.b16 %v1091
        %v3889 = vunpack.c.h.b16 %v1091
        %v3890 = vunpack.c.l.b16 %v1092
        %v3891 = vunpack.c.h.b16 %v1092
        %v3892 = vunpack.c.l.b16 %v1093
        %v3893 = vunpack.c.h.b16 %v1093
        %v3894 = vunpack.c.l.b16 %v1094
        %v3895 = vunpack.c.h.b16 %v1094
        %v3896 = vunpack.c.l.b16 %v1095
        %v3897 = vunpack.c.h.b16 %v1095
        %v3898 = vunpack.c.l.b16 %v1096
        %v3899 = vunpack.c.h.b16 %v1096
        %v3900 = vunpack.c.l.b16 %v1097
        %v3901 = vunpack.c.h.b16 %v1097
        %v3902 = vunpack.c.l.b16 %v1098
        %v3903 = vunpack.c.h.b16 %v1098
        %v3904 = vunpack.c.l.b16 %v1099
        %v3905 = vunpack.c.h.b16 %v1099
        %v3906 = vunpack.c.l.b16 %v1100
        %v3907 = vunpack.c.h.b16 %v1100
        %v3908 = vunpack.c.l.b16 %v1101
        %v3909 = vunpack.c.h.b16 %v1101
        %v3910 = vunpack.c.l.b16 %v1102
        %v3911 = vunpack.c.h.b16 %v1102
        %v3912 = vunpack.c.l.b16 %v1103
        %v3913 = vunpack.c.h.b16 %v1103
        %v3914 = vunpack.c.l.b16 %v1104
        %v3915 = vunpack.c.h.b16 %v1104
        %v3916 = vunpack.c.l.b16 %v1105
        %v3917 = vunpack.c.h.b16 %v1105
        %v3918 = vunpack.c.l.b16 %v1106
        %v3919 = vunpack.c.h.b16 %v1106
        %v3920 = vunpack.c.l.b16 %v1107
        %v3921 = vunpack.c.h.b16 %v1107
        %v3922 = vunpack.c.l.b16 %v1108
        %v3923 = vunpack.c.h.b16 %v1108
        %v3924 = vunpack.c.l.b16 %v1109
        %v3925 = vunpack.c.h.b16 %v1109
        %v3926 = vunpack.c.l.b16 %v1110
        %v3927 = vunpack.c.h.b16 %v1110
        %v3928 = vunpack.c.l.b16 %v1111
        %v3929 = vunpack.c.h.b16 %v1111
        %v3930 = vunpack.c.l.b16 %v1112
        %v3931 = vunpack.c.h.b16 %v1112
        %v3932 = vunpack.c.l.b16 %v1113
        %v3933 = vunpack.c.h.b16 %v1113
        %v3934 = vunpack.c.l.b16 %v1114
        %v3935 = vunpack.c.h.b16 %v1114
        %v3936 = vunpack.c.l.b16 %v1115
        %v3937 = vunpack.c.h.b16 %v1115
        %v3938 = vunpack.c.l.b16 %v1116
        %v3939 = vunpack.c.h.b16 %v1116
        %v3940 = vunpack.c.l.b16 %v1117
        %v3941 = vunpack.c.h.b16 %v1117
        %v3942 = vunpack.c.l.b16 %v1118
        %v3943 = vunpack.c.h.b16 %v1118
        %v3944 = vunpack.c.l.b16 %v1119
        %v3945 = vunpack.c.h.b16 %v1119
        %v3946 = vunpack.c.l.b16 %v1120
        %v3947 = vunpack.c.h.b16 %v1120
        %v3948 = vunpack.c.l.b16 %v1121
        %v3949 = vunpack.c.h.b16 %v1121
        %v3950 = vunpack.c.l.b16 %v1122
        %v3951 = vunpack.c.h.b16 %v1122
        %v3952 = vunpack.c.l.b16 %v1123
        %v3953 = vunpack.c.h.b16 %v1123
        %v3954 = vunpack.c.l.b16 %v1124
        %v3955 = vunpack.c.h.b16 %v1124
        %v3956 = vunpack.c.l.b16 %v1125
        %v3957 = vunpack.c.h.b16 %v1125
        %v3958 = vunpack.c.l.b16 %v1126
        %v3959 = vunpack.c.h.b16 %v1126
        %v3960 = vunpack.c.l.b16 %v1127
        %v3961 = vunpack.c.h.b16 %v1127
        %v3962 = vunpack.c.l.b16 %v1128
        %v3963 = vunpack.c.h.b16 %v1128
        %v3964 = vunpack.c.l.b16 %v1129
        %v3965 = vunpack.c.h.b16 %v1129
        %v3966 = vunpack.c.l.b16 %v1130
        %v3967 = vunpack.c.h.b16 %v1130
        %v3968 = vunpack.c.l.b16 %v1131
        %v3969 = vunpack.c.h.b16 %v1131
        %v3970 = vunpack.c.l.b16 %v1132
        %v3971 = vunpack.c.h.b16 %v1132
        %v3972 = vunpack.c.l.b16 %v1133
        %v3973 = vunpack.c.h.b16 %v1133
        %v3974 = vunpack.c.l.b16 %v1134
        %v3975 = vunpack.c.h.b16 %v1134
        %v3976 = vunpack.c.l.b16 %v1135
        %v3977 = vunpack.c.h.b16 %v1135
        %v3978 = vunpack.c.l.b16 %v1136
        %v3979 = vunpack.c.h.b16 %v1136
        %v3980 = vunpack.c.l.b16 %v1137
        %v3981 = vunpack.c.h.b16 %v1137
        %v3982 = vunpack.c.l.b16 %v1138
        %v3983 = vunpack.c.h.b16 %v1138
        %v3984 = vunpack.c.l.b16 %v1139
        %v3985 = vunpack.c.h.b16 %v1139
        %v3986 = vunpack.c.l.b16 %v1140
        %v3987 = vunpack.c.h.b16 %v1140
        %v3988 = vunpack.c.l.b16 %v1141
        %v3989 = vunpack.c.h.b16 %v1141
        %v3990 = vunpack.c.l.b16 %v1142
        %v3991 = vunpack.c.h.b16 %v1142
        %v3992 = vunpack.c.l.b16 %v1143
        %v3993 = vunpack.c.h.b16 %v1143
        %v3994 = vunpack.c.l.b16 %v1144
        %v3995 = vunpack.c.h.b16 %v1144
        %v3996 = vunpack.c.l.b16 %v1145
        %v3997 = vunpack.c.h.b16 %v1145
        %v3998 = vunpack.c.l.b16 %v1146
        %v3999 = vunpack.c.h.b16 %v1146
        %v4000 = vunpack.c.l.b16 %v1147
        %v4001 = vunpack.c.h.b16 %v1147
        %v4002 = vunpack.c.l.b16 %v1148
        %v4003 = vunpack.c.h.b16 %v1148
        %v4004 = vunpack.c.l.b16 %v1149
        %v4005 = vunpack.c.h.b16 %v1149
        %v4006 = vunpack.c.l.b16 %v1150
        %v4007 = vunpack.c.h.b16 %v1150
        %v4008 = vunpack.c.l.b16 %v1151
        %v4009 = vunpack.c.h.b16 %v1151
        %v4010 = vunpack.c.l.b16 %v1152
        %v4011 = vunpack.c.h.b16 %v1152
        %v4012 = vunpack.c.l.b16 %v1153
        %v4013 = vunpack.c.h.b16 %v1153
        %v4014 = vunpack.c.l.b16 %v1154
        %v4015 = vunpack.c.h.b16 %v1154
        %v4016 = vunpack.c.l.b16 %v1155
        %v4017 = vunpack.c.h.b16 %v1155
        %v4018 = vunpack.c.l.b16 %v1156
        %v4019 = vunpack.c.h.b16 %v1156
        %v4020 = vunpack.c.l.b16 %v1157
        %v4021 = vunpack.c.h.b16 %v1157
        %v4022 = vunpack.c.l.b16 %v1158
        %v4023 = vunpack.c.h.b16 %v1158
        %v4024 = vunpack.c.l.b16 %v1159
        %v4025 = vunpack.c.h.b16 %v1159
        %v4026 = vunpack.c.l.b16 %v1160
        %v4027 = vunpack.c.h.b16 %v1160
        %v4028 = vunpack.c.l.b16 %v1161
        %v4029 = vunpack.c.h.b16 %v1161
        %v4030 = vunpack.c.l.b16 %v1162
        %v4031 = vunpack.c.h.b16 %v1162
        %v4032 = vunpack.c.l.b16 %v1163
        %v4033 = vunpack.c.h.b16 %v1163
        %v4034 = vunpack.c.l.b16 %v1164
        %v4035 = vunpack.c.h.b16 %v1164
        %v4036 = vunpack.c.l.b16 %v1165
        %v4037 = vunpack.c.h.b16 %v1165
        %v4038 = vunpack.c.l.b16 %v1166
        %v4039 = vunpack.c.h.b16 %v1166
        %v4040 = vunpack.c.l.b16 %v1167
        %v4041 = vunpack.c.h.b16 %v1167
        %v4042 = vunpack.c.l.b16 %v1168
        %v4043 = vunpack.c.h.b16 %v1168
        %v4044 = vunpack.c.l.b16 %v1169
        %v4045 = vunpack.c.h.b16 %v1169
        %v4046 = vunpack.c.l.b16 %v1170
        %v4047 = vunpack.c.h.b16 %v1170
        %v4048 = vunpack.c.l.b16 %v1171
        %v4049 = vunpack.c.h.b16 %v1171
        %v4050 = vunpack.c.l.b16 %v1172
        %v4051 = vunpack.c.h.b16 %v1172
        %v4052 = vunpack.c.l.b16 %v1173
        %v4053 = vunpack.c.h.b16 %v1173
        %v4054 = vunpack.c.l.b16 %v1174
        %v4055 = vunpack.c.h.b16 %v1174
        %v4056 = vunpack.c.l.b16 %v1175
        %v4057 = vunpack.c.h.b16 %v1175
        %v4058 = vunpack.c.l.b16 %v1176
        %v4059 = vunpack.c.h.b16 %v1176
        %v4060 = vunpack.c.l.b16 %v1177
        %v4061 = vunpack.c.h.b16 %v1177
        %v4062 = vunpack.c.l.b16 %v1178
        %v4063 = vunpack.c.h.b16 %v1178
        %v4064 = vunpack.c.l.b16 %v1179
        %v4065 = vunpack.c.h.b16 %v1179
        %v4066 = vunpack.c.l.b16 %v1180
        %v4067 = vunpack.c.h.b16 %v1180
        %v4068 = vunpack.c.l.b16 %v1181
        %v4069 = vunpack.c.h.b16 %v1181
        %v4070 = vunpack.c.l.b16 %v1182
        %v4071 = vunpack.c.h.b16 %v1182
        %v4072 = vunpack.c.l.b16 %v1183
        %v4073 = vunpack.c.h.b16 %v1183
        %v4074 = vunpack.c.l.b16 %v1184
        %v4075 = vunpack.c.h.b16 %v1184
        %v4076 = vunpack.c.l.b16 %v1185
        %v4077 = vunpack.c.h.b16 %v1185
        %v4078 = vunpack.c.l.b16 %v1186
        %v4079 = vunpack.c.h.b16 %v1186
        %v4080 = vunpack.c.l.b16 %v1187
        %v4081 = vunpack.c.h.b16 %v1187
        %v4082 = vunpack.c.l.b16 %v1188
        %v4083 = vunpack.c.h.b16 %v1188
        %v4084 = vunpack.c.l.b16 %v1189
        %v4085 = vunpack.c.h.b16 %v1189
        %v4086 = vunpack.c.l.b16 %v1190
        %v4087 = vunpack.c.h.b16 %v1190
        %v4088 = vunpack.c.l.b16 %v1191
        %v4089 = vunpack.c.h.b16 %v1191
        %v4090 = vunpack.c.l.b16 %v1192
        %v4091 = vunpack.c.h.b16 %v1192
        %v4092 = vunpack.c.l.b16 %v1193
        %v4093 = vunpack.c.h.b16 %v1193
        %v4094 = vunpack.c.l.b16 %v1194
        %v4095 = vunpack.c.h.b16 %v1194
        %v4096 = vunpack.c.l.b16 %v1195
        %v4097 = vunpack.c.h.b16 %v1195
        %v4098 = vunpack.c.l.b16 %v1196
        %v4099 = vunpack.c.h.b16 %v1196
        %v4100 = vunpack.c.l.b16 %v1197
        %v4101 = vunpack.c.h.b16 %v1197
        %v4102 = vunpack.c.l.b16 %v1198
        %v4103 = vunpack.c.h.b16 %v1198
        %v4104 = vunpack.c.l.b16 %v1199
        %v4105 = vunpack.c.h.b16 %v1199
        %v4106 = vunpack.c.l.b16 %v1200
        %v4107 = vunpack.c.h.b16 %v1200
        %v4108 = vunpack.c.l.b16 %v1201
        %v4109 = vunpack.c.h.b16 %v1201
        %v4110 = vunpack.c.l.b16 %v1202
        %v4111 = vunpack.c.h.b16 %v1202
        %v4112 = vunpack.c.l.b16 %v1203
        %v4113 = vunpack.c.h.b16 %v1203
        %v4114 = vunpack.c.l.b16 %v1204
        %v4115 = vunpack.c.h.b16 %v1204
        %v4116 = vunpack.c.l.b16 %v1205
        %v4117 = vunpack.c.h.b16 %v1205
        %v4118 = vunpack.c.l.b16 %v1206
        %v4119 = vunpack.c.h.b16 %v1206
        %v4120 = vunpack.c.l.b16 %v1207
        %v4121 = vunpack.c.h.b16 %v1207
        %v4122 = vunpack.c.l.b16 %v1208
        %v4123 = vunpack.c.h.b16 %v1208
        %v4124 = vunpack.c.l.b16 %v1209
        %v4125 = vunpack.c.h.b16 %v1209
        %v4126 = vunpack.c.l.b16 %v1210
        %v4127 = vunpack.c.h.b16 %v1210
        %v4128 = vunpack.c.l.b16 %v1211
        %v4129 = vunpack.c.h.b16 %v1211
        %v4130 = vunpack.c.l.b16 %v1212
        %v4131 = vunpack.c.h.b16 %v1212
        %v4132 = vunpack.c.l.b16 %v1213
        %v4133 = vunpack.c.h.b16 %v1213
        %v4134 = vunpack.c.l.b16 %v1214
        %v4135 = vunpack.c.h.b16 %v1214
        %v4136 = vunpack.c.l.b16 %v1215
        %v4137 = vunpack.c.h.b16 %v1215
        %v4138 = vunpack.c.l.b16 %v1216
        %v4139 = vunpack.c.h.b16 %v1216
        %v4140 = vunpack.c.l.b16 %v1217
        %v4141 = vunpack.c.h.b16 %v1217
        %v4142 = vunpack.c.l.b16 %v1218
        %v4143 = vunpack.c.h.b16 %v1218
        %v4144 = vunpack.c.l.b16 %v1219
        %v4145 = vunpack.c.h.b16 %v1219
        %v4146 = vunpack.c.l.b16 %v1220
        %v4147 = vunpack.c.h.b16 %v1220
        %v4148 = vunpack.c.l.b16 %v1221
        %v4149 = vunpack.c.h.b16 %v1221
        %v4150 = vunpack.c.l.b16 %v1222
        %v4151 = vunpack.c.h.b16 %v1222
        %v4152 = vunpack.c.l.b16 %v1223
        %v4153 = vunpack.c.h.b16 %v1223
        %v4154 = vunpack.c.l.b16 %v1224
        %v4155 = vunpack.c.h.b16 %v1224
        %v4156 = vunpack.c.l.b16 %v1225
        %v4157 = vunpack.c.h.b16 %v1225
        %v4158 = vunpack.c.l.b16 %v1226
        %v4159 = vunpack.c.h.b16 %v1226
        %v4160 = vunpack.c.l.b16 %v1227
        %v4161 = vunpack.c.h.b16 %v1227
        %v4162 = vunpack.c.l.b16 %v1228
        %v4163 = vunpack.c.h.b16 %v1228
        %v4164 = vunpack.c.l.b16 %v1229
        %v4165 = vunpack.c.h.b16 %v1229
        %v4166 = vunpack.c.l.b16 %v1230
        %v4167 = vunpack.c.h.b16 %v1230
        %v4168 = vunpack.c.l.b16 %v1231
        %v4169 = vunpack.c.h.b16 %v1231
        %v4170 = vunpack.c.l.b16 %v1232
        %v4171 = vunpack.c.h.b16 %v1232
        %v4172 = vunpack.c.l.b16 %v1233
        %v4173 = vunpack.c.h.b16 %v1233
        %v4174 = vunpack.c.l.b16 %v1234
        %v4175 = vunpack.c.h.b16 %v1234
        %v4176 = vunpack.c.l.b16 %v1235
        %v4177 = vunpack.c.h.b16 %v1235
        %v4178 = vunpack.c.l.b16 %v1236
        %v4179 = vunpack.c.h.b16 %v1236
        %v4180 = vunpack.c.l.b16 %v1237
        %v4181 = vunpack.c.h.b16 %v1237
        %v4182 = vunpack.c.l.b16 %v1238
        %v4183 = vunpack.c.h.b16 %v1238
        %v4184 = vunpack.c.l.b16 %v1239
        %v4185 = vunpack.c.h.b16 %v1239
        %v4186 = vunpack.c.l.b16 %v1240
        %v4187 = vunpack.c.h.b16 %v1240
        %v4188 = vunpack.c.l.b16 %v1241
        %v4189 = vunpack.c.h.b16 %v1241
        %v4190 = vunpack.c.l.b16 %v1242
        %v4191 = vunpack.c.h.b16 %v1242
        %v4192 = vunpack.c.l.b16 %v1243
        %v4193 = vunpack.c.h.b16 %v1243
        %v4194 = vunpack.c.l.b16 %v1244
        %v4195 = vunpack.c.h.b16 %v1244
        %v4196 = vunpack.c.l.b16 %v1245
        %v4197 = vunpack.c.h.b16 %v1245
        %v4198 = vunpack.c.l.b16 %v1246
        %v4199 = vunpack.c.h.b16 %v1246
        %v4200 = vunpack.c.l.b16 %v1247
        %v4201 = vunpack.c.h.b16 %v1247
        %v4202 = vunpack.c.l.b16 %v1248
        %v4203 = vunpack.c.h.b16 %v1248
        %v4204 = vunpack.c.l.b16 %v1249
        %v4205 = vunpack.c.h.b16 %v1249
        %v4206 = vunpack.c.l.b16 %v1250
        %v4207 = vunpack.c.h.b16 %v1250
        %v4208 = vunpack.c.l.b16 %v1251
        %v4209 = vunpack.c.h.b16 %v1251
        %v4210 = vunpack.c.l.b16 %v1252
        %v4211 = vunpack.c.h.b16 %v1252
        %v4212 = vunpack.c.l.b16 %v1253
        %v4213 = vunpack.c.h.b16 %v1253
        %v4214 = vunpack.c.l.b16 %v1254
        %v4215 = vunpack.c.h.b16 %v1254
        %v4216 = vunpack.c.l.b16 %v1255
        %v4217 = vunpack.c.h.b16 %v1255
        %v4218 = vunpack.c.l.b16 %v1256
        %v4219 = vunpack.c.h.b16 %v1256
        %v4220 = vunpack.c.l.b16 %v1257
        %v4221 = vunpack.c.h.b16 %v1257
        %v4222 = vunpack.c.l.b16 %v1258
        %v4223 = vunpack.c.h.b16 %v1258
        %v4224 = vunpack.c.l.b16 %v1259
        %v4225 = vunpack.c.h.b16 %v1259
        %v4226 = vunpack.c.l.b16 %v1260
        %v4227 = vunpack.c.h.b16 %v1260
        %v4228 = vunpack.c.l.b16 %v1261
        %v4229 = vunpack.c.h.b16 %v1261
        %v4230 = vunpack.c.l.b16 %v1262
        %v4231 = vunpack.c.h.b16 %v1262
        %v4232 = vunpack.c.l.b16 %v1263
        %v4233 = vunpack.c.h.b16 %v1263
        %v4234 = vunpack.c.l.b16 %v1264
        %v4235 = vunpack.c.h.b16 %v1264
        %v4236 = vunpack.c.l.b16 %v1265
        %v4237 = vunpack.c.h.b16 %v1265
        %v4238 = vunpack.c.l.b16 %v1266
        %v4239 = vunpack.c.h.b16 %v1266
        %v4240 = vunpack.c.l.b16 %v1267
        %v4241 = vunpack.c.h.b16 %v1267
        %v4242 = vunpack.c.l.b16 %v1268
        %v4243 = vunpack.c.h.b16 %v1268
        %v4244 = vunpack.c.l.b16 %v1269
        %v4245 = vunpack.c.h.b16 %v1269
        %v4246 = vunpack.c.l.b16 %v1270
        %v4247 = vunpack.c.h.b16 %v1270
        %v4248 = vunpack.c.l.b16 %v1271
        %v4249 = vunpack.c.h.b16 %v1271
        %v4250 = vunpack.c.l.b16 %v1272
        %v4251 = vunpack.c.h.b16 %v1272
        %v4252 = vunpack.c.l.b16 %v1273
        %v4253 = vunpack.c.h.b16 %v1273
        %v4254 = vunpack.c.l.b16 %v1274
        %v4255 = vunpack.c.h.b16 %v1274
        %v4256 = vunpack.c.l.b16 %v1275
        %v4257 = vunpack.c.h.b16 %v1275
        %v4258 = vunpack.c.l.b16 %v1276
        %v4259 = vunpack.c.h.b16 %v1276
        %v4260 = vunpack.c.l.b16 %v1277
        %v4261 = vunpack.c.h.b16 %v1277
        %v4262 = vunpack.c.l.b16 %v1278
        %v4263 = vunpack.c.h.b16 %v1278
        %v4264 = vunpack.c.l.b16 %v1279
        %v4265 = vunpack.c.h.b16 %v1279
        %v4266 = vunpack.c.l.b16 %v1280
        %v4267 = vunpack.c.h.b16 %v1280
        %v4268 = vunpack.c.l.b16 %v1281
        %v4269 = vunpack.c.h.b16 %v1281
        %v4270 = vunpack.c.l.b16 %v1282
        %v4271 = vunpack.c.h.b16 %v1282
        %v4272 = vunpack.c.l.b16 %v1283
        %v4273 = vunpack.c.h.b16 %v1283
        %v4274 = vunpack.c.l.b16 %v1284
        %v4275 = vunpack.c.h.b16 %v1284
        %v4276 = vunpack.c.l.b16 %v1285
        %v4277 = vunpack.c.h.b16 %v1285
        %v4278 = vunpack.c.l.b16 %v1286
        %v4279 = vunpack.c.h.b16 %v1286
        %v4280 = vunpack.c.l.b16 %v1287
        %v4281 = vunpack.c.h.b16 %v1287
        %v4282 = vunpack.c.l.b16 %v1288
        %v4283 = vunpack.c.h.b16 %v1288
        %v4284 = vunpack.c.l.b16 %v1289
        %v4285 = vunpack.c.h.b16 %v1289
        %v4286 = vunpack.c.l.b16 %v1290
        %v4287 = vunpack.c.h.b16 %v1290
        %v4288 = vunpack.c.l.b16 %v1291
        %v4289 = vunpack.c.h.b16 %v1291
        %v4290 = vunpack.c.l.b16 %v1292
        %v4291 = vunpack.c.h.b16 %v1292
        %v4292 = vunpack.c.l.b16 %v1293
        %v4293 = vunpack.c.h.b16 %v1293
        %v4294 = vunpack.c.l.b16 %v1294
        %v4295 = vunpack.c.h.b16 %v1294
        %v4296 = vunpack.c.l.b16 %v1295
        %v4297 = vunpack.c.h.b16 %v1295
        %v4298 = vunpack.c.l.b16 %v1296
        %v4299 = vunpack.c.h.b16 %v1296
        %v4300 = vunpack.c.l.b16 %v1297
        %v4301 = vunpack.c.h.b16 %v1297
        %v4302 = vunpack.c.l.b16 %v1298
        %v4303 = vunpack.c.h.b16 %v1298
        %v4304 = vunpack.c.l.b16 %v1299
        %v4305 = vunpack.c.h.b16 %v1299
        %v4306 = vunpack.c.l.b16 %v1300
        %v4307 = vunpack.c.h.b16 %v1300
        %v4308 = vunpack.c.l.b16 %v1301
        %v4309 = vunpack.c.h.b16 %v1301
        %v4310 = vunpack.c.l.b16 %v1302
        %v4311 = vunpack.c.h.b16 %v1302
        %v4312 = vunpack.c.l.b16 %v1303
        %v4313 = vunpack.c.h.b16 %v1303
        %v4314 = vunpack.c.l.b16 %v1304
        %v4315 = vunpack.c.h.b16 %v1304
        %v4316 = vunpack.c.l.b16 %v1305
        %v4317 = vunpack.c.h.b16 %v1305
        %v4318 = vunpack.c.l.b16 %v1306
        %v4319 = vunpack.c.h.b16 %v1306
        %v4320 = vunpack.c.l.b16 %v1307
        %v4321 = vunpack.c.h.b16 %v1307
        %v4322 = vunpack.c.l.b16 %v1308
        %v4323 = vunpack.c.h.b16 %v1308
        %v4324 = vunpack.c.l.b16 %v1309
        %v4325 = vunpack.c.h.b16 %v1309
        %v4326 = vunpack.c.l.b16 %v1310
        %v4327 = vunpack.c.h.b16 %v1310
        %v4328 = vunpack.c.l.b16 %v1311
        %v4329 = vunpack.c.h.b16 %v1311
        %v4330 = vunpack.c.l.b16 %v1312
        %v4331 = vunpack.c.h.b16 %v1312
        %v4332 = vunpack.c.l.b16 %v1313
        %v4333 = vunpack.c.h.b16 %v1313
        %v4334 = vunpack.c.l.b16 %v1314
        %v4335 = vunpack.c.h.b16 %v1314
        %v4336 = vunpack.c.l.b16 %v1315
        %v4337 = vunpack.c.h.b16 %v1315
        %v4338 = vunpack.c.l.b16 %v1316
        %v4339 = vunpack.c.h.b16 %v1316
        %v4340 = vunpack.c.l.b16 %v1317
        %v4341 = vunpack.c.h.b16 %v1317
        %v4342 = vunpack.c.l.b16 %v1318
        %v4343 = vunpack.c.h.b16 %v1318
        %v4344 = vunpack.c.l.b16 %v1319
        %v4345 = vunpack.c.h.b16 %v1319
        %v4346 = vunpack.c.l.b16 %v1320
        %v4347 = vunpack.c.h.b16 %v1320
        %v4348 = vunpack.c.l.b16 %v1321
        %v4349 = vunpack.c.h.b16 %v1321
        %v4350 = vunpack.c.l.b16 %v1322
        %v4351 = vunpack.c.h.b16 %v1322
        %v4352 = vunpack.c.l.b16 %v1323
        %v4353 = vunpack.c.h.b16 %v1323
        %v4354 = vpack.c.b16 %v2438, %v2434
        %v4355 = vpack.c.b16 %v2439, %v2435
        %v4356 = vpack.c.b16 %v2440, %v2436
        %v4357 = vpack.c.b16 %v2441, %v2437
        %v4358 = vpack.c.b16 %v2446, %v2442
        %v4359 = vpack.c.b16 %v2447, %v2443
        %v4360 = vpack.c.b16 %v2448, %v2444
        %v4361 = vpack.c.b16 %v2449, %v2445
        %v4362 = vpack.c.b16 %v2454, %v2450
        %v4363 = vpack.c.b16 %v2455, %v2451
        %v4364 = vpack.c.b16 %v2456, %v2452
        %v4365 = vpack.c.b16 %v2457, %v2453
        %v4366 = vpack.c.b16 %v2462, %v2458
        %v4367 = vpack.c.b16 %v2463, %v2459
        %v4368 = vpack.c.b16 %v2464, %v2460
        %v4369 = vpack.c.b16 %v2465, %v2461
        %v4370 = vpack.c.b16 %v2470, %v2466
        %v4371 = vpack.c.b16 %v2471, %v2467
        %v4372 = vpack.c.b16 %v2472, %v2468
        %v4373 = vpack.c.b16 %v2473, %v2469
        %v4374 = vpack.c.b16 %v2478, %v2474
        %v4375 = vpack.c.b16 %v2479, %v2475
        %v4376 = vpack.c.b16 %v2480, %v2476
        %v4377 = vpack.c.b16 %v2481, %v2477
        %v4378 = vpack.c.b16 %v2486, %v2482
        %v4379 = vpack.c.b16 %v2487, %v2483
        %v4380 = vpack.c.b16 %v2488, %v2484
        %v4381 = vpack.c.b16 %v2489, %v2485
        %v4382 = vpack.c.b16 %v2494, %v2490
        %v4383 = vpack.c.b16 %v2495, %v2491
        %v4384 = vpack.c.b16 %v2496, %v2492
        %v4385 = vpack.c.b16 %v2497, %v2493
        %v4386 = vpack.c.b16 %v2502, %v2498
        %v4387 = vpack.c.b16 %v2503, %v2499
        %v4388 = vpack.c.b16 %v2504, %v2500
        %v4389 = vpack.c.b16 %v2505, %v2501
        %v4390 = vpack.c.b16 %v2510, %v2506
        %v4391 = vpack.c.b16 %v2511, %v2507
        %v4392 = vpack.c.b16 %v2512, %v2508
        %v4393 = vpack.c.b16 %v2513, %v2509
        %v4394 = vpack.c.b16 %v2518, %v2514
        %v4395 = vpack.c.b16 %v2519, %v2515
        %v4396 = vpack.c.b16 %v2520, %v2516
        %v4397 = vpack.c.b16 %v2521, %v2517
        %v4398 = vpack.c.b16 %v2526, %v2522
        %v4399 = vpack.c.b16 %v2527, %v2523
        %v4400 = vpack.c.b16 %v2528, %v2524
        %v4401 = vpack.c.b16 %v2529, %v2525
        %v4402 = vpack.c.b16 %v2534, %v2530
        %v4403 = vpack.c.b16 %v2535, %v2531
        %v4404 = vpack.c.b16 %v2536, %v2532
        %v4405 = vpack.c.b16 %v2537, %v2533
        %v4406 = vpack.c.b16 %v2542, %v2538
        %v4407 = vpack.c.b16 %v2543, %v2539
        %v4408 = vpack.c.b16 %v2544, %v2540
        %v4409 = vpack.c.b16 %v2545, %v2541
        %v4410 = vpack.c.b16 %v2550, %v2546
        %v4411 = vpack.c.b16 %v2551, %v2547
        %v4412 = vpack.c.b16 %v2552, %v2548
        %v4413 = vpack.c.b16 %v2553, %v2549
        %v4414 = vpack.c.b16 %v2558, %v2554
        %v4415 = vpack.c.b16 %v2559, %v2555
        %v4416 = vpack.c.b16 %v2560, %v2556
        %v4417 = vpack.c.b16 %v2561, %v2557
        %v4418 = vpack.c.b16 %v2566, %v2562
        %v4419 = vpack.c.b16 %v2567, %v2563
        %v4420 = vpack.c.b16 %v2568, %v2564
        %v4421 = vpack.c.b16 %v2569, %v2565
        %v4422 = vpack.c.b16 %v2574, %v2570
        %v4423 = vpack.c.b16 %v2575, %v2571
        %v4424 = vpack.c.b16 %v2576, %v2572
        %v4425 = vpack.c.b16 %v2577, %v2573
        %v4426 = vpack.c.b16 %v2582, %v2578
        %v4427 = vpack.c.b16 %v2583, %v2579
        %v4428 = vpack.c.b16 %v2584, %v2580
        %v4429 = vpack.c.b16 %v2585, %v2581
        %v4430 = vpack.c.b16 %v2590, %v2586
        %v4431 = vpack.c.b16 %v2591, %v2587
        %v4432 = vpack.c.b16 %v2592, %v2588
        %v4433 = vpack.c.b16 %v2593, %v2589
        %v4434 = vpack.c.b16 %v2598, %v2594
        %v4435 = vpack.c.b16 %v2599, %v2595
        %v4436 = vpack.c.b16 %v2600, %v2596
        %v4437 = vpack.c.b16 %v2601, %v2597
        %v4438 = vpack.c.b16 %v2606, %v2602
        %v4439 = vpack.c.b16 %v2607, %v2603
        %v4440 = vpack.c.b16 %v2608, %v2604
        %v4441 = vpack.c.b16 %v2609, %v2605
        %v4442 = vpack.c.b16 %v2614, %v2610
        %v4443 = vpack.c.b16 %v2615, %v2611
        %v4444 = vpack.c.b16 %v2616, %v2612
        %v4445 = vpack.c.b16 %v2617, %v2613
        %v4446 = vpack.c.b16 %v2622, %v2618
        %v4447 = vpack.c.b16 %v2623, %v2619
        %v4448 = vpack.c.b16 %v2624, %v2620
        %v4449 = vpack.c.b16 %v2625, %v2621
        %v4450 = vpack.c.b16 %v2630, %v2626
        %v4451 = vpack.c.b16 %v2631, %v2627
        %v4452 = vpack.c.b16 %v2632, %v2628
        %v4453 = vpack.c.b16 %v2633, %v2629
        %v4454 = vpack.c.b16 %v2638, %v2634
        %v4455 = vpack.c.b16 %v2639, %v2635
        %v4456 = vpack.c.b16 %v2640, %v2636
        %v4457 = vpack.c.b16 %v2641, %v2637
        %v4458 = vpack.c.b16 %v2646, %v2642
        %v4459 = vpack.c.b16 %v2647, %v2643
        %v4460 = vpack.c.b16 %v2648, %v2644
        %v4461 = vpack.c.b16 %v2649, %v2645
        %v4462 = vpack.c.b16 %v2654, %v2650
        %v4463 = vpack.c.b16 %v2655, %v2651
        %v4464 = vpack.c.b16 %v2656, %v2652
        %v4465 = vpack.c.b16 %v2657, %v2653
        %v4466 = vpack.c.b16 %v2662, %v2658
        %v4467 = vpack.c.b16 %v2663, %v2659
        %v4468 = vpack.c.b16 %v2664, %v2660
        %v4469 = vpack.c.b16 %v2665, %v2661
        %v4470 = vpack.c.b16 %v2670, %v2666
        %v4471 = vpack.c.b16 %v2671, %v2667
        %v4472 = vpack.c.b16 %v2672, %v2668
        %v4473 = vpack.c.b16 %v2673, %v2669
        %v4474 = vpack.c.b16 %v2678, %v2674
        %v4475 = vpack.c.b16 %v2679, %v2675
        %v4476 = vpack.c.b16 %v2680, %v2676
        %v4477 = vpack.c.b16 %v2681, %v2677
        %v4478 = vpack.c.b16 %v2686, %v2682
        %v4479 = vpack.c.b16 %v2687, %v2683
        %v4480 = vpack.c.b16 %v2688, %v2684
        %v4481 = vpack.c.b16 %v2689, %v2685
        %v4482 = vpack.c.b16 %v2694, %v2690
        %v4483 = vpack.c.b16 %v2695, %v2691
        %v4484 = vpack.c.b16 %v2696, %v2692
        %v4485 = vpack.c.b16 %v2697, %v2693
        %v4486 = vpack.c.b16 %v2702, %v2698
        %v4487 = vpack.c.b16 %v2703, %v2699
        %v4488 = vpack.c.b16 %v2704, %v2700
        %v4489 = vpack.c.b16 %v2705, %v2701
        %v4490 = vpack.c.b16 %v2710, %v2706
        %v4491 = vpack.c.b16 %v2711, %v2707
        %v4492 = vpack.c.b16 %v2712, %v2708
        %v4493 = vpack.c.b16 %v2713, %v2709
        %v4494 = vpack.c.b16 %v2718, %v2714
        %v4495 = vpack.c.b16 %v2719, %v2715
        %v4496 = vpack.c.b16 %v2720, %v2716
        %v4497 = vpack.c.b16 %v2721, %v2717
        %v4498 = vpack.c.b16 %v2726, %v2722
        %v4499 = vpack.c.b16 %v2727, %v2723
        %v4500 = vpack.c.b16 %v2728, %v2724
        %v4501 = vpack.c.b16 %v2729, %v2725
        %v4502 = vpack.c.b16 %v2734, %v2730
        %v4503 = vpack.c.b16 %v2735, %v2731
        %v4504 = vpack.c.b16 %v2736, %v2732
        %v4505 = vpack.c.b16 %v2737, %v2733
        %v4506 = vpack.c.b16 %v2742, %v2738
        %v4507 = vpack.c.b16 %v2743, %v2739
        %v4508 = vpack.c.b16 %v2744, %v2740
        %v4509 = vpack.c.b16 %v2745, %v2741
        %v4510 = vpack.c.b16 %v2750, %v2746
        %v4511 = vpack.c.b16 %v2751, %v2747
        %v4512 = vpack.c.b16 %v2752, %v2748
        %v4513 = vpack.c.b16 %v2753, %v2749
        %v4514 = vpack.c.b16 %v2758, %v2754
        %v4515 = vpack.c.b16 %v2759, %v2755
        %v4516 = vpack.c.b16 %v2760, %v2756
        %v4517 = vpack.c.b16 %v2761, %v2757
        %v4518 = vpack.c.b16 %v2766, %v2762
        %v4519 = vpack.c.b16 %v2767, %v2763
        %v4520 = vpack.c.b16 %v2768, %v2764
        %v4521 = vpack.c.b16 %v2769, %v2765
        %v4522 = vpack.c.b16 %v2774, %v2770
        %v4523 = vpack.c.b16 %v2775, %v2771
        %v4524 = vpack.c.b16 %v2776, %v2772
        %v4525 = vpack.c.b16 %v2777, %v2773
        %v4526 = vpack.c.b16 %v2782, %v2778
        %v4527 = vpack.c.b16 %v2783, %v2779
        %v4528 = vpack.c.b16 %v2784, %v2780
        %v4529 = vpack.c.b16 %v2785, %v2781
        %v4530 = vpack.c.b16 %v2790, %v2786
        %v4531 = vpack.c.b16 %v2791, %v2787
        %v4532 = vpack.c.b16 %v2792, %v2788
        %v4533 = vpack.c.b16 %v2793, %v2789
        %v4534 = vpack.c.b16 %v2798, %v2794
        %v4535 = vpack.c.b16 %v2799, %v2795
        %v4536 = vpack.c.b16 %v2800, %v2796
        %v4537 = vpack.c.b16 %v2801, %v2797
        %v4538 = vpack.c.b16 %v2806, %v2802
        %v4539 = vpack.c.b16 %v2807, %v2803
        %v4540 = vpack.c.b16 %v2808, %v2804
        %v4541 = vpack.c.b16 %v2809, %v2805
        %v4542 = vpack.c.b16 %v2814, %v2810
        %v4543 = vpack.c.b16 %v2815, %v2811
        %v4544 = vpack.c.b16 %v2816, %v2812
        %v4545 = vpack.c.b16 %v2817, %v2813
        %v4546 = vpack.c.b16 %v2822, %v2818
        %v4547 = vpack.c.b16 %v2823, %v2819
        %v4548 = vpack.c.b16 %v2824, %v2820
        %v4549 = vpack.c.b16 %v2825, %v2821
        %v4550 = vpack.c.b16 %v2830, %v2826
        %v4551 = vpack.c.b16 %v2831, %v2827
        %v4552 = vpack.c.b16 %v2832, %v2828
        %v4553 = vpack.c.b16 %v2833, %v2829
        %v4554 = vpack.c.b16 %v2838, %v2834
        %v4555 = vpack.c.b16 %v2839, %v2835
        %v4556 = vpack.c.b16 %v2840, %v2836
        %v4557 = vpack.c.b16 %v2841, %v2837
        %v4558 = vpack.c.b16 %v2846, %v2842
        %v4559 = vpack.c.b16 %v2847, %v2843
        %v4560 = vpack.c.b16 %v2848, %v2844
        %v4561 = vpack.c.b16 %v2849, %v2845
        %v4562 = vpack.c.b16 %v2854, %v2850
        %v4563 = vpack.c.b16 %v2855, %v2851
        %v4564 = vpack.c.b16 %v2856, %v2852
        %v4565 = vpack.c.b16 %v2857, %v2853
        %v4566 = vpack.c.b16 %v2862, %v2858
        %v4567 = vpack.c.b16 %v2863, %v2859
        %v4568 = vpack.c.b16 %v2864, %v2860
        %v4569 = vpack.c.b16 %v2865, %v2861
        %v4570 = vpack.c.b16 %v2870, %v2866
        %v4571 = vpack.c.b16 %v2871, %v2867
        %v4572 = vpack.c.b16 %v2872, %v2868
        %v4573 = vpack.c.b16 %v2873, %v2869
        %v4574 = vpack.c.b16 %v2878, %v2874
        %v4575 = vpack.c.b16 %v2879, %v2875
        %v4576 = vpack.c.b16 %v2880, %v2876
        %v4577 = vpack.c.b16 %v2881, %v2877
        %v4578 = vpack.c.b16 %v2886, %v2882
        %v4579 = vpack.c.b16 %v2887, %v2883
        %v4580 = vpack.c.b16 %v2888, %v2884
        %v4581 = vpack.c.b16 %v2889, %v2885
        %v4582 = vpack.c.b16 %v2894, %v2890
        %v4583 = vpack.c.b16 %v2895, %v2891
        %v4584 = vpack.c.b16 %v2896, %v2892
        %v4585 = vpack.c.b16 %v2897, %v2893
        %v4586 = vpack.c.b16 %v2902, %v2898
        %v4587 = vpack.c.b16 %v2903, %v2899
        %v4588 = vpack.c.b16 %v2904, %v2900
        %v4589 = vpack.c.b16 %v2905, %v2901
        %v4590 = vpack.c.b16 %v2910, %v2906
        %v4591 = vpack.c.b16 %v2911, %v2907
        %v4592 = vpack.c.b16 %v2912, %v2908
        %v4593 = vpack.c.b16 %v2913, %v2909
        %v4594 = vpack.c.b16 %v2918, %v2914
        %v4595 = vpack.c.b16 %v2919, %v2915
        %v4596 = vpack.c.b16 %v2920, %v2916
        %v4597 = vpack.c.b16 %v2921, %v2917
        %v4598 = vpack.c.b16 %v2926, %v2922
        %v4599 = vpack.c.b16 %v2927, %v2923
        %v4600 = vpack.c.b16 %v2928, %v2924
        %v4601 = vpack.c.b16 %v2929, %v2925
        %v4602 = vpack.c.b16 %v2934, %v2930
        %v4603 = vpack.c.b16 %v2935, %v2931
        %v4604 = vpack.c.b16 %v2936, %v2932
        %v4605 = vpack.c.b16 %v2937, %v2933
        %v4606 = vpack.c.b16 %v2942, %v2938
        %v4607 = vpack.c.b16 %v2943, %v2939
        %v4608 = vpack.c.b16 %v2944, %v2940
        %v4609 = vpack.c.b16 %v2945, %v2941
        %v4610 = vpack.c.b16 %v2950, %v2946
        %v4611 = vpack.c.b16 %v2951, %v2947
        %v4612 = vpack.c.b16 %v2952, %v2948
        %v4613 = vpack.c.b16 %v2953, %v2949
        %v4614 = vpack.c.b16 %v2958, %v2954
        %v4615 = vpack.c.b16 %v2959, %v2955
        %v4616 = vpack.c.b16 %v2960, %v2956
        %v4617 = vpack.c.b16 %v2961, %v2957
        %v4618 = vpack.c.b16 %v2966, %v2962
        %v4619 = vpack.c.b16 %v2967, %v2963
        %v4620 = vpack.c.b16 %v2968, %v2964
        %v4621 = vpack.c.b16 %v2969, %v2965
        %v4622 = vpack.c.b16 %v2974, %v2970
        %v4623 = vpack.c.b16 %v2975, %v2971
        %v4624 = vpack.c.b16 %v2976, %v2972
        %v4625 = vpack.c.b16 %v2977, %v2973
        %v4626 = vpack.c.b16 %v2982, %v2978
        %v4627 = vpack.c.b16 %v2983, %v2979
        %v4628 = vpack.c.b16 %v2984, %v2980
        %v4629 = vpack.c.b16 %v2985, %v2981
        %v4630 = vpack.c.b16 %v2990, %v2986
        %v4631 = vpack.c.b16 %v2991, %v2987
        %v4632 = vpack.c.b16 %v2992, %v2988
        %v4633 = vpack.c.b16 %v2993, %v2989
        %v4634 = vpack.c.b16 %v2998, %v2994
        %v4635 = vpack.c.b16 %v2999, %v2995
        %v4636 = vpack.c.b16 %v3000, %v2996
        %v4637 = vpack.c.b16 %v3001, %v2997
        %v4638 = vpack.c.b16 %v3006, %v3002
        %v4639 = vpack.c.b16 %v3007, %v3003
        %v4640 = vpack.c.b16 %v3008, %v3004
        %v4641 = vpack.c.b16 %v3009, %v3005
        %v4642 = vpack.c.b16 %v3014, %v3010
        %v4643 = vpack.c.b16 %v3015, %v3011
        %v4644 = vpack.c.b16 %v3016, %v3012
        %v4645 = vpack.c.b16 %v3017, %v3013
        %v4646 = vpack.c.b16 %v3022, %v3018
        %v4647 = vpack.c.b16 %v3023, %v3019
        %v4648 = vpack.c.b16 %v3024, %v3020
        %v4649 = vpack.c.b16 %v3025, %v3021
        %v4650 = vpack.c.b16 %v3030, %v3026
        %v4651 = vpack.c.b16 %v3031, %v3027
        %v4652 = vpack.c.b16 %v3032, %v3028
        %v4653 = vpack.c.b16 %v3033, %v3029
        %v4654 = vpack.c.b16 %v3038, %v3034
        %v4655 = vpack.c.b16 %v3039, %v3035
        %v4656 = vpack.c.b16 %v3040, %v3036
        %v4657 = vpack.c.b16 %v3041, %v3037
        %v4658 = vpack.c.b16 %v3046, %v3042
        %v4659 = vpack.c.b16 %v3047, %v3043
        %v4660 = vpack.c.b16 %v3048, %v3044
        %v4661 = vpack.c.b16 %v3049, %v3045
        %v4662 = vpack.c.b16 %v3054, %v3050
        %v4663 = vpack.c.b16 %v3055, %v3051
        %v4664 = vpack.c.b16 %v3056, %v3052
        %v4665 = vpack.c.b16 %v3057, %v3053
        %v4666 = vpack.c.b16 %v3062, %v3058
        %v4667 = vpack.c.b16 %v3063, %v3059
        %v4668 = vpack.c.b16 %v3064, %v3060
        %v4669 = vpack.c.b16 %v3065, %v3061
        %v4670 = vpack.c.b16 %v3070, %v3066
        %v4671 = vpack.c.b16 %v3071, %v3067
        %v4672 = vpack.c.b16 %v3072, %v3068
        %v4673 = vpack.c.b16 %v3073, %v3069
        %v4674 = vpack.c.b16 %v3078, %v3074
        %v4675 = vpack.c.b16 %v3079, %v3075
        %v4676 = vpack.c.b16 %v3080, %v3076
        %v4677 = vpack.c.b16 %v3081, %v3077
        %v4678 = vpack.c.b16 %v3086, %v3082
        %v4679 = vpack.c.b16 %v3087, %v3083
        %v4680 = vpack.c.b16 %v3088, %v3084
        %v4681 = vpack.c.b16 %v3089, %v3085
        %v4682 = vpack.c.b16 %v3094, %v3090
        %v4683 = vpack.c.b16 %v3095, %v3091
        %v4684 = vpack.c.b16 %v3096, %v3092
        %v4685 = vpack.c.b16 %v3097, %v3093
        %v4686 = vpack.c.b16 %v3102, %v3098
        %v4687 = vpack.c.b16 %v3103, %v3099
        %v4688 = vpack.c.b16 %v3104, %v3100
        %v4689 = vpack.c.b16 %v3105, %v3101
        %v4690 = vpack.c.b16 %v3110, %v3106
        %v4691 = vpack.c.b16 %v3111, %v3107
        %v4692 = vpack.c.b16 %v3112, %v3108
        %v4693 = vpack.c.b16 %v3113, %v3109
        %v4694 = vpack.c.b16 %v3118, %v3114
        %v4695 = vpack.c.b16 %v3119, %v3115
        %v4696 = vpack.c.b16 %v3120, %v3116
        %v4697 = vpack.c.b16 %v3121, %v3117
        %v4698 = vpack.c.b16 %v3126, %v3122
        %v4699 = vpack.c.b16 %v3127, %v3123
        %v4700 = vpack.c.b16 %v3128, %v3124
        %v4701 = vpack.c.b16 %v3129, %v3125
        %v4702 = vpack.c.b16 %v3134, %v3130
        %v4703 = vpack.c.b16 %v3135, %v3131
        %v4704 = vpack.c.b16 %v3136, %v3132
        %v4705 = vpack.c.b16 %v3137, %v3133
        %v4706 = vpack.c.b16 %v3142, %v3138
        %v4707 = vpack.c.b16 %v3143, %v3139
        %v4708 = vpack.c.b16 %v3144, %v3140
        %v4709 = vpack.c.b16 %v3145, %v3141
        %v4710 = vpack.c.b16 %v3150, %v3146
        %v4711 = vpack.c.b16 %v3151, %v3147
        %v4712 = vpack.c.b16 %v3152, %v3148
        %v4713 = vpack.c.b16 %v3153, %v3149
        %v4714 = vpack.c.b16 %v3158, %v3154
        %v4715 = vpack.c.b16 %v3159, %v3155
        %v4716 = vpack.c.b16 %v3160, %v3156
        %v4717 = vpack.c.b16 %v3161, %v3157
        %v4718 = vpack.c.b16 %v3166, %v3162
        %v4719 = vpack.c.b16 %v3167, %v3163
        %v4720 = vpack.c.b16 %v3168, %v3164
        %v4721 = vpack.c.b16 %v3169, %v3165
        %v4722 = vpack.c.b16 %v3174, %v3170
        %v4723 = vpack.c.b16 %v3175, %v3171
        %v4724 = vpack.c.b16 %v3176, %v3172
        %v4725 = vpack.c.b16 %v3177, %v3173
        %v4726 = vpack.c.b16 %v3182, %v3178
        %v4727 = vpack.c.b16 %v3183, %v3179
        %v4728 = vpack.c.b16 %v3184, %v3180
        %v4729 = vpack.c.b16 %v3185, %v3181
        %v4730 = vpack.c.b16 %v3190, %v3186
        %v4731 = vpack.c.b16 %v3191, %v3187
        %v4732 = vpack.c.b16 %v3192, %v3188
        %v4733 = vpack.c.b16 %v3193, %v3189
        %v4734 = vpack.c.b16 %v3198, %v3194
        %v4735 = vpack.c.b16 %v3199, %v3195
        %v4736 = vpack.c.b16 %v3200, %v3196
        %v4737 = vpack.c.b16 %v3201, %v3197
        %v4738 = vpack.c.b16 %v3206, %v3202
        %v4739 = vpack.c.b16 %v3207, %v3203
        %v4740 = vpack.c.b16 %v3208, %v3204
        %v4741 = vpack.c.b16 %v3209, %v3205
        %v4742 = vpack.c.b16 %v3214, %v3210
        %v4743 = vpack.c.b16 %v3215, %v3211
        %v4744 = vpack.c.b16 %v3216, %v3212
        %v4745 = vpack.c.b16 %v3217, %v3213
        %v4746 = vpack.c.b16 %v3222, %v3218
        %v4747 = vpack.c.b16 %v3223, %v3219
        %v4748 = vpack.c.b16 %v3224, %v3220
        %v4749 = vpack.c.b16 %v3225, %v3221
        %v4750 = vpack.c.b16 %v3230, %v3226
        %v4751 = vpack.c.b16 %v3231, %v3227
        %v4752 = vpack.c.b16 %v3232, %v3228
        %v4753 = vpack.c.b16 %v3233, %v3229
        %v4754 = vpack.c.b16 %v3238, %v3234
        %v4755 = vpack.c.b16 %v3239, %v3235
        %v4756 = vpack.c.b16 %v3240, %v3236
        %v4757 = vpack.c.b16 %v3241, %v3237
        %v4758 = vpack.c.b16 %v3246, %v3242
        %v4759 = vpack.c.b16 %v3247, %v3243
        %v4760 = vpack.c.b16 %v3248, %v3244
        %v4761 = vpack.c.b16 %v3249, %v3245
        %v4762 = vpack.c.b16 %v3254, %v3250
        %v4763 = vpack.c.b16 %v3255, %v3251
        %v4764 = vpack.c.b16 %v3256, %v3252
        %v4765 = vpack.c.b16 %v3257, %v3253
        %v4766 = vpack.c.b16 %v3262, %v3258
        %v4767 = vpack.c.b16 %v3263, %v3259
        %v4768 = vpack.c.b16 %v3264, %v3260
        %v4769 = vpack.c.b16 %v3265, %v3261
        %v4770 = vpack.c.b16 %v3270, %v3266
        %v4771 = vpack.c.b16 %v3271, %v3267
        %v4772 = vpack.c.b16 %v3272, %v3268
        %v4773 = vpack.c.b16 %v3273, %v3269
        %v4774 = vpack.c.b16 %v3278, %v3274
        %v4775 = vpack.c.b16 %v3279, %v3275
        %v4776 = vpack.c.b16 %v3280, %v3276
        %v4777 = vpack.c.b16 %v3281, %v3277
        %v4778 = vpack.c.b16 %v3286, %v3282
        %v4779 = vpack.c.b16 %v3287, %v3283
        %v4780 = vpack.c.b16 %v3288, %v3284
        %v4781 = vpack.c.b16 %v3289, %v3285
        %v4782 = vpack.c.b16 %v3294, %v3290
        %v4783 = vpack.c.b16 %v3295, %v3291
        %v4784 = vpack.c.b16 %v3296, %v3292
        %v4785 = vpack.c.b16 %v3297, %v3293
        %v4786 = vpack.c.b16 %v3302, %v3298
        %v4787 = vpack.c.b16 %v3303, %v3299
        %v4788 = vpack.c.b16 %v3304, %v3300
        %v4789 = vpack.c.b16 %v3305, %v3301
        %v4790 = vpack.c.b16 %v3310, %v3306
        %v4791 = vpack.c.b16 %v3311, %v3307
        %v4792 = vpack.c.b16 %v3312, %v3308
        %v4793 = vpack.c.b16 %v3313, %v3309
        %v4794 = vpack.c.b16 %v3318, %v3314
        %v4795 = vpack.c.b16 %v3319, %v3315
        %v4796 = vpack.c.b16 %v3320, %v3316
        %v4797 = vpack.c.b16 %v3321, %v3317
        %v4798 = vpack.c.b16 %v3326, %v3322
        %v4799 = vpack.c.b16 %v3327, %v3323
        %v4800 = vpack.c.b16 %v3328, %v3324
        %v4801 = vpack.c.b16 %v3329, %v3325
        %v4802 = vpack.c.b16 %v3334, %v3330
        %v4803 = vpack.c.b16 %v3335, %v3331
        %v4804 = vpack.c.b16 %v3336, %v3332
        %v4805 = vpack.c.b16 %v3337, %v3333
        %v4806 = vpack.c.b16 %v3342, %v3338
        %v4807 = vpack.c.b16 %v3343, %v3339
        %v4808 = vpack.c.b16 %v3344, %v3340
        %v4809 = vpack.c.b16 %v3345, %v3341
        %v4810 = vpack.c.b16 %v3350, %v3346
        %v4811 = vpack.c.b16 %v3351, %v3347
        %v4812 = vpack.c.b16 %v3352, %v3348
        %v4813 = vpack.c.b16 %v3353, %v3349
        %v4814 = vpack.c.b16 %v3358, %v3354
        %v4815 = vpack.c.b16 %v3359, %v3355
        %v4816 = vpack.c.b16 %v3360, %v3356
        %v4817 = vpack.c.b16 %v3361, %v3357
        %v4818 = vpack.c.b16 %v3366, %v3362
        %v4819 = vpack.c.b16 %v3367, %v3363
        %v4820 = vpack.c.b16 %v3368, %v3364
        %v4821 = vpack.c.b16 %v3369, %v3365
        %v4822 = vpack.c.b16 %v3374, %v3370
        %v4823 = vpack.c.b16 %v3375, %v3371
        %v4824 = vpack.c.b16 %v3376, %v3372
        %v4825 = vpack.c.b16 %v3377, %v3373
        %v4826 = vpack.c.b16 %v3382, %v3378
        %v4827 = vpack.c.b16 %v3383, %v3379
        %v4828 = vpack.c.b16 %v3384, %v3380
        %v4829 = vpack.c.b16 %v3385, %v3381
        %v4830 = vpack.c.b16 %v3390, %v3386
        %v4831 = vpack.c.b16 %v3391, %v3387
        %v4832 = vpack.c.b16 %v3392, %v3388
        %v4833 = vpack.c.b16 %v3393, %v3389
        %v4834 = vpack.c.b16 %v3398, %v3394
        %v4835 = vpack.c.b16 %v3399, %v3395
        %v4836 = vpack.c.b16 %v3400, %v3396
        %v4837 = vpack.c.b16 %v3401, %v3397
        %v4838 = vpack.c.b16 %v3406, %v3402
        %v4839 = vpack.c.b16 %v3407, %v3403
        %v4840 = vpack.c.b16 %v3408, %v3404
        %v4841 = vpack.c.b16 %v3409, %v3405
        %v4842 = vpack.c.b16 %v3414, %v3410
        %v4843 = vpack.c.b16 %v3415, %v3411
        %v4844 = vpack.c.b16 %v3416, %v3412
        %v4845 = vpack.c.b16 %v3417, %v3413
        %v4846 = vpack.c.b16 %v3422, %v3418
        %v4847 = vpack.c.b16 %v3423, %v3419
        %v4848 = vpack.c.b16 %v3424, %v3420
        %v4849 = vpack.c.b16 %v3425, %v3421
        %v4850 = vpack.c.b16 %v3430, %v3426
        %v4851 = vpack.c.b16 %v3431, %v3427
        %v4852 = vpack.c.b16 %v3432, %v3428
        %v4853 = vpack.c.b16 %v3433, %v3429
        %v4854 = vpack.c.b16 %v3438, %v3434
        %v4855 = vpack.c.b16 %v3439, %v3435
        %v4856 = vpack.c.b16 %v3440, %v3436
        %v4857 = vpack.c.b16 %v3441, %v3437
        %v4858 = vpack.c.b16 %v3446, %v3442
        %v4859 = vpack.c.b16 %v3447, %v3443
        %v4860 = vpack.c.b16 %v3448, %v3444
        %v4861 = vpack.c.b16 %v3449, %v3445
        %v4862 = vpack.c.b16 %v3454, %v3450
        %v4863 = vpack.c.b16 %v3455, %v3451
        %v4864 = vpack.c.b16 %v3456, %v3452
        %v4865 = vpack.c.b16 %v3457, %v3453
        %v4866 = vpack.c.b16 %v3462, %v3458
        %v4867 = vpack.c.b16 %v3463, %v3459
        %v4868 = vpack.c.b16 %v3464, %v3460
        %v4869 = vpack.c.b16 %v3465, %v3461
        %v4870 = vpack.c.b16 %v3470, %v3466
        %v4871 = vpack.c.b16 %v3471, %v3467
        %v4872 = vpack.c.b16 %v3472, %v3468
        %v4873 = vpack.c.b16 %v3473, %v3469
        %v4874 = vpack.c.b16 %v3478, %v3474
        %v4875 = vpack.c.b16 %v3479, %v3475
        %v4876 = vpack.c.b16 %v3480, %v3476
        %v4877 = vpack.c.b16 %v3481, %v3477
        %v4878 = vpack.c.b16 %v3486, %v3482
        %v4879 = vpack.c.b16 %v3487, %v3483
        %v4880 = vpack.c.b16 %v3488, %v3484
        %v4881 = vpack.c.b16 %v3489, %v3485
        %v4882 = vpack.c.b16 %v3494, %v3490
        %v4883 = vpack.c.b16 %v3495, %v3491
        %v4884 = vpack.c.b16 %v3496, %v3492
        %v4885 = vpack.c.b16 %v3497, %v3493
        %v4886 = vpack.c.b16 %v3502, %v3498
        %v4887 = vpack.c.b16 %v3503, %v3499
        %v4888 = vpack.c.b16 %v3504, %v3500
        %v4889 = vpack.c.b16 %v3505, %v3501
        %v4890 = vpack.c.b16 %v3510, %v3506
        %v4891 = vpack.c.b16 %v3511, %v3507
        %v4892 = vpack.c.b16 %v3512, %v3508
        %v4893 = vpack.c.b16 %v3513, %v3509
        %v4894 = vpack.c.b16 %v3518, %v3514
        %v4895 = vpack.c.b16 %v3519, %v3515
        %v4896 = vpack.c.b16 %v3520, %v3516
        %v4897 = vpack.c.b16 %v3521, %v3517
        %v4898 = vpack.c.b16 %v3526, %v3522
        %v4899 = vpack.c.b16 %v3527, %v3523
        %v4900 = vpack.c.b16 %v3528, %v3524
        %v4901 = vpack.c.b16 %v3529, %v3525
        %v4902 = vpack.c.b16 %v3534, %v3530
        %v4903 = vpack.c.b16 %v3535, %v3531
        %v4904 = vpack.c.b16 %v3536, %v3532
        %v4905 = vpack.c.b16 %v3537, %v3533
        %v4906 = vpack.c.b16 %v3542, %v3538
        %v4907 = vpack.c.b16 %v3543, %v3539
        %v4908 = vpack.c.b16 %v3544, %v3540
        %v4909 = vpack.c.b16 %v3545, %v3541
        %v4910 = vpack.c.b16 %v3550, %v3546
        %v4911 = vpack.c.b16 %v3551, %v3547
        %v4912 = vpack.c.b16 %v3552, %v3548
        %v4913 = vpack.c.b16 %v3553, %v3549
        %v4914 = vpack.c.b16 %v3558, %v3554
        %v4915 = vpack.c.b16 %v3559, %v3555
        %v4916 = vpack.c.b16 %v3560, %v3556
        %v4917 = vpack.c.b16 %v3561, %v3557
        %v4918 = vpack.c.b16 %v3566, %v3562
        %v4919 = vpack.c.b16 %v3567, %v3563
        %v4920 = vpack.c.b16 %v3568, %v3564
        %v4921 = vpack.c.b16 %v3569, %v3565
        %v4922 = vpack.c.b16 %v3574, %v3570
        %v4923 = vpack.c.b16 %v3575, %v3571
        %v4924 = vpack.c.b16 %v3576, %v3572
        %v4925 = vpack.c.b16 %v3577, %v3573
        %v4926 = vpack.c.b16 %v3582, %v3578
        %v4927 = vpack.c.b16 %v3583, %v3579
        %v4928 = vpack.c.b16 %v3584, %v3580
        %v4929 = vpack.c.b16 %v3585, %v3581
        %v4930 = vpack.c.b16 %v3590, %v3586
        %v4931 = vpack.c.b16 %v3591, %v3587
        %v4932 = vpack.c.b16 %v3592, %v3588
        %v4933 = vpack.c.b16 %v3593, %v3589
        %v4934 = vpack.c.b16 %v3598, %v3594
        %v4935 = vpack.c.b16 %v3599, %v3595
        %v4936 = vpack.c.b16 %v3600, %v3596
        %v4937 = vpack.c.b16 %v3601, %v3597
        %v4938 = vpack.c.b16 %v3606, %v3602
        %v4939 = vpack.c.b16 %v3607, %v3603
        %v4940 = vpack.c.b16 %v3608, %v3604
        %v4941 = vpack.c.b16 %v3609, %v3605
        %v4942 = vpack.c.b16 %v3614, %v3610
        %v4943 = vpack.c.b16 %v3615, %v3611
        %v4944 = vpack.c.b16 %v3616, %v3612
        %v4945 = vpack.c.b16 %v3617, %v3613
        %v4946 = vpack.c.b16 %v3622, %v3618
        %v4947 = vpack.c.b16 %v3623, %v3619
        %v4948 = vpack.c.b16 %v3624, %v3620
        %v4949 = vpack.c.b16 %v3625, %v3621
        %v4950 = vpack.c.b16 %v3630, %v3626
        %v4951 = vpack.c.b16 %v3631, %v3627
        %v4952 = vpack.c.b16 %v3632, %v3628
        %v4953 = vpack.c.b16 %v3633, %v3629
        %v4954 = vpack.c.b16 %v3638, %v3634
        %v4955 = vpack.c.b16 %v3639, %v3635
        %v4956 = vpack.c.b16 %v3640, %v3636
        %v4957 = vpack.c.b16 %v3641, %v3637
        %v4958 = vpack.c.b16 %v3646, %v3642
        %v4959 = vpack.c.b16 %v3647, %v3643
        %v4960 = vpack.c.b16 %v3648, %v3644
        %v4961 = vpack.c.b16 %v3649, %v3645
        %v4962 = vpack.c.b16 %v3654, %v3650
        %v4963 = vpack.c.b16 %v3655, %v3651
        %v4964 = vpack.c.b16 %v3656, %v3652
        %v4965 = vpack.c.b16 %v3657, %v3653
        %v4966 = vpack.c.b16 %v3662, %v3658
        %v4967 = vpack.c.b16 %v3663, %v3659
        %v4968 = vpack.c.b16 %v3664, %v3660
        %v4969 = vpack.c.b16 %v3665, %v3661
        %v4970 = vpack.c.b16 %v3670, %v3666
        %v4971 = vpack.c.b16 %v3671, %v3667
        %v4972 = vpack.c.b16 %v3672, %v3668
        %v4973 = vpack.c.b16 %v3673, %v3669
        %v4974 = vpack.c.b16 %v3678, %v3674
        %v4975 = vpack.c.b16 %v3679, %v3675
        %v4976 = vpack.c.b16 %v3680, %v3676
        %v4977 = vpack.c.b16 %v3681, %v3677
        %v4978 = vpack.c.b16 %v3686, %v3682
        %v4979 = vpack.c.b16 %v3687, %v3683
        %v4980 = vpack.c.b16 %v3688, %v3684
        %v4981 = vpack.c.b16 %v3689, %v3685
        %v4982 = vpack.c.b16 %v3694, %v3690
        %v4983 = vpack.c.b16 %v3695, %v3691
        %v4984 = vpack.c.b16 %v3696, %v3692
        %v4985 = vpack.c.b16 %v3697, %v3693
        %v4986 = vpack.c.b16 %v3702, %v3698
        %v4987 = vpack.c.b16 %v3703, %v3699
        %v4988 = vpack.c.b16 %v3704, %v3700
        %v4989 = vpack.c.b16 %v3705, %v3701
        %v4990 = vpack.c.b16 %v3710, %v3706
        %v4991 = vpack.c.b16 %v3711, %v3707
        %v4992 = vpack.c.b16 %v3712, %v3708
        %v4993 = vpack.c.b16 %v3713, %v3709
        %v4994 = vpack.c.b16 %v3718, %v3714
        %v4995 = vpack.c.b16 %v3719, %v3715
        %v4996 = vpack.c.b16 %v3720, %v3716
        %v4997 = vpack.c.b16 %v3721, %v3717
        %v4998 = vpack.c.b16 %v3726, %v3722
        %v4999 = vpack.c.b16 %v3727, %v3723
        %v5000 = vpack.c.b16 %v3728, %v3724
        %v5001 = vpack.c.b16 %v3729, %v3725
        %v5002 = vpack.c.b16 %v3734, %v3730
        %v5003 = vpack.c.b16 %v3735, %v3731
        %v5004 = vpack.c.b16 %v3736, %v3732
        %v5005 = vpack.c.b16 %v3737, %v3733
        %v5006 = vpack.c.b16 %v3742, %v3738
        %v5007 = vpack.c.b16 %v3743, %v3739
        %v5008 = vpack.c.b16 %v3744, %v3740
        %v5009 = vpack.c.b16 %v3745, %v3741
        %v5010 = vpack.c.b16 %v3750, %v3746
        %v5011 = vpack.c.b16 %v3751, %v3747
        %v5012 = vpack.c.b16 %v3752, %v3748
        %v5013 = vpack.c.b16 %v3753, %v3749
        %v5014 = vpack.c.b16 %v3758, %v3754
        %v5015 = vpack.c.b16 %v3759, %v3755
        %v5016 = vpack.c.b16 %v3760, %v3756
        %v5017 = vpack.c.b16 %v3761, %v3757
        %v5018 = vpack.c.b16 %v3766, %v3762
        %v5019 = vpack.c.b16 %v3767, %v3763
        %v5020 = vpack.c.b16 %v3768, %v3764
        %v5021 = vpack.c.b16 %v3769, %v3765
        %v5022 = vpack.c.b16 %v3774, %v3770
        %v5023 = vpack.c.b16 %v3775, %v3771
        %v5024 = vpack.c.b16 %v3776, %v3772
        %v5025 = vpack.c.b16 %v3777, %v3773
        %v5026 = vpack.c.b16 %v3782, %v3778
        %v5027 = vpack.c.b16 %v3783, %v3779
        %v5028 = vpack.c.b16 %v3784, %v3780
        %v5029 = vpack.c.b16 %v3785, %v3781
        %v5030 = vpack.c.b16 %v3790, %v3786
        %v5031 = vpack.c.b16 %v3791, %v3787
        %v5032 = vpack.c.b16 %v3792, %v3788
        %v5033 = vpack.c.b16 %v3793, %v3789
        %v5034 = vpack.c.b16 %v3798, %v3794
        %v5035 = vpack.c.b16 %v3799, %v3795
        %v5036 = vpack.c.b16 %v3800, %v3796
        %v5037 = vpack.c.b16 %v3801, %v3797
        %v5038 = vpack.c.b16 %v3806, %v3802
        %v5039 = vpack.c.b16 %v3807, %v3803
        %v5040 = vpack.c.b16 %v3808, %v3804
        %v5041 = vpack.c.b16 %v3809, %v3805
        %v5042 = vpack.c.b16 %v3814, %v3810
        %v5043 = vpack.c.b16 %v3815, %v3811
        %v5044 = vpack.c.b16 %v3816, %v3812
        %v5045 = vpack.c.b16 %v3817, %v3813
        %v5046 = vpack.c.b16 %v3822, %v3818
        %v5047 = vpack.c.b16 %v3823, %v3819
        %v5048 = vpack.c.b16 %v3824, %v3820
        %v5049 = vpack.c.b16 %v3825, %v3821
        %v5050 = vpack.c.b16 %v3830, %v3826
        %v5051 = vpack.c.b16 %v3831, %v3827
        %v5052 = vpack.c.b16 %v3832, %v3828
        %v5053 = vpack.c.b16 %v3833, %v3829
        %v5054 = vpack.c.b16 %v3838, %v3834
        %v5055 = vpack.c.b16 %v3839, %v3835
        %v5056 = vpack.c.b16 %v3840, %v3836
        %v5057 = vpack.c.b16 %v3841, %v3837
        %v5058 = vpack.c.b16 %v3846, %v3842
        %v5059 = vpack.c.b16 %v3847, %v3843
        %v5060 = vpack.c.b16 %v3848, %v3844
        %v5061 = vpack.c.b16 %v3849, %v3845
        %v5062 = vpack.c.b16 %v3854, %v3850
        %v5063 = vpack.c.b16 %v3855, %v3851
        %v5064 = vpack.c.b16 %v3856, %v3852
        %v5065 = vpack.c.b16 %v3857, %v3853
        %v5066 = vpack.c.b16 %v3862, %v3858
        %v5067 = vpack.c.b16 %v3863, %v3859
        %v5068 = vpack.c.b16 %v3864, %v3860
        %v5069 = vpack.c.b16 %v3865, %v3861
        %v5070 = vpack.c.b16 %v3870, %v3866
        %v5071 = vpack.c.b16 %v3871, %v3867
        %v5072 = vpack.c.b16 %v3872, %v3868
        %v5073 = vpack.c.b16 %v3873, %v3869
        %v5074 = vpack.c.b16 %v3878, %v3874
        %v5075 = vpack.c.b16 %v3879, %v3875
        %v5076 = vpack.c.b16 %v3880, %v3876
        %v5077 = vpack.c.b16 %v3881, %v3877
        %v5078 = vpack.c.b16 %v3886, %v3882
        %v5079 = vpack.c.b16 %v3887, %v3883
        %v5080 = vpack.c.b16 %v3888, %v3884
        %v5081 = vpack.c.b16 %v3889, %v3885
        %v5082 = vpack.c.b16 %v3894, %v3890
        %v5083 = vpack.c.b16 %v3895, %v3891
        %v5084 = vpack.c.b16 %v3896, %v3892
        %v5085 = vpack.c.b16 %v3897, %v3893
        %v5086 = vpack.c.b16 %v3902, %v3898
        %v5087 = vpack.c.b16 %v3903, %v3899
        %v5088 = vpack.c.b16 %v3904, %v3900
        %v5089 = vpack.c.b16 %v3905, %v3901
        %v5090 = vpack.c.b16 %v3910, %v3906
        %v5091 = vpack.c.b16 %v3911, %v3907
        %v5092 = vpack.c.b16 %v3912, %v3908
        %v5093 = vpack.c.b16 %v3913, %v3909
        %v5094 = vpack.c.b16 %v3918, %v3914
        %v5095 = vpack.c.b16 %v3919, %v3915
        %v5096 = vpack.c.b16 %v3920, %v3916
        %v5097 = vpack.c.b16 %v3921, %v3917
        %v5098 = vpack.c.b16 %v3926, %v3922
        %v5099 = vpack.c.b16 %v3927, %v3923
        %v5100 = vpack.c.b16 %v3928, %v3924
        %v5101 = vpack.c.b16 %v3929, %v3925
        %v5102 = vpack.c.b16 %v3934, %v3930
        %v5103 = vpack.c.b16 %v3935, %v3931
        %v5104 = vpack.c.b16 %v3936, %v3932
        %v5105 = vpack.c.b16 %v3937, %v3933
        %v5106 = vpack.c.b16 %v3942, %v3938
        %v5107 = vpack.c.b16 %v3943, %v3939
        %v5108 = vpack.c.b16 %v3944, %v3940
        %v5109 = vpack.c.b16 %v3945, %v3941
        %v5110 = vpack.c.b16 %v3950, %v3946
        %v5111 = vpack.c.b16 %v3951, %v3947
        %v5112 = vpack.c.b16 %v3952, %v3948
        %v5113 = vpack.c.b16 %v3953, %v3949
        %v5114 = vpack.c.b16 %v3958, %v3954
        %v5115 = vpack.c.b16 %v3959, %v3955
        %v5116 = vpack.c.b16 %v3960, %v3956
        %v5117 = vpack.c.b16 %v3961, %v3957
        %v5118 = vpack.c.b16 %v3966, %v3962
        %v5119 = vpack.c.b16 %v3967, %v3963
        %v5120 = vpack.c.b16 %v3968, %v3964
        %v5121 = vpack.c.b16 %v3969, %v3965
        %v5122 = vpack.c.b16 %v3974, %v3970
        %v5123 = vpack.c.b16 %v3975, %v3971
        %v5124 = vpack.c.b16 %v3976, %v3972
        %v5125 = vpack.c.b16 %v3977, %v3973
        %v5126 = vpack.c.b16 %v3982, %v3978
        %v5127 = vpack.c.b16 %v3983, %v3979
        %v5128 = vpack.c.b16 %v3984, %v3980
        %v5129 = vpack.c.b16 %v3985, %v3981
        %v5130 = vpack.c.b16 %v3990, %v3986
        %v5131 = vpack.c.b16 %v3991, %v3987
        %v5132 = vpack.c.b16 %v3992, %v3988
        %v5133 = vpack.c.b16 %v3993, %v3989
        %v5134 = vpack.c.b16 %v3998, %v3994
        %v5135 = vpack.c.b16 %v3999, %v3995
        %v5136 = vpack.c.b16 %v4000, %v3996
        %v5137 = vpack.c.b16 %v4001, %v3997
        %v5138 = vpack.c.b16 %v4006, %v4002
        %v5139 = vpack.c.b16 %v4007, %v4003
        %v5140 = vpack.c.b16 %v4008, %v4004
        %v5141 = vpack.c.b16 %v4009, %v4005
        %v5142 = vpack.c.b16 %v4014, %v4010
        %v5143 = vpack.c.b16 %v4015, %v4011
        %v5144 = vpack.c.b16 %v4016, %v4012
        %v5145 = vpack.c.b16 %v4017, %v4013
        %v5146 = vpack.c.b16 %v4022, %v4018
        %v5147 = vpack.c.b16 %v4023, %v4019
        %v5148 = vpack.c.b16 %v4024, %v4020
        %v5149 = vpack.c.b16 %v4025, %v4021
        %v5150 = vpack.c.b16 %v4030, %v4026
        %v5151 = vpack.c.b16 %v4031, %v4027
        %v5152 = vpack.c.b16 %v4032, %v4028
        %v5153 = vpack.c.b16 %v4033, %v4029
        %v5154 = vpack.c.b16 %v4038, %v4034
        %v5155 = vpack.c.b16 %v4039, %v4035
        %v5156 = vpack.c.b16 %v4040, %v4036
        %v5157 = vpack.c.b16 %v4041, %v4037
        %v5158 = vpack.c.b16 %v4046, %v4042
        %v5159 = vpack.c.b16 %v4047, %v4043
        %v5160 = vpack.c.b16 %v4048, %v4044
        %v5161 = vpack.c.b16 %v4049, %v4045
        %v5162 = vpack.c.b16 %v4054, %v4050
        %v5163 = vpack.c.b16 %v4055, %v4051
        %v5164 = vpack.c.b16 %v4056, %v4052
        %v5165 = vpack.c.b16 %v4057, %v4053
        %v5166 = vpack.c.b16 %v4062, %v4058
        %v5167 = vpack.c.b16 %v4063, %v4059
        %v5168 = vpack.c.b16 %v4064, %v4060
        %v5169 = vpack.c.b16 %v4065, %v4061
        %v5170 = vpack.c.b16 %v4070, %v4066
        %v5171 = vpack.c.b16 %v4071, %v4067
        %v5172 = vpack.c.b16 %v4072, %v4068
        %v5173 = vpack.c.b16 %v4073, %v4069
        %v5174 = vpack.c.b16 %v4078, %v4074
        %v5175 = vpack.c.b16 %v4079, %v4075
        %v5176 = vpack.c.b16 %v4080, %v4076
        %v5177 = vpack.c.b16 %v4081, %v4077
        %v5178 = vpack.c.b16 %v4086, %v4082
        %v5179 = vpack.c.b16 %v4087, %v4083
        %v5180 = vpack.c.b16 %v4088, %v4084
        %v5181 = vpack.c.b16 %v4089, %v4085
        %v5182 = vpack.c.b16 %v4094, %v4090
        %v5183 = vpack.c.b16 %v4095, %v4091
        %v5184 = vpack.c.b16 %v4096, %v4092
        %v5185 = vpack.c.b16 %v4097, %v4093
        %v5186 = vpack.c.b16 %v4102, %v4098
        %v5187 = vpack.c.b16 %v4103, %v4099
        %v5188 = vpack.c.b16 %v4104, %v4100
        %v5189 = vpack.c.b16 %v4105, %v4101
        %v5190 = vpack.c.b16 %v4110, %v4106
        %v5191 = vpack.c.b16 %v4111, %v4107
        %v5192 = vpack.c.b16 %v4112, %v4108
        %v5193 = vpack.c.b16 %v4113, %v4109
        %v5194 = vpack.c.b16 %v4118, %v4114
        %v5195 = vpack.c.b16 %v4119, %v4115
        %v5196 = vpack.c.b16 %v4120, %v4116
        %v5197 = vpack.c.b16 %v4121, %v4117
        %v5198 = vpack.c.b16 %v4126, %v4122
        %v5199 = vpack.c.b16 %v4127, %v4123
        %v5200 = vpack.c.b16 %v4128, %v4124
        %v5201 = vpack.c.b16 %v4129, %v4125
        %v5202 = vpack.c.b16 %v4134, %v4130
        %v5203 = vpack.c.b16 %v4135, %v4131
        %v5204 = vpack.c.b16 %v4136, %v4132
        %v5205 = vpack.c.b16 %v4137, %v4133
        %v5206 = vpack.c.b16 %v4142, %v4138
        %v5207 = vpack.c.b16 %v4143, %v4139
        %v5208 = vpack.c.b16 %v4144, %v4140
        %v5209 = vpack.c.b16 %v4145, %v4141
        %v5210 = vpack.c.b16 %v4150, %v4146
        %v5211 = vpack.c.b16 %v4151, %v4147
        %v5212 = vpack.c.b16 %v4152, %v4148
        %v5213 = vpack.c.b16 %v4153, %v4149
        %v5214 = vpack.c.b16 %v4158, %v4154
        %v5215 = vpack.c.b16 %v4159, %v4155
        %v5216 = vpack.c.b16 %v4160, %v4156
        %v5217 = vpack.c.b16 %v4161, %v4157
        %v5218 = vpack.c.b16 %v4166, %v4162
        %v5219 = vpack.c.b16 %v4167, %v4163
        %v5220 = vpack.c.b16 %v4168, %v4164
        %v5221 = vpack.c.b16 %v4169, %v4165
        %v5222 = vpack.c.b16 %v4174, %v4170
        %v5223 = vpack.c.b16 %v4175, %v4171
        %v5224 = vpack.c.b16 %v4176, %v4172
        %v5225 = vpack.c.b16 %v4177, %v4173
        %v5226 = vpack.c.b16 %v4182, %v4178
        %v5227 = vpack.c.b16 %v4183, %v4179
        %v5228 = vpack.c.b16 %v4184, %v4180
        %v5229 = vpack.c.b16 %v4185, %v4181
        %v5230 = vpack.c.b16 %v4190, %v4186
        %v5231 = vpack.c.b16 %v4191, %v4187
        %v5232 = vpack.c.b16 %v4192, %v4188
        %v5233 = vpack.c.b16 %v4193, %v4189
        %v5234 = vpack.c.b16 %v4198, %v4194
        %v5235 = vpack.c.b16 %v4199, %v4195
        %v5236 = vpack.c.b16 %v4200, %v4196
        %v5237 = vpack.c.b16 %v4201, %v4197
        %v5238 = vpack.c.b16 %v4206, %v4202
        %v5239 = vpack.c.b16 %v4207, %v4203
        %v5240 = vpack.c.b16 %v4208, %v4204
        %v5241 = vpack.c.b16 %v4209, %v4205
        %v5242 = vpack.c.b16 %v4214, %v4210
        %v5243 = vpack.c.b16 %v4215, %v4211
        %v5244 = vpack.c.b16 %v4216, %v4212
        %v5245 = vpack.c.b16 %v4217, %v4213
        %v5246 = vpack.c.b16 %v4222, %v4218
        %v5247 = vpack.c.b16 %v4223, %v4219
        %v5248 = vpack.c.b16 %v4224, %v4220
        %v5249 = vpack.c.b16 %v4225, %v4221
        %v5250 = vpack.c.b16 %v4230, %v4226
        %v5251 = vpack.c.b16 %v4231, %v4227
        %v5252 = vpack.c.b16 %v4232, %v4228
        %v5253 = vpack.c.b16 %v4233, %v4229
        %v5254 = vpack.c.b16 %v4238, %v4234
        %v5255 = vpack.c.b16 %v4239, %v4235
        %v5256 = vpack.c.b16 %v4240, %v4236
        %v5257 = vpack.c.b16 %v4241, %v4237
        %v5258 = vpack.c.b16 %v4246, %v4242
        %v5259 = vpack.c.b16 %v4247, %v4243
        %v5260 = vpack.c.b16 %v4248, %v4244
        %v5261 = vpack.c.b16 %v4249, %v4245
        %v5262 = vpack.c.b16 %v4254, %v4250
        %v5263 = vpack.c.b16 %v4255, %v4251
        %v5264 = vpack.c.b16 %v4256, %v4252
        %v5265 = vpack.c.b16 %v4257, %v4253
        %v5266 = vpack.c.b16 %v4262, %v4258
        %v5267 = vpack.c.b16 %v4263, %v4259
        %v5268 = vpack.c.b16 %v4264, %v4260
        %v5269 = vpack.c.b16 %v4265, %v4261
        %v5270 = vpack.c.b16 %v4270, %v4266
        %v5271 = vpack.c.b16 %v4271, %v4267
        %v5272 = vpack.c.b16 %v4272, %v4268
        %v5273 = vpack.c.b16 %v4273, %v4269
        %v5274 = vpack.c.b16 %v4278, %v4274
        %v5275 = vpack.c.b16 %v4279, %v4275
        %v5276 = vpack.c.b16 %v4280, %v4276
        %v5277 = vpack.c.b16 %v4281, %v4277
        %v5278 = vpack.c.b16 %v4286, %v4282
        %v5279 = vpack.c.b16 %v4287, %v4283
        %v5280 = vpack.c.b16 %v4288, %v4284
        %v5281 = vpack.c.b16 %v4289, %v4285
        %v5282 = vpack.c.b16 %v4294, %v4290
        %v5283 = vpack.c.b16 %v4295, %v4291
        %v5284 = vpack.c.b16 %v4296, %v4292
        %v5285 = vpack.c.b16 %v4297, %v4293
        %v5286 = vpack.c.b16 %v4302, %v4298
        %v5287 = vpack.c.b16 %v4303, %v4299
        %v5288 = vpack.c.b16 %v4304, %v4300
        %v5289 = vpack.c.b16 %v4305, %v4301
        %v5290 = vpack.c.b16 %v4310, %v4306
        %v5291 = vpack.c.b16 %v4311, %v4307
        %v5292 = vpack.c.b16 %v4312, %v4308
        %v5293 = vpack.c.b16 %v4313, %v4309
        %v5294 = vpack.c.b16 %v4318, %v4314
        %v5295 = vpack.c.b16 %v4319, %v4315
        %v5296 = vpack.c.b16 %v4320, %v4316
        %v5297 = vpack.c.b16 %v4321, %v4317
        %v5298 = vpack.c.b16 %v4326, %v4322
        %v5299 = vpack.c.b16 %v4327, %v4323
        %v5300 = vpack.c.b16 %v4328, %v4324
        %v5301 = vpack.c.b16 %v4329, %v4325
        %v5302 = vpack.c.b16 %v4334, %v4330
        %v5303 = vpack.c.b16 %v4335, %v4331
        %v5304 = vpack.c.b16 %v4336, %v4332
        %v5305 = vpack.c.b16 %v4337, %v4333
        %v5306 = vpack.c.b16 %v4342, %v4338
        %v5307 = vpack.c.b16 %v4343, %v4339
        %v5308 = vpack.c.b16 %v4344, %v4340
        %v5309 = vpack.c.b16 %v4345, %v4341
        %v5310 = vpack.c.b16 %v4350, %v4346
        %v5311 = vpack.c.b16 %v4351, %v4347
        %v5312 = vpack.c.b16 %v4352, %v4348
        %v5313 = vpack.c.b16 %v4353, %v4349
        %6274 = vmatprep.subr.bf16.mxu0 %v4355
        %6275 = vmatpush1.bf16.msra.mxu0 %v4354
        %6276 = vmatprep.subr.bf16.mxu0 %v4359
        %6277 = vmatpush1.bf16.msra.mxu0 %v4358
        %6278 = vmatprep.subr.bf16.mxu0 %v4363
        %6279 = vmatpush1.bf16.msra.mxu0 %v4362
        %6280 = vmatprep.subr.bf16.mxu0 %v4367
        %6281 = vmatpush1.bf16.msra.mxu0 %v4366
        %6282 = vmatprep.subr.bf16.mxu0 %v4371
        %6283 = vmatpush1.bf16.msra.mxu0 %v4370
        %6284 = vmatprep.subr.bf16.mxu0 %v4375
        %6285 = vmatpush1.bf16.msra.mxu0 %v4374
        %6286 = vmatprep.subr.bf16.mxu0 %v4379
        %6287 = vmatpush1.bf16.msra.mxu0 %v4378
        %6288 = vmatprep.subr.bf16.mxu0 %v4383
        %6289 = vmatpush1.bf16.msra.mxu0 %v4382
        %6290 = vmatprep.subr.bf16.mxu0 %v4387
        %6291 = vmatpush1.bf16.msra.mxu0 %v4386
        %6292 = vmatprep.subr.bf16.mxu0 %v4391
        %6293 = vmatpush1.bf16.msra.mxu0 %v4390
        %6294 = vmatprep.subr.bf16.mxu0 %v4395
        %6295 = vmatpush1.bf16.msra.mxu0 %v4394
        %6296 = vmatprep.subr.bf16.mxu0 %v4399
        %6297 = vmatpush1.bf16.msra.mxu0 %v4398
        %6298 = vmatprep.subr.bf16.mxu0 %v4403
        %6299 = vmatpush1.bf16.msra.mxu0 %v4402
        %6300 = vmatprep.subr.bf16.mxu0 %v4407
        %6301 = vmatpush1.bf16.msra.mxu0 %v4406
        %6302 = vmatprep.subr.bf16.mxu0 %v4411
        %6303 = vmatpush1.bf16.msra.mxu0 %v4410
        %6304 = vmatprep.subr.bf16.mxu0 %v4415
        %6305 = vmatpush1.bf16.msra.mxu0 %v4414
        %6306 = vmatprep.mubr.bf16.mxu0 %v1415
        %6307 = vmatmul.mubr.bf16.gmra.mrb[0].mxu0 %v1414
        %v6308 = vpop.f32.mrb[0].mxu0
        %v6309 = vadd.f32 0.0, %v6308
        %v6310 = vpop.f32.mrb[0].mxu0
        %v6311 = vadd.f32 0.0, %v6310
        %v6312 = vpop.f32.mrb[0].mxu0
        %v6313 = vadd.f32 0.0, %v6312
        %v6314 = vpop.f32.mrb[0].mxu0
        %v6315 = vadd.f32 0.0, %v6314
        %6316 = vdwg.mxu0
        %6317 = vmatprep.subr.bf16.mxu0 %v4419
        %6318 = vmatpush1.bf16.msra.mxu0 %v4418
        %6319 = vmatprep.subr.bf16.mxu0 %v4423
        %6320 = vmatpush1.bf16.msra.mxu0 %v4422
        %6321 = vmatprep.subr.bf16.mxu0 %v4427
        %6322 = vmatpush1.bf16.msra.mxu0 %v4426
        %6323 = vmatprep.subr.bf16.mxu0 %v4431
        %6324 = vmatpush1.bf16.msra.mxu0 %v4430
        %6325 = vmatprep.subr.bf16.mxu0 %v4435
        %6326 = vmatpush1.bf16.msra.mxu0 %v4434
        %6327 = vmatprep.subr.bf16.mxu0 %v4439
        %6328 = vmatpush1.bf16.msra.mxu0 %v4438
        %6329 = vmatprep.subr.bf16.mxu0 %v4443
        %6330 = vmatpush1.bf16.msra.mxu0 %v4442
        %6331 = vmatprep.subr.bf16.mxu0 %v4447
        %6332 = vmatpush1.bf16.msra.mxu0 %v4446
        %6333 = vmatprep.subr.bf16.mxu0 %v4451
        %6334 = vmatpush1.bf16.msra.mxu0 %v4450
        %6335 = vmatprep.subr.bf16.mxu0 %v4455
        %6336 = vmatpush1.bf16.msra.mxu0 %v4454
        %6337 = vmatprep.subr.bf16.mxu0 %v4459
        %6338 = vmatpush1.bf16.msra.mxu0 %v4458
        %6339 = vmatprep.subr.bf16.mxu0 %v4463
        %6340 = vmatpush1.bf16.msra.mxu0 %v4462
        %6341 = vmatprep.subr.bf16.mxu0 %v4467
        %6342 = vmatpush1.bf16.msra.mxu0 %v4466
        %6343 = vmatprep.subr.bf16.mxu0 %v4471
        %6344 = vmatpush1.bf16.msra.mxu0 %v4470
        %6345 = vmatprep.subr.bf16.mxu0 %v4475
        %6346 = vmatpush1.bf16.msra.mxu0 %v4474
        %6347 = vmatprep.subr.bf16.mxu0 %v4479
        %6348 = vmatpush1.bf16.msra.mxu0 %v4478
        %6349 = vmatprep.mubr.bf16.mxu0 %v1417
        %6350 = vmatmul.mubr.bf16.gmra.mrb[0].mxu0 %v1416
        %v6351 = vpop.f32.mrb[0].mxu0
        %v6352 = vadd.f32 %v6309, %v6351
        %v6353 = vpop.f32.mrb[0].mxu0
        %v6354 = vadd.f32 %v6311, %v6353
        %v6355 = vpop.f32.mrb[0].mxu0
        %v6356 = vadd.f32 %v6313, %v6355
        %v6357 = vpop.f32.mrb[0].mxu0
        %v6358 = vadd.f32 %v6315, %v6357
        %6359 = vdwg.mxu0
        %6360 = vmatprep.subr.bf16.mxu0 %v4483
        %6361 = vmatpush1.bf16.msra.mxu0 %v4482
        %6362 = vmatprep.subr.bf16.mxu0 %v4487
        %6363 = vmatpush1.bf16.msra.mxu0 %v4486
        %6364 = vmatprep.subr.bf16.mxu0 %v4491
        %6365 = vmatpush1.bf16.msra.mxu0 %v4490
        %6366 = vmatprep.subr.bf16.mxu0 %v4495
        %6367 = vmatpush1.bf16.msra.mxu0 %v4494
        %6368 = vmatprep.subr.bf16.mxu0 %v4499
        %6369 = vmatpush1.bf16.msra.mxu0 %v4498
        %6370 = vmatprep.subr.bf16.mxu0 %v4503
        %6371 = vmatpush1.bf16.msra.mxu0 %v4502
        %6372 = vmatprep.subr.bf16.mxu0 %v4507
        %6373 = vmatpush1.bf16.msra.mxu0 %v4506
        %6374 = vmatprep.subr.bf16.mxu0 %v4511
        %6375 = vmatpush1.bf16.msra.mxu0 %v4510
        %6376 = vmatprep.subr.bf16.mxu0 %v4515
        %6377 = vmatpush1.bf16.msra.mxu0 %v4514
        %6378 = vmatprep.subr.bf16.mxu0 %v4519
        %6379 = vmatpush1.bf16.msra.mxu0 %v4518
        %6380 = vmatprep.subr.bf16.mxu0 %v4523
        %6381 = vmatpush1.bf16.msra.mxu0 %v4522
        %6382 = vmatprep.subr.bf16.mxu0 %v4527
        %6383 = vmatpush1.bf16.msra.mxu0 %v4526
        %6384 = vmatprep.subr.bf16.mxu0 %v4531
        %6385 = vmatpush1.bf16.msra.mxu0 %v4530
        %6386 = vmatprep.subr.bf16.mxu0 %v4535
        %6387 = vmatpush1.bf16.msra.mxu0 %v4534
        %6388 = vmatprep.subr.bf16.mxu0 %v4539
        %6389 = vmatpush1.bf16.msra.mxu0 %v4538
        %6390 = vmatprep.subr.bf16.mxu0 %v4543
        %6391 = vmatpush1.bf16.msra.mxu0 %v4542
        %6392 = vmatprep.mubr.bf16.mxu0 %v1419
        %6393 = vmatmul.mubr.bf16.gmra.mrb[0].mxu0 %v1418
        %v6394 = vpop.f32.mrb[0].mxu0
        %v6395 = vadd.f32 %v6352, %v6394
        %v6396 = vpop.f32.mrb[0].mxu0
        %v6397 = vadd.f32 %v6354, %v6396
        %v6398 = vpop.f32.mrb[0].mxu0
        %v6399 = vadd.f32 %v6356, %v6398
        %v6400 = vpop.f32.mrb[0].mxu0
        %v6401 = vadd.f32 %v6358, %v6400
        %6402 = vdwg.mxu0
        %6403 = vmatprep.subr.bf16.mxu0 %v4547
        %6404 = vmatpush1.bf16.msra.mxu0 %v4546
        %6405 = vmatprep.subr.bf16.mxu0 %v4551
        %6406 = vmatpush1.bf16.msra.mxu0 %v4550
        %6407 = vmatprep.subr.bf16.mxu0 %v4555
        %6408 = vmatpush1.bf16.msra.mxu0 %v4554
        %6409 = vmatprep.subr.bf16.mxu0 %v4559
        %6410 = vmatpush1.bf16.msra.mxu0 %v4558
        %6411 = vmatprep.subr.bf16.mxu0 %v4563
        %6412 = vmatpush1.bf16.msra.mxu0 %v4562
        %6413 = vmatprep.subr.bf16.mxu0 %v4567
        %6414 = vmatpush1.bf16.msra.mxu0 %v4566
        %6415 = vmatprep.subr.bf16.mxu0 %v4571
        %6416 = vmatpush1.bf16.msra.mxu0 %v4570
        %6417 = vmatprep.subr.bf16.mxu0 %v4575
        %6418 = vmatpush1.bf16.msra.mxu0 %v4574
        %6419 = vmatprep.subr.bf16.mxu0 %v4579
        %6420 = vmatpush1.bf16.msra.mxu0 %v4578
        %6421 = vmatprep.subr.bf16.mxu0 %v4583
        %6422 = vmatpush1.bf16.msra.mxu0 %v4582
        %6423 = vmatprep.subr.bf16.mxu0 %v4587
        %6424 = vmatpush1.bf16.msra.mxu0 %v4586
        %6425 = vmatprep.subr.bf16.mxu0 %v4591
        %6426 = vmatpush1.bf16.msra.mxu0 %v4590
        %6427 = vmatprep.subr.bf16.mxu0 %v4595
        %6428 = vmatpush1.bf16.msra.mxu0 %v4594
        %6429 = vmatprep.subr.bf16.mxu0 %v4599
        %6430 = vmatpush1.bf16.msra.mxu0 %v4598
        %6431 = vmatprep.subr.bf16.mxu0 %v4603
        %6432 = vmatpush1.bf16.msra.mxu0 %v4602
        %6433 = vmatprep.subr.bf16.mxu0 %v4607
        %6434 = vmatpush1.bf16.msra.mxu0 %v4606
        %6435 = vmatprep.mubr.bf16.mxu0 %v1421
        %6436 = vmatmul.mubr.bf16.gmra.mrb[0].mxu0 %v1420
        %v6437 = vpop.f32.mrb[0].mxu0
        %v6438 = vadd.f32 %v6395, %v6437
        %v6439 = vpop.f32.mrb[0].mxu0
        %v6440 = vadd.f32 %v6397, %v6439
        %v6441 = vpop.f32.mrb[0].mxu0
        %v6442 = vadd.f32 %v6399, %v6441
        %v6443 = vpop.f32.mrb[0].mxu0
        %v6444 = vadd.f32 %v6401, %v6443
        %6445 = vdwg.mxu0
        %6446 = vmatprep.subr.bf16.mxu0 %v4611
        %6447 = vmatpush1.bf16.msra.mxu0 %v4610
        %6448 = vmatprep.subr.bf16.mxu0 %v4615
        %6449 = vmatpush1.bf16.msra.mxu0 %v4614
        %6450 = vmatprep.subr.bf16.mxu0 %v4619
        %6451 = vmatpush1.bf16.msra.mxu0 %v4618
        %6452 = vmatprep.subr.bf16.mxu0 %v4623
        %6453 = vmatpush1.bf16.msra.mxu0 %v4622
        %6454 = vmatprep.subr.bf16.mxu0 %v4627
        %6455 = vmatpush1.bf16.msra.mxu0 %v4626
        %6456 = vmatprep.subr.bf16.mxu0 %v4631
        %6457 = vmatpush1.bf16.msra.mxu0 %v4630
        %6458 = vmatprep.subr.bf16.mxu0 %v4635
        %6459 = vmatpush1.bf16.msra.mxu0 %v4634
        %6460 = vmatprep.subr.bf16.mxu0 %v4639
        %6461 = vmatpush1.bf16.msra.mxu0 %v4638
        %6462 = vmatprep.subr.bf16.mxu0 %v4643
        %6463 = vmatpush1.bf16.msra.mxu0 %v4642
        %6464 = vmatprep.subr.bf16.mxu0 %v4647
        %6465 = vmatpush1.bf16.msra.mxu0 %v4646
        %6466 = vmatprep.subr.bf16.mxu0 %v4651
        %6467 = vmatpush1.bf16.msra.mxu0 %v4650
        %6468 = vmatprep.subr.bf16.mxu0 %v4655
        %6469 = vmatpush1.bf16.msra.mxu0 %v4654
        %6470 = vmatprep.subr.bf16.mxu0 %v4659
        %6471 = vmatpush1.bf16.msra.mxu0 %v4658
        %6472 = vmatprep.subr.bf16.mxu0 %v4663
        %6473 = vmatpush1.bf16.msra.mxu0 %v4662
        %6474 = vmatprep.subr.bf16.mxu0 %v4667
        %6475 = vmatpush1.bf16.msra.mxu0 %v4666
        %6476 = vmatprep.subr.bf16.mxu0 %v4671
        %6477 = vmatpush1.bf16.msra.mxu0 %v4670
        %6478 = vmatprep.mubr.bf16.mxu0 %v1423
        %6479 = vmatmul.mubr.bf16.gmra.mrb[0].mxu0 %v1422
        %v6480 = vpop.f32.mrb[0].mxu0
        %v6481 = vadd.f32 %v6438, %v6480
        %v6482 = vpop.f32.mrb[0].mxu0
        %v6483 = vadd.f32 %v6440, %v6482
        %v6484 = vpop.f32.mrb[0].mxu0
        %v6485 = vadd.f32 %v6442, %v6484
        %v6486 = vpop.f32.mrb[0].mxu0
        %v6487 = vadd.f32 %v6444, %v6486
        %6488 = vdwg.mxu0
        %6489 = vmatprep.subr.bf16.mxu0 %v4675
        %6490 = vmatpush1.bf16.msra.mxu0 %v4674
        %6491 = vmatprep.subr.bf16.mxu0 %v4679
        %6492 = vmatpush1.bf16.msra.mxu0 %v4678
        %6493 = vmatprep.subr.bf16.mxu0 %v4683
        %6494 = vmatpush1.bf16.msra.mxu0 %v4682
        %6495 = vmatprep.subr.bf16.mxu0 %v4687
        %6496 = vmatpush1.bf16.msra.mxu0 %v4686
        %6497 = vmatprep.subr.bf16.mxu0 %v4691
        %6498 = vmatpush1.bf16.msra.mxu0 %v4690
        %6499 = vmatprep.subr.bf16.mxu0 %v4695
        %6500 = vmatpush1.bf16.msra.mxu0 %v4694
        %6501 = vmatprep.subr.bf16.mxu0 %v4699
        %6502 = vmatpush1.bf16.msra.mxu0 %v4698
        %6503 = vmatprep.subr.bf16.mxu0 %v4703
        %6504 = vmatpush1.bf16.msra.mxu0 %v4702
        %6505 = vmatprep.subr.bf16.mxu0 %v4707
        %6506 = vmatpush1.bf16.msra.mxu0 %v4706
        %6507 = vmatprep.subr.bf16.mxu0 %v4711
        %6508 = vmatpush1.bf16.msra.mxu0 %v4710
        %6509 = vmatprep.subr.bf16.mxu0 %v4715
        %6510 = vmatpush1.bf16.msra.mxu0 %v4714
        %6511 = vmatprep.subr.bf16.mxu0 %v4719
        %6512 = vmatpush1.bf16.msra.mxu0 %v4718
        %6513 = vmatprep.subr.bf16.mxu0 %v4723
        %6514 = vmatpush1.bf16.msra.mxu0 %v4722
        %6515 = vmatprep.subr.bf16.mxu0 %v4727
        %6516 = vmatpush1.bf16.msra.mxu0 %v4726
        %6517 = vmatprep.subr.bf16.mxu0 %v4731
        %6518 = vmatpush1.bf16.msra.mxu0 %v4730
        %6519 = vmatprep.subr.bf16.mxu0 %v4735
        %6520 = vmatpush1.bf16.msra.mxu0 %v4734
        %6521 = vmatprep.mubr.bf16.mxu0 %v1425
        %6522 = vmatmul.mubr.bf16.gmra.mrb[0].mxu0 %v1424
        %v6523 = vpop.f32.mrb[0].mxu0
        %v6524 = vadd.f32 %v6481, %v6523
        %v6525 = vpop.f32.mrb[0].mxu0
        %v6526 = vadd.f32 %v6483, %v6525
        %v6527 = vpop.f32.mrb[0].mxu0
        %v6528 = vadd.f32 %v6485, %v6527
        %v6529 = vpop.f32.mrb[0].mxu0
        %v6530 = vadd.f32 %v6487, %v6529
        %6531 = vdwg.mxu0
        %6532 = vmatprep.subr.bf16.mxu0 %v4739
        %6533 = vmatpush1.bf16.msra.mxu0 %v4738
        %6534 = vmatprep.subr.bf16.mxu0 %v4743
        %6535 = vmatpush1.bf16.msra.mxu0 %v4742
        %6536 = vmatprep.subr.bf16.mxu0 %v4747
        %6537 = vmatpush1.bf16.msra.mxu0 %v4746
        %6538 = vmatprep.subr.bf16.mxu0 %v4751
        %6539 = vmatpush1.bf16.msra.mxu0 %v4750
        %6540 = vmatprep.subr.bf16.mxu0 %v4755
        %6541 = vmatpush1.bf16.msra.mxu0 %v4754
        %6542 = vmatprep.subr.bf16.mxu0 %v4759
        %6543 = vmatpush1.bf16.msra.mxu0 %v4758
        %6544 = vmatprep.subr.bf16.mxu0 %v4763
        %6545 = vmatpush1.bf16.msra.mxu0 %v4762
        %6546 = vmatprep.subr.bf16.mxu0 %v4767
        %6547 = vmatpush1.bf16.msra.mxu0 %v4766
        %6548 = vmatprep.subr.bf16.mxu0 %v4771
        %6549 = vmatpush1.bf16.msra.mxu0 %v4770
        %6550 = vmatprep.subr.bf16.mxu0 %v4775
        %6551 = vmatpush1.bf16.msra.mxu0 %v4774
        %6552 = vmatprep.subr.bf16.mxu0 %v4779
        %6553 = vmatpush1.bf16.msra.mxu0 %v4778
        %6554 = vmatprep.subr.bf16.mxu0 %v4783
        %6555 = vmatpush1.bf16.msra.mxu0 %v4782
        %6556 = vmatprep.subr.bf16.mxu0 %v4787
        %6557 = vmatpush1.bf16.msra.mxu0 %v4786
        %6558 = vmatprep.subr.bf16.mxu0 %v4791
        %6559 = vmatpush1.bf16.msra.mxu0 %v4790
        %6560 = vmatprep.subr.bf16.mxu0 %v4795
        %6561 = vmatpush1.bf16.msra.mxu0 %v4794
        %6562 = vmatprep.subr.bf16.mxu0 %v4799
        %6563 = vmatpush1.bf16.msra.mxu0 %v4798
        %6564 = vmatprep.mubr.bf16.mxu0 %v1427
        %6565 = vmatmul.mubr.bf16.gmra.mrb[0].mxu0 %v1426
        %v6566 = vpop.f32.mrb[0].mxu0
        %v6567 = vadd.f32 %v6524, %v6566
        %v6568 = vpop.f32.mrb[0].mxu0
        %v6569 = vadd.f32 %v6526, %v6568
        %v6570 = vpop.f32.mrb[0].mxu0
        %v6571 = vadd.f32 %v6528, %v6570
        %v6572 = vpop.f32.mrb[0].mxu0
        %v6573 = vadd.f32 %v6530, %v6572
        %6574 = vdwg.mxu0
        %6575 = vmatprep.subr.bf16.mxu0 %v4803
        %6576 = vmatpush1.bf16.msra.mxu0 %v4802
        %6577 = vmatprep.subr.bf16.mxu0 %v4807
        %6578 = vmatpush1.bf16.msra.mxu0 %v4806
        %6579 = vmatprep.subr.bf16.mxu0 %v4811
        %6580 = vmatpush1.bf16.msra.mxu0 %v4810
        %6581 = vmatprep.subr.bf16.mxu0 %v4815
        %6582 = vmatpush1.bf16.msra.mxu0 %v4814
        %6583 = vmatprep.subr.bf16.mxu0 %v4819
        %6584 = vmatpush1.bf16.msra.mxu0 %v4818
        %6585 = vmatprep.subr.bf16.mxu0 %v4823
        %6586 = vmatpush1.bf16.msra.mxu0 %v4822
        %6587 = vmatprep.subr.bf16.mxu0 %v4827
        %6588 = vmatpush1.bf16.msra.mxu0 %v4826
        %6589 = vmatprep.subr.bf16.mxu0 %v4831
        %6590 = vmatpush1.bf16.msra.mxu0 %v4830
        %6591 = vmatprep.subr.bf16.mxu0 %v4835
        %6592 = vmatpush1.bf16.msra.mxu0 %v4834
        %6593 = vmatprep.subr.bf16.mxu0 %v4839
        %6594 = vmatpush1.bf16.msra.mxu0 %v4838
        %6595 = vmatprep.subr.bf16.mxu0 %v4843
        %6596 = vmatpush1.bf16.msra.mxu0 %v4842
        %6597 = vmatprep.subr.bf16.mxu0 %v4847
        %6598 = vmatpush1.bf16.msra.mxu0 %v4846
        %6599 = vmatprep.subr.bf16.mxu0 %v4851
        %6600 = vmatpush1.bf16.msra.mxu0 %v4850
        %6601 = vmatprep.subr.bf16.mxu0 %v4855
        %6602 = vmatpush1.bf16.msra.mxu0 %v4854
        %6603 = vmatprep.subr.bf16.mxu0 %v4859
        %6604 = vmatpush1.bf16.msra.mxu0 %v4858
        %6605 = vmatprep.subr.bf16.mxu0 %v4863
        %6606 = vmatpush1.bf16.msra.mxu0 %v4862
        %6607 = vmatprep.mubr.bf16.mxu0 %v1429
        %6608 = vmatmul.mubr.bf16.gmra.mrb[0].mxu0 %v1428
        %v6609 = vpop.f32.mrb[0].mxu0
        %v6610 = vadd.f32 %v6567, %v6609
        %v6611 = vpop.f32.mrb[0].mxu0
        %v6612 = vadd.f32 %v6569, %v6611
        %v6613 = vpop.f32.mrb[0].mxu0
        %v6614 = vadd.f32 %v6571, %v6613
        %v6615 = vpop.f32.mrb[0].mxu0
        %v6616 = vadd.f32 %v6573, %v6615
        %6617 = vdwg.mxu0
        %6618 = vmatprep.subr.bf16.mxu0 %v4867
        %6619 = vmatpush1.bf16.msra.mxu0 %v4866
        %6620 = vmatprep.subr.bf16.mxu0 %v4871
        %6621 = vmatpush1.bf16.msra.mxu0 %v4870
        %6622 = vmatprep.subr.bf16.mxu0 %v4875
        %6623 = vmatpush1.bf16.msra.mxu0 %v4874
        %6624 = vmatprep.subr.bf16.mxu0 %v4879
        %6625 = vmatpush1.bf16.msra.mxu0 %v4878
        %6626 = vmatprep.subr.bf16.mxu0 %v4883
        %6627 = vmatpush1.bf16.msra.mxu0 %v4882
        %6628 = vmatprep.subr.bf16.mxu0 %v4887
        %6629 = vmatpush1.bf16.msra.mxu0 %v4886
        %6630 = vmatprep.subr.bf16.mxu0 %v4891
        %6631 = vmatpush1.bf16.msra.mxu0 %v4890
        %6632 = vmatprep.subr.bf16.mxu0 %v4895
        %6633 = vmatpush1.bf16.msra.mxu0 %v4894
        %6634 = vmatprep.subr.bf16.mxu0 %v4899
        %6635 = vmatpush1.bf16.msra.mxu0 %v4898
        %6636 = vmatprep.subr.bf16.mxu0 %v4903
        %6637 = vmatpush1.bf16.msra.mxu0 %v4902
        %6638 = vmatprep.subr.bf16.mxu0 %v4907
        %6639 = vmatpush1.bf16.msra.mxu0 %v4906
        %6640 = vmatprep.subr.bf16.mxu0 %v4911
        %6641 = vmatpush1.bf16.msra.mxu0 %v4910
        %6642 = vmatprep.subr.bf16.mxu0 %v4915
        %6643 = vmatpush1.bf16.msra.mxu0 %v4914
        %6644 = vmatprep.subr.bf16.mxu0 %v4919
        %6645 = vmatpush1.bf16.msra.mxu0 %v4918
        %6646 = vmatprep.subr.bf16.mxu0 %v4923
        %6647 = vmatpush1.bf16.msra.mxu0 %v4922
        %6648 = vmatprep.subr.bf16.mxu0 %v4927
        %6649 = vmatpush1.bf16.msra.mxu0 %v4926
        %6650 = vmatprep.mubr.bf16.mxu0 %v1431
        %6651 = vmatmul.mubr.bf16.gmra.mrb[0].mxu0 %v1430
        %v6652 = vpop.f32.mrb[0].mxu0
        %v6653 = vadd.f32 %v6610, %v6652
        %v6654 = vpop.f32.mrb[0].mxu0
        %v6655 = vadd.f32 %v6612, %v6654
        %v6656 = vpop.f32.mrb[0].mxu0
        %v6657 = vadd.f32 %v6614, %v6656
        %v6658 = vpop.f32.mrb[0].mxu0
        %v6659 = vadd.f32 %v6616, %v6658
        %6660 = vdwg.mxu0
        %6661 = vmatprep.subr.bf16.mxu0 %v4931
        %6662 = vmatpush1.bf16.msra.mxu0 %v4930
        %6663 = vmatprep.subr.bf16.mxu0 %v4935
        %6664 = vmatpush1.bf16.msra.mxu0 %v4934
        %6665 = vmatprep.subr.bf16.mxu0 %v4939
        %6666 = vmatpush1.bf16.msra.mxu0 %v4938
        %6667 = vmatprep.subr.bf16.mxu0 %v4943
        %6668 = vmatpush1.bf16.msra.mxu0 %v4942
        %6669 = vmatprep.subr.bf16.mxu0 %v4947
        %6670 = vmatpush1.bf16.msra.mxu0 %v4946
        %6671 = vmatprep.subr.bf16.mxu0 %v4951
        %6672 = vmatpush1.bf16.msra.mxu0 %v4950
        %6673 = vmatprep.subr.bf16.mxu0 %v4955
        %6674 = vmatpush1.bf16.msra.mxu0 %v4954
        %6675 = vmatprep.subr.bf16.mxu0 %v4959
        %6676 = vmatpush1.bf16.msra.mxu0 %v4958
        %6677 = vmatprep.subr.bf16.mxu0 %v4963
        %6678 = vmatpush1.bf16.msra.mxu0 %v4962
        %6679 = vmatprep.subr.bf16.mxu0 %v4967
        %6680 = vmatpush1.bf16.msra.mxu0 %v4966
        %6681 = vmatprep.subr.bf16.mxu0 %v4971
        %6682 = vmatpush1.bf16.msra.mxu0 %v4970
        %6683 = vmatprep.subr.bf16.mxu0 %v4975
        %6684 = vmatpush1.bf16.msra.mxu0 %v4974
        %6685 = vmatprep.subr.bf16.mxu0 %v4979
        %6686 = vmatpush1.bf16.msra.mxu0 %v4978
        %6687 = vmatprep.subr.bf16.mxu0 %v4983
        %6688 = vmatpush1.bf16.msra.mxu0 %v4982
        %6689 = vmatprep.subr.bf16.mxu0 %v4987
        %6690 = vmatpush1.bf16.msra.mxu0 %v4986
        %6691 = vmatprep.subr.bf16.mxu0 %v4991
        %6692 = vmatpush1.bf16.msra.mxu0 %v4990
        %6693 = vmatprep.mubr.bf16.mxu0 %v1433
        %6694 = vmatmul.mubr.bf16.gmra.mrb[0].mxu0 %v1432
        %v6695 = vpop.f32.mrb[0].mxu0
        %v6696 = vadd.f32 %v6653, %v6695
        %v6697 = vpop.f32.mrb[0].mxu0
        %v6698 = vadd.f32 %v6655, %v6697
        %v6699 = vpop.f32.mrb[0].mxu0
        %v6700 = vadd.f32 %v6657, %v6699
        %v6701 = vpop.f32.mrb[0].mxu0
        %v6702 = vadd.f32 %v6659, %v6701
        %6703 = vdwg.mxu0
        %6704 = vmatprep.subr.bf16.mxu0 %v4995
        %6705 = vmatpush1.bf16.msra.mxu0 %v4994
        %6706 = vmatprep.subr.bf16.mxu0 %v4999
        %6707 = vmatpush1.bf16.msra.mxu0 %v4998
        %6708 = vmatprep.subr.bf16.mxu0 %v5003
        %6709 = vmatpush1.bf16.msra.mxu0 %v5002
        %6710 = vmatprep.subr.bf16.mxu0 %v5007
        %6711 = vmatpush1.bf16.msra.mxu0 %v5006
        %6712 = vmatprep.subr.bf16.mxu0 %v5011
        %6713 = vmatpush1.bf16.msra.mxu0 %v5010
        %6714 = vmatprep.subr.bf16.mxu0 %v5015
        %6715 = vmatpush1.bf16.msra.mxu0 %v5014
        %6716 = vmatprep.subr.bf16.mxu0 %v5019
        %6717 = vmatpush1.bf16.msra.mxu0 %v5018
        %6718 = vmatprep.subr.bf16.mxu0 %v5023
        %6719 = vmatpush1.bf16.msra.mxu0 %v5022
        %6720 = vmatprep.subr.bf16.mxu0 %v5027
        %6721 = vmatpush1.bf16.msra.mxu0 %v5026
        %6722 = vmatprep.subr.bf16.mxu0 %v5031
        %6723 = vmatpush1.bf16.msra.mxu0 %v5030
        %6724 = vmatprep.subr.bf16.mxu0 %v5035
        %6725 = vmatpush1.bf16.msra.mxu0 %v5034
        %6726 = vmatprep.subr.bf16.mxu0 %v5039
        %6727 = vmatpush1.bf16.msra.mxu0 %v5038
        %6728 = vmatprep.subr.bf16.mxu0 %v5043
        %6729 = vmatpush1.bf16.msra.mxu0 %v5042
        %6730 = vmatprep.subr.bf16.mxu0 %v5047
        %6731 = vmatpush1.bf16.msra.mxu0 %v5046
        %6732 = vmatprep.subr.bf16.mxu0 %v5051
        %6733 = vmatpush1.bf16.msra.mxu0 %v5050
        %6734 = vmatprep.subr.bf16.mxu0 %v5055
        %6735 = vmatpush1.bf16.msra.mxu0 %v5054
        %6736 = vmatprep.mubr.bf16.mxu0 %v1435
        %6737 = vmatmul.mubr.bf16.gmra.mrb[0].mxu0 %v1434
        %v6738 = vpop.f32.mrb[0].mxu0
        %v6739 = vadd.f32 %v6696, %v6738
        %v6740 = vpop.f32.mrb[0].mxu0
        %v6741 = vadd.f32 %v6698, %v6740
        %v6742 = vpop.f32.mrb[0].mxu0
        %v6743 = vadd.f32 %v6700, %v6742
        %v6744 = vpop.f32.mrb[0].mxu0
        %v6745 = vadd.f32 %v6702, %v6744
        %6746 = vdwg.mxu0
        %6747 = vmatprep.subr.bf16.mxu0 %v5059
        %6748 = vmatpush1.bf16.msra.mxu0 %v5058
        %6749 = vmatprep.subr.bf16.mxu0 %v5063
        %6750 = vmatpush1.bf16.msra.mxu0 %v5062
        %6751 = vmatprep.subr.bf16.mxu0 %v5067
        %6752 = vmatpush1.bf16.msra.mxu0 %v5066
        %6753 = vmatprep.subr.bf16.mxu0 %v5071
        %6754 = vmatpush1.bf16.msra.mxu0 %v5070
        %6755 = vmatprep.subr.bf16.mxu0 %v5075
        %6756 = vmatpush1.bf16.msra.mxu0 %v5074
        %6757 = vmatprep.subr.bf16.mxu0 %v5079
        %6758 = vmatpush1.bf16.msra.mxu0 %v5078
        %6759 = vmatprep.subr.bf16.mxu0 %v5083
        %6760 = vmatpush1.bf16.msra.mxu0 %v5082
        %6761 = vmatprep.subr.bf16.mxu0 %v5087
        %6762 = vmatpush1.bf16.msra.mxu0 %v5086
        %6763 = vmatprep.subr.bf16.mxu0 %v5091
        %6764 = vmatpush1.bf16.msra.mxu0 %v5090
        %6765 = vmatprep.subr.bf16.mxu0 %v5095
        %6766 = vmatpush1.bf16.msra.mxu0 %v5094
        %6767 = vmatprep.subr.bf16.mxu0 %v5099
        %6768 = vmatpush1.bf16.msra.mxu0 %v5098
        %6769 = vmatprep.subr.bf16.mxu0 %v5103
        %6770 = vmatpush1.bf16.msra.mxu0 %v5102
        %6771 = vmatprep.subr.bf16.mxu0 %v5107
        %6772 = vmatpush1.bf16.msra.mxu0 %v5106
        %6773 = vmatprep.subr.bf16.mxu0 %v5111
        %6774 = vmatpush1.bf16.msra.mxu0 %v5110
        %6775 = vmatprep.subr.bf16.mxu0 %v5115
        %6776 = vmatpush1.bf16.msra.mxu0 %v5114
        %6777 = vmatprep.subr.bf16.mxu0 %v5119
        %6778 = vmatpush1.bf16.msra.mxu0 %v5118
        %6779 = vmatprep.mubr.bf16.mxu0 %v1437
        %6780 = vmatmul.mubr.bf16.gmra.mrb[0].mxu0 %v1436
        %v6781 = vpop.f32.mrb[0].mxu0
        %v6782 = vadd.f32 %v6739, %v6781
        %v6783 = vpop.f32.mrb[0].mxu0
        %v6784 = vadd.f32 %v6741, %v6783
        %v6785 = vpop.f32.mrb[0].mxu0
        %v6786 = vadd.f32 %v6743, %v6785
        %v6787 = vpop.f32.mrb[0].mxu0
        %v6788 = vadd.f32 %v6745, %v6787
        %6789 = vdwg.mxu0
        %6790 = vmatprep.subr.bf16.mxu0 %v5123
        %6791 = vmatpush1.bf16.msra.mxu0 %v5122
        %6792 = vmatprep.subr.bf16.mxu0 %v5127
        %6793 = vmatpush1.bf16.msra.mxu0 %v5126
        %6794 = vmatprep.subr.bf16.mxu0 %v5131
        %6795 = vmatpush1.bf16.msra.mxu0 %v5130
        %6796 = vmatprep.subr.bf16.mxu0 %v5135
        %6797 = vmatpush1.bf16.msra.mxu0 %v5134
        %6798 = vmatprep.subr.bf16.mxu0 %v5139
        %6799 = vmatpush1.bf16.msra.mxu0 %v5138
        %6800 = vmatprep.subr.bf16.mxu0 %v5143
        %6801 = vmatpush1.bf16.msra.mxu0 %v5142
        %6802 = vmatprep.subr.bf16.mxu0 %v5147
        %6803 = vmatpush1.bf16.msra.mxu0 %v5146
        %6804 = vmatprep.subr.bf16.mxu0 %v5151
        %6805 = vmatpush1.bf16.msra.mxu0 %v5150
        %6806 = vmatprep.subr.bf16.mxu0 %v5155
        %6807 = vmatpush1.bf16.msra.mxu0 %v5154
        %6808 = vmatprep.subr.bf16.mxu0 %v5159
        %6809 = vmatpush1.bf16.msra.mxu0 %v5158
        %6810 = vmatprep.subr.bf16.mxu0 %v5163
        %6811 = vmatpush1.bf16.msra.mxu0 %v5162
        %6812 = vmatprep.subr.bf16.mxu0 %v5167
        %6813 = vmatpush1.bf16.msra.mxu0 %v5166
        %6814 = vmatprep.subr.bf16.mxu0 %v5171
        %6815 = vmatpush1.bf16.msra.mxu0 %v5170
        %6816 = vmatprep.subr.bf16.mxu0 %v5175
        %6817 = vmatpush1.bf16.msra.mxu0 %v5174
        %6818 = vmatprep.subr.bf16.mxu0 %v5179
        %6819 = vmatpush1.bf16.msra.mxu0 %v5178
        %6820 = vmatprep.subr.bf16.mxu0 %v5183
        %6821 = vmatpush1.bf16.msra.mxu0 %v5182
        %6822 = vmatprep.mubr.bf16.mxu0 %v1439
        %6823 = vmatmul.mubr.bf16.gmra.mrb[0].mxu0 %v1438
        %v6824 = vpop.f32.mrb[0].mxu0
        %v6825 = vadd.f32 %v6782, %v6824
        %v6826 = vpop.f32.mrb[0].mxu0
        %v6827 = vadd.f32 %v6784, %v6826
        %v6828 = vpop.f32.mrb[0].mxu0
        %v6829 = vadd.f32 %v6786, %v6828
        %v6830 = vpop.f32.mrb[0].mxu0
        %v6831 = vadd.f32 %v6788, %v6830
        %6832 = vdwg.mxu0
        %6833 = vmatprep.subr.bf16.mxu0 %v5187
        %6834 = vmatpush1.bf16.msra.mxu0 %v5186
        %6835 = vmatprep.subr.bf16.mxu0 %v5191
        %6836 = vmatpush1.bf16.msra.mxu0 %v5190
        %6837 = vmatprep.subr.bf16.mxu0 %v5195
        %6838 = vmatpush1.bf16.msra.mxu0 %v5194
        %6839 = vmatprep.subr.bf16.mxu0 %v5199
        %6840 = vmatpush1.bf16.msra.mxu0 %v5198
        %6841 = vmatprep.subr.bf16.mxu0 %v5203
        %6842 = vmatpush1.bf16.msra.mxu0 %v5202
        %6843 = vmatprep.subr.bf16.mxu0 %v5207
        %6844 = vmatpush1.bf16.msra.mxu0 %v5206
        %6845 = vmatprep.subr.bf16.mxu0 %v5211
        %6846 = vmatpush1.bf16.msra.mxu0 %v5210
        %6847 = vmatprep.subr.bf16.mxu0 %v5215
        %6848 = vmatpush1.bf16.msra.mxu0 %v5214
        %6849 = vmatprep.subr.bf16.mxu0 %v5219
        %6850 = vmatpush1.bf16.msra.mxu0 %v5218
        %6851 = vmatprep.subr.bf16.mxu0 %v5223
        %6852 = vmatpush1.bf16.msra.mxu0 %v5222
        %6853 = vmatprep.subr.bf16.mxu0 %v5227
        %6854 = vmatpush1.bf16.msra.mxu0 %v5226
        %6855 = vmatprep.subr.bf16.mxu0 %v5231
        %6856 = vmatpush1.bf16.msra.mxu0 %v5230
        %6857 = vmatprep.subr.bf16.mxu0 %v5235
        %6858 = vmatpush1.bf16.msra.mxu0 %v5234
        %6859 = vmatprep.subr.bf16.mxu0 %v5239
        %6860 = vmatpush1.bf16.msra.mxu0 %v5238
        %6861 = vmatprep.subr.bf16.mxu0 %v5243
        %6862 = vmatpush1.bf16.msra.mxu0 %v5242
        %6863 = vmatprep.subr.bf16.mxu0 %v5247
        %6864 = vmatpush1.bf16.msra.mxu0 %v5246
        %6865 = vmatprep.mubr.bf16.mxu0 %v1441
        %6866 = vmatmul.mubr.bf16.gmra.mrb[0].mxu0 %v1440
        %v6867 = vpop.f32.mrb[0].mxu0
        %v6868 = vadd.f32 %v6825, %v6867
        %v6869 = vpop.f32.mrb[0].mxu0
        %v6870 = vadd.f32 %v6827, %v6869
        %v6871 = vpop.f32.mrb[0].mxu0
        %v6872 = vadd.f32 %v6829, %v6871
        %v6873 = vpop.f32.mrb[0].mxu0
        %v6874 = vadd.f32 %v6831, %v6873
        %6875 = vdwg.mxu0
        %6876 = vmatprep.subr.bf16.mxu0 %v5251
        %6877 = vmatpush1.bf16.msra.mxu0 %v5250
        %6878 = vmatprep.subr.bf16.mxu0 %v5255
        %6879 = vmatpush1.bf16.msra.mxu0 %v5254
        %6880 = vmatprep.subr.bf16.mxu0 %v5259
        %6881 = vmatpush1.bf16.msra.mxu0 %v5258
        %6882 = vmatprep.subr.bf16.mxu0 %v5263
        %6883 = vmatpush1.bf16.msra.mxu0 %v5262
        %6884 = vmatprep.subr.bf16.mxu0 %v5267
        %6885 = vmatpush1.bf16.msra.mxu0 %v5266
        %6886 = vmatprep.subr.bf16.mxu0 %v5271
        %6887 = vmatpush1.bf16.msra.mxu0 %v5270
        %6888 = vmatprep.subr.bf16.mxu0 %v5275
        %6889 = vmatpush1.bf16.msra.mxu0 %v5274
        %6890 = vmatprep.subr.bf16.mxu0 %v5279
        %6891 = vmatpush1.bf16.msra.mxu0 %v5278
        %6892 = vmatprep.subr.bf16.mxu0 %v5283
        %6893 = vmatpush1.bf16.msra.mxu0 %v5282
        %6894 = vmatprep.subr.bf16.mxu0 %v5287
        %6895 = vmatpush1.bf16.msra.mxu0 %v5286
        %6896 = vmatprep.subr.bf16.mxu0 %v5291
        %6897 = vmatpush1.bf16.msra.mxu0 %v5290
        %6898 = vmatprep.subr.bf16.mxu0 %v5295
        %6899 = vmatpush1.bf16.msra.mxu0 %v5294
        %6900 = vmatprep.subr.bf16.mxu0 %v5299
        %6901 = vmatpush1.bf16.msra.mxu0 %v5298
        %6902 = vmatprep.subr.bf16.mxu0 %v5303
        %6903 = vmatpush1.bf16.msra.mxu0 %v5302
        %6904 = vmatprep.subr.bf16.mxu0 %v5307
        %6905 = vmatpush1.bf16.msra.mxu0 %v5306
        %6906 = vmatprep.subr.bf16.mxu0 %v5311
        %6907 = vmatpush1.bf16.msra.mxu0 %v5310
        %6908 = vmatprep.mubr.bf16.mxu0 %v1443
        %6909 = vmatmul.mubr.bf16.gmra.mrb[0].mxu0 %v1442
        %v6910 = vpop.f32.mrb[0].mxu0
        %v6911 = vadd.f32 %v6868, %v6910
        %v6912 = vpop.f32.mrb[0].mxu0
        %v6913 = vadd.f32 %v6870, %v6912
        %v6914 = vpop.f32.mrb[0].mxu0
        %v6915 = vadd.f32 %v6872, %v6914
        %v6916 = vpop.f32.mrb[0].mxu0
        %v6917 = vadd.f32 %v6874, %v6916
        %6918 = vdwg.mxu0
        %6919 = vmatprep.subr.bf16.mxu0 %v4357
        %6920 = vmatpush1.bf16.msra.mxu0 %v4356
        %6921 = vmatprep.subr.bf16.mxu0 %v4361
        %6922 = vmatpush1.bf16.msra.mxu0 %v4360
        %6923 = vmatprep.subr.bf16.mxu0 %v4365
        %6924 = vmatpush1.bf16.msra.mxu0 %v4364
        %6925 = vmatprep.subr.bf16.mxu0 %v4369
        %6926 = vmatpush1.bf16.msra.mxu0 %v4368
        %6927 = vmatprep.subr.bf16.mxu0 %v4373
        %6928 = vmatpush1.bf16.msra.mxu0 %v4372
        %6929 = vmatprep.subr.bf16.mxu0 %v4377
        %6930 = vmatpush1.bf16.msra.mxu0 %v4376
        %6931 = vmatprep.subr.bf16.mxu0 %v4381
        %6932 = vmatpush1.bf16.msra.mxu0 %v4380
        %6933 = vmatprep.subr.bf16.mxu0 %v4385
        %6934 = vmatpush1.bf16.msra.mxu0 %v4384
        %6935 = vmatprep.subr.bf16.mxu0 %v4389
        %6936 = vmatpush1.bf16.msra.mxu0 %v4388
        %6937 = vmatprep.subr.bf16.mxu0 %v4393
        %6938 = vmatpush1.bf16.msra.mxu0 %v4392
        %6939 = vmatprep.subr.bf16.mxu0 %v4397
        %6940 = vmatpush1.bf16.msra.mxu0 %v4396
        %6941 = vmatprep.subr.bf16.mxu0 %v4401
        %6942 = vmatpush1.bf16.msra.mxu0 %v4400
        %6943 = vmatprep.subr.bf16.mxu0 %v4405
        %6944 = vmatpush1.bf16.msra.mxu0 %v4404
        %6945 = vmatprep.subr.bf16.mxu0 %v4409
        %6946 = vmatpush1.bf16.msra.mxu0 %v4408
        %6947 = vmatprep.subr.bf16.mxu0 %v4413
        %6948 = vmatpush1.bf16.msra.mxu0 %v4412
        %6949 = vmatprep.subr.bf16.mxu0 %v4417
        %6950 = vmatpush1.bf16.msra.mxu0 %v4416
        %6951 = vmatprep.mubr.bf16.mxu0 %v1415
        %6952 = vmatmul.mubr.bf16.gmra.mrb[0].mxu0 %v1414
        %v6953 = vpop.f32.mrb[0].mxu0
        %v6954 = vadd.f32 0.0, %v6953
        %v6955 = vpop.f32.mrb[0].mxu0
        %v6956 = vadd.f32 0.0, %v6955
        %v6957 = vpop.f32.mrb[0].mxu0
        %v6958 = vadd.f32 0.0, %v6957
        %v6959 = vpop.f32.mrb[0].mxu0
        %v6960 = vadd.f32 0.0, %v6959
        %6961 = vdwg.mxu0
        %6962 = vmatprep.subr.bf16.mxu0 %v4421
        %6963 = vmatpush1.bf16.msra.mxu0 %v4420
        %6964 = vmatprep.subr.bf16.mxu0 %v4425
        %6965 = vmatpush1.bf16.msra.mxu0 %v4424
        %6966 = vmatprep.subr.bf16.mxu0 %v4429
        %6967 = vmatpush1.bf16.msra.mxu0 %v4428
        %6968 = vmatprep.subr.bf16.mxu0 %v4433
        %6969 = vmatpush1.bf16.msra.mxu0 %v4432
        %6970 = vmatprep.subr.bf16.mxu0 %v4437
        %6971 = vmatpush1.bf16.msra.mxu0 %v4436
        %6972 = vmatprep.subr.bf16.mxu0 %v4441
        %6973 = vmatpush1.bf16.msra.mxu0 %v4440
        %6974 = vmatprep.subr.bf16.mxu0 %v4445
        %6975 = vmatpush1.bf16.msra.mxu0 %v4444
        %6976 = vmatprep.subr.bf16.mxu0 %v4449
        %6977 = vmatpush1.bf16.msra.mxu0 %v4448
        %6978 = vmatprep.subr.bf16.mxu0 %v4453
        %6979 = vmatpush1.bf16.msra.mxu0 %v4452
        %6980 = vmatprep.subr.bf16.mxu0 %v4457
        %6981 = vmatpush1.bf16.msra.mxu0 %v4456
        %6982 = vmatprep.subr.bf16.mxu0 %v4461
        %6983 = vmatpush1.bf16.msra.mxu0 %v4460
        %6984 = vmatprep.subr.bf16.mxu0 %v4465
        %6985 = vmatpush1.bf16.msra.mxu0 %v4464
        %6986 = vmatprep.subr.bf16.mxu0 %v4469
        %6987 = vmatpush1.bf16.msra.mxu0 %v4468
        %6988 = vmatprep.subr.bf16.mxu0 %v4473
        %6989 = vmatpush1.bf16.msra.mxu0 %v4472
        %6990 = vmatprep.subr.bf16.mxu0 %v4477
        %6991 = vmatpush1.bf16.msra.mxu0 %v4476
        %6992 = vmatprep.subr.bf16.mxu0 %v4481
        %6993 = vmatpush1.bf16.msra.mxu0 %v4480
        %6994 = vmatprep.mubr.bf16.mxu0 %v1417
        %6995 = vmatmul.mubr.bf16.gmra.mrb[0].mxu0 %v1416
        %v6996 = vpop.f32.mrb[0].mxu0
        %v6997 = vadd.f32 %v6954, %v6996
        %v6998 = vpop.f32.mrb[0].mxu0
        %v6999 = vadd.f32 %v6956, %v6998
        %v7000 = vpop.f32.mrb[0].mxu0
        %v7001 = vadd.f32 %v6958, %v7000
        %v7002 = vpop.f32.mrb[0].mxu0
        %v7003 = vadd.f32 %v6960, %v7002
        %7004 = vdwg.mxu0
        %7005 = vmatprep.subr.bf16.mxu0 %v4485
        %7006 = vmatpush1.bf16.msra.mxu0 %v4484
        %7007 = vmatprep.subr.bf16.mxu0 %v4489
        %7008 = vmatpush1.bf16.msra.mxu0 %v4488
        %7009 = vmatprep.subr.bf16.mxu0 %v4493
        %7010 = vmatpush1.bf16.msra.mxu0 %v4492
        %7011 = vmatprep.subr.bf16.mxu0 %v4497
        %7012 = vmatpush1.bf16.msra.mxu0 %v4496
        %7013 = vmatprep.subr.bf16.mxu0 %v4501
        %7014 = vmatpush1.bf16.msra.mxu0 %v4500
        %7015 = vmatprep.subr.bf16.mxu0 %v4505
        %7016 = vmatpush1.bf16.msra.mxu0 %v4504
        %7017 = vmatprep.subr.bf16.mxu0 %v4509
        %7018 = vmatpush1.bf16.msra.mxu0 %v4508
        %7019 = vmatprep.subr.bf16.mxu0 %v4513
        %7020 = vmatpush1.bf16.msra.mxu0 %v4512
        %7021 = vmatprep.subr.bf16.mxu0 %v4517
        %7022 = vmatpush1.bf16.msra.mxu0 %v4516
        %7023 = vmatprep.subr.bf16.mxu0 %v4521
        %7024 = vmatpush1.bf16.msra.mxu0 %v4520
        %7025 = vmatprep.subr.bf16.mxu0 %v4525
        %7026 = vmatpush1.bf16.msra.mxu0 %v4524
        %7027 = vmatprep.subr.bf16.mxu0 %v4529
        %7028 = vmatpush1.bf16.msra.mxu0 %v4528
        %7029 = vmatprep.subr.bf16.mxu0 %v4533
        %7030 = vmatpush1.bf16.msra.mxu0 %v4532
        %7031 = vmatprep.subr.bf16.mxu0 %v4537
        %7032 = vmatpush1.bf16.msra.mxu0 %v4536
        %7033 = vmatprep.subr.bf16.mxu0 %v4541
        %7034 = vmatpush1.bf16.msra.mxu0 %v4540
        %7035 = vmatprep.subr.bf16.mxu0 %v4545
        %7036 = vmatpush1.bf16.msra.mxu0 %v4544
        %7037 = vmatprep.mubr.bf16.mxu0 %v1419
        %7038 = vmatmul.mubr.bf16.gmra.mrb[0].mxu0 %v1418
        %v7039 = vpop.f32.mrb[0].mxu0
        %v7040 = vadd.f32 %v6997, %v7039
        %v7041 = vpop.f32.mrb[0].mxu0
        %v7042 = vadd.f32 %v6999, %v7041
        %v7043 = vpop.f32.mrb[0].mxu0
        %v7044 = vadd.f32 %v7001, %v7043
        %v7045 = vpop.f32.mrb[0].mxu0
        %v7046 = vadd.f32 %v7003, %v7045
        %7047 = vdwg.mxu0
        %7048 = vmatprep.subr.bf16.mxu0 %v4549
        %7049 = vmatpush1.bf16.msra.mxu0 %v4548
        %7050 = vmatprep.subr.bf16.mxu0 %v4553
        %7051 = vmatpush1.bf16.msra.mxu0 %v4552
        %7052 = vmatprep.subr.bf16.mxu0 %v4557
        %7053 = vmatpush1.bf16.msra.mxu0 %v4556
        %7054 = vmatprep.subr.bf16.mxu0 %v4561
        %7055 = vmatpush1.bf16.msra.mxu0 %v4560
        %7056 = vmatprep.subr.bf16.mxu0 %v4565
        %7057 = vmatpush1.bf16.msra.mxu0 %v4564
        %7058 = vmatprep.subr.bf16.mxu0 %v4569
        %7059 = vmatpush1.bf16.msra.mxu0 %v4568
        %7060 = vmatprep.subr.bf16.mxu0 %v4573
        %7061 = vmatpush1.bf16.msra.mxu0 %v4572
        %7062 = vmatprep.subr.bf16.mxu0 %v4577
        %7063 = vmatpush1.bf16.msra.mxu0 %v4576
        %7064 = vmatprep.subr.bf16.mxu0 %v4581
        %7065 = vmatpush1.bf16.msra.mxu0 %v4580
        %7066 = vmatprep.subr.bf16.mxu0 %v4585
        %7067 = vmatpush1.bf16.msra.mxu0 %v4584
        %7068 = vmatprep.subr.bf16.mxu0 %v4589
        %7069 = vmatpush1.bf16.msra.mxu0 %v4588
        %7070 = vmatprep.subr.bf16.mxu0 %v4593
        %7071 = vmatpush1.bf16.msra.mxu0 %v4592
        %7072 = vmatprep.subr.bf16.mxu0 %v4597
        %7073 = vmatpush1.bf16.msra.mxu0 %v4596
        %7074 = vmatprep.subr.bf16.mxu0 %v4601
        %7075 = vmatpush1.bf16.msra.mxu0 %v4600
        %7076 = vmatprep.subr.bf16.mxu0 %v4605
        %7077 = vmatpush1.bf16.msra.mxu0 %v4604
        %7078 = vmatprep.subr.bf16.mxu0 %v4609
        %7079 = vmatpush1.bf16.msra.mxu0 %v4608
        %7080 = vmatprep.mubr.bf16.mxu0 %v1421
        %7081 = vmatmul.mubr.bf16.gmra.mrb[0].mxu0 %v1420
        %v7082 = vpop.f32.mrb[0].mxu0
        %v7083 = vadd.f32 %v7040, %v7082
        %v7084 = vpop.f32.mrb[0].mxu0
        %v7085 = vadd.f32 %v7042, %v7084
        %v7086 = vpop.f32.mrb[0].mxu0
        %v7087 = vadd.f32 %v7044, %v7086
        %v7088 = vpop.f32.mrb[0].mxu0
        %v7089 = vadd.f32 %v7046, %v7088
        %7090 = vdwg.mxu0
        %7091 = vmatprep.subr.bf16.mxu0 %v4613
        %7092 = vmatpush1.bf16.msra.mxu0 %v4612
        %7093 = vmatprep.subr.bf16.mxu0 %v4617
        %7094 = vmatpush1.bf16.msra.mxu0 %v4616
        %7095 = vmatprep.subr.bf16.mxu0 %v4621
        %7096 = vmatpush1.bf16.msra.mxu0 %v4620
        %7097 = vmatprep.subr.bf16.mxu0 %v4625
        %7098 = vmatpush1.bf16.msra.mxu0 %v4624
        %7099 = vmatprep.subr.bf16.mxu0 %v4629
        %7100 = vmatpush1.bf16.msra.mxu0 %v4628
        %7101 = vmatprep.subr.bf16.mxu0 %v4633
        %7102 = vmatpush1.bf16.msra.mxu0 %v4632
        %7103 = vmatprep.subr.bf16.mxu0 %v4637
        %7104 = vmatpush1.bf16.msra.mxu0 %v4636
        %7105 = vmatprep.subr.bf16.mxu0 %v4641
        %7106 = vmatpush1.bf16.msra.mxu0 %v4640
        %7107 = vmatprep.subr.bf16.mxu0 %v4645
        %7108 = vmatpush1.bf16.msra.mxu0 %v4644
        %7109 = vmatprep.subr.bf16.mxu0 %v4649
        %7110 = vmatpush1.bf16.msra.mxu0 %v4648
        %7111 = vmatprep.subr.bf16.mxu0 %v4653
        %7112 = vmatpush1.bf16.msra.mxu0 %v4652
        %7113 = vmatprep.subr.bf16.mxu0 %v4657
        %7114 = vmatpush1.bf16.msra.mxu0 %v4656
        %7115 = vmatprep.subr.bf16.mxu0 %v4661
        %7116 = vmatpush1.bf16.msra.mxu0 %v4660
        %7117 = vmatprep.subr.bf16.mxu0 %v4665
        %7118 = vmatpush1.bf16.msra.mxu0 %v4664
        %7119 = vmatprep.subr.bf16.mxu0 %v4669
        %7120 = vmatpush1.bf16.msra.mxu0 %v4668
        %7121 = vmatprep.subr.bf16.mxu0 %v4673
        %7122 = vmatpush1.bf16.msra.mxu0 %v4672
        %7123 = vmatprep.mubr.bf16.mxu0 %v1423
        %7124 = vmatmul.mubr.bf16.gmra.mrb[0].mxu0 %v1422
        %v7125 = vpop.f32.mrb[0].mxu0
        %v7126 = vadd.f32 %v7083, %v7125
        %v7127 = vpop.f32.mrb[0].mxu0
        %v7128 = vadd.f32 %v7085, %v7127
        %v7129 = vpop.f32.mrb[0].mxu0
        %v7130 = vadd.f32 %v7087, %v7129
        %v7131 = vpop.f32.mrb[0].mxu0
        %v7132 = vadd.f32 %v7089, %v7131
        %7133 = vdwg.mxu0
        %7134 = vmatprep.subr.bf16.mxu0 %v4677
        %7135 = vmatpush1.bf16.msra.mxu0 %v4676
        %7136 = vmatprep.subr.bf16.mxu0 %v4681
        %7137 = vmatpush1.bf16.msra.mxu0 %v4680
        %7138 = vmatprep.subr.bf16.mxu0 %v4685
        %7139 = vmatpush1.bf16.msra.mxu0 %v4684
        %7140 = vmatprep.subr.bf16.mxu0 %v4689
        %7141 = vmatpush1.bf16.msra.mxu0 %v4688
        %7142 = vmatprep.subr.bf16.mxu0 %v4693
        %7143 = vmatpush1.bf16.msra.mxu0 %v4692
        %7144 = vmatprep.subr.bf16.mxu0 %v4697
        %7145 = vmatpush1.bf16.msra.mxu0 %v4696
        %7146 = vmatprep.subr.bf16.mxu0 %v4701
        %7147 = vmatpush1.bf16.msra.mxu0 %v4700
        %7148 = vmatprep.subr.bf16.mxu0 %v4705
        %7149 = vmatpush1.bf16.msra.mxu0 %v4704
        %7150 = vmatprep.subr.bf16.mxu0 %v4709
        %7151 = vmatpush1.bf16.msra.mxu0 %v4708
        %7152 = vmatprep.subr.bf16.mxu0 %v4713
        %7153 = vmatpush1.bf16.msra.mxu0 %v4712
        %7154 = vmatprep.subr.bf16.mxu0 %v4717
        %7155 = vmatpush1.bf16.msra.mxu0 %v4716
        %7156 = vmatprep.subr.bf16.mxu0 %v4721
        %7157 = vmatpush1.bf16.msra.mxu0 %v4720
        %7158 = vmatprep.subr.bf16.mxu0 %v4725
        %7159 = vmatpush1.bf16.msra.mxu0 %v4724
        %7160 = vmatprep.subr.bf16.mxu0 %v4729
        %7161 = vmatpush1.bf16.msra.mxu0 %v4728
        %7162 = vmatprep.subr.bf16.mxu0 %v4733
        %7163 = vmatpush1.bf16.msra.mxu0 %v4732
        %7164 = vmatprep.subr.bf16.mxu0 %v4737
        %7165 = vmatpush1.bf16.msra.mxu0 %v4736
        %7166 = vmatprep.mubr.bf16.mxu0 %v1425
        %7167 = vmatmul.mubr.bf16.gmra.mrb[0].mxu0 %v1424
        %v7168 = vpop.f32.mrb[0].mxu0
        %v7169 = vadd.f32 %v7126, %v7168
        %v7170 = vpop.f32.mrb[0].mxu0
        %v7171 = vadd.f32 %v7128, %v7170
        %v7172 = vpop.f32.mrb[0].mxu0
        %v7173 = vadd.f32 %v7130, %v7172
        %v7174 = vpop.f32.mrb[0].mxu0
        %v7175 = vadd.f32 %v7132, %v7174
        %7176 = vdwg.mxu0
        %7177 = vmatprep.subr.bf16.mxu0 %v4741
        %7178 = vmatpush1.bf16.msra.mxu0 %v4740
        %7179 = vmatprep.subr.bf16.mxu0 %v4745
        %7180 = vmatpush1.bf16.msra.mxu0 %v4744
        %7181 = vmatprep.subr.bf16.mxu0 %v4749
        %7182 = vmatpush1.bf16.msra.mxu0 %v4748
        %7183 = vmatprep.subr.bf16.mxu0 %v4753
        %7184 = vmatpush1.bf16.msra.mxu0 %v4752
        %7185 = vmatprep.subr.bf16.mxu0 %v4757
        %7186 = vmatpush1.bf16.msra.mxu0 %v4756
        %7187 = vmatprep.subr.bf16.mxu0 %v4761
        %7188 = vmatpush1.bf16.msra.mxu0 %v4760
        %7189 = vmatprep.subr.bf16.mxu0 %v4765
        %7190 = vmatpush1.bf16.msra.mxu0 %v4764
        %7191 = vmatprep.subr.bf16.mxu0 %v4769
        %7192 = vmatpush1.bf16.msra.mxu0 %v4768
        %7193 = vmatprep.subr.bf16.mxu0 %v4773
        %7194 = vmatpush1.bf16.msra.mxu0 %v4772
        %7195 = vmatprep.subr.bf16.mxu0 %v4777
        %7196 = vmatpush1.bf16.msra.mxu0 %v4776
        %7197 = vmatprep.subr.bf16.mxu0 %v4781
        %7198 = vmatpush1.bf16.msra.mxu0 %v4780
        %7199 = vmatprep.subr.bf16.mxu0 %v4785
        %7200 = vmatpush1.bf16.msra.mxu0 %v4784
        %7201 = vmatprep.subr.bf16.mxu0 %v4789
        %7202 = vmatpush1.bf16.msra.mxu0 %v4788
        %7203 = vmatprep.subr.bf16.mxu0 %v4793
        %7204 = vmatpush1.bf16.msra.mxu0 %v4792
        %7205 = vmatprep.subr.bf16.mxu0 %v4797
        %7206 = vmatpush1.bf16.msra.mxu0 %v4796
        %7207 = vmatprep.subr.bf16.mxu0 %v4801
        %7208 = vmatpush1.bf16.msra.mxu0 %v4800
        %7209 = vmatprep.mubr.bf16.mxu0 %v1427
        %7210 = vmatmul.mubr.bf16.gmra.mrb[0].mxu0 %v1426
        %v7211 = vpop.f32.mrb[0].mxu0
        %v7212 = vadd.f32 %v7169, %v7211
        %v7213 = vpop.f32.mrb[0].mxu0
        %v7214 = vadd.f32 %v7171, %v7213
        %v7215 = vpop.f32.mrb[0].mxu0
        %v7216 = vadd.f32 %v7173, %v7215
        %v7217 = vpop.f32.mrb[0].mxu0
        %v7218 = vadd.f32 %v7175, %v7217
        %7219 = vdwg.mxu0
        %7220 = vmatprep.subr.bf16.mxu0 %v4805
        %7221 = vmatpush1.bf16.msra.mxu0 %v4804
        %7222 = vmatprep.subr.bf16.mxu0 %v4809
        %7223 = vmatpush1.bf16.msra.mxu0 %v4808
        %7224 = vmatprep.subr.bf16.mxu0 %v4813
        %7225 = vmatpush1.bf16.msra.mxu0 %v4812
        %7226 = vmatprep.subr.bf16.mxu0 %v4817
        %7227 = vmatpush1.bf16.msra.mxu0 %v4816
        %7228 = vmatprep.subr.bf16.mxu0 %v4821
        %7229 = vmatpush1.bf16.msra.mxu0 %v4820
        %7230 = vmatprep.subr.bf16.mxu0 %v4825
        %7231 = vmatpush1.bf16.msra.mxu0 %v4824
        %7232 = vmatprep.subr.bf16.mxu0 %v4829
        %7233 = vmatpush1.bf16.msra.mxu0 %v4828
        %7234 = vmatprep.subr.bf16.mxu0 %v4833
        %7235 = vmatpush1.bf16.msra.mxu0 %v4832
        %7236 = vmatprep.subr.bf16.mxu0 %v4837
        %7237 = vmatpush1.bf16.msra.mxu0 %v4836
        %7238 = vmatprep.subr.bf16.mxu0 %v4841
        %7239 = vmatpush1.bf16.msra.mxu0 %v4840
        %7240 = vmatprep.subr.bf16.mxu0 %v4845
        %7241 = vmatpush1.bf16.msra.mxu0 %v4844
        %7242 = vmatprep.subr.bf16.mxu0 %v4849
        %7243 = vmatpush1.bf16.msra.mxu0 %v4848
        %7244 = vmatprep.subr.bf16.mxu0 %v4853
        %7245 = vmatpush1.bf16.msra.mxu0 %v4852
        %7246 = vmatprep.subr.bf16.mxu0 %v4857
        %7247 = vmatpush1.bf16.msra.mxu0 %v4856
        %7248 = vmatprep.subr.bf16.mxu0 %v4861
        %7249 = vmatpush1.bf16.msra.mxu0 %v4860
        %7250 = vmatprep.subr.bf16.mxu0 %v4865
        %7251 = vmatpush1.bf16.msra.mxu0 %v4864
        %7252 = vmatprep.mubr.bf16.mxu0 %v1429
        %7253 = vmatmul.mubr.bf16.gmra.mrb[0].mxu0 %v1428
        %v7254 = vpop.f32.mrb[0].mxu0
        %v7255 = vadd.f32 %v7212, %v7254
        %v7256 = vpop.f32.mrb[0].mxu0
        %v7257 = vadd.f32 %v7214, %v7256
        %v7258 = vpop.f32.mrb[0].mxu0
        %v7259 = vadd.f32 %v7216, %v7258
        %v7260 = vpop.f32.mrb[0].mxu0
        %v7261 = vadd.f32 %v7218, %v7260
        %7262 = vdwg.mxu0
        %7263 = vmatprep.subr.bf16.mxu0 %v4869
        %7264 = vmatpush1.bf16.msra.mxu0 %v4868
        %7265 = vmatprep.subr.bf16.mxu0 %v4873
        %7266 = vmatpush1.bf16.msra.mxu0 %v4872
        %7267 = vmatprep.subr.bf16.mxu0 %v4877
        %7268 = vmatpush1.bf16.msra.mxu0 %v4876
        %7269 = vmatprep.subr.bf16.mxu0 %v4881
        %7270 = vmatpush1.bf16.msra.mxu0 %v4880
        %7271 = vmatprep.subr.bf16.mxu0 %v4885
        %7272 = vmatpush1.bf16.msra.mxu0 %v4884
        %7273 = vmatprep.subr.bf16.mxu0 %v4889
        %7274 = vmatpush1.bf16.msra.mxu0 %v4888
        %7275 = vmatprep.subr.bf16.mxu0 %v4893
        %7276 = vmatpush1.bf16.msra.mxu0 %v4892
        %7277 = vmatprep.subr.bf16.mxu0 %v4897
        %7278 = vmatpush1.bf16.msra.mxu0 %v4896
        %7279 = vmatprep.subr.bf16.mxu0 %v4901
        %7280 = vmatpush1.bf16.msra.mxu0 %v4900
        %7281 = vmatprep.subr.bf16.mxu0 %v4905
        %7282 = vmatpush1.bf16.msra.mxu0 %v4904
        %7283 = vmatprep.subr.bf16.mxu0 %v4909
        %7284 = vmatpush1.bf16.msra.mxu0 %v4908
        %7285 = vmatprep.subr.bf16.mxu0 %v4913
        %7286 = vmatpush1.bf16.msra.mxu0 %v4912
        %7287 = vmatprep.subr.bf16.mxu0 %v4917
        %7288 = vmatpush1.bf16.msra.mxu0 %v4916
        %7289 = vmatprep.subr.bf16.mxu0 %v4921
        %7290 = vmatpush1.bf16.msra.mxu0 %v4920
        %7291 = vmatprep.subr.bf16.mxu0 %v4925
        %7292 = vmatpush1.bf16.msra.mxu0 %v4924
        %7293 = vmatprep.subr.bf16.mxu0 %v4929
        %7294 = vmatpush1.bf16.msra.mxu0 %v4928
        %7295 = vmatprep.mubr.bf16.mxu0 %v1431
        %7296 = vmatmul.mubr.bf16.gmra.mrb[0].mxu0 %v1430
        %v7297 = vpop.f32.mrb[0].mxu0
        %v7298 = vadd.f32 %v7255, %v7297
        %v7299 = vpop.f32.mrb[0].mxu0
        %v7300 = vadd.f32 %v7257, %v7299
        %v7301 = vpop.f32.mrb[0].mxu0
        %v7302 = vadd.f32 %v7259, %v7301
        %v7303 = vpop.f32.mrb[0].mxu0
        %v7304 = vadd.f32 %v7261, %v7303
        %7305 = vdwg.mxu0
        %7306 = vmatprep.subr.bf16.mxu0 %v4933
        %7307 = vmatpush1.bf16.msra.mxu0 %v4932
        %7308 = vmatprep.subr.bf16.mxu0 %v4937
        %7309 = vmatpush1.bf16.msra.mxu0 %v4936
        %7310 = vmatprep.subr.bf16.mxu0 %v4941
        %7311 = vmatpush1.bf16.msra.mxu0 %v4940
        %7312 = vmatprep.subr.bf16.mxu0 %v4945
        %7313 = vmatpush1.bf16.msra.mxu0 %v4944
        %7314 = vmatprep.subr.bf16.mxu0 %v4949
        %7315 = vmatpush1.bf16.msra.mxu0 %v4948
        %7316 = vmatprep.subr.bf16.mxu0 %v4953
        %7317 = vmatpush1.bf16.msra.mxu0 %v4952
        %7318 = vmatprep.subr.bf16.mxu0 %v4957
        %7319 = vmatpush1.bf16.msra.mxu0 %v4956
        %7320 = vmatprep.subr.bf16.mxu0 %v4961
        %7321 = vmatpush1.bf16.msra.mxu0 %v4960
        %7322 = vmatprep.subr.bf16.mxu0 %v4965
        %7323 = vmatpush1.bf16.msra.mxu0 %v4964
        %7324 = vmatprep.subr.bf16.mxu0 %v4969
        %7325 = vmatpush1.bf16.msra.mxu0 %v4968
        %7326 = vmatprep.subr.bf16.mxu0 %v4973
        %7327 = vmatpush1.bf16.msra.mxu0 %v4972
        %7328 = vmatprep.subr.bf16.mxu0 %v4977
        %7329 = vmatpush1.bf16.msra.mxu0 %v4976
        %7330 = vmatprep.subr.bf16.mxu0 %v4981
        %7331 = vmatpush1.bf16.msra.mxu0 %v4980
        %7332 = vmatprep.subr.bf16.mxu0 %v4985
        %7333 = vmatpush1.bf16.msra.mxu0 %v4984
        %7334 = vmatprep.subr.bf16.mxu0 %v4989
        %7335 = vmatpush1.bf16.msra.mxu0 %v4988
        %7336 = vmatprep.subr.bf16.mxu0 %v4993
        %7337 = vmatpush1.bf16.msra.mxu0 %v4992
        %7338 = vmatprep.mubr.bf16.mxu0 %v1433
        %7339 = vmatmul.mubr.bf16.gmra.mrb[0].mxu0 %v1432
        %v7340 = vpop.f32.mrb[0].mxu0
        %v7341 = vadd.f32 %v7298, %v7340
        %v7342 = vpop.f32.mrb[0].mxu0
        %v7343 = vadd.f32 %v7300, %v7342
        %v7344 = vpop.f32.mrb[0].mxu0
        %v7345 = vadd.f32 %v7302, %v7344
        %v7346 = vpop.f32.mrb[0].mxu0
        %v7347 = vadd.f32 %v7304, %v7346
        %7348 = vdwg.mxu0
        %7349 = vmatprep.subr.bf16.mxu0 %v4997
        %7350 = vmatpush1.bf16.msra.mxu0 %v4996
        %7351 = vmatprep.subr.bf16.mxu0 %v5001
        %7352 = vmatpush1.bf16.msra.mxu0 %v5000
        %7353 = vmatprep.subr.bf16.mxu0 %v5005
        %7354 = vmatpush1.bf16.msra.mxu0 %v5004
        %7355 = vmatprep.subr.bf16.mxu0 %v5009
        %7356 = vmatpush1.bf16.msra.mxu0 %v5008
        %7357 = vmatprep.subr.bf16.mxu0 %v5013
        %7358 = vmatpush1.bf16.msra.mxu0 %v5012
        %7359 = vmatprep.subr.bf16.mxu0 %v5017
        %7360 = vmatpush1.bf16.msra.mxu0 %v5016
        %7361 = vmatprep.subr.bf16.mxu0 %v5021
        %7362 = vmatpush1.bf16.msra.mxu0 %v5020
        %7363 = vmatprep.subr.bf16.mxu0 %v5025
        %7364 = vmatpush1.bf16.msra.mxu0 %v5024
        %7365 = vmatprep.subr.bf16.mxu0 %v5029
        %7366 = vmatpush1.bf16.msra.mxu0 %v5028
        %7367 = vmatprep.subr.bf16.mxu0 %v5033
        %7368 = vmatpush1.bf16.msra.mxu0 %v5032
        %7369 = vmatprep.subr.bf16.mxu0 %v5037
        %7370 = vmatpush1.bf16.msra.mxu0 %v5036
        %7371 = vmatprep.subr.bf16.mxu0 %v5041
        %7372 = vmatpush1.bf16.msra.mxu0 %v5040
        %7373 = vmatprep.subr.bf16.mxu0 %v5045
        %7374 = vmatpush1.bf16.msra.mxu0 %v5044
        %7375 = vmatprep.subr.bf16.mxu0 %v5049
        %7376 = vmatpush1.bf16.msra.mxu0 %v5048
        %7377 = vmatprep.subr.bf16.mxu0 %v5053
        %7378 = vmatpush1.bf16.msra.mxu0 %v5052
        %7379 = vmatprep.subr.bf16.mxu0 %v5057
        %7380 = vmatpush1.bf16.msra.mxu0 %v5056
        %7381 = vmatprep.mubr.bf16.mxu0 %v1435
        %7382 = vmatmul.mubr.bf16.gmra.mrb[0].mxu0 %v1434
        %v7383 = vpop.f32.mrb[0].mxu0
        %v7384 = vadd.f32 %v7341, %v7383
        %v7385 = vpop.f32.mrb[0].mxu0
        %v7386 = vadd.f32 %v7343, %v7385
        %v7387 = vpop.f32.mrb[0].mxu0
        %v7388 = vadd.f32 %v7345, %v7387
        %v7389 = vpop.f32.mrb[0].mxu0
        %v7390 = vadd.f32 %v7347, %v7389
        %7391 = vdwg.mxu0
        %7392 = vmatprep.subr.bf16.mxu0 %v5061
        %7393 = vmatpush1.bf16.msra.mxu0 %v5060
        %7394 = vmatprep.subr.bf16.mxu0 %v5065
        %7395 = vmatpush1.bf16.msra.mxu0 %v5064
        %7396 = vmatprep.subr.bf16.mxu0 %v5069
        %7397 = vmatpush1.bf16.msra.mxu0 %v5068
        %7398 = vmatprep.subr.bf16.mxu0 %v5073
        %7399 = vmatpush1.bf16.msra.mxu0 %v5072
        %7400 = vmatprep.subr.bf16.mxu0 %v5077
        %7401 = vmatpush1.bf16.msra.mxu0 %v5076
        %7402 = vmatprep.subr.bf16.mxu0 %v5081
        %7403 = vmatpush1.bf16.msra.mxu0 %v5080
        %7404 = vmatprep.subr.bf16.mxu0 %v5085
        %7405 = vmatpush1.bf16.msra.mxu0 %v5084
        %7406 = vmatprep.subr.bf16.mxu0 %v5089
        %7407 = vmatpush1.bf16.msra.mxu0 %v5088
        %7408 = vmatprep.subr.bf16.mxu0 %v5093
        %7409 = vmatpush1.bf16.msra.mxu0 %v5092
        %7410 = vmatprep.subr.bf16.mxu0 %v5097
        %7411 = vmatpush1.bf16.msra.mxu0 %v5096
        %7412 = vmatprep.subr.bf16.mxu0 %v5101
        %7413 = vmatpush1.bf16.msra.mxu0 %v5100
        %7414 = vmatprep.subr.bf16.mxu0 %v5105
        %7415 = vmatpush1.bf16.msra.mxu0 %v5104
        %7416 = vmatprep.subr.bf16.mxu0 %v5109
        %7417 = vmatpush1.bf16.msra.mxu0 %v5108
        %7418 = vmatprep.subr.bf16.mxu0 %v5113
        %7419 = vmatpush1.bf16.msra.mxu0 %v5112
        %7420 = vmatprep.subr.bf16.mxu0 %v5117
        %7421 = vmatpush1.bf16.msra.mxu0 %v5116
        %7422 = vmatprep.subr.bf16.mxu0 %v5121
        %7423 = vmatpush1.bf16.msra.mxu0 %v5120
        %7424 = vmatprep.mubr.bf16.mxu0 %v1437
        %7425 = vmatmul.mubr.bf16.gmra.mrb[0].mxu0 %v1436
        %v7426 = vpop.f32.mrb[0].mxu0
        %v7427 = vadd.f32 %v7384, %v7426
        %v7428 = vpop.f32.mrb[0].mxu0
        %v7429 = vadd.f32 %v7386, %v7428
        %v7430 = vpop.f32.mrb[0].mxu0
        %v7431 = vadd.f32 %v7388, %v7430
        %v7432 = vpop.f32.mrb[0].mxu0
        %v7433 = vadd.f32 %v7390, %v7432
        %7434 = vdwg.mxu0
        %7435 = vmatprep.subr.bf16.mxu0 %v5125
        %7436 = vmatpush1.bf16.msra.mxu0 %v5124
        %7437 = vmatprep.subr.bf16.mxu0 %v5129
        %7438 = vmatpush1.bf16.msra.mxu0 %v5128
        %7439 = vmatprep.subr.bf16.mxu0 %v5133
        %7440 = vmatpush1.bf16.msra.mxu0 %v5132
        %7441 = vmatprep.subr.bf16.mxu0 %v5137
        %7442 = vmatpush1.bf16.msra.mxu0 %v5136
        %7443 = vmatprep.subr.bf16.mxu0 %v5141
        %7444 = vmatpush1.bf16.msra.mxu0 %v5140
        %7445 = vmatprep.subr.bf16.mxu0 %v5145
        %7446 = vmatpush1.bf16.msra.mxu0 %v5144
        %7447 = vmatprep.subr.bf16.mxu0 %v5149
        %7448 = vmatpush1.bf16.msra.mxu0 %v5148
        %7449 = vmatprep.subr.bf16.mxu0 %v5153
        %7450 = vmatpush1.bf16.msra.mxu0 %v5152
        %7451 = vmatprep.subr.bf16.mxu0 %v5157
        %7452 = vmatpush1.bf16.msra.mxu0 %v5156
        %7453 = vmatprep.subr.bf16.mxu0 %v5161
        %7454 = vmatpush1.bf16.msra.mxu0 %v5160
        %7455 = vmatprep.subr.bf16.mxu0 %v5165
        %7456 = vmatpush1.bf16.msra.mxu0 %v5164
        %7457 = vmatprep.subr.bf16.mxu0 %v5169
        %7458 = vmatpush1.bf16.msra.mxu0 %v5168
        %7459 = vmatprep.subr.bf16.mxu0 %v5173
        %7460 = vmatpush1.bf16.msra.mxu0 %v5172
        %7461 = vmatprep.subr.bf16.mxu0 %v5177
        %7462 = vmatpush1.bf16.msra.mxu0 %v5176
        %7463 = vmatprep.subr.bf16.mxu0 %v5181
        %7464 = vmatpush1.bf16.msra.mxu0 %v5180
        %7465 = vmatprep.subr.bf16.mxu0 %v5185
        %7466 = vmatpush1.bf16.msra.mxu0 %v5184
        %7467 = vmatprep.mubr.bf16.mxu0 %v1439
        %7468 = vmatmul.mubr.bf16.gmra.mrb[0].mxu0 %v1438
        %v7469 = vpop.f32.mrb[0].mxu0
        %v7470 = vadd.f32 %v7427, %v7469
        %v7471 = vpop.f32.mrb[0].mxu0
        %v7472 = vadd.f32 %v7429, %v7471
        %v7473 = vpop.f32.mrb[0].mxu0
        %v7474 = vadd.f32 %v7431, %v7473
        %v7475 = vpop.f32.mrb[0].mxu0
        %v7476 = vadd.f32 %v7433, %v7475
        %7477 = vdwg.mxu0
        %7478 = vmatprep.subr.bf16.mxu0 %v5189
        %7479 = vmatpush1.bf16.msra.mxu0 %v5188
        %7480 = vmatprep.subr.bf16.mxu0 %v5193
        %7481 = vmatpush1.bf16.msra.mxu0 %v5192
        %7482 = vmatprep.subr.bf16.mxu0 %v5197
        %7483 = vmatpush1.bf16.msra.mxu0 %v5196
        %7484 = vmatprep.subr.bf16.mxu0 %v5201
        %7485 = vmatpush1.bf16.msra.mxu0 %v5200
        %7486 = vmatprep.subr.bf16.mxu0 %v5205
        %7487 = vmatpush1.bf16.msra.mxu0 %v5204
        %7488 = vmatprep.subr.bf16.mxu0 %v5209
        %7489 = vmatpush1.bf16.msra.mxu0 %v5208
        %7490 = vmatprep.subr.bf16.mxu0 %v5213
        %7491 = vmatpush1.bf16.msra.mxu0 %v5212
        %7492 = vmatprep.subr.bf16.mxu0 %v5217
        %7493 = vmatpush1.bf16.msra.mxu0 %v5216
        %7494 = vmatprep.subr.bf16.mxu0 %v5221
        %7495 = vmatpush1.bf16.msra.mxu0 %v5220
        %7496 = vmatprep.subr.bf16.mxu0 %v5225
        %7497 = vmatpush1.bf16.msra.mxu0 %v5224
        %7498 = vmatprep.subr.bf16.mxu0 %v5229
        %7499 = vmatpush1.bf16.msra.mxu0 %v5228
        %7500 = vmatprep.subr.bf16.mxu0 %v5233
        %7501 = vmatpush1.bf16.msra.mxu0 %v5232
        %7502 = vmatprep.subr.bf16.mxu0 %v5237
        %7503 = vmatpush1.bf16.msra.mxu0 %v5236
        %7504 = vmatprep.subr.bf16.mxu0 %v5241
        %7505 = vmatpush1.bf16.msra.mxu0 %v5240
        %7506 = vmatprep.subr.bf16.mxu0 %v5245
        %7507 = vmatpush1.bf16.msra.mxu0 %v5244
        %7508 = vmatprep.subr.bf16.mxu0 %v5249
        %7509 = vmatpush1.bf16.msra.mxu0 %v5248
        %7510 = vmatprep.mubr.bf16.mxu0 %v1441
        %7511 = vmatmul.mubr.bf16.gmra.mrb[0].mxu0 %v1440
        %v7512 = vpop.f32.mrb[0].mxu0
        %v7513 = vadd.f32 %v7470, %v7512
        %v7514 = vpop.f32.mrb[0].mxu0
        %v7515 = vadd.f32 %v7472, %v7514
        %v7516 = vpop.f32.mrb[0].mxu0
        %v7517 = vadd.f32 %v7474, %v7516
        %v7518 = vpop.f32.mrb[0].mxu0
        %v7519 = vadd.f32 %v7476, %v7518
        %7520 = vdwg.mxu0
        %7521 = vmatprep.subr.bf16.mxu0 %v5253
        %7522 = vmatpush1.bf16.msra.mxu0 %v5252
        %7523 = vmatprep.subr.bf16.mxu0 %v5257
        %7524 = vmatpush1.bf16.msra.mxu0 %v5256
        %7525 = vmatprep.subr.bf16.mxu0 %v5261
        %7526 = vmatpush1.bf16.msra.mxu0 %v5260
        %7527 = vmatprep.subr.bf16.mxu0 %v5265
        %7528 = vmatpush1.bf16.msra.mxu0 %v5264
        %7529 = vmatprep.subr.bf16.mxu0 %v5269
        %7530 = vmatpush1.bf16.msra.mxu0 %v5268
        %7531 = vmatprep.subr.bf16.mxu0 %v5273
        %7532 = vmatpush1.bf16.msra.mxu0 %v5272
        %7533 = vmatprep.subr.bf16.mxu0 %v5277
        %7534 = vmatpush1.bf16.msra.mxu0 %v5276
        %7535 = vmatprep.subr.bf16.mxu0 %v5281
        %7536 = vmatpush1.bf16.msra.mxu0 %v5280
        %7537 = vmatprep.subr.bf16.mxu0 %v5285
        %7538 = vmatpush1.bf16.msra.mxu0 %v5284
        %7539 = vmatprep.subr.bf16.mxu0 %v5289
        %7540 = vmatpush1.bf16.msra.mxu0 %v5288
        %7541 = vmatprep.subr.bf16.mxu0 %v5293
        %7542 = vmatpush1.bf16.msra.mxu0 %v5292
        %7543 = vmatprep.subr.bf16.mxu0 %v5297
        %7544 = vmatpush1.bf16.msra.mxu0 %v5296
        %7545 = vmatprep.subr.bf16.mxu0 %v5301
        %7546 = vmatpush1.bf16.msra.mxu0 %v5300
        %7547 = vmatprep.subr.bf16.mxu0 %v5305
        %7548 = vmatpush1.bf16.msra.mxu0 %v5304
        %7549 = vmatprep.subr.bf16.mxu0 %v5309
        %7550 = vmatpush1.bf16.msra.mxu0 %v5308
        %7551 = vmatprep.subr.bf16.mxu0 %v5313
        %7552 = vmatpush1.bf16.msra.mxu0 %v5312
        %7553 = vmatprep.mubr.bf16.mxu0 %v1443
        %7554 = vmatmul.mubr.bf16.gmra.mrb[0].mxu0 %v1442
        %v7555 = vpop.f32.mrb[0].mxu0
        %v7556 = vadd.f32 %v7513, %v7555
        %v7557 = vpop.f32.mrb[0].mxu0
        %v7558 = vadd.f32 %v7515, %v7557
        %v7559 = vpop.f32.mrb[0].mxu0
        %v7560 = vadd.f32 %v7517, %v7559
        %v7561 = vpop.f32.mrb[0].mxu0
        %v7562 = vadd.f32 %v7519, %v7561
        %7563 = vdwg.mxu0
        %v7564 = vadd.f32 %v326, %v6911
        %v7565 = vadd.f32 %v327, %v6913
        %v7566 = vadd.f32 %v328, %v7556
        %v7567 = vadd.f32 %v329, %v7558
        %v7568 = vadd.f32 %v330, %v6915
        %v7569 = vadd.f32 %v331, %v6917
        %v7570 = vadd.f32 %v332, %v7560
        %v7571 = vadd.f32 %v333, %v7562
        %7572 = vst [vmem:[#allocation2] sm:$0xff] %v7564
        %7573 = vst [vmem:[#allocation2 + $0x8] sm:$0xff] %v7565
        %7574 = vst [vmem:[#allocation2 + $0x10] sm:$0xff] %v7566
        %7575 = vst [vmem:[#allocation2 + $0x18] sm:$0xff] %v7567
        %7576 = vst [vmem:[#allocation2 + $0x20] sm:$0xff] %v7568
        %7577 = vst [vmem:[#allocation2 + $0x28] sm:$0xff] %v7569
        %7578 = vst [vmem:[#allocation2 + $0x30] sm:$0xff] %v7570
        %7579 = vst [vmem:[#allocation2 + $0x38] sm:$0xff] %v7571
        %p7580 = scmp.eq.s32.totalorder %s16, 1
        // Predicated region
        $region68: #{encoder_forward.5} parent=58 // pred_check
          %p7581 = pneg %p7580
        $region69: #{encoder_forward.5} parent=58 // pred_check_branch
          %7583 = sbr.rel (%p7581) target = $region71
        $region70: #{encoder_forward.5} parent=58 // pred_region
          %v7584 = vld [vmem:[#allocation2] sm:$0xff]
          %v7585 = vld [vmem:[#allocation2 + $0x8] sm:$0xff]
          %v7586 = vld [vmem:[#allocation2 + $0x10] sm:$0xff]
          %v7587 = vld [vmem:[#allocation2 + $0x18] sm:$0xff]
          %v7588 = vld [vmem:[#allocation2 + $0x20] sm:$0xff]
          %v7589 = vld [vmem:[#allocation2 + $0x28] sm:$0xff]
          %v7590 = vld [vmem:[#allocation2 + $0x30] sm:$0xff]
          %v7591 = vld [vmem:[#allocation2 + $0x38] sm:$0xff]
          %v7592 = vld [vmem:[%s2] sm:$0xf]
          %v7594 = vlaneseq
          %v7595 = vshrl.u32 %v7594, 7
          %v7596 = vsub.s32 0, %v7595
          %v7597 = vrot.slane %v7592, %v7596
          %v7598 = vlaneseq
          %v7599 = vshrl.u32 %v7598, 7
          %v7600 = vsub.s32 1, %v7599
          %v7601 = vrot.slane %v7592, %v7600
          %v7602 = vlaneseq
          %v7603 = vshrl.u32 %v7602, 7
          %v7604 = vsub.s32 2, %v7603
          %v7605 = vrot.slane %v7592, %v7604
          %v7606 = vlaneseq
          %v7607 = vshrl.u32 %v7606, 7
          %v7608 = vsub.s32 3, %v7607
          %v7609 = vrot.slane %v7592, %v7608
          %v7614 = vadd.f32 %v7584, %v7597
          %v7615 = vadd.f32 %v7585, %v7601
          %v7616 = vadd.f32 %v7586, %v7605
          %v7617 = vadd.f32 %v7587, %v7609
          %v7618 = vadd.f32 %v7588, %v7597
          %v7619 = vadd.f32 %v7589, %v7601
          %v7620 = vadd.f32 %v7590, %v7605
          %v7621 = vadd.f32 %v7591, %v7609
          %v7622 = vmax.f32 %v7614, 0.0
          %v7623 = vmax.f32 %v7615, 0.0
          %v7624 = vmax.f32 %v7616, 0.0
          %v7625 = vmax.f32 %v7617, 0.0
          %v7626 = vmax.f32 %v7618, 0.0
          %v7627 = vmax.f32 %v7619, 0.0
          %v7628 = vmax.f32 %v7620, 0.0
          %v7629 = vmax.f32 %v7621, 0.0
          %v7630 = vld [vmem:[%s3] sm:$0xff]
          %v7631 = vld [vmem:[%s3 + $0x8] sm:$0xff]
          %v7632 = vld [vmem:[%s3 + $0x10] sm:$0xff]
          %v7633 = vld [vmem:[%s3 + $0x18] sm:$0xff]
          %v7634 = vld [vmem:[%s3 + $0x20] sm:$0xff]
          %v7635 = vld [vmem:[%s3 + $0x28] sm:$0xff]
          %v7636 = vld [vmem:[%s3 + $0x30] sm:$0xff]
          %v7637 = vld [vmem:[%s3 + $0x38] sm:$0xff]
          %v7638 = vld [vmem:[%s3 + $0x40] sm:$0xff]
          %v7639 = vld [vmem:[%s3 + $0x48] sm:$0xff]
          %v7640 = vld [vmem:[%s3 + $0x50] sm:$0xff]
          %v7641 = vld [vmem:[%s3 + $0x58] sm:$0xff]
          %v7642 = vld [vmem:[%s3 + $0x60] sm:$0xff]
          %v7643 = vld [vmem:[%s3 + $0x68] sm:$0xff]
          %v7644 = vld [vmem:[%s3 + $0x70] sm:$0xff]
          %v7645 = vld [vmem:[%s3 + $0x78] sm:$0xff]
          %v7646 = vld [vmem:[%s3 + $0x80] sm:$0xff]
          %v7647 = vld [vmem:[%s3 + $0x88] sm:$0xff]
          %v7648 = vld [vmem:[%s3 + $0x90] sm:$0xff]
          %v7649 = vld [vmem:[%s3 + $0x98] sm:$0xff]
          %v7650 = vld [vmem:[%s3 + $0xa0] sm:$0xff]
          %v7651 = vld [vmem:[%s3 + $0xa8] sm:$0xff]
          %v7652 = vld [vmem:[%s3 + $0xb0] sm:$0xff]
          %v7653 = vld [vmem:[%s3 + $0xb8] sm:$0xff]
          %v7654 = vld [vmem:[%s3 + $0xc0] sm:$0xff]
          %v7655 = vld [vmem:[%s3 + $0xc8] sm:$0xff]
          %v7656 = vld [vmem:[%s3 + $0xd0] sm:$0xff]
          %v7657 = vld [vmem:[%s3 + $0xd8] sm:$0xff]
          %v7658 = vld [vmem:[%s3 + $0xe0] sm:$0xff]
          %v7659 = vld [vmem:[%s3 + $0xe8] sm:$0xff]
          %v7660 = vld [vmem:[%s3 + $0xf0] sm:$0xff]
          %v7661 = vld [vmem:[%s3 + $0xf8] sm:$0xff]
          %v7662 = vld [vmem:[%s3 + $0x100] sm:$0xff]
          %v7663 = vld [vmem:[%s3 + $0x108] sm:$0xff]
          %v7664 = vld [vmem:[%s3 + $0x110] sm:$0xff]
          %v7665 = vld [vmem:[%s3 + $0x118] sm:$0xff]
          %v7666 = vld [vmem:[%s3 + $0x120] sm:$0xff]
          %v7667 = vld [vmem:[%s3 + $0x128] sm:$0xff]
          %v7668 = vld [vmem:[%s3 + $0x130] sm:$0xff]
          %v7669 = vld [vmem:[%s3 + $0x138] sm:$0xff]
          %v7670 = vld [vmem:[%s3 + $0x140] sm:$0xff]
          %v7671 = vld [vmem:[%s3 + $0x148] sm:$0xff]
          %v7672 = vld [vmem:[%s3 + $0x150] sm:$0xff]
          %v7673 = vld [vmem:[%s3 + $0x158] sm:$0xff]
          %v7674 = vld [vmem:[%s3 + $0x160] sm:$0xff]
          %v7675 = vld [vmem:[%s3 + $0x168] sm:$0xff]
          %v7676 = vld [vmem:[%s3 + $0x170] sm:$0xff]
          %v7677 = vld [vmem:[%s3 + $0x178] sm:$0xff]
          %v7678 = vld [vmem:[%s3 + $0x180] sm:$0xff]
          %v7679 = vld [vmem:[%s3 + $0x188] sm:$0xff]
          %v7680 = vld [vmem:[%s3 + $0x190] sm:$0xff]
          %v7681 = vld [vmem:[%s3 + $0x198] sm:$0xff]
          %v7682 = vld [vmem:[%s3 + $0x1a0] sm:$0xff]
          %v7683 = vld [vmem:[%s3 + $0x1a8] sm:$0xff]
          %v7684 = vld [vmem:[%s3 + $0x1b0] sm:$0xff]
          %v7685 = vld [vmem:[%s3 + $0x1b8] sm:$0xff]
          %v7686 = vld [vmem:[%s3 + $0x1c0] sm:$0xff]
          %v7687 = vld [vmem:[%s3 + $0x1c8] sm:$0xff]
          %v7688 = vld [vmem:[%s3 + $0x1d0] sm:$0xff]
          %v7689 = vld [vmem:[%s3 + $0x1d8] sm:$0xff]
          %v7690 = vld [vmem:[%s3 + $0x1e0] sm:$0xff]
          %v7691 = vld [vmem:[%s3 + $0x1e8] sm:$0xff]
          %v7692 = vld [vmem:[%s3 + $0x1f0] sm:$0xff]
          %v7693 = vld [vmem:[%s3 + $0x1f8] sm:$0xff]
          %v7694 = vld [vmem:[%s4] sm:$0x1]
          %v7696 = vlaneseq
          %v7697 = vshrl.u32 %v7696, 7
          %v7698 = vsub.s32 0, %v7697
          %v7699 = vrot.slane %v7694, %v7698
          %7701 = vmatprep.subr.mxu0 0.0
          %7702 = vmatpush1.msra.mxu0 %v7630
          %7703 = vmatprep.subr.mxu0 0.0
          %7704 = vmatpush1.msra.mxu0 %v7631
          %7705 = vmatprep.subr.mxu0 0.0
          %7706 = vmatpush1.msra.mxu0 %v7632
          %7707 = vmatprep.subr.mxu0 0.0
          %7708 = vmatpush1.msra.mxu0 %v7633
          %7709 = vmatprep.subr.mxu0 0.0
          %7710 = vmatpush1.msra.mxu0 %v7634
          %7711 = vmatprep.subr.mxu0 0.0
          %7712 = vmatpush1.msra.mxu0 %v7635
          %7713 = vmatprep.subr.mxu0 0.0
          %7714 = vmatpush1.msra.mxu0 %v7636
          %7715 = vmatprep.subr.mxu0 0.0
          %7716 = vmatpush1.msra.mxu0 %v7637
          %7717 = vmatprep.subr.mxu0 0.0
          %7718 = vmatpush1.msra.mxu0 %v7638
          %7719 = vmatprep.subr.mxu0 0.0
          %7720 = vmatpush1.msra.mxu0 %v7639
          %7721 = vmatprep.subr.mxu0 0.0
          %7722 = vmatpush1.msra.mxu0 %v7640
          %7723 = vmatprep.subr.mxu0 0.0
          %7724 = vmatpush1.msra.mxu0 %v7641
          %7725 = vmatprep.subr.mxu0 0.0
          %7726 = vmatpush1.msra.mxu0 %v7642
          %7727 = vmatprep.subr.mxu0 0.0
          %7728 = vmatpush1.msra.mxu0 %v7643
          %7729 = vmatprep.subr.mxu0 0.0
          %7730 = vmatpush1.msra.mxu0 %v7644
          %7731 = vmatprep.subr.mxu0 0.0
          %7732 = vmatpush1.msra.mxu0 %v7645
          %7733 = vmatprep.subr.mxu0 0.0
          %7734 = vmatpush1.msra.mxu0 %v7646
          %7735 = vmatprep.subr.mxu0 0.0
          %7736 = vmatpush1.msra.mxu0 %v7647
          %7737 = vmatprep.subr.mxu0 0.0
          %7738 = vmatpush1.msra.mxu0 %v7648
          %7739 = vmatprep.subr.mxu0 0.0
          %7740 = vmatpush1.msra.mxu0 %v7649
          %7741 = vmatprep.subr.mxu0 0.0
          %7742 = vmatpush1.msra.mxu0 %v7650
          %7743 = vmatprep.subr.mxu0 0.0
          %7744 = vmatpush1.msra.mxu0 %v7651
          %7745 = vmatprep.subr.mxu0 0.0
          %7746 = vmatpush1.msra.mxu0 %v7652
          %7747 = vmatprep.subr.mxu0 0.0
          %7748 = vmatpush1.msra.mxu0 %v7653
          %7749 = vmatprep.subr.mxu0 0.0
          %7750 = vmatpush1.msra.mxu0 %v7654
          %7751 = vmatprep.subr.mxu0 0.0
          %7752 = vmatpush1.msra.mxu0 %v7655
          %7753 = vmatprep.subr.mxu0 0.0
          %7754 = vmatpush1.msra.mxu0 %v7656
          %7755 = vmatprep.subr.mxu0 0.0
          %7756 = vmatpush1.msra.mxu0 %v7657
          %7757 = vmatprep.subr.mxu0 0.0
          %7758 = vmatpush1.msra.mxu0 %v7658
          %7759 = vmatprep.subr.mxu0 0.0
          %7760 = vmatpush1.msra.mxu0 %v7659
          %7761 = vmatprep.subr.mxu0 0.0
          %7762 = vmatpush1.msra.mxu0 %v7660
          %7763 = vmatprep.subr.mxu0 0.0
          %7764 = vmatpush1.msra.mxu0 %v7661
          %7765 = vmatprep.mubr.f32.mxu0 %v7623
          %7766 = vmatmul.mubr.f32.gmra.mrb[0].mxu0 %v7622
          %v7767 = vpop.f32.mrb[0].mxu0
          %v7768 = vadd.f32 %v7699, %v7767
          %v7769 = vpop.f32.mrb[0].mxu0
          %7770 = vmatprep.mubr.f32.mxu0 %v7627
          %7771 = vmatmul.mubr.f32.gmra.mrb[0].mxu0 %v7626
          %v7772 = vpop.f32.mrb[0].mxu0
          %v7773 = vadd.f32 %v7699, %v7772
          %v7774 = vpop.f32.mrb[0].mxu0
          %7775 = vdwg.mxu0
          %7776 = vmatprep.subr.mxu0 0.0
          %7777 = vmatpush1.msra.mxu0 %v7662
          %7778 = vmatprep.subr.mxu0 0.0
          %7779 = vmatpush1.msra.mxu0 %v7663
          %7780 = vmatprep.subr.mxu0 0.0
          %7781 = vmatpush1.msra.mxu0 %v7664
          %7782 = vmatprep.subr.mxu0 0.0
          %7783 = vmatpush1.msra.mxu0 %v7665
          %7784 = vmatprep.subr.mxu0 0.0
          %7785 = vmatpush1.msra.mxu0 %v7666
          %7786 = vmatprep.subr.mxu0 0.0
          %7787 = vmatpush1.msra.mxu0 %v7667
          %7788 = vmatprep.subr.mxu0 0.0
          %7789 = vmatpush1.msra.mxu0 %v7668
          %7790 = vmatprep.subr.mxu0 0.0
          %7791 = vmatpush1.msra.mxu0 %v7669
          %7792 = vmatprep.subr.mxu0 0.0
          %7793 = vmatpush1.msra.mxu0 %v7670
          %7794 = vmatprep.subr.mxu0 0.0
          %7795 = vmatpush1.msra.mxu0 %v7671
          %7796 = vmatprep.subr.mxu0 0.0
          %7797 = vmatpush1.msra.mxu0 %v7672
          %7798 = vmatprep.subr.mxu0 0.0
          %7799 = vmatpush1.msra.mxu0 %v7673
          %7800 = vmatprep.subr.mxu0 0.0
          %7801 = vmatpush1.msra.mxu0 %v7674
          %7802 = vmatprep.subr.mxu0 0.0
          %7803 = vmatpush1.msra.mxu0 %v7675
          %7804 = vmatprep.subr.mxu0 0.0
          %7805 = vmatpush1.msra.mxu0 %v7676
          %7806 = vmatprep.subr.mxu0 0.0
          %7807 = vmatpush1.msra.mxu0 %v7677
          %7808 = vmatprep.subr.mxu0 0.0
          %7809 = vmatpush1.msra.mxu0 %v7678
          %7810 = vmatprep.subr.mxu0 0.0
          %7811 = vmatpush1.msra.mxu0 %v7679
          %7812 = vmatprep.subr.mxu0 0.0
          %7813 = vmatpush1.msra.mxu0 %v7680
          %7814 = vmatprep.subr.mxu0 0.0
          %7815 = vmatpush1.msra.mxu0 %v7681
          %7816 = vmatprep.subr.mxu0 0.0
          %7817 = vmatpush1.msra.mxu0 %v7682
          %7818 = vmatprep.subr.mxu0 0.0
          %7819 = vmatpush1.msra.mxu0 %v7683
          %7820 = vmatprep.subr.mxu0 0.0
          %7821 = vmatpush1.msra.mxu0 %v7684
          %7822 = vmatprep.subr.mxu0 0.0
          %7823 = vmatpush1.msra.mxu0 %v7685
          %7824 = vmatprep.subr.mxu0 0.0
          %7825 = vmatpush1.msra.mxu0 %v7686
          %7826 = vmatprep.subr.mxu0 0.0
          %7827 = vmatpush1.msra.mxu0 %v7687
          %7828 = vmatprep.subr.mxu0 0.0
          %7829 = vmatpush1.msra.mxu0 %v7688
          %7830 = vmatprep.subr.mxu0 0.0
          %7831 = vmatpush1.msra.mxu0 %v7689
          %7832 = vmatprep.subr.mxu0 0.0
          %7833 = vmatpush1.msra.mxu0 %v7690
          %7834 = vmatprep.subr.mxu0 0.0
          %7835 = vmatpush1.msra.mxu0 %v7691
          %7836 = vmatprep.subr.mxu0 0.0
          %7837 = vmatpush1.msra.mxu0 %v7692
          %7838 = vmatprep.subr.mxu0 0.0
          %7839 = vmatpush1.msra.mxu0 %v7693
          %7840 = vmatprep.mubr.f32.mxu0 %v7625
          %7841 = vmatmul.mubr.f32.gmra.mrb[0].mxu0 %v7624
          %v7842 = vpop.f32.mrb[0].mxu0
          %v7843 = vadd.f32 %v7768, %v7842
          %v7844 = vpop.f32.mrb[0].mxu0
          %7845 = vmatprep.mubr.f32.mxu0 %v7629
          %7846 = vmatmul.mubr.f32.gmra.mrb[0].mxu0 %v7628
          %v7847 = vpop.f32.mrb[0].mxu0
          %v7848 = vadd.f32 %v7773, %v7847
          %v7849 = vpop.f32.mrb[0].mxu0
          %7850 = vdwg.mxu0
          %7851 = vst [vmem:[%s5] sm:$0xff] %v7843
          %7852 = vst [vmem:[%s5 + $0x8] sm:$0xff] %v7848
        $region71: #{encoder_forward.5} parent=58 // pred_fallthru
          _
        // Predicated region
        $region72: #{encoder_forward.5} parent=58 // pred_check
          %p7853 = pneg %p144
        $region73: #{encoder_forward.5} parent=58 // pred_check_branch
          %7855 = sbr.rel (%p7853) target = $region75
        $region74: #{encoder_forward.5} parent=58 // pred_region
          _
        $region75: #{encoder_forward.5} parent=58 // pred_fallthru
          _
        // Predicated region
        $region76: #{encoder_forward.5} parent=58 // pred_check
          %p7856 = pneg %p144
        $region77: #{encoder_forward.5} parent=58 // pred_check_branch
          %7858 = sbr.rel (%p7856) target = $region79
        $region78: #{encoder_forward.5} parent=58 // pred_region
          _
        $region79: #{encoder_forward.5} parent=58 // pred_fallthru
          _
      $region59: #{encoder_forward.5} parent=5 // pred_fallthru
        _
      %p7859 = scmp.le.s32.totalorder 2, %s11
      // Predicated region
      $region80: #{encoder_forward.5} parent=5 // pred_check
        %p7860 = pneg %p7859
      $region81: #{encoder_forward.5} parent=5 // pred_check_branch
        %7862 = sbr.rel (%p7860) target = $region83
      $region82: #{encoder_forward.5} parent=5 // pred_region
        %s7863 = ssub.s32 %s11, 2
      $region83: #{encoder_forward.5} parent=5 // pred_fallthru
        _
    $region6: #{encoder_forward.5} parent=1 // loop_footer
      %s15 = sadd.s32 1, %s11
    $region7: #{encoder_forward.5} parent=1 // loop_footer_branch
      %10 = sbr.rel target = $region3
    $region8: #{encoder_forward.5} parent=1 // loop_exit
      _

</llo_original>
